<compile_context>
chip_gen: v7x
topology: tpu7x:2x2x1
jax: 0.10.0
libtpu: 0.0.40
codegen_flags: <defaults>
</compile_context>

<pallas_src>
import jax
import jax.numpy as jnp
from jax.experimental import pallas as pl
from jax.experimental.pallas import tpu as pltpu


# ---------------------------------------------------------------------------
# Fused kernel: one grid step == one image, everything stays on-chip.
# ---------------------------------------------------------------------------
def _pool2x2(v, rows, cols):
    """Exact 2x2 max pool of a (2*rows, 2*cols) value via static slice/concat."""
    ev = jnp.concatenate([v[2 * p:2 * p + 1, :] for p in range(rows)], axis=0)
    od = jnp.concatenate([v[2 * p + 1:2 * p + 2, :] for p in range(rows)], axis=0)
    h = jnp.maximum(ev, od)                                          # (rows, 2*cols)
    ce = jnp.concatenate([h[:, 2 * q:2 * q + 1] for q in range(cols)], axis=1)
    co = jnp.concatenate([h[:, 2 * q + 1:2 * q + 2] for q in range(cols)], axis=1)
    return jnp.maximum(ce, co)                                       # (rows, cols)


def _fused_kernel(x_ref, w1_ref, b1_ref, w2f_ref, b2_ref, w1r_ref,
                  b1fc_ref, w2fc_ref, b2fc_ref, o_ref):
    f32 = jnp.float32
    x = x_ref[0]                                                     # (28, 28)

    # ---- conv1 (1->6, 5x5 valid): direct 25-tap accumulation, SMEM scalars.
    taps = [x[ki:ki + 24, kj:kj + 24] for ki in range(5) for kj in range(5)]
    pooled1 = []
    for c in range(6):
        acc = jnp.zeros((24, 24), f32)
        for t in range(25):
            acc = acc + taps[t] * w1_ref[c * 25 + t]
        acc = acc + b1_ref[c]
        # pool(tanh(z)) == tanh(pool(z)) (tanh monotone) -> pool first, then
        # tanh on the 4x smaller array, then relu (matches relu(pool(tanh))).
        pooled1.append(jnp.maximum(jnp.tanh(_pool2x2(acc, 12, 12)), 0.0))

    # ---- conv2 (6->14, 3x3 valid): one MXU matmul per output row,
    # (14, 54) @ (54, 10); the 54 rows are the (kj, ki, c) taps.
    w2f = w2f_ref[...]                                               # (14, 54)
    b2c = b2_ref[...]                                                # (14, 1)

    def conv2_row(r):
        rows18 = jnp.concatenate(
            [pooled1[c][r + ki:r + ki + 1, :]
             for ki in range(3) for c in range(6)], axis=0)          # (18, 12)
        s = jnp.concatenate([rows18[:, kj:kj + 10] for kj in range(3)],
                            axis=0)                                  # (54, 10)
        return jnp.dot(w2f, s, preferred_element_type=f32) + b2c     # (14, 10)

    # ---- pool2 + tanh fused in the conv2 row loop (channels on sublanes).
    feats = []
    for pi in range(5):
        hm = jnp.maximum(conv2_row(2 * pi), conv2_row(2 * pi + 1))   # (14, 10)
        ce = jnp.concatenate([hm[:, 2 * q:2 * q + 1] for q in range(5)], axis=1)
        co = jnp.concatenate([hm[:, 2 * q + 1:2 * q + 2] for q in range(5)], axis=1)
        feats.append(jnp.tanh(jnp.maximum(ce, co)))                  # (14, 5)
    feat = jnp.concatenate(feats, axis=1)                            # (14, 25)

    # ---- fc1 (350 -> 150) + tanh: weights pre-permuted to (14, 25, 150) so
    # (channel, h*5+w) matches PyTorch's NCHW flatten.
    out1 = b1fc_ref[...]                                             # (1, 150)
    for c in range(14):
        out1 = out1 + jnp.dot(feat[c:c + 1, :], w1r_ref[c],
                              preferred_element_type=f32)            # (1,25)@(25,150)
    out1 = jnp.tanh(out1)

    # ---- fc2 (150 -> 10)
    out2 = jnp.dot(out1, w2fc_ref[...], preferred_element_type=f32) + b2fc_ref[...]
    o_ref[0] = out2                                                  # (1, 10)


# ---------------------------------------------------------------------------
# Parameters (PyTorch layout) and one-time re-layout for the kernel.
# ---------------------------------------------------------------------------
def init_params(key):
    def uni(k, shape, fan_in):
        bound = 1.0 / jnp.sqrt(jnp.float32(fan_in))
        return jax.random.uniform(k, shape, jnp.float32, -bound, bound)

    ks = jax.random.split(key, 8)
    return {
        "conv1_w": uni(ks[0], (6, 1, 5, 5), 25),
        "conv1_b": uni(ks[1], (6,), 25),
        "conv2_w": uni(ks[2], (14, 6, 3, 3), 54),
        "conv2_b": uni(ks[3], (14,), 54),
        "fc1_w": uni(ks[4], (150, 14 * 5 * 5), 14 * 5 * 5),
        "fc1_b": uni(ks[5], (150,), 14 * 5 * 5),
        "fc2_w": uni(ks[6], (10, 150), 150),
        "fc2_b": uni(ks[7], (10,), 150),
    }


def prepare_params(params):
    """One-time weight re-layout (no per-forward transposes / padding)."""
    return {
        "w1": params["conv1_w"].reshape(-1).astype(jnp.float32),            # (150,)
        "b1": params["conv1_b"].astype(jnp.float32),                        # (6,)
        # (oc, c, ki, kj) -> (oc, kj, ki, c) -> (14, 54); column m = kj*18+ki*6+c
        "w2f": params["conv2_w"].transpose(0, 3, 2, 1).reshape(14, 54),
        "b2": params["conv2_b"].reshape(14, 1),
        # fc1_w[n, c*25 + pos] -> (14, 25, 150)
        "w1r": params["fc1_w"].reshape(150, 14, 25).transpose(1, 2, 0),
        "b1fc": params["fc1_b"].reshape(1, 150),
        "w2fc": params["fc2_w"].T,                                          # (150, 10)
        "b2fc": params["fc2_b"].reshape(1, 10),
    }


@jax.jit
def robust_conv_net(prep, x):
    # x: (N, 1, 28, 28) NCHW (PyTorch layout); single layout op at the input.
    n = x.shape[0]
    x2 = x.reshape(n, 28, 28).astype(jnp.float32)

    flops = n * (2 * 24 * 24 * 25 * 6 + 2 * 10 * 10 * 54 * 14
                 + 2 * 350 * 150 + 2 * 150 * 10)
    transcendentals = n * (6 * 12 * 12 + 14 * 25 + 150)
    bytes_accessed = 4 * (n * 28 * 28 + n * 10 + 150 + 6 + 14 * 54 + 14
                          + 14 * 25 * 150 + 150 + 150 * 10 + 10)

    out = pl.pallas_call(
        _fused_kernel,
        out_shape=jax.ShapeDtypeStruct((n, 1, 10), jnp.float32),
        grid=(n,),
        in_specs=[
            pl.BlockSpec((1, 28, 28), lambda b: (b, 0, 0)),
            pl.BlockSpec(memory_space=pltpu.MemorySpace.SMEM),   # conv1 w (150,)
            pl.BlockSpec(memory_space=pltpu.MemorySpace.SMEM),   # conv1 b (6,)
            pl.BlockSpec((14, 54), lambda b: (0, 0)),            # conv2 w
            pl.BlockSpec((14, 1), lambda b: (0, 0)),             # conv2 b
            pl.BlockSpec((14, 25, 150), lambda b: (0, 0, 0)),    # fc1 w
            pl.BlockSpec((1, 150), lambda b: (0, 0)),            # fc1 b
            pl.BlockSpec((150, 10), lambda b: (0, 0)),           # fc2 w
            pl.BlockSpec((1, 10), lambda b: (0, 0)),             # fc2 b
        ],
        out_specs=pl.BlockSpec((1, 1, 10), lambda b: (b, 0, 0)),
        compiler_params=pltpu.CompilerParams(
            dimension_semantics=("parallel",)),
        cost_estimate=pl.CostEstimate(flops=flops,
                                      transcendentals=transcendentals,
                                      bytes_accessed=bytes_accessed),
    )(x2, prep["w1"], prep["b1"], prep["w2f"], prep["b2"], prep["w1r"],
      prep["b1fc"], prep["w2fc"], prep["b2fc"])
    return out.reshape(n, 10)


# ---------------------------------------------------------------------------
# Pure-JAX reference (PyTorch semantics) for validation.
# ---------------------------------------------------------------------------
def reference(params, x):
    dn1 = jax.lax.conv_dimension_numbers(x.shape, params["conv1_w"].shape,
                                         ("NCHW", "OIHW", "NCHW"))
    out = jax.lax.conv_general_dilated(x, params["conv1_w"], (1, 1), "VALID",
                                       dimension_numbers=dn1)
    out = jnp.tanh(out + params["conv1_b"][None, :, None, None])
    out = jax.lax.reduce_window(out, -jnp.inf, jax.lax.max,
                                (1, 1, 2, 2), (1, 1, 2, 2), "VALID")
    out = jnp.maximum(out, 0.0)
    dn2 = jax.lax.conv_dimension_numbers(out.shape, params["conv2_w"].shape,
                                         ("NCHW", "OIHW", "NCHW"))
    out = jax.lax.conv_general_dilated(out, params["conv2_w"], (1, 1), "VALID",
                                       dimension_numbers=dn2)
    out = out + params["conv2_b"][None, :, None, None]
    out = jax.lax.reduce_window(out, -jnp.inf, jax.lax.max,
                                (1, 1, 2, 2), (1, 1, 2, 2), "VALID")
    out = jnp.tanh(out)
    out = out.reshape(out.shape[0], -1)
    out = jnp.tanh(out @ params["fc1_w"].T + params["fc1_b"])
    out = out @ params["fc2_w"].T + params["fc2_b"]
    return out


if __name__ == "__main__":
    key = jax.random.PRNGKey(0)
    k_param, k_x = jax.random.split(key)
    params = init_params(k_param)
    prep = prepare_params(params)
    # fc1's 14*5*5 fixes the input to 1 channel, 28x28.
    x = jax.random.normal(k_x, (2, 1, 28, 28), dtype=jnp.float32)

    out = jax.block_until_ready(robust_conv_net(prep, x))
    ref = jax.block_until_ready(reference(params, x))

    assert out.shape == (2, 10), out.shape
    err = jnp.max(jnp.abs(out - ref))
    assert jnp.allclose(out, ref, atol=2e-4, rtol=2e-4), f"max abs err {err}"

    print("KERNEL_OK")
</pallas_src>

<mosaic_0001>
module attributes {stable_mosaic.version = 11 : i64} {
  func.func @_fused_kernel(%arg0: i32, %arg1: memref<1x28x28xf32, #tpu.memory_space<vmem>>, %arg2: memref<150xf32, #tpu.memory_space<smem>>, %arg3: memref<6xf32, #tpu.memory_space<smem>>, %arg4: memref<14x54xf32, #tpu.memory_space<vmem>>, %arg5: memref<14x1xf32, #tpu.memory_space<vmem>>, %arg6: memref<14x25x150xf32, #tpu.memory_space<vmem>>, %arg7: memref<1x150xf32, #tpu.memory_space<vmem>>, %arg8: memref<150x10xf32, #tpu.memory_space<vmem>>, %arg9: memref<1x10xf32, #tpu.memory_space<vmem>>, %arg10: memref<1x1x10xf32, #tpu.memory_space<vmem>>) attributes {dimension_semantics = [#tpu.dimension_semantics<parallel>], iteration_bounds = array<i64: 2>, scalar_prefetch = 0 : i64, scratch_operands = 0 : i64, tpu.core_type = #tpu.core_type<tc>, window_params = [{transform_indices = @transform_0, window_bounds = array<i64: 1, 28, 28>}, {transform_indices = @transform_1, window_bounds = array<i64: 150>}, {transform_indices = @transform_2, window_bounds = array<i64: 6>}, {pipeline_mode = #tpu.pipeline_mode<synchronous>, transform_indices = @transform_3, window_bounds = array<i64: 14, 54>}, {pipeline_mode = #tpu.pipeline_mode<synchronous>, transform_indices = @transform_4, window_bounds = array<i64: 14, 1>}, {pipeline_mode = #tpu.pipeline_mode<synchronous>, transform_indices = @transform_5, window_bounds = array<i64: 14, 25, 150>}, {pipeline_mode = #tpu.pipeline_mode<synchronous>, transform_indices = @transform_6, window_bounds = array<i64: 1, 150>}, {pipeline_mode = #tpu.pipeline_mode<synchronous>, transform_indices = @transform_7, window_bounds = array<i64: 150, 10>}, {pipeline_mode = #tpu.pipeline_mode<synchronous>, transform_indices = @transform_8, window_bounds = array<i64: 1, 10>}, {transform_indices = @transform_9, window_bounds = array<i64: 1, 1, 10>}]} {
    %c0 = arith.constant 0 : index
    %c0_0 = arith.constant 0 : index
    %c0_1 = arith.constant 0 : index
    %0 = vector.load %arg1[%c0, %c0_0, %c0_1] : memref<1x28x28xf32, #tpu.memory_space<vmem>>, vector<1x28x28xf32>
    %1 = vector.shape_cast %0 : vector<1x28x28xf32> to vector<28x28xf32>
    %2 = vector.extract_strided_slice %1 {offsets = [0, 0], sizes = [24, 24], strides = [1, 1]} : vector<28x28xf32> to vector<24x24xf32>
    %3 = vector.extract_strided_slice %1 {offsets = [0, 1], sizes = [24, 24], strides = [1, 1]} : vector<28x28xf32> to vector<24x24xf32>
    %4 = vector.extract_strided_slice %1 {offsets = [0, 2], sizes = [24, 24], strides = [1, 1]} : vector<28x28xf32> to vector<24x24xf32>
    %5 = vector.extract_strided_slice %1 {offsets = [0, 3], sizes = [24, 24], strides = [1, 1]} : vector<28x28xf32> to vector<24x24xf32>
    %6 = vector.extract_strided_slice %1 {offsets = [0, 4], sizes = [24, 24], strides = [1, 1]} : vector<28x28xf32> to vector<24x24xf32>
    %7 = vector.extract_strided_slice %1 {offsets = [1, 0], sizes = [24, 24], strides = [1, 1]} : vector<28x28xf32> to vector<24x24xf32>
    %8 = vector.extract_strided_slice %1 {offsets = [1, 1], sizes = [24, 24], strides = [1, 1]} : vector<28x28xf32> to vector<24x24xf32>
    %9 = vector.extract_strided_slice %1 {offsets = [1, 2], sizes = [24, 24], strides = [1, 1]} : vector<28x28xf32> to vector<24x24xf32>
    %10 = vector.extract_strided_slice %1 {offsets = [1, 3], sizes = [24, 24], strides = [1, 1]} : vector<28x28xf32> to vector<24x24xf32>
    %11 = vector.extract_strided_slice %1 {offsets = [1, 4], sizes = [24, 24], strides = [1, 1]} : vector<28x28xf32> to vector<24x24xf32>
    %12 = vector.extract_strided_slice %1 {offsets = [2, 0], sizes = [24, 24], strides = [1, 1]} : vector<28x28xf32> to vector<24x24xf32>
    %13 = vector.extract_strided_slice %1 {offsets = [2, 1], sizes = [24, 24], strides = [1, 1]} : vector<28x28xf32> to vector<24x24xf32>
    %14 = vector.extract_strided_slice %1 {offsets = [2, 2], sizes = [24, 24], strides = [1, 1]} : vector<28x28xf32> to vector<24x24xf32>
    %15 = vector.extract_strided_slice %1 {offsets = [2, 3], sizes = [24, 24], strides = [1, 1]} : vector<28x28xf32> to vector<24x24xf32>
    %16 = vector.extract_strided_slice %1 {offsets = [2, 4], sizes = [24, 24], strides = [1, 1]} : vector<28x28xf32> to vector<24x24xf32>
    %17 = vector.extract_strided_slice %1 {offsets = [3, 0], sizes = [24, 24], strides = [1, 1]} : vector<28x28xf32> to vector<24x24xf32>
    %18 = vector.extract_strided_slice %1 {offsets = [3, 1], sizes = [24, 24], strides = [1, 1]} : vector<28x28xf32> to vector<24x24xf32>
    %19 = vector.extract_strided_slice %1 {offsets = [3, 2], sizes = [24, 24], strides = [1, 1]} : vector<28x28xf32> to vector<24x24xf32>
    %20 = vector.extract_strided_slice %1 {offsets = [3, 3], sizes = [24, 24], strides = [1, 1]} : vector<28x28xf32> to vector<24x24xf32>
    %21 = vector.extract_strided_slice %1 {offsets = [3, 4], sizes = [24, 24], strides = [1, 1]} : vector<28x28xf32> to vector<24x24xf32>
    %22 = vector.extract_strided_slice %1 {offsets = [4, 0], sizes = [24, 24], strides = [1, 1]} : vector<28x28xf32> to vector<24x24xf32>
    %23 = vector.extract_strided_slice %1 {offsets = [4, 1], sizes = [24, 24], strides = [1, 1]} : vector<28x28xf32> to vector<24x24xf32>
    %24 = vector.extract_strided_slice %1 {offsets = [4, 2], sizes = [24, 24], strides = [1, 1]} : vector<28x28xf32> to vector<24x24xf32>
    %25 = vector.extract_strided_slice %1 {offsets = [4, 3], sizes = [24, 24], strides = [1, 1]} : vector<28x28xf32> to vector<24x24xf32>
    %26 = vector.extract_strided_slice %1 {offsets = [4, 4], sizes = [24, 24], strides = [1, 1]} : vector<28x28xf32> to vector<24x24xf32>
    %cst = arith.constant 0.000000e+00 : f32
    %27 = vector.broadcast %cst : f32 to vector<24x24xf32>
    %c0_2 = arith.constant 0 : index
    %28 = memref.load %arg2[%c0_2] : memref<150xf32, #tpu.memory_space<smem>>
    %29 = vector.broadcast %28 : f32 to vector<24x24xf32>
    %30 = arith.mulf %2, %29 : vector<24x24xf32>
    %31 = arith.addf %27, %30 : vector<24x24xf32>
    %c1 = arith.constant 1 : index
    %32 = memref.load %arg2[%c1] : memref<150xf32, #tpu.memory_space<smem>>
    %33 = vector.broadcast %32 : f32 to vector<24x24xf32>
    %34 = arith.mulf %3, %33 : vector<24x24xf32>
    %35 = arith.addf %31, %34 : vector<24x24xf32>
    %c2 = arith.constant 2 : index
    %36 = memref.load %arg2[%c2] : memref<150xf32, #tpu.memory_space<smem>>
    %37 = vector.broadcast %36 : f32 to vector<24x24xf32>
    %38 = arith.mulf %4, %37 : vector<24x24xf32>
    %39 = arith.addf %35, %38 : vector<24x24xf32>
    %c3 = arith.constant 3 : index
    %40 = memref.load %arg2[%c3] : memref<150xf32, #tpu.memory_space<smem>>
    %41 = vector.broadcast %40 : f32 to vector<24x24xf32>
    %42 = arith.mulf %5, %41 : vector<24x24xf32>
    %43 = arith.addf %39, %42 : vector<24x24xf32>
    %c4 = arith.constant 4 : index
    %44 = memref.load %arg2[%c4] : memref<150xf32, #tpu.memory_space<smem>>
    %45 = vector.broadcast %44 : f32 to vector<24x24xf32>
    %46 = arith.mulf %6, %45 : vector<24x24xf32>
    %47 = arith.addf %43, %46 : vector<24x24xf32>
    %c5 = arith.constant 5 : index
    %48 = memref.load %arg2[%c5] : memref<150xf32, #tpu.memory_space<smem>>
    %49 = vector.broadcast %48 : f32 to vector<24x24xf32>
    %50 = arith.mulf %7, %49 : vector<24x24xf32>
    %51 = arith.addf %47, %50 : vector<24x24xf32>
    %c6 = arith.constant 6 : index
    %52 = memref.load %arg2[%c6] : memref<150xf32, #tpu.memory_space<smem>>
    %53 = vector.broadcast %52 : f32 to vector<24x24xf32>
    %54 = arith.mulf %8, %53 : vector<24x24xf32>
    %55 = arith.addf %51, %54 : vector<24x24xf32>
    %c7 = arith.constant 7 : index
    %56 = memref.load %arg2[%c7] : memref<150xf32, #tpu.memory_space<smem>>
    %57 = vector.broadcast %56 : f32 to vector<24x24xf32>
    %58 = arith.mulf %9, %57 : vector<24x24xf32>
    %59 = arith.addf %55, %58 : vector<24x24xf32>
    %c8 = arith.constant 8 : index
    %60 = memref.load %arg2[%c8] : memref<150xf32, #tpu.memory_space<smem>>
    %61 = vector.broadcast %60 : f32 to vector<24x24xf32>
    %62 = arith.mulf %10, %61 : vector<24x24xf32>
    %63 = arith.addf %59, %62 : vector<24x24xf32>
    %c9 = arith.constant 9 : index
    %64 = memref.load %arg2[%c9] : memref<150xf32, #tpu.memory_space<smem>>
    %65 = vector.broadcast %64 : f32 to vector<24x24xf32>
    %66 = arith.mulf %11, %65 : vector<24x24xf32>
    %67 = arith.addf %63, %66 : vector<24x24xf32>
    %c10 = arith.constant 10 : index
    %68 = memref.load %arg2[%c10] : memref<150xf32, #tpu.memory_space<smem>>
    %69 = vector.broadcast %68 : f32 to vector<24x24xf32>
    %70 = arith.mulf %12, %69 : vector<24x24xf32>
    %71 = arith.addf %67, %70 : vector<24x24xf32>
    %c11 = arith.constant 11 : index
    %72 = memref.load %arg2[%c11] : memref<150xf32, #tpu.memory_space<smem>>
    %73 = vector.broadcast %72 : f32 to vector<24x24xf32>
    %74 = arith.mulf %13, %73 : vector<24x24xf32>
    %75 = arith.addf %71, %74 : vector<24x24xf32>
    %c12 = arith.constant 12 : index
    %76 = memref.load %arg2[%c12] : memref<150xf32, #tpu.memory_space<smem>>
    %77 = vector.broadcast %76 : f32 to vector<24x24xf32>
    %78 = arith.mulf %14, %77 : vector<24x24xf32>
    %79 = arith.addf %75, %78 : vector<24x24xf32>
    %c13 = arith.constant 13 : index
    %80 = memref.load %arg2[%c13] : memref<150xf32, #tpu.memory_space<smem>>
    %81 = vector.broadcast %80 : f32 to vector<24x24xf32>
    %82 = arith.mulf %15, %81 : vector<24x24xf32>
    %83 = arith.addf %79, %82 : vector<24x24xf32>
    %c14 = arith.constant 14 : index
    %84 = memref.load %arg2[%c14] : memref<150xf32, #tpu.memory_space<smem>>
    %85 = vector.broadcast %84 : f32 to vector<24x24xf32>
    %86 = arith.mulf %16, %85 : vector<24x24xf32>
    %87 = arith.addf %83, %86 : vector<24x24xf32>
    %c15 = arith.constant 15 : index
    %88 = memref.load %arg2[%c15] : memref<150xf32, #tpu.memory_space<smem>>
    %89 = vector.broadcast %88 : f32 to vector<24x24xf32>
    %90 = arith.mulf %17, %89 : vector<24x24xf32>
    %91 = arith.addf %87, %90 : vector<24x24xf32>
    %c16 = arith.constant 16 : index
    %92 = memref.load %arg2[%c16] : memref<150xf32, #tpu.memory_space<smem>>
    %93 = vector.broadcast %92 : f32 to vector<24x24xf32>
    %94 = arith.mulf %18, %93 : vector<24x24xf32>
    %95 = arith.addf %91, %94 : vector<24x24xf32>
    %c17 = arith.constant 17 : index
    %96 = memref.load %arg2[%c17] : memref<150xf32, #tpu.memory_space<smem>>
    %97 = vector.broadcast %96 : f32 to vector<24x24xf32>
    %98 = arith.mulf %19, %97 : vector<24x24xf32>
    %99 = arith.addf %95, %98 : vector<24x24xf32>
    %c18 = arith.constant 18 : index
    %100 = memref.load %arg2[%c18] : memref<150xf32, #tpu.memory_space<smem>>
    %101 = vector.broadcast %100 : f32 to vector<24x24xf32>
    %102 = arith.mulf %20, %101 : vector<24x24xf32>
    %103 = arith.addf %99, %102 : vector<24x24xf32>
    %c19 = arith.constant 19 : index
    %104 = memref.load %arg2[%c19] : memref<150xf32, #tpu.memory_space<smem>>
    %105 = vector.broadcast %104 : f32 to vector<24x24xf32>
    %106 = arith.mulf %21, %105 : vector<24x24xf32>
    %107 = arith.addf %103, %106 : vector<24x24xf32>
    %c20 = arith.constant 20 : index
    %108 = memref.load %arg2[%c20] : memref<150xf32, #tpu.memory_space<smem>>
    %109 = vector.broadcast %108 : f32 to vector<24x24xf32>
    %110 = arith.mulf %22, %109 : vector<24x24xf32>
    %111 = arith.addf %107, %110 : vector<24x24xf32>
    %c21 = arith.constant 21 : index
    %112 = memref.load %arg2[%c21] : memref<150xf32, #tpu.memory_space<smem>>
    %113 = vector.broadcast %112 : f32 to vector<24x24xf32>
    %114 = arith.mulf %23, %113 : vector<24x24xf32>
    %115 = arith.addf %111, %114 : vector<24x24xf32>
    %c22 = arith.constant 22 : index
    %116 = memref.load %arg2[%c22] : memref<150xf32, #tpu.memory_space<smem>>
    %117 = vector.broadcast %116 : f32 to vector<24x24xf32>
    %118 = arith.mulf %24, %117 : vector<24x24xf32>
    %119 = arith.addf %115, %118 : vector<24x24xf32>
    %c23 = arith.constant 23 : index
    %120 = memref.load %arg2[%c23] : memref<150xf32, #tpu.memory_space<smem>>
    %121 = vector.broadcast %120 : f32 to vector<24x24xf32>
    %122 = arith.mulf %25, %121 : vector<24x24xf32>
    %123 = arith.addf %119, %122 : vector<24x24xf32>
    %c24 = arith.constant 24 : index
    %124 = memref.load %arg2[%c24] : memref<150xf32, #tpu.memory_space<smem>>
    %125 = vector.broadcast %124 : f32 to vector<24x24xf32>
    %126 = arith.mulf %26, %125 : vector<24x24xf32>
    %127 = arith.addf %123, %126 : vector<24x24xf32>
    %c0_3 = arith.constant 0 : index
    %128 = memref.load %arg3[%c0_3] : memref<6xf32, #tpu.memory_space<smem>>
    %129 = vector.broadcast %128 : f32 to vector<24x24xf32>
    %130 = arith.addf %127, %129 : vector<24x24xf32>
    %131 = vector.extract_strided_slice %130 {offsets = [0, 0], sizes = [1, 24], strides = [1, 1]} : vector<24x24xf32> to vector<1x24xf32>
    %132 = vector.extract_strided_slice %130 {offsets = [2, 0], sizes = [1, 24], strides = [1, 1]} : vector<24x24xf32> to vector<1x24xf32>
    %133 = vector.extract_strided_slice %130 {offsets = [4, 0], sizes = [1, 24], strides = [1, 1]} : vector<24x24xf32> to vector<1x24xf32>
    %134 = vector.extract_strided_slice %130 {offsets = [6, 0], sizes = [1, 24], strides = [1, 1]} : vector<24x24xf32> to vector<1x24xf32>
    %135 = vector.extract_strided_slice %130 {offsets = [8, 0], sizes = [1, 24], strides = [1, 1]} : vector<24x24xf32> to vector<1x24xf32>
    %136 = vector.extract_strided_slice %130 {offsets = [10, 0], sizes = [1, 24], strides = [1, 1]} : vector<24x24xf32> to vector<1x24xf32>
    %137 = vector.extract_strided_slice %130 {offsets = [12, 0], sizes = [1, 24], strides = [1, 1]} : vector<24x24xf32> to vector<1x24xf32>
    %138 = vector.extract_strided_slice %130 {offsets = [14, 0], sizes = [1, 24], strides = [1, 1]} : vector<24x24xf32> to vector<1x24xf32>
    %139 = vector.extract_strided_slice %130 {offsets = [16, 0], sizes = [1, 24], strides = [1, 1]} : vector<24x24xf32> to vector<1x24xf32>
    %140 = vector.extract_strided_slice %130 {offsets = [18, 0], sizes = [1, 24], strides = [1, 1]} : vector<24x24xf32> to vector<1x24xf32>
    %141 = vector.extract_strided_slice %130 {offsets = [20, 0], sizes = [1, 24], strides = [1, 1]} : vector<24x24xf32> to vector<1x24xf32>
    %142 = vector.extract_strided_slice %130 {offsets = [22, 0], sizes = [1, 24], strides = [1, 1]} : vector<24x24xf32> to vector<1x24xf32>
    %143 = tpu.concatenate %131, %132, %133, %134, %135, %136, %137, %138, %139, %140, %141, %142 in 0 : vector<1x24xf32>, vector<1x24xf32>, vector<1x24xf32>, vector<1x24xf32>, vector<1x24xf32>, vector<1x24xf32>, vector<1x24xf32>, vector<1x24xf32>, vector<1x24xf32>, vector<1x24xf32>, vector<1x24xf32>, vector<1x24xf32> -> vector<12x24xf32>
    %144 = vector.extract_strided_slice %130 {offsets = [1, 0], sizes = [1, 24], strides = [1, 1]} : vector<24x24xf32> to vector<1x24xf32>
    %145 = vector.extract_strided_slice %130 {offsets = [3, 0], sizes = [1, 24], strides = [1, 1]} : vector<24x24xf32> to vector<1x24xf32>
    %146 = vector.extract_strided_slice %130 {offsets = [5, 0], sizes = [1, 24], strides = [1, 1]} : vector<24x24xf32> to vector<1x24xf32>
    %147 = vector.extract_strided_slice %130 {offsets = [7, 0], sizes = [1, 24], strides = [1, 1]} : vector<24x24xf32> to vector<1x24xf32>
    %148 = vector.extract_strided_slice %130 {offsets = [9, 0], sizes = [1, 24], strides = [1, 1]} : vector<24x24xf32> to vector<1x24xf32>
    %149 = vector.extract_strided_slice %130 {offsets = [11, 0], sizes = [1, 24], strides = [1, 1]} : vector<24x24xf32> to vector<1x24xf32>
    %150 = vector.extract_strided_slice %130 {offsets = [13, 0], sizes = [1, 24], strides = [1, 1]} : vector<24x24xf32> to vector<1x24xf32>
    %151 = vector.extract_strided_slice %130 {offsets = [15, 0], sizes = [1, 24], strides = [1, 1]} : vector<24x24xf32> to vector<1x24xf32>
    %152 = vector.extract_strided_slice %130 {offsets = [17, 0], sizes = [1, 24], strides = [1, 1]} : vector<24x24xf32> to vector<1x24xf32>
    %153 = vector.extract_strided_slice %130 {offsets = [19, 0], sizes = [1, 24], strides = [1, 1]} : vector<24x24xf32> to vector<1x24xf32>
    %154 = vector.extract_strided_slice %130 {offsets = [21, 0], sizes = [1, 24], strides = [1, 1]} : vector<24x24xf32> to vector<1x24xf32>
    %155 = vector.extract_strided_slice %130 {offsets = [23, 0], sizes = [1, 24], strides = [1, 1]} : vector<24x24xf32> to vector<1x24xf32>
    %156 = tpu.concatenate %144, %145, %146, %147, %148, %149, %150, %151, %152, %153, %154, %155 in 0 : vector<1x24xf32>, vector<1x24xf32>, vector<1x24xf32>, vector<1x24xf32>, vector<1x24xf32>, vector<1x24xf32>, vector<1x24xf32>, vector<1x24xf32>, vector<1x24xf32>, vector<1x24xf32>, vector<1x24xf32>, vector<1x24xf32> -> vector<12x24xf32>
    %157 = arith.maximumf %143, %156 : vector<12x24xf32>
    %158 = vector.extract_strided_slice %157 {offsets = [0, 0], sizes = [12, 1], strides = [1, 1]} : vector<12x24xf32> to vector<12x1xf32>
    %159 = vector.extract_strided_slice %157 {offsets = [0, 2], sizes = [12, 1], strides = [1, 1]} : vector<12x24xf32> to vector<12x1xf32>
    %160 = vector.extract_strided_slice %157 {offsets = [0, 4], sizes = [12, 1], strides = [1, 1]} : vector<12x24xf32> to vector<12x1xf32>
    %161 = vector.extract_strided_slice %157 {offsets = [0, 6], sizes = [12, 1], strides = [1, 1]} : vector<12x24xf32> to vector<12x1xf32>
    %162 = vector.extract_strided_slice %157 {offsets = [0, 8], sizes = [12, 1], strides = [1, 1]} : vector<12x24xf32> to vector<12x1xf32>
    %163 = vector.extract_strided_slice %157 {offsets = [0, 10], sizes = [12, 1], strides = [1, 1]} : vector<12x24xf32> to vector<12x1xf32>
    %164 = vector.extract_strided_slice %157 {offsets = [0, 12], sizes = [12, 1], strides = [1, 1]} : vector<12x24xf32> to vector<12x1xf32>
    %165 = vector.extract_strided_slice %157 {offsets = [0, 14], sizes = [12, 1], strides = [1, 1]} : vector<12x24xf32> to vector<12x1xf32>
    %166 = vector.extract_strided_slice %157 {offsets = [0, 16], sizes = [12, 1], strides = [1, 1]} : vector<12x24xf32> to vector<12x1xf32>
    %167 = vector.extract_strided_slice %157 {offsets = [0, 18], sizes = [12, 1], strides = [1, 1]} : vector<12x24xf32> to vector<12x1xf32>
    %168 = vector.extract_strided_slice %157 {offsets = [0, 20], sizes = [12, 1], strides = [1, 1]} : vector<12x24xf32> to vector<12x1xf32>
    %169 = vector.extract_strided_slice %157 {offsets = [0, 22], sizes = [12, 1], strides = [1, 1]} : vector<12x24xf32> to vector<12x1xf32>
    %170 = tpu.concatenate %158, %159, %160, %161, %162, %163, %164, %165, %166, %167, %168, %169 in 1 : vector<12x1xf32>, vector<12x1xf32>, vector<12x1xf32>, vector<12x1xf32>, vector<12x1xf32>, vector<12x1xf32>, vector<12x1xf32>, vector<12x1xf32>, vector<12x1xf32>, vector<12x1xf32>, vector<12x1xf32>, vector<12x1xf32> -> vector<12x12xf32>
    %171 = vector.extract_strided_slice %157 {offsets = [0, 1], sizes = [12, 1], strides = [1, 1]} : vector<12x24xf32> to vector<12x1xf32>
    %172 = vector.extract_strided_slice %157 {offsets = [0, 3], sizes = [12, 1], strides = [1, 1]} : vector<12x24xf32> to vector<12x1xf32>
    %173 = vector.extract_strided_slice %157 {offsets = [0, 5], sizes = [12, 1], strides = [1, 1]} : vector<12x24xf32> to vector<12x1xf32>
    %174 = vector.extract_strided_slice %157 {offsets = [0, 7], sizes = [12, 1], strides = [1, 1]} : vector<12x24xf32> to vector<12x1xf32>
    %175 = vector.extract_strided_slice %157 {offsets = [0, 9], sizes = [12, 1], strides = [1, 1]} : vector<12x24xf32> to vector<12x1xf32>
    %176 = vector.extract_strided_slice %157 {offsets = [0, 11], sizes = [12, 1], strides = [1, 1]} : vector<12x24xf32> to vector<12x1xf32>
    %177 = vector.extract_strided_slice %157 {offsets = [0, 13], sizes = [12, 1], strides = [1, 1]} : vector<12x24xf32> to vector<12x1xf32>
    %178 = vector.extract_strided_slice %157 {offsets = [0, 15], sizes = [12, 1], strides = [1, 1]} : vector<12x24xf32> to vector<12x1xf32>
    %179 = vector.extract_strided_slice %157 {offsets = [0, 17], sizes = [12, 1], strides = [1, 1]} : vector<12x24xf32> to vector<12x1xf32>
    %180 = vector.extract_strided_slice %157 {offsets = [0, 19], sizes = [12, 1], strides = [1, 1]} : vector<12x24xf32> to vector<12x1xf32>
    %181 = vector.extract_strided_slice %157 {offsets = [0, 21], sizes = [12, 1], strides = [1, 1]} : vector<12x24xf32> to vector<12x1xf32>
    %182 = vector.extract_strided_slice %157 {offsets = [0, 23], sizes = [12, 1], strides = [1, 1]} : vector<12x24xf32> to vector<12x1xf32>
    %183 = tpu.concatenate %171, %172, %173, %174, %175, %176, %177, %178, %179, %180, %181, %182 in 1 : vector<12x1xf32>, vector<12x1xf32>, vector<12x1xf32>, vector<12x1xf32>, vector<12x1xf32>, vector<12x1xf32>, vector<12x1xf32>, vector<12x1xf32>, vector<12x1xf32>, vector<12x1xf32>, vector<12x1xf32>, vector<12x1xf32> -> vector<12x12xf32>
    %184 = arith.maximumf %170, %183 : vector<12x12xf32>
    %185 = math.tanh %184 : vector<12x12xf32>
    %cst_4 = arith.constant 0.000000e+00 : f32
    %186 = vector.broadcast %cst_4 : f32 to vector<12x12xf32>
    %187 = arith.maximumf %185, %186 : vector<12x12xf32>
    %cst_5 = arith.constant 0.000000e+00 : f32
    %188 = vector.broadcast %cst_5 : f32 to vector<24x24xf32>
    %c25 = arith.constant 25 : index
    %189 = memref.load %arg2[%c25] : memref<150xf32, #tpu.memory_space<smem>>
    %190 = vector.broadcast %189 : f32 to vector<24x24xf32>
    %191 = arith.mulf %2, %190 : vector<24x24xf32>
    %192 = arith.addf %188, %191 : vector<24x24xf32>
    %c26 = arith.constant 26 : index
    %193 = memref.load %arg2[%c26] : memref<150xf32, #tpu.memory_space<smem>>
    %194 = vector.broadcast %193 : f32 to vector<24x24xf32>
    %195 = arith.mulf %3, %194 : vector<24x24xf32>
    %196 = arith.addf %192, %195 : vector<24x24xf32>
    %c27 = arith.constant 27 : index
    %197 = memref.load %arg2[%c27] : memref<150xf32, #tpu.memory_space<smem>>
    %198 = vector.broadcast %197 : f32 to vector<24x24xf32>
    %199 = arith.mulf %4, %198 : vector<24x24xf32>
    %200 = arith.addf %196, %199 : vector<24x24xf32>
    %c28 = arith.constant 28 : index
    %201 = memref.load %arg2[%c28] : memref<150xf32, #tpu.memory_space<smem>>
    %202 = vector.broadcast %201 : f32 to vector<24x24xf32>
    %203 = arith.mulf %5, %202 : vector<24x24xf32>
    %204 = arith.addf %200, %203 : vector<24x24xf32>
    %c29 = arith.constant 29 : index
    %205 = memref.load %arg2[%c29] : memref<150xf32, #tpu.memory_space<smem>>
    %206 = vector.broadcast %205 : f32 to vector<24x24xf32>
    %207 = arith.mulf %6, %206 : vector<24x24xf32>
    %208 = arith.addf %204, %207 : vector<24x24xf32>
    %c30 = arith.constant 30 : index
    %209 = memref.load %arg2[%c30] : memref<150xf32, #tpu.memory_space<smem>>
    %210 = vector.broadcast %209 : f32 to vector<24x24xf32>
    %211 = arith.mulf %7, %210 : vector<24x24xf32>
    %212 = arith.addf %208, %211 : vector<24x24xf32>
    %c31 = arith.constant 31 : index
    %213 = memref.load %arg2[%c31] : memref<150xf32, #tpu.memory_space<smem>>
    %214 = vector.broadcast %213 : f32 to vector<24x24xf32>
    %215 = arith.mulf %8, %214 : vector<24x24xf32>
    %216 = arith.addf %212, %215 : vector<24x24xf32>
    %c32 = arith.constant 32 : index
    %217 = memref.load %arg2[%c32] : memref<150xf32, #tpu.memory_space<smem>>
    %218 = vector.broadcast %217 : f32 to vector<24x24xf32>
    %219 = arith.mulf %9, %218 : vector<24x24xf32>
    %220 = arith.addf %216, %219 : vector<24x24xf32>
    %c33 = arith.constant 33 : index
    %221 = memref.load %arg2[%c33] : memref<150xf32, #tpu.memory_space<smem>>
    %222 = vector.broadcast %221 : f32 to vector<24x24xf32>
    %223 = arith.mulf %10, %222 : vector<24x24xf32>
    %224 = arith.addf %220, %223 : vector<24x24xf32>
    %c34 = arith.constant 34 : index
    %225 = memref.load %arg2[%c34] : memref<150xf32, #tpu.memory_space<smem>>
    %226 = vector.broadcast %225 : f32 to vector<24x24xf32>
    %227 = arith.mulf %11, %226 : vector<24x24xf32>
    %228 = arith.addf %224, %227 : vector<24x24xf32>
    %c35 = arith.constant 35 : index
    %229 = memref.load %arg2[%c35] : memref<150xf32, #tpu.memory_space<smem>>
    %230 = vector.broadcast %229 : f32 to vector<24x24xf32>
    %231 = arith.mulf %12, %230 : vector<24x24xf32>
    %232 = arith.addf %228, %231 : vector<24x24xf32>
    %c36 = arith.constant 36 : index
    %233 = memref.load %arg2[%c36] : memref<150xf32, #tpu.memory_space<smem>>
    %234 = vector.broadcast %233 : f32 to vector<24x24xf32>
    %235 = arith.mulf %13, %234 : vector<24x24xf32>
    %236 = arith.addf %232, %235 : vector<24x24xf32>
    %c37 = arith.constant 37 : index
    %237 = memref.load %arg2[%c37] : memref<150xf32, #tpu.memory_space<smem>>
    %238 = vector.broadcast %237 : f32 to vector<24x24xf32>
    %239 = arith.mulf %14, %238 : vector<24x24xf32>
    %240 = arith.addf %236, %239 : vector<24x24xf32>
    %c38 = arith.constant 38 : index
    %241 = memref.load %arg2[%c38] : memref<150xf32, #tpu.memory_space<smem>>
    %242 = vector.broadcast %241 : f32 to vector<24x24xf32>
    %243 = arith.mulf %15, %242 : vector<24x24xf32>
    %244 = arith.addf %240, %243 : vector<24x24xf32>
    %c39 = arith.constant 39 : index
    %245 = memref.load %arg2[%c39] : memref<150xf32, #tpu.memory_space<smem>>
    %246 = vector.broadcast %245 : f32 to vector<24x24xf32>
    %247 = arith.mulf %16, %246 : vector<24x24xf32>
    %248 = arith.addf %244, %247 : vector<24x24xf32>
    %c40 = arith.constant 40 : index
    %249 = memref.load %arg2[%c40] : memref<150xf32, #tpu.memory_space<smem>>
    %250 = vector.broadcast %249 : f32 to vector<24x24xf32>
    %251 = arith.mulf %17, %250 : vector<24x24xf32>
    %252 = arith.addf %248, %251 : vector<24x24xf32>
    %c41 = arith.constant 41 : index
    %253 = memref.load %arg2[%c41] : memref<150xf32, #tpu.memory_space<smem>>
    %254 = vector.broadcast %253 : f32 to vector<24x24xf32>
    %255 = arith.mulf %18, %254 : vector<24x24xf32>
    %256 = arith.addf %252, %255 : vector<24x24xf32>
    %c42 = arith.constant 42 : index
    %257 = memref.load %arg2[%c42] : memref<150xf32, #tpu.memory_space<smem>>
    %258 = vector.broadcast %257 : f32 to vector<24x24xf32>
    %259 = arith.mulf %19, %258 : vector<24x24xf32>
    %260 = arith.addf %256, %259 : vector<24x24xf32>
    %c43 = arith.constant 43 : index
    %261 = memref.load %arg2[%c43] : memref<150xf32, #tpu.memory_space<smem>>
    %262 = vector.broadcast %261 : f32 to vector<24x24xf32>
    %263 = arith.mulf %20, %262 : vector<24x24xf32>
    %264 = arith.addf %260, %263 : vector<24x24xf32>
    %c44 = arith.constant 44 : index
    %265 = memref.load %arg2[%c44] : memref<150xf32, #tpu.memory_space<smem>>
    %266 = vector.broadcast %265 : f32 to vector<24x24xf32>
    %267 = arith.mulf %21, %266 : vector<24x24xf32>
    %268 = arith.addf %264, %267 : vector<24x24xf32>
    %c45 = arith.constant 45 : index
    %269 = memref.load %arg2[%c45] : memref<150xf32, #tpu.memory_space<smem>>
    %270 = vector.broadcast %269 : f32 to vector<24x24xf32>
    %271 = arith.mulf %22, %270 : vector<24x24xf32>
    %272 = arith.addf %268, %271 : vector<24x24xf32>
    %c46 = arith.constant 46 : index
    %273 = memref.load %arg2[%c46] : memref<150xf32, #tpu.memory_space<smem>>
    %274 = vector.broadcast %273 : f32 to vector<24x24xf32>
    %275 = arith.mulf %23, %274 : vector<24x24xf32>
    %276 = arith.addf %272, %275 : vector<24x24xf32>
    %c47 = arith.constant 47 : index
    %277 = memref.load %arg2[%c47] : memref<150xf32, #tpu.memory_space<smem>>
    %278 = vector.broadcast %277 : f32 to vector<24x24xf32>
    %279 = arith.mulf %24, %278 : vector<24x24xf32>
    %280 = arith.addf %276, %279 : vector<24x24xf32>
    %c48 = arith.constant 48 : index
    %281 = memref.load %arg2[%c48] : memref<150xf32, #tpu.memory_space<smem>>
    %282 = vector.broadcast %281 : f32 to vector<24x24xf32>
    %283 = arith.mulf %25, %282 : vector<24x24xf32>
    %284 = arith.addf %280, %283 : vector<24x24xf32>
    %c49 = arith.constant 49 : index
    %285 = memref.load %arg2[%c49] : memref<150xf32, #tpu.memory_space<smem>>
    %286 = vector.broadcast %285 : f32 to vector<24x24xf32>
    %287 = arith.mulf %26, %286 : vector<24x24xf32>
    %288 = arith.addf %284, %287 : vector<24x24xf32>
    %c1_6 = arith.constant 1 : index
    %289 = memref.load %arg3[%c1_6] : memref<6xf32, #tpu.memory_space<smem>>
    %290 = vector.broadcast %289 : f32 to vector<24x24xf32>
    %291 = arith.addf %288, %290 : vector<24x24xf32>
    %292 = vector.extract_strided_slice %291 {offsets = [0, 0], sizes = [1, 24], strides = [1, 1]} : vector<24x24xf32> to vector<1x24xf32>
    %293 = vector.extract_strided_slice %291 {offsets = [2, 0], sizes = [1, 24], strides = [1, 1]} : vector<24x24xf32> to vector<1x24xf32>
    %294 = vector.extract_strided_slice %291 {offsets = [4, 0], sizes = [1, 24], strides = [1, 1]} : vector<24x24xf32> to vector<1x24xf32>
    %295 = vector.extract_strided_slice %291 {offsets = [6, 0], sizes = [1, 24], strides = [1, 1]} : vector<24x24xf32> to vector<1x24xf32>
    %296 = vector.extract_strided_slice %291 {offsets = [8, 0], sizes = [1, 24], strides = [1, 1]} : vector<24x24xf32> to vector<1x24xf32>
    %297 = vector.extract_strided_slice %291 {offsets = [10, 0], sizes = [1, 24], strides = [1, 1]} : vector<24x24xf32> to vector<1x24xf32>
    %298 = vector.extract_strided_slice %291 {offsets = [12, 0], sizes = [1, 24], strides = [1, 1]} : vector<24x24xf32> to vector<1x24xf32>
    %299 = vector.extract_strided_slice %291 {offsets = [14, 0], sizes = [1, 24], strides = [1, 1]} : vector<24x24xf32> to vector<1x24xf32>
    %300 = vector.extract_strided_slice %291 {offsets = [16, 0], sizes = [1, 24], strides = [1, 1]} : vector<24x24xf32> to vector<1x24xf32>
    %301 = vector.extract_strided_slice %291 {offsets = [18, 0], sizes = [1, 24], strides = [1, 1]} : vector<24x24xf32> to vector<1x24xf32>
    %302 = vector.extract_strided_slice %291 {offsets = [20, 0], sizes = [1, 24], strides = [1, 1]} : vector<24x24xf32> to vector<1x24xf32>
    %303 = vector.extract_strided_slice %291 {offsets = [22, 0], sizes = [1, 24], strides = [1, 1]} : vector<24x24xf32> to vector<1x24xf32>
    %304 = tpu.concatenate %292, %293, %294, %295, %296, %297, %298, %299, %300, %301, %302, %303 in 0 : vector<1x24xf32>, vector<1x24xf32>, vector<1x24xf32>, vector<1x24xf32>, vector<1x24xf32>, vector<1x24xf32>, vector<1x24xf32>, vector<1x24xf32>, vector<1x24xf32>, vector<1x24xf32>, vector<1x24xf32>, vector<1x24xf32> -> vector<12x24xf32>
    %305 = vector.extract_strided_slice %291 {offsets = [1, 0], sizes = [1, 24], strides = [1, 1]} : vector<24x24xf32> to vector<1x24xf32>
    %306 = vector.extract_strided_slice %291 {offsets = [3, 0], sizes = [1, 24], strides = [1, 1]} : vector<24x24xf32> to vector<1x24xf32>
    %307 = vector.extract_strided_slice %291 {offsets = [5, 0], sizes = [1, 24], strides = [1, 1]} : vector<24x24xf32> to vector<1x24xf32>
    %308 = vector.extract_strided_slice %291 {offsets = [7, 0], sizes = [1, 24], strides = [1, 1]} : vector<24x24xf32> to vector<1x24xf32>
    %309 = vector.extract_strided_slice %291 {offsets = [9, 0], sizes = [1, 24], strides = [1, 1]} : vector<24x24xf32> to vector<1x24xf32>
    %310 = vector.extract_strided_slice %291 {offsets = [11, 0], sizes = [1, 24], strides = [1, 1]} : vector<24x24xf32> to vector<1x24xf32>
    %311 = vector.extract_strided_slice %291 {offsets = [13, 0], sizes = [1, 24], strides = [1, 1]} : vector<24x24xf32> to vector<1x24xf32>
    %312 = vector.extract_strided_slice %291 {offsets = [15, 0], sizes = [1, 24], strides = [1, 1]} : vector<24x24xf32> to vector<1x24xf32>
    %313 = vector.extract_strided_slice %291 {offsets = [17, 0], sizes = [1, 24], strides = [1, 1]} : vector<24x24xf32> to vector<1x24xf32>
    %314 = vector.extract_strided_slice %291 {offsets = [19, 0], sizes = [1, 24], strides = [1, 1]} : vector<24x24xf32> to vector<1x24xf32>
    %315 = vector.extract_strided_slice %291 {offsets = [21, 0], sizes = [1, 24], strides = [1, 1]} : vector<24x24xf32> to vector<1x24xf32>
    %316 = vector.extract_strided_slice %291 {offsets = [23, 0], sizes = [1, 24], strides = [1, 1]} : vector<24x24xf32> to vector<1x24xf32>
    %317 = tpu.concatenate %305, %306, %307, %308, %309, %310, %311, %312, %313, %314, %315, %316 in 0 : vector<1x24xf32>, vector<1x24xf32>, vector<1x24xf32>, vector<1x24xf32>, vector<1x24xf32>, vector<1x24xf32>, vector<1x24xf32>, vector<1x24xf32>, vector<1x24xf32>, vector<1x24xf32>, vector<1x24xf32>, vector<1x24xf32> -> vector<12x24xf32>
    %318 = arith.maximumf %304, %317 : vector<12x24xf32>
    %319 = vector.extract_strided_slice %318 {offsets = [0, 0], sizes = [12, 1], strides = [1, 1]} : vector<12x24xf32> to vector<12x1xf32>
    %320 = vector.extract_strided_slice %318 {offsets = [0, 2], sizes = [12, 1], strides = [1, 1]} : vector<12x24xf32> to vector<12x1xf32>
    %321 = vector.extract_strided_slice %318 {offsets = [0, 4], sizes = [12, 1], strides = [1, 1]} : vector<12x24xf32> to vector<12x1xf32>
    %322 = vector.extract_strided_slice %318 {offsets = [0, 6], sizes = [12, 1], strides = [1, 1]} : vector<12x24xf32> to vector<12x1xf32>
    %323 = vector.extract_strided_slice %318 {offsets = [0, 8], sizes = [12, 1], strides = [1, 1]} : vector<12x24xf32> to vector<12x1xf32>
    %324 = vector.extract_strided_slice %318 {offsets = [0, 10], sizes = [12, 1], strides = [1, 1]} : vector<12x24xf32> to vector<12x1xf32>
    %325 = vector.extract_strided_slice %318 {offsets = [0, 12], sizes = [12, 1], strides = [1, 1]} : vector<12x24xf32> to vector<12x1xf32>
    %326 = vector.extract_strided_slice %318 {offsets = [0, 14], sizes = [12, 1], strides = [1, 1]} : vector<12x24xf32> to vector<12x1xf32>
    %327 = vector.extract_strided_slice %318 {offsets = [0, 16], sizes = [12, 1], strides = [1, 1]} : vector<12x24xf32> to vector<12x1xf32>
    %328 = vector.extract_strided_slice %318 {offsets = [0, 18], sizes = [12, 1], strides = [1, 1]} : vector<12x24xf32> to vector<12x1xf32>
    %329 = vector.extract_strided_slice %318 {offsets = [0, 20], sizes = [12, 1], strides = [1, 1]} : vector<12x24xf32> to vector<12x1xf32>
    %330 = vector.extract_strided_slice %318 {offsets = [0, 22], sizes = [12, 1], strides = [1, 1]} : vector<12x24xf32> to vector<12x1xf32>
    %331 = tpu.concatenate %319, %320, %321, %322, %323, %324, %325, %326, %327, %328, %329, %330 in 1 : vector<12x1xf32>, vector<12x1xf32>, vector<12x1xf32>, vector<12x1xf32>, vector<12x1xf32>, vector<12x1xf32>, vector<12x1xf32>, vector<12x1xf32>, vector<12x1xf32>, vector<12x1xf32>, vector<12x1xf32>, vector<12x1xf32> -> vector<12x12xf32>
    %332 = vector.extract_strided_slice %318 {offsets = [0, 1], sizes = [12, 1], strides = [1, 1]} : vector<12x24xf32> to vector<12x1xf32>
    %333 = vector.extract_strided_slice %318 {offsets = [0, 3], sizes = [12, 1], strides = [1, 1]} : vector<12x24xf32> to vector<12x1xf32>
    %334 = vector.extract_strided_slice %318 {offsets = [0, 5], sizes = [12, 1], strides = [1, 1]} : vector<12x24xf32> to vector<12x1xf32>
    %335 = vector.extract_strided_slice %318 {offsets = [0, 7], sizes = [12, 1], strides = [1, 1]} : vector<12x24xf32> to vector<12x1xf32>
    %336 = vector.extract_strided_slice %318 {offsets = [0, 9], sizes = [12, 1], strides = [1, 1]} : vector<12x24xf32> to vector<12x1xf32>
    %337 = vector.extract_strided_slice %318 {offsets = [0, 11], sizes = [12, 1], strides = [1, 1]} : vector<12x24xf32> to vector<12x1xf32>
    %338 = vector.extract_strided_slice %318 {offsets = [0, 13], sizes = [12, 1], strides = [1, 1]} : vector<12x24xf32> to vector<12x1xf32>
    %339 = vector.extract_strided_slice %318 {offsets = [0, 15], sizes = [12, 1], strides = [1, 1]} : vector<12x24xf32> to vector<12x1xf32>
    %340 = vector.extract_strided_slice %318 {offsets = [0, 17], sizes = [12, 1], strides = [1, 1]} : vector<12x24xf32> to vector<12x1xf32>
    %341 = vector.extract_strided_slice %318 {offsets = [0, 19], sizes = [12, 1], strides = [1, 1]} : vector<12x24xf32> to vector<12x1xf32>
    %342 = vector.extract_strided_slice %318 {offsets = [0, 21], sizes = [12, 1], strides = [1, 1]} : vector<12x24xf32> to vector<12x1xf32>
    %343 = vector.extract_strided_slice %318 {offsets = [0, 23], sizes = [12, 1], strides = [1, 1]} : vector<12x24xf32> to vector<12x1xf32>
    %344 = tpu.concatenate %332, %333, %334, %335, %336, %337, %338, %339, %340, %341, %342, %343 in 1 : vector<12x1xf32>, vector<12x1xf32>, vector<12x1xf32>, vector<12x1xf32>, vector<12x1xf32>, vector<12x1xf32>, vector<12x1xf32>, vector<12x1xf32>, vector<12x1xf32>, vector<12x1xf32>, vector<12x1xf32>, vector<12x1xf32> -> vector<12x12xf32>
    %345 = arith.maximumf %331, %344 : vector<12x12xf32>
    %346 = math.tanh %345 : vector<12x12xf32>
    %cst_7 = arith.constant 0.000000e+00 : f32
    %347 = vector.broadcast %cst_7 : f32 to vector<12x12xf32>
    %348 = arith.maximumf %346, %347 : vector<12x12xf32>
    %cst_8 = arith.constant 0.000000e+00 : f32
    %349 = vector.broadcast %cst_8 : f32 to vector<24x24xf32>
    %c50 = arith.constant 50 : index
    %350 = memref.load %arg2[%c50] : memref<150xf32, #tpu.memory_space<smem>>
    %351 = vector.broadcast %350 : f32 to vector<24x24xf32>
    %352 = arith.mulf %2, %351 : vector<24x24xf32>
    %353 = arith.addf %349, %352 : vector<24x24xf32>
    %c51 = arith.constant 51 : index
    %354 = memref.load %arg2[%c51] : memref<150xf32, #tpu.memory_space<smem>>
    %355 = vector.broadcast %354 : f32 to vector<24x24xf32>
    %356 = arith.mulf %3, %355 : vector<24x24xf32>
    %357 = arith.addf %353, %356 : vector<24x24xf32>
    %c52 = arith.constant 52 : index
    %358 = memref.load %arg2[%c52] : memref<150xf32, #tpu.memory_space<smem>>
    %359 = vector.broadcast %358 : f32 to vector<24x24xf32>
    %360 = arith.mulf %4, %359 : vector<24x24xf32>
    %361 = arith.addf %357, %360 : vector<24x24xf32>
    %c53 = arith.constant 53 : index
    %362 = memref.load %arg2[%c53] : memref<150xf32, #tpu.memory_space<smem>>
    %363 = vector.broadcast %362 : f32 to vector<24x24xf32>
    %364 = arith.mulf %5, %363 : vector<24x24xf32>
    %365 = arith.addf %361, %364 : vector<24x24xf32>
    %c54 = arith.constant 54 : index
    %366 = memref.load %arg2[%c54] : memref<150xf32, #tpu.memory_space<smem>>
    %367 = vector.broadcast %366 : f32 to vector<24x24xf32>
    %368 = arith.mulf %6, %367 : vector<24x24xf32>
    %369 = arith.addf %365, %368 : vector<24x24xf32>
    %c55 = arith.constant 55 : index
    %370 = memref.load %arg2[%c55] : memref<150xf32, #tpu.memory_space<smem>>
    %371 = vector.broadcast %370 : f32 to vector<24x24xf32>
    %372 = arith.mulf %7, %371 : vector<24x24xf32>
    %373 = arith.addf %369, %372 : vector<24x24xf32>
    %c56 = arith.constant 56 : index
    %374 = memref.load %arg2[%c56] : memref<150xf32, #tpu.memory_space<smem>>
    %375 = vector.broadcast %374 : f32 to vector<24x24xf32>
    %376 = arith.mulf %8, %375 : vector<24x24xf32>
    %377 = arith.addf %373, %376 : vector<24x24xf32>
    %c57 = arith.constant 57 : index
    %378 = memref.load %arg2[%c57] : memref<150xf32, #tpu.memory_space<smem>>
    %379 = vector.broadcast %378 : f32 to vector<24x24xf32>
    %380 = arith.mulf %9, %379 : vector<24x24xf32>
    %381 = arith.addf %377, %380 : vector<24x24xf32>
    %c58 = arith.constant 58 : index
    %382 = memref.load %arg2[%c58] : memref<150xf32, #tpu.memory_space<smem>>
    %383 = vector.broadcast %382 : f32 to vector<24x24xf32>
    %384 = arith.mulf %10, %383 : vector<24x24xf32>
    %385 = arith.addf %381, %384 : vector<24x24xf32>
    %c59 = arith.constant 59 : index
    %386 = memref.load %arg2[%c59] : memref<150xf32, #tpu.memory_space<smem>>
    %387 = vector.broadcast %386 : f32 to vector<24x24xf32>
    %388 = arith.mulf %11, %387 : vector<24x24xf32>
    %389 = arith.addf %385, %388 : vector<24x24xf32>
    %c60 = arith.constant 60 : index
    %390 = memref.load %arg2[%c60] : memref<150xf32, #tpu.memory_space<smem>>
    %391 = vector.broadcast %390 : f32 to vector<24x24xf32>
    %392 = arith.mulf %12, %391 : vector<24x24xf32>
    %393 = arith.addf %389, %392 : vector<24x24xf32>
    %c61 = arith.constant 61 : index
    %394 = memref.load %arg2[%c61] : memref<150xf32, #tpu.memory_space<smem>>
    %395 = vector.broadcast %394 : f32 to vector<24x24xf32>
    %396 = arith.mulf %13, %395 : vector<24x24xf32>
    %397 = arith.addf %393, %396 : vector<24x24xf32>
    %c62 = arith.constant 62 : index
    %398 = memref.load %arg2[%c62] : memref<150xf32, #tpu.memory_space<smem>>
    %399 = vector.broadcast %398 : f32 to vector<24x24xf32>
    %400 = arith.mulf %14, %399 : vector<24x24xf32>
    %401 = arith.addf %397, %400 : vector<24x24xf32>
    %c63 = arith.constant 63 : index
    %402 = memref.load %arg2[%c63] : memref<150xf32, #tpu.memory_space<smem>>
    %403 = vector.broadcast %402 : f32 to vector<24x24xf32>
    %404 = arith.mulf %15, %403 : vector<24x24xf32>
    %405 = arith.addf %401, %404 : vector<24x24xf32>
    %c64 = arith.constant 64 : index
    %406 = memref.load %arg2[%c64] : memref<150xf32, #tpu.memory_space<smem>>
    %407 = vector.broadcast %406 : f32 to vector<24x24xf32>
    %408 = arith.mulf %16, %407 : vector<24x24xf32>
    %409 = arith.addf %405, %408 : vector<24x24xf32>
    %c65 = arith.constant 65 : index
    %410 = memref.load %arg2[%c65] : memref<150xf32, #tpu.memory_space<smem>>
    %411 = vector.broadcast %410 : f32 to vector<24x24xf32>
    %412 = arith.mulf %17, %411 : vector<24x24xf32>
    %413 = arith.addf %409, %412 : vector<24x24xf32>
    %c66 = arith.constant 66 : index
    %414 = memref.load %arg2[%c66] : memref<150xf32, #tpu.memory_space<smem>>
    %415 = vector.broadcast %414 : f32 to vector<24x24xf32>
    %416 = arith.mulf %18, %415 : vector<24x24xf32>
    %417 = arith.addf %413, %416 : vector<24x24xf32>
    %c67 = arith.constant 67 : index
    %418 = memref.load %arg2[%c67] : memref<150xf32, #tpu.memory_space<smem>>
    %419 = vector.broadcast %418 : f32 to vector<24x24xf32>
    %420 = arith.mulf %19, %419 : vector<24x24xf32>
    %421 = arith.addf %417, %420 : vector<24x24xf32>
    %c68 = arith.constant 68 : index
    %422 = memref.load %arg2[%c68] : memref<150xf32, #tpu.memory_space<smem>>
    %423 = vector.broadcast %422 : f32 to vector<24x24xf32>
    %424 = arith.mulf %20, %423 : vector<24x24xf32>
    %425 = arith.addf %421, %424 : vector<24x24xf32>
    %c69 = arith.constant 69 : index
    %426 = memref.load %arg2[%c69] : memref<150xf32, #tpu.memory_space<smem>>
    %427 = vector.broadcast %426 : f32 to vector<24x24xf32>
    %428 = arith.mulf %21, %427 : vector<24x24xf32>
    %429 = arith.addf %425, %428 : vector<24x24xf32>
    %c70 = arith.constant 70 : index
    %430 = memref.load %arg2[%c70] : memref<150xf32, #tpu.memory_space<smem>>
    %431 = vector.broadcast %430 : f32 to vector<24x24xf32>
    %432 = arith.mulf %22, %431 : vector<24x24xf32>
    %433 = arith.addf %429, %432 : vector<24x24xf32>
    %c71 = arith.constant 71 : index
    %434 = memref.load %arg2[%c71] : memref<150xf32, #tpu.memory_space<smem>>
    %435 = vector.broadcast %434 : f32 to vector<24x24xf32>
    %436 = arith.mulf %23, %435 : vector<24x24xf32>
    %437 = arith.addf %433, %436 : vector<24x24xf32>
    %c72 = arith.constant 72 : index
    %438 = memref.load %arg2[%c72] : memref<150xf32, #tpu.memory_space<smem>>
    %439 = vector.broadcast %438 : f32 to vector<24x24xf32>
    %440 = arith.mulf %24, %439 : vector<24x24xf32>
    %441 = arith.addf %437, %440 : vector<24x24xf32>
    %c73 = arith.constant 73 : index
    %442 = memref.load %arg2[%c73] : memref<150xf32, #tpu.memory_space<smem>>
    %443 = vector.broadcast %442 : f32 to vector<24x24xf32>
    %444 = arith.mulf %25, %443 : vector<24x24xf32>
    %445 = arith.addf %441, %444 : vector<24x24xf32>
    %c74 = arith.constant 74 : index
    %446 = memref.load %arg2[%c74] : memref<150xf32, #tpu.memory_space<smem>>
    %447 = vector.broadcast %446 : f32 to vector<24x24xf32>
    %448 = arith.mulf %26, %447 : vector<24x24xf32>
    %449 = arith.addf %445, %448 : vector<24x24xf32>
    %c2_9 = arith.constant 2 : index
    %450 = memref.load %arg3[%c2_9] : memref<6xf32, #tpu.memory_space<smem>>
    %451 = vector.broadcast %450 : f32 to vector<24x24xf32>
    %452 = arith.addf %449, %451 : vector<24x24xf32>
    %453 = vector.extract_strided_slice %452 {offsets = [0, 0], sizes = [1, 24], strides = [1, 1]} : vector<24x24xf32> to vector<1x24xf32>
    %454 = vector.extract_strided_slice %452 {offsets = [2, 0], sizes = [1, 24], strides = [1, 1]} : vector<24x24xf32> to vector<1x24xf32>
    %455 = vector.extract_strided_slice %452 {offsets = [4, 0], sizes = [1, 24], strides = [1, 1]} : vector<24x24xf32> to vector<1x24xf32>
    %456 = vector.extract_strided_slice %452 {offsets = [6, 0], sizes = [1, 24], strides = [1, 1]} : vector<24x24xf32> to vector<1x24xf32>
    %457 = vector.extract_strided_slice %452 {offsets = [8, 0], sizes = [1, 24], strides = [1, 1]} : vector<24x24xf32> to vector<1x24xf32>
    %458 = vector.extract_strided_slice %452 {offsets = [10, 0], sizes = [1, 24], strides = [1, 1]} : vector<24x24xf32> to vector<1x24xf32>
    %459 = vector.extract_strided_slice %452 {offsets = [12, 0], sizes = [1, 24], strides = [1, 1]} : vector<24x24xf32> to vector<1x24xf32>
    %460 = vector.extract_strided_slice %452 {offsets = [14, 0], sizes = [1, 24], strides = [1, 1]} : vector<24x24xf32> to vector<1x24xf32>
    %461 = vector.extract_strided_slice %452 {offsets = [16, 0], sizes = [1, 24], strides = [1, 1]} : vector<24x24xf32> to vector<1x24xf32>
    %462 = vector.extract_strided_slice %452 {offsets = [18, 0], sizes = [1, 24], strides = [1, 1]} : vector<24x24xf32> to vector<1x24xf32>
    %463 = vector.extract_strided_slice %452 {offsets = [20, 0], sizes = [1, 24], strides = [1, 1]} : vector<24x24xf32> to vector<1x24xf32>
    %464 = vector.extract_strided_slice %452 {offsets = [22, 0], sizes = [1, 24], strides = [1, 1]} : vector<24x24xf32> to vector<1x24xf32>
    %465 = tpu.concatenate %453, %454, %455, %456, %457, %458, %459, %460, %461, %462, %463, %464 in 0 : vector<1x24xf32>, vector<1x24xf32>, vector<1x24xf32>, vector<1x24xf32>, vector<1x24xf32>, vector<1x24xf32>, vector<1x24xf32>, vector<1x24xf32>, vector<1x24xf32>, vector<1x24xf32>, vector<1x24xf32>, vector<1x24xf32> -> vector<12x24xf32>
    %466 = vector.extract_strided_slice %452 {offsets = [1, 0], sizes = [1, 24], strides = [1, 1]} : vector<24x24xf32> to vector<1x24xf32>
    %467 = vector.extract_strided_slice %452 {offsets = [3, 0], sizes = [1, 24], strides = [1, 1]} : vector<24x24xf32> to vector<1x24xf32>
    %468 = vector.extract_strided_slice %452 {offsets = [5, 0], sizes = [1, 24], strides = [1, 1]} : vector<24x24xf32> to vector<1x24xf32>
    %469 = vector.extract_strided_slice %452 {offsets = [7, 0], sizes = [1, 24], strides = [1, 1]} : vector<24x24xf32> to vector<1x24xf32>
    %470 = vector.extract_strided_slice %452 {offsets = [9, 0], sizes = [1, 24], strides = [1, 1]} : vector<24x24xf32> to vector<1x24xf32>
    %471 = vector.extract_strided_slice %452 {offsets = [11, 0], sizes = [1, 24], strides = [1, 1]} : vector<24x24xf32> to vector<1x24xf32>
    %472 = vector.extract_strided_slice %452 {offsets = [13, 0], sizes = [1, 24], strides = [1, 1]} : vector<24x24xf32> to vector<1x24xf32>
    %473 = vector.extract_strided_slice %452 {offsets = [15, 0], sizes = [1, 24], strides = [1, 1]} : vector<24x24xf32> to vector<1x24xf32>
    %474 = vector.extract_strided_slice %452 {offsets = [17, 0], sizes = [1, 24], strides = [1, 1]} : vector<24x24xf32> to vector<1x24xf32>
    %475 = vector.extract_strided_slice %452 {offsets = [19, 0], sizes = [1, 24], strides = [1, 1]} : vector<24x24xf32> to vector<1x24xf32>
    %476 = vector.extract_strided_slice %452 {offsets = [21, 0], sizes = [1, 24], strides = [1, 1]} : vector<24x24xf32> to vector<1x24xf32>
    %477 = vector.extract_strided_slice %452 {offsets = [23, 0], sizes = [1, 24], strides = [1, 1]} : vector<24x24xf32> to vector<1x24xf32>
    %478 = tpu.concatenate %466, %467, %468, %469, %470, %471, %472, %473, %474, %475, %476, %477 in 0 : vector<1x24xf32>, vector<1x24xf32>, vector<1x24xf32>, vector<1x24xf32>, vector<1x24xf32>, vector<1x24xf32>, vector<1x24xf32>, vector<1x24xf32>, vector<1x24xf32>, vector<1x24xf32>, vector<1x24xf32>, vector<1x24xf32> -> vector<12x24xf32>
    %479 = arith.maximumf %465, %478 : vector<12x24xf32>
    %480 = vector.extract_strided_slice %479 {offsets = [0, 0], sizes = [12, 1], strides = [1, 1]} : vector<12x24xf32> to vector<12x1xf32>
    %481 = vector.extract_strided_slice %479 {offsets = [0, 2], sizes = [12, 1], strides = [1, 1]} : vector<12x24xf32> to vector<12x1xf32>
    %482 = vector.extract_strided_slice %479 {offsets = [0, 4], sizes = [12, 1], strides = [1, 1]} : vector<12x24xf32> to vector<12x1xf32>
    %483 = vector.extract_strided_slice %479 {offsets = [0, 6], sizes = [12, 1], strides = [1, 1]} : vector<12x24xf32> to vector<12x1xf32>
    %484 = vector.extract_strided_slice %479 {offsets = [0, 8], sizes = [12, 1], strides = [1, 1]} : vector<12x24xf32> to vector<12x1xf32>
    %485 = vector.extract_strided_slice %479 {offsets = [0, 10], sizes = [12, 1], strides = [1, 1]} : vector<12x24xf32> to vector<12x1xf32>
    %486 = vector.extract_strided_slice %479 {offsets = [0, 12], sizes = [12, 1], strides = [1, 1]} : vector<12x24xf32> to vector<12x1xf32>
    %487 = vector.extract_strided_slice %479 {offsets = [0, 14], sizes = [12, 1], strides = [1, 1]} : vector<12x24xf32> to vector<12x1xf32>
    %488 = vector.extract_strided_slice %479 {offsets = [0, 16], sizes = [12, 1], strides = [1, 1]} : vector<12x24xf32> to vector<12x1xf32>
    %489 = vector.extract_strided_slice %479 {offsets = [0, 18], sizes = [12, 1], strides = [1, 1]} : vector<12x24xf32> to vector<12x1xf32>
    %490 = vector.extract_strided_slice %479 {offsets = [0, 20], sizes = [12, 1], strides = [1, 1]} : vector<12x24xf32> to vector<12x1xf32>
    %491 = vector.extract_strided_slice %479 {offsets = [0, 22], sizes = [12, 1], strides = [1, 1]} : vector<12x24xf32> to vector<12x1xf32>
    %492 = tpu.concatenate %480, %481, %482, %483, %484, %485, %486, %487, %488, %489, %490, %491 in 1 : vector<12x1xf32>, vector<12x1xf32>, vector<12x1xf32>, vector<12x1xf32>, vector<12x1xf32>, vector<12x1xf32>, vector<12x1xf32>, vector<12x1xf32>, vector<12x1xf32>, vector<12x1xf32>, vector<12x1xf32>, vector<12x1xf32> -> vector<12x12xf32>
    %493 = vector.extract_strided_slice %479 {offsets = [0, 1], sizes = [12, 1], strides = [1, 1]} : vector<12x24xf32> to vector<12x1xf32>
    %494 = vector.extract_strided_slice %479 {offsets = [0, 3], sizes = [12, 1], strides = [1, 1]} : vector<12x24xf32> to vector<12x1xf32>
    %495 = vector.extract_strided_slice %479 {offsets = [0, 5], sizes = [12, 1], strides = [1, 1]} : vector<12x24xf32> to vector<12x1xf32>
    %496 = vector.extract_strided_slice %479 {offsets = [0, 7], sizes = [12, 1], strides = [1, 1]} : vector<12x24xf32> to vector<12x1xf32>
    %497 = vector.extract_strided_slice %479 {offsets = [0, 9], sizes = [12, 1], strides = [1, 1]} : vector<12x24xf32> to vector<12x1xf32>
    %498 = vector.extract_strided_slice %479 {offsets = [0, 11], sizes = [12, 1], strides = [1, 1]} : vector<12x24xf32> to vector<12x1xf32>
    %499 = vector.extract_strided_slice %479 {offsets = [0, 13], sizes = [12, 1], strides = [1, 1]} : vector<12x24xf32> to vector<12x1xf32>
    %500 = vector.extract_strided_slice %479 {offsets = [0, 15], sizes = [12, 1], strides = [1, 1]} : vector<12x24xf32> to vector<12x1xf32>
    %501 = vector.extract_strided_slice %479 {offsets = [0, 17], sizes = [12, 1], strides = [1, 1]} : vector<12x24xf32> to vector<12x1xf32>
    %502 = vector.extract_strided_slice %479 {offsets = [0, 19], sizes = [12, 1], strides = [1, 1]} : vector<12x24xf32> to vector<12x1xf32>
    %503 = vector.extract_strided_slice %479 {offsets = [0, 21], sizes = [12, 1], strides = [1, 1]} : vector<12x24xf32> to vector<12x1xf32>
    %504 = vector.extract_strided_slice %479 {offsets = [0, 23], sizes = [12, 1], strides = [1, 1]} : vector<12x24xf32> to vector<12x1xf32>
    %505 = tpu.concatenate %493, %494, %495, %496, %497, %498, %499, %500, %501, %502, %503, %504 in 1 : vector<12x1xf32>, vector<12x1xf32>, vector<12x1xf32>, vector<12x1xf32>, vector<12x1xf32>, vector<12x1xf32>, vector<12x1xf32>, vector<12x1xf32>, vector<12x1xf32>, vector<12x1xf32>, vector<12x1xf32>, vector<12x1xf32> -> vector<12x12xf32>
    %506 = arith.maximumf %492, %505 : vector<12x12xf32>
    %507 = math.tanh %506 : vector<12x12xf32>
    %cst_10 = arith.constant 0.000000e+00 : f32
    %508 = vector.broadcast %cst_10 : f32 to vector<12x12xf32>
    %509 = arith.maximumf %507, %508 : vector<12x12xf32>
    %cst_11 = arith.constant 0.000000e+00 : f32
    %510 = vector.broadcast %cst_11 : f32 to vector<24x24xf32>
    %c75 = arith.constant 75 : index
    %511 = memref.load %arg2[%c75] : memref<150xf32, #tpu.memory_space<smem>>
    %512 = vector.broadcast %511 : f32 to vector<24x24xf32>
    %513 = arith.mulf %2, %512 : vector<24x24xf32>
    %514 = arith.addf %510, %513 : vector<24x24xf32>
    %c76 = arith.constant 76 : index
    %515 = memref.load %arg2[%c76] : memref<150xf32, #tpu.memory_space<smem>>
    %516 = vector.broadcast %515 : f32 to vector<24x24xf32>
    %517 = arith.mulf %3, %516 : vector<24x24xf32>
    %518 = arith.addf %514, %517 : vector<24x24xf32>
    %c77 = arith.constant 77 : index
    %519 = memref.load %arg2[%c77] : memref<150xf32, #tpu.memory_space<smem>>
    %520 = vector.broadcast %519 : f32 to vector<24x24xf32>
    %521 = arith.mulf %4, %520 : vector<24x24xf32>
    %522 = arith.addf %518, %521 : vector<24x24xf32>
    %c78 = arith.constant 78 : index
    %523 = memref.load %arg2[%c78] : memref<150xf32, #tpu.memory_space<smem>>
    %524 = vector.broadcast %523 : f32 to vector<24x24xf32>
    %525 = arith.mulf %5, %524 : vector<24x24xf32>
    %526 = arith.addf %522, %525 : vector<24x24xf32>
    %c79 = arith.constant 79 : index
    %527 = memref.load %arg2[%c79] : memref<150xf32, #tpu.memory_space<smem>>
    %528 = vector.broadcast %527 : f32 to vector<24x24xf32>
    %529 = arith.mulf %6, %528 : vector<24x24xf32>
    %530 = arith.addf %526, %529 : vector<24x24xf32>
    %c80 = arith.constant 80 : index
    %531 = memref.load %arg2[%c80] : memref<150xf32, #tpu.memory_space<smem>>
    %532 = vector.broadcast %531 : f32 to vector<24x24xf32>
    %533 = arith.mulf %7, %532 : vector<24x24xf32>
    %534 = arith.addf %530, %533 : vector<24x24xf32>
    %c81 = arith.constant 81 : index
    %535 = memref.load %arg2[%c81] : memref<150xf32, #tpu.memory_space<smem>>
    %536 = vector.broadcast %535 : f32 to vector<24x24xf32>
    %537 = arith.mulf %8, %536 : vector<24x24xf32>
    %538 = arith.addf %534, %537 : vector<24x24xf32>
    %c82 = arith.constant 82 : index
    %539 = memref.load %arg2[%c82] : memref<150xf32, #tpu.memory_space<smem>>
    %540 = vector.broadcast %539 : f32 to vector<24x24xf32>
    %541 = arith.mulf %9, %540 : vector<24x24xf32>
    %542 = arith.addf %538, %541 : vector<24x24xf32>
    %c83 = arith.constant 83 : index
    %543 = memref.load %arg2[%c83] : memref<150xf32, #tpu.memory_space<smem>>
    %544 = vector.broadcast %543 : f32 to vector<24x24xf32>
    %545 = arith.mulf %10, %544 : vector<24x24xf32>
    %546 = arith.addf %542, %545 : vector<24x24xf32>
    %c84 = arith.constant 84 : index
    %547 = memref.load %arg2[%c84] : memref<150xf32, #tpu.memory_space<smem>>
    %548 = vector.broadcast %547 : f32 to vector<24x24xf32>
    %549 = arith.mulf %11, %548 : vector<24x24xf32>
    %550 = arith.addf %546, %549 : vector<24x24xf32>
    %c85 = arith.constant 85 : index
    %551 = memref.load %arg2[%c85] : memref<150xf32, #tpu.memory_space<smem>>
    %552 = vector.broadcast %551 : f32 to vector<24x24xf32>
    %553 = arith.mulf %12, %552 : vector<24x24xf32>
    %554 = arith.addf %550, %553 : vector<24x24xf32>
    %c86 = arith.constant 86 : index
    %555 = memref.load %arg2[%c86] : memref<150xf32, #tpu.memory_space<smem>>
    %556 = vector.broadcast %555 : f32 to vector<24x24xf32>
    %557 = arith.mulf %13, %556 : vector<24x24xf32>
    %558 = arith.addf %554, %557 : vector<24x24xf32>
    %c87 = arith.constant 87 : index
    %559 = memref.load %arg2[%c87] : memref<150xf32, #tpu.memory_space<smem>>
    %560 = vector.broadcast %559 : f32 to vector<24x24xf32>
    %561 = arith.mulf %14, %560 : vector<24x24xf32>
    %562 = arith.addf %558, %561 : vector<24x24xf32>
    %c88 = arith.constant 88 : index
    %563 = memref.load %arg2[%c88] : memref<150xf32, #tpu.memory_space<smem>>
    %564 = vector.broadcast %563 : f32 to vector<24x24xf32>
    %565 = arith.mulf %15, %564 : vector<24x24xf32>
    %566 = arith.addf %562, %565 : vector<24x24xf32>
    %c89 = arith.constant 89 : index
    %567 = memref.load %arg2[%c89] : memref<150xf32, #tpu.memory_space<smem>>
    %568 = vector.broadcast %567 : f32 to vector<24x24xf32>
    %569 = arith.mulf %16, %568 : vector<24x24xf32>
    %570 = arith.addf %566, %569 : vector<24x24xf32>
    %c90 = arith.constant 90 : index
    %571 = memref.load %arg2[%c90] : memref<150xf32, #tpu.memory_space<smem>>
    %572 = vector.broadcast %571 : f32 to vector<24x24xf32>
    %573 = arith.mulf %17, %572 : vector<24x24xf32>
    %574 = arith.addf %570, %573 : vector<24x24xf32>
    %c91 = arith.constant 91 : index
    %575 = memref.load %arg2[%c91] : memref<150xf32, #tpu.memory_space<smem>>
    %576 = vector.broadcast %575 : f32 to vector<24x24xf32>
    %577 = arith.mulf %18, %576 : vector<24x24xf32>
    %578 = arith.addf %574, %577 : vector<24x24xf32>
    %c92 = arith.constant 92 : index
    %579 = memref.load %arg2[%c92] : memref<150xf32, #tpu.memory_space<smem>>
    %580 = vector.broadcast %579 : f32 to vector<24x24xf32>
    %581 = arith.mulf %19, %580 : vector<24x24xf32>
    %582 = arith.addf %578, %581 : vector<24x24xf32>
    %c93 = arith.constant 93 : index
    %583 = memref.load %arg2[%c93] : memref<150xf32, #tpu.memory_space<smem>>
    %584 = vector.broadcast %583 : f32 to vector<24x24xf32>
    %585 = arith.mulf %20, %584 : vector<24x24xf32>
    %586 = arith.addf %582, %585 : vector<24x24xf32>
    %c94 = arith.constant 94 : index
    %587 = memref.load %arg2[%c94] : memref<150xf32, #tpu.memory_space<smem>>
    %588 = vector.broadcast %587 : f32 to vector<24x24xf32>
    %589 = arith.mulf %21, %588 : vector<24x24xf32>
    %590 = arith.addf %586, %589 : vector<24x24xf32>
    %c95 = arith.constant 95 : index
    %591 = memref.load %arg2[%c95] : memref<150xf32, #tpu.memory_space<smem>>
    %592 = vector.broadcast %591 : f32 to vector<24x24xf32>
    %593 = arith.mulf %22, %592 : vector<24x24xf32>
    %594 = arith.addf %590, %593 : vector<24x24xf32>
    %c96 = arith.constant 96 : index
    %595 = memref.load %arg2[%c96] : memref<150xf32, #tpu.memory_space<smem>>
    %596 = vector.broadcast %595 : f32 to vector<24x24xf32>
    %597 = arith.mulf %23, %596 : vector<24x24xf32>
    %598 = arith.addf %594, %597 : vector<24x24xf32>
    %c97 = arith.constant 97 : index
    %599 = memref.load %arg2[%c97] : memref<150xf32, #tpu.memory_space<smem>>
    %600 = vector.broadcast %599 : f32 to vector<24x24xf32>
    %601 = arith.mulf %24, %600 : vector<24x24xf32>
    %602 = arith.addf %598, %601 : vector<24x24xf32>
    %c98 = arith.constant 98 : index
    %603 = memref.load %arg2[%c98] : memref<150xf32, #tpu.memory_space<smem>>
    %604 = vector.broadcast %603 : f32 to vector<24x24xf32>
    %605 = arith.mulf %25, %604 : vector<24x24xf32>
    %606 = arith.addf %602, %605 : vector<24x24xf32>
    %c99 = arith.constant 99 : index
    %607 = memref.load %arg2[%c99] : memref<150xf32, #tpu.memory_space<smem>>
    %608 = vector.broadcast %607 : f32 to vector<24x24xf32>
    %609 = arith.mulf %26, %608 : vector<24x24xf32>
    %610 = arith.addf %606, %609 : vector<24x24xf32>
    %c3_12 = arith.constant 3 : index
    %611 = memref.load %arg3[%c3_12] : memref<6xf32, #tpu.memory_space<smem>>
    %612 = vector.broadcast %611 : f32 to vector<24x24xf32>
    %613 = arith.addf %610, %612 : vector<24x24xf32>
    %614 = vector.extract_strided_slice %613 {offsets = [0, 0], sizes = [1, 24], strides = [1, 1]} : vector<24x24xf32> to vector<1x24xf32>
    %615 = vector.extract_strided_slice %613 {offsets = [2, 0], sizes = [1, 24], strides = [1, 1]} : vector<24x24xf32> to vector<1x24xf32>
    %616 = vector.extract_strided_slice %613 {offsets = [4, 0], sizes = [1, 24], strides = [1, 1]} : vector<24x24xf32> to vector<1x24xf32>
    %617 = vector.extract_strided_slice %613 {offsets = [6, 0], sizes = [1, 24], strides = [1, 1]} : vector<24x24xf32> to vector<1x24xf32>
    %618 = vector.extract_strided_slice %613 {offsets = [8, 0], sizes = [1, 24], strides = [1, 1]} : vector<24x24xf32> to vector<1x24xf32>
    %619 = vector.extract_strided_slice %613 {offsets = [10, 0], sizes = [1, 24], strides = [1, 1]} : vector<24x24xf32> to vector<1x24xf32>
    %620 = vector.extract_strided_slice %613 {offsets = [12, 0], sizes = [1, 24], strides = [1, 1]} : vector<24x24xf32> to vector<1x24xf32>
    %621 = vector.extract_strided_slice %613 {offsets = [14, 0], sizes = [1, 24], strides = [1, 1]} : vector<24x24xf32> to vector<1x24xf32>
    %622 = vector.extract_strided_slice %613 {offsets = [16, 0], sizes = [1, 24], strides = [1, 1]} : vector<24x24xf32> to vector<1x24xf32>
    %623 = vector.extract_strided_slice %613 {offsets = [18, 0], sizes = [1, 24], strides = [1, 1]} : vector<24x24xf32> to vector<1x24xf32>
    %624 = vector.extract_strided_slice %613 {offsets = [20, 0], sizes = [1, 24], strides = [1, 1]} : vector<24x24xf32> to vector<1x24xf32>
    %625 = vector.extract_strided_slice %613 {offsets = [22, 0], sizes = [1, 24], strides = [1, 1]} : vector<24x24xf32> to vector<1x24xf32>
    %626 = tpu.concatenate %614, %615, %616, %617, %618, %619, %620, %621, %622, %623, %624, %625 in 0 : vector<1x24xf32>, vector<1x24xf32>, vector<1x24xf32>, vector<1x24xf32>, vector<1x24xf32>, vector<1x24xf32>, vector<1x24xf32>, vector<1x24xf32>, vector<1x24xf32>, vector<1x24xf32>, vector<1x24xf32>, vector<1x24xf32> -> vector<12x24xf32>
    %627 = vector.extract_strided_slice %613 {offsets = [1, 0], sizes = [1, 24], strides = [1, 1]} : vector<24x24xf32> to vector<1x24xf32>
    %628 = vector.extract_strided_slice %613 {offsets = [3, 0], sizes = [1, 24], strides = [1, 1]} : vector<24x24xf32> to vector<1x24xf32>
    %629 = vector.extract_strided_slice %613 {offsets = [5, 0], sizes = [1, 24], strides = [1, 1]} : vector<24x24xf32> to vector<1x24xf32>
    %630 = vector.extract_strided_slice %613 {offsets = [7, 0], sizes = [1, 24], strides = [1, 1]} : vector<24x24xf32> to vector<1x24xf32>
    %631 = vector.extract_strided_slice %613 {offsets = [9, 0], sizes = [1, 24], strides = [1, 1]} : vector<24x24xf32> to vector<1x24xf32>
    %632 = vector.extract_strided_slice %613 {offsets = [11, 0], sizes = [1, 24], strides = [1, 1]} : vector<24x24xf32> to vector<1x24xf32>
    %633 = vector.extract_strided_slice %613 {offsets = [13, 0], sizes = [1, 24], strides = [1, 1]} : vector<24x24xf32> to vector<1x24xf32>
    %634 = vector.extract_strided_slice %613 {offsets = [15, 0], sizes = [1, 24], strides = [1, 1]} : vector<24x24xf32> to vector<1x24xf32>
    %635 = vector.extract_strided_slice %613 {offsets = [17, 0], sizes = [1, 24], strides = [1, 1]} : vector<24x24xf32> to vector<1x24xf32>
    %636 = vector.extract_strided_slice %613 {offsets = [19, 0], sizes = [1, 24], strides = [1, 1]} : vector<24x24xf32> to vector<1x24xf32>
    %637 = vector.extract_strided_slice %613 {offsets = [21, 0], sizes = [1, 24], strides = [1, 1]} : vector<24x24xf32> to vector<1x24xf32>
    %638 = vector.extract_strided_slice %613 {offsets = [23, 0], sizes = [1, 24], strides = [1, 1]} : vector<24x24xf32> to vector<1x24xf32>
    %639 = tpu.concatenate %627, %628, %629, %630, %631, %632, %633, %634, %635, %636, %637, %638 in 0 : vector<1x24xf32>, vector<1x24xf32>, vector<1x24xf32>, vector<1x24xf32>, vector<1x24xf32>, vector<1x24xf32>, vector<1x24xf32>, vector<1x24xf32>, vector<1x24xf32>, vector<1x24xf32>, vector<1x24xf32>, vector<1x24xf32> -> vector<12x24xf32>
    %640 = arith.maximumf %626, %639 : vector<12x24xf32>
    %641 = vector.extract_strided_slice %640 {offsets = [0, 0], sizes = [12, 1], strides = [1, 1]} : vector<12x24xf32> to vector<12x1xf32>
    %642 = vector.extract_strided_slice %640 {offsets = [0, 2], sizes = [12, 1], strides = [1, 1]} : vector<12x24xf32> to vector<12x1xf32>
    %643 = vector.extract_strided_slice %640 {offsets = [0, 4], sizes = [12, 1], strides = [1, 1]} : vector<12x24xf32> to vector<12x1xf32>
    %644 = vector.extract_strided_slice %640 {offsets = [0, 6], sizes = [12, 1], strides = [1, 1]} : vector<12x24xf32> to vector<12x1xf32>
    %645 = vector.extract_strided_slice %640 {offsets = [0, 8], sizes = [12, 1], strides = [1, 1]} : vector<12x24xf32> to vector<12x1xf32>
    %646 = vector.extract_strided_slice %640 {offsets = [0, 10], sizes = [12, 1], strides = [1, 1]} : vector<12x24xf32> to vector<12x1xf32>
    %647 = vector.extract_strided_slice %640 {offsets = [0, 12], sizes = [12, 1], strides = [1, 1]} : vector<12x24xf32> to vector<12x1xf32>
    %648 = vector.extract_strided_slice %640 {offsets = [0, 14], sizes = [12, 1], strides = [1, 1]} : vector<12x24xf32> to vector<12x1xf32>
    %649 = vector.extract_strided_slice %640 {offsets = [0, 16], sizes = [12, 1], strides = [1, 1]} : vector<12x24xf32> to vector<12x1xf32>
    %650 = vector.extract_strided_slice %640 {offsets = [0, 18], sizes = [12, 1], strides = [1, 1]} : vector<12x24xf32> to vector<12x1xf32>
    %651 = vector.extract_strided_slice %640 {offsets = [0, 20], sizes = [12, 1], strides = [1, 1]} : vector<12x24xf32> to vector<12x1xf32>
    %652 = vector.extract_strided_slice %640 {offsets = [0, 22], sizes = [12, 1], strides = [1, 1]} : vector<12x24xf32> to vector<12x1xf32>
    %653 = tpu.concatenate %641, %642, %643, %644, %645, %646, %647, %648, %649, %650, %651, %652 in 1 : vector<12x1xf32>, vector<12x1xf32>, vector<12x1xf32>, vector<12x1xf32>, vector<12x1xf32>, vector<12x1xf32>, vector<12x1xf32>, vector<12x1xf32>, vector<12x1xf32>, vector<12x1xf32>, vector<12x1xf32>, vector<12x1xf32> -> vector<12x12xf32>
    %654 = vector.extract_strided_slice %640 {offsets = [0, 1], sizes = [12, 1], strides = [1, 1]} : vector<12x24xf32> to vector<12x1xf32>
    %655 = vector.extract_strided_slice %640 {offsets = [0, 3], sizes = [12, 1], strides = [1, 1]} : vector<12x24xf32> to vector<12x1xf32>
    %656 = vector.extract_strided_slice %640 {offsets = [0, 5], sizes = [12, 1], strides = [1, 1]} : vector<12x24xf32> to vector<12x1xf32>
    %657 = vector.extract_strided_slice %640 {offsets = [0, 7], sizes = [12, 1], strides = [1, 1]} : vector<12x24xf32> to vector<12x1xf32>
    %658 = vector.extract_strided_slice %640 {offsets = [0, 9], sizes = [12, 1], strides = [1, 1]} : vector<12x24xf32> to vector<12x1xf32>
    %659 = vector.extract_strided_slice %640 {offsets = [0, 11], sizes = [12, 1], strides = [1, 1]} : vector<12x24xf32> to vector<12x1xf32>
    %660 = vector.extract_strided_slice %640 {offsets = [0, 13], sizes = [12, 1], strides = [1, 1]} : vector<12x24xf32> to vector<12x1xf32>
    %661 = vector.extract_strided_slice %640 {offsets = [0, 15], sizes = [12, 1], strides = [1, 1]} : vector<12x24xf32> to vector<12x1xf32>
    %662 = vector.extract_strided_slice %640 {offsets = [0, 17], sizes = [12, 1], strides = [1, 1]} : vector<12x24xf32> to vector<12x1xf32>
    %663 = vector.extract_strided_slice %640 {offsets = [0, 19], sizes = [12, 1], strides = [1, 1]} : vector<12x24xf32> to vector<12x1xf32>
    %664 = vector.extract_strided_slice %640 {offsets = [0, 21], sizes = [12, 1], strides = [1, 1]} : vector<12x24xf32> to vector<12x1xf32>
    %665 = vector.extract_strided_slice %640 {offsets = [0, 23], sizes = [12, 1], strides = [1, 1]} : vector<12x24xf32> to vector<12x1xf32>
    %666 = tpu.concatenate %654, %655, %656, %657, %658, %659, %660, %661, %662, %663, %664, %665 in 1 : vector<12x1xf32>, vector<12x1xf32>, vector<12x1xf32>, vector<12x1xf32>, vector<12x1xf32>, vector<12x1xf32>, vector<12x1xf32>, vector<12x1xf32>, vector<12x1xf32>, vector<12x1xf32>, vector<12x1xf32>, vector<12x1xf32> -> vector<12x12xf32>
    %667 = arith.maximumf %653, %666 : vector<12x12xf32>
    %668 = math.tanh %667 : vector<12x12xf32>
    %cst_13 = arith.constant 0.000000e+00 : f32
    %669 = vector.broadcast %cst_13 : f32 to vector<12x12xf32>
    %670 = arith.maximumf %668, %669 : vector<12x12xf32>
    %cst_14 = arith.constant 0.000000e+00 : f32
    %671 = vector.broadcast %cst_14 : f32 to vector<24x24xf32>
    %c100 = arith.constant 100 : index
    %672 = memref.load %arg2[%c100] : memref<150xf32, #tpu.memory_space<smem>>
    %673 = vector.broadcast %672 : f32 to vector<24x24xf32>
    %674 = arith.mulf %2, %673 : vector<24x24xf32>
    %675 = arith.addf %671, %674 : vector<24x24xf32>
    %c101 = arith.constant 101 : index
    %676 = memref.load %arg2[%c101] : memref<150xf32, #tpu.memory_space<smem>>
    %677 = vector.broadcast %676 : f32 to vector<24x24xf32>
    %678 = arith.mulf %3, %677 : vector<24x24xf32>
    %679 = arith.addf %675, %678 : vector<24x24xf32>
    %c102 = arith.constant 102 : index
    %680 = memref.load %arg2[%c102] : memref<150xf32, #tpu.memory_space<smem>>
    %681 = vector.broadcast %680 : f32 to vector<24x24xf32>
    %682 = arith.mulf %4, %681 : vector<24x24xf32>
    %683 = arith.addf %679, %682 : vector<24x24xf32>
    %c103 = arith.constant 103 : index
    %684 = memref.load %arg2[%c103] : memref<150xf32, #tpu.memory_space<smem>>
    %685 = vector.broadcast %684 : f32 to vector<24x24xf32>
    %686 = arith.mulf %5, %685 : vector<24x24xf32>
    %687 = arith.addf %683, %686 : vector<24x24xf32>
    %c104 = arith.constant 104 : index
    %688 = memref.load %arg2[%c104] : memref<150xf32, #tpu.memory_space<smem>>
    %689 = vector.broadcast %688 : f32 to vector<24x24xf32>
    %690 = arith.mulf %6, %689 : vector<24x24xf32>
    %691 = arith.addf %687, %690 : vector<24x24xf32>
    %c105 = arith.constant 105 : index
    %692 = memref.load %arg2[%c105] : memref<150xf32, #tpu.memory_space<smem>>
    %693 = vector.broadcast %692 : f32 to vector<24x24xf32>
    %694 = arith.mulf %7, %693 : vector<24x24xf32>
    %695 = arith.addf %691, %694 : vector<24x24xf32>
    %c106 = arith.constant 106 : index
    %696 = memref.load %arg2[%c106] : memref<150xf32, #tpu.memory_space<smem>>
    %697 = vector.broadcast %696 : f32 to vector<24x24xf32>
    %698 = arith.mulf %8, %697 : vector<24x24xf32>
    %699 = arith.addf %695, %698 : vector<24x24xf32>
    %c107 = arith.constant 107 : index
    %700 = memref.load %arg2[%c107] : memref<150xf32, #tpu.memory_space<smem>>
    %701 = vector.broadcast %700 : f32 to vector<24x24xf32>
    %702 = arith.mulf %9, %701 : vector<24x24xf32>
    %703 = arith.addf %699, %702 : vector<24x24xf32>
    %c108 = arith.constant 108 : index
    %704 = memref.load %arg2[%c108] : memref<150xf32, #tpu.memory_space<smem>>
    %705 = vector.broadcast %704 : f32 to vector<24x24xf32>
    %706 = arith.mulf %10, %705 : vector<24x24xf32>
    %707 = arith.addf %703, %706 : vector<24x24xf32>
    %c109 = arith.constant 109 : index
    %708 = memref.load %arg2[%c109] : memref<150xf32, #tpu.memory_space<smem>>
    %709 = vector.broadcast %708 : f32 to vector<24x24xf32>
    %710 = arith.mulf %11, %709 : vector<24x24xf32>
    %711 = arith.addf %707, %710 : vector<24x24xf32>
    %c110 = arith.constant 110 : index
    %712 = memref.load %arg2[%c110] : memref<150xf32, #tpu.memory_space<smem>>
    %713 = vector.broadcast %712 : f32 to vector<24x24xf32>
    %714 = arith.mulf %12, %713 : vector<24x24xf32>
    %715 = arith.addf %711, %714 : vector<24x24xf32>
    %c111 = arith.constant 111 : index
    %716 = memref.load %arg2[%c111] : memref<150xf32, #tpu.memory_space<smem>>
    %717 = vector.broadcast %716 : f32 to vector<24x24xf32>
    %718 = arith.mulf %13, %717 : vector<24x24xf32>
    %719 = arith.addf %715, %718 : vector<24x24xf32>
    %c112 = arith.constant 112 : index
    %720 = memref.load %arg2[%c112] : memref<150xf32, #tpu.memory_space<smem>>
    %721 = vector.broadcast %720 : f32 to vector<24x24xf32>
    %722 = arith.mulf %14, %721 : vector<24x24xf32>
    %723 = arith.addf %719, %722 : vector<24x24xf32>
    %c113 = arith.constant 113 : index
    %724 = memref.load %arg2[%c113] : memref<150xf32, #tpu.memory_space<smem>>
    %725 = vector.broadcast %724 : f32 to vector<24x24xf32>
    %726 = arith.mulf %15, %725 : vector<24x24xf32>
    %727 = arith.addf %723, %726 : vector<24x24xf32>
    %c114 = arith.constant 114 : index
    %728 = memref.load %arg2[%c114] : memref<150xf32, #tpu.memory_space<smem>>
    %729 = vector.broadcast %728 : f32 to vector<24x24xf32>
    %730 = arith.mulf %16, %729 : vector<24x24xf32>
    %731 = arith.addf %727, %730 : vector<24x24xf32>
    %c115 = arith.constant 115 : index
    %732 = memref.load %arg2[%c115] : memref<150xf32, #tpu.memory_space<smem>>
    %733 = vector.broadcast %732 : f32 to vector<24x24xf32>
    %734 = arith.mulf %17, %733 : vector<24x24xf32>
    %735 = arith.addf %731, %734 : vector<24x24xf32>
    %c116 = arith.constant 116 : index
    %736 = memref.load %arg2[%c116] : memref<150xf32, #tpu.memory_space<smem>>
    %737 = vector.broadcast %736 : f32 to vector<24x24xf32>
    %738 = arith.mulf %18, %737 : vector<24x24xf32>
    %739 = arith.addf %735, %738 : vector<24x24xf32>
    %c117 = arith.constant 117 : index
    %740 = memref.load %arg2[%c117] : memref<150xf32, #tpu.memory_space<smem>>
    %741 = vector.broadcast %740 : f32 to vector<24x24xf32>
    %742 = arith.mulf %19, %741 : vector<24x24xf32>
    %743 = arith.addf %739, %742 : vector<24x24xf32>
    %c118 = arith.constant 118 : index
    %744 = memref.load %arg2[%c118] : memref<150xf32, #tpu.memory_space<smem>>
    %745 = vector.broadcast %744 : f32 to vector<24x24xf32>
    %746 = arith.mulf %20, %745 : vector<24x24xf32>
    %747 = arith.addf %743, %746 : vector<24x24xf32>
    %c119 = arith.constant 119 : index
    %748 = memref.load %arg2[%c119] : memref<150xf32, #tpu.memory_space<smem>>
    %749 = vector.broadcast %748 : f32 to vector<24x24xf32>
    %750 = arith.mulf %21, %749 : vector<24x24xf32>
    %751 = arith.addf %747, %750 : vector<24x24xf32>
    %c120 = arith.constant 120 : index
    %752 = memref.load %arg2[%c120] : memref<150xf32, #tpu.memory_space<smem>>
    %753 = vector.broadcast %752 : f32 to vector<24x24xf32>
    %754 = arith.mulf %22, %753 : vector<24x24xf32>
    %755 = arith.addf %751, %754 : vector<24x24xf32>
    %c121 = arith.constant 121 : index
    %756 = memref.load %arg2[%c121] : memref<150xf32, #tpu.memory_space<smem>>
    %757 = vector.broadcast %756 : f32 to vector<24x24xf32>
    %758 = arith.mulf %23, %757 : vector<24x24xf32>
    %759 = arith.addf %755, %758 : vector<24x24xf32>
    %c122 = arith.constant 122 : index
    %760 = memref.load %arg2[%c122] : memref<150xf32, #tpu.memory_space<smem>>
    %761 = vector.broadcast %760 : f32 to vector<24x24xf32>
    %762 = arith.mulf %24, %761 : vector<24x24xf32>
    %763 = arith.addf %759, %762 : vector<24x24xf32>
    %c123 = arith.constant 123 : index
    %764 = memref.load %arg2[%c123] : memref<150xf32, #tpu.memory_space<smem>>
    %765 = vector.broadcast %764 : f32 to vector<24x24xf32>
    %766 = arith.mulf %25, %765 : vector<24x24xf32>
    %767 = arith.addf %763, %766 : vector<24x24xf32>
    %c124 = arith.constant 124 : index
    %768 = memref.load %arg2[%c124] : memref<150xf32, #tpu.memory_space<smem>>
    %769 = vector.broadcast %768 : f32 to vector<24x24xf32>
    %770 = arith.mulf %26, %769 : vector<24x24xf32>
    %771 = arith.addf %767, %770 : vector<24x24xf32>
    %c4_15 = arith.constant 4 : index
    %772 = memref.load %arg3[%c4_15] : memref<6xf32, #tpu.memory_space<smem>>
    %773 = vector.broadcast %772 : f32 to vector<24x24xf32>
    %774 = arith.addf %771, %773 : vector<24x24xf32>
    %775 = vector.extract_strided_slice %774 {offsets = [0, 0], sizes = [1, 24], strides = [1, 1]} : vector<24x24xf32> to vector<1x24xf32>
    %776 = vector.extract_strided_slice %774 {offsets = [2, 0], sizes = [1, 24], strides = [1, 1]} : vector<24x24xf32> to vector<1x24xf32>
    %777 = vector.extract_strided_slice %774 {offsets = [4, 0], sizes = [1, 24], strides = [1, 1]} : vector<24x24xf32> to vector<1x24xf32>
    %778 = vector.extract_strided_slice %774 {offsets = [6, 0], sizes = [1, 24], strides = [1, 1]} : vector<24x24xf32> to vector<1x24xf32>
    %779 = vector.extract_strided_slice %774 {offsets = [8, 0], sizes = [1, 24], strides = [1, 1]} : vector<24x24xf32> to vector<1x24xf32>
    %780 = vector.extract_strided_slice %774 {offsets = [10, 0], sizes = [1, 24], strides = [1, 1]} : vector<24x24xf32> to vector<1x24xf32>
    %781 = vector.extract_strided_slice %774 {offsets = [12, 0], sizes = [1, 24], strides = [1, 1]} : vector<24x24xf32> to vector<1x24xf32>
    %782 = vector.extract_strided_slice %774 {offsets = [14, 0], sizes = [1, 24], strides = [1, 1]} : vector<24x24xf32> to vector<1x24xf32>
    %783 = vector.extract_strided_slice %774 {offsets = [16, 0], sizes = [1, 24], strides = [1, 1]} : vector<24x24xf32> to vector<1x24xf32>
    %784 = vector.extract_strided_slice %774 {offsets = [18, 0], sizes = [1, 24], strides = [1, 1]} : vector<24x24xf32> to vector<1x24xf32>
    %785 = vector.extract_strided_slice %774 {offsets = [20, 0], sizes = [1, 24], strides = [1, 1]} : vector<24x24xf32> to vector<1x24xf32>
    %786 = vector.extract_strided_slice %774 {offsets = [22, 0], sizes = [1, 24], strides = [1, 1]} : vector<24x24xf32> to vector<1x24xf32>
    %787 = tpu.concatenate %775, %776, %777, %778, %779, %780, %781, %782, %783, %784, %785, %786 in 0 : vector<1x24xf32>, vector<1x24xf32>, vector<1x24xf32>, vector<1x24xf32>, vector<1x24xf32>, vector<1x24xf32>, vector<1x24xf32>, vector<1x24xf32>, vector<1x24xf32>, vector<1x24xf32>, vector<1x24xf32>, vector<1x24xf32> -> vector<12x24xf32>
    %788 = vector.extract_strided_slice %774 {offsets = [1, 0], sizes = [1, 24], strides = [1, 1]} : vector<24x24xf32> to vector<1x24xf32>
    %789 = vector.extract_strided_slice %774 {offsets = [3, 0], sizes = [1, 24], strides = [1, 1]} : vector<24x24xf32> to vector<1x24xf32>
    %790 = vector.extract_strided_slice %774 {offsets = [5, 0], sizes = [1, 24], strides = [1, 1]} : vector<24x24xf32> to vector<1x24xf32>
    %791 = vector.extract_strided_slice %774 {offsets = [7, 0], sizes = [1, 24], strides = [1, 1]} : vector<24x24xf32> to vector<1x24xf32>
    %792 = vector.extract_strided_slice %774 {offsets = [9, 0], sizes = [1, 24], strides = [1, 1]} : vector<24x24xf32> to vector<1x24xf32>
    %793 = vector.extract_strided_slice %774 {offsets = [11, 0], sizes = [1, 24], strides = [1, 1]} : vector<24x24xf32> to vector<1x24xf32>
    %794 = vector.extract_strided_slice %774 {offsets = [13, 0], sizes = [1, 24], strides = [1, 1]} : vector<24x24xf32> to vector<1x24xf32>
    %795 = vector.extract_strided_slice %774 {offsets = [15, 0], sizes = [1, 24], strides = [1, 1]} : vector<24x24xf32> to vector<1x24xf32>
    %796 = vector.extract_strided_slice %774 {offsets = [17, 0], sizes = [1, 24], strides = [1, 1]} : vector<24x24xf32> to vector<1x24xf32>
    %797 = vector.extract_strided_slice %774 {offsets = [19, 0], sizes = [1, 24], strides = [1, 1]} : vector<24x24xf32> to vector<1x24xf32>
    %798 = vector.extract_strided_slice %774 {offsets = [21, 0], sizes = [1, 24], strides = [1, 1]} : vector<24x24xf32> to vector<1x24xf32>
    %799 = vector.extract_strided_slice %774 {offsets = [23, 0], sizes = [1, 24], strides = [1, 1]} : vector<24x24xf32> to vector<1x24xf32>
    %800 = tpu.concatenate %788, %789, %790, %791, %792, %793, %794, %795, %796, %797, %798, %799 in 0 : vector<1x24xf32>, vector<1x24xf32>, vector<1x24xf32>, vector<1x24xf32>, vector<1x24xf32>, vector<1x24xf32>, vector<1x24xf32>, vector<1x24xf32>, vector<1x24xf32>, vector<1x24xf32>, vector<1x24xf32>, vector<1x24xf32> -> vector<12x24xf32>
    %801 = arith.maximumf %787, %800 : vector<12x24xf32>
    %802 = vector.extract_strided_slice %801 {offsets = [0, 0], sizes = [12, 1], strides = [1, 1]} : vector<12x24xf32> to vector<12x1xf32>
    %803 = vector.extract_strided_slice %801 {offsets = [0, 2], sizes = [12, 1], strides = [1, 1]} : vector<12x24xf32> to vector<12x1xf32>
    %804 = vector.extract_strided_slice %801 {offsets = [0, 4], sizes = [12, 1], strides = [1, 1]} : vector<12x24xf32> to vector<12x1xf32>
    %805 = vector.extract_strided_slice %801 {offsets = [0, 6], sizes = [12, 1], strides = [1, 1]} : vector<12x24xf32> to vector<12x1xf32>
    %806 = vector.extract_strided_slice %801 {offsets = [0, 8], sizes = [12, 1], strides = [1, 1]} : vector<12x24xf32> to vector<12x1xf32>
    %807 = vector.extract_strided_slice %801 {offsets = [0, 10], sizes = [12, 1], strides = [1, 1]} : vector<12x24xf32> to vector<12x1xf32>
    %808 = vector.extract_strided_slice %801 {offsets = [0, 12], sizes = [12, 1], strides = [1, 1]} : vector<12x24xf32> to vector<12x1xf32>
    %809 = vector.extract_strided_slice %801 {offsets = [0, 14], sizes = [12, 1], strides = [1, 1]} : vector<12x24xf32> to vector<12x1xf32>
    %810 = vector.extract_strided_slice %801 {offsets = [0, 16], sizes = [12, 1], strides = [1, 1]} : vector<12x24xf32> to vector<12x1xf32>
    %811 = vector.extract_strided_slice %801 {offsets = [0, 18], sizes = [12, 1], strides = [1, 1]} : vector<12x24xf32> to vector<12x1xf32>
    %812 = vector.extract_strided_slice %801 {offsets = [0, 20], sizes = [12, 1], strides = [1, 1]} : vector<12x24xf32> to vector<12x1xf32>
    %813 = vector.extract_strided_slice %801 {offsets = [0, 22], sizes = [12, 1], strides = [1, 1]} : vector<12x24xf32> to vector<12x1xf32>
    %814 = tpu.concatenate %802, %803, %804, %805, %806, %807, %808, %809, %810, %811, %812, %813 in 1 : vector<12x1xf32>, vector<12x1xf32>, vector<12x1xf32>, vector<12x1xf32>, vector<12x1xf32>, vector<12x1xf32>, vector<12x1xf32>, vector<12x1xf32>, vector<12x1xf32>, vector<12x1xf32>, vector<12x1xf32>, vector<12x1xf32> -> vector<12x12xf32>
    %815 = vector.extract_strided_slice %801 {offsets = [0, 1], sizes = [12, 1], strides = [1, 1]} : vector<12x24xf32> to vector<12x1xf32>
    %816 = vector.extract_strided_slice %801 {offsets = [0, 3], sizes = [12, 1], strides = [1, 1]} : vector<12x24xf32> to vector<12x1xf32>
    %817 = vector.extract_strided_slice %801 {offsets = [0, 5], sizes = [12, 1], strides = [1, 1]} : vector<12x24xf32> to vector<12x1xf32>
    %818 = vector.extract_strided_slice %801 {offsets = [0, 7], sizes = [12, 1], strides = [1, 1]} : vector<12x24xf32> to vector<12x1xf32>
    %819 = vector.extract_strided_slice %801 {offsets = [0, 9], sizes = [12, 1], strides = [1, 1]} : vector<12x24xf32> to vector<12x1xf32>
    %820 = vector.extract_strided_slice %801 {offsets = [0, 11], sizes = [12, 1], strides = [1, 1]} : vector<12x24xf32> to vector<12x1xf32>
    %821 = vector.extract_strided_slice %801 {offsets = [0, 13], sizes = [12, 1], strides = [1, 1]} : vector<12x24xf32> to vector<12x1xf32>
    %822 = vector.extract_strided_slice %801 {offsets = [0, 15], sizes = [12, 1], strides = [1, 1]} : vector<12x24xf32> to vector<12x1xf32>
    %823 = vector.extract_strided_slice %801 {offsets = [0, 17], sizes = [12, 1], strides = [1, 1]} : vector<12x24xf32> to vector<12x1xf32>
    %824 = vector.extract_strided_slice %801 {offsets = [0, 19], sizes = [12, 1], strides = [1, 1]} : vector<12x24xf32> to vector<12x1xf32>
    %825 = vector.extract_strided_slice %801 {offsets = [0, 21], sizes = [12, 1], strides = [1, 1]} : vector<12x24xf32> to vector<12x1xf32>
    %826 = vector.extract_strided_slice %801 {offsets = [0, 23], sizes = [12, 1], strides = [1, 1]} : vector<12x24xf32> to vector<12x1xf32>
    %827 = tpu.concatenate %815, %816, %817, %818, %819, %820, %821, %822, %823, %824, %825, %826 in 1 : vector<12x1xf32>, vector<12x1xf32>, vector<12x1xf32>, vector<12x1xf32>, vector<12x1xf32>, vector<12x1xf32>, vector<12x1xf32>, vector<12x1xf32>, vector<12x1xf32>, vector<12x1xf32>, vector<12x1xf32>, vector<12x1xf32> -> vector<12x12xf32>
    %828 = arith.maximumf %814, %827 : vector<12x12xf32>
    %829 = math.tanh %828 : vector<12x12xf32>
    %cst_16 = arith.constant 0.000000e+00 : f32
    %830 = vector.broadcast %cst_16 : f32 to vector<12x12xf32>
    %831 = arith.maximumf %829, %830 : vector<12x12xf32>
    %cst_17 = arith.constant 0.000000e+00 : f32
    %832 = vector.broadcast %cst_17 : f32 to vector<24x24xf32>
    %c125 = arith.constant 125 : index
    %833 = memref.load %arg2[%c125] : memref<150xf32, #tpu.memory_space<smem>>
    %834 = vector.broadcast %833 : f32 to vector<24x24xf32>
    %835 = arith.mulf %2, %834 : vector<24x24xf32>
    %836 = arith.addf %832, %835 : vector<24x24xf32>
    %c126 = arith.constant 126 : index
    %837 = memref.load %arg2[%c126] : memref<150xf32, #tpu.memory_space<smem>>
    %838 = vector.broadcast %837 : f32 to vector<24x24xf32>
    %839 = arith.mulf %3, %838 : vector<24x24xf32>
    %840 = arith.addf %836, %839 : vector<24x24xf32>
    %c127 = arith.constant 127 : index
    %841 = memref.load %arg2[%c127] : memref<150xf32, #tpu.memory_space<smem>>
    %842 = vector.broadcast %841 : f32 to vector<24x24xf32>
    %843 = arith.mulf %4, %842 : vector<24x24xf32>
    %844 = arith.addf %840, %843 : vector<24x24xf32>
    %c128 = arith.constant 128 : index
    %845 = memref.load %arg2[%c128] : memref<150xf32, #tpu.memory_space<smem>>
    %846 = vector.broadcast %845 : f32 to vector<24x24xf32>
    %847 = arith.mulf %5, %846 : vector<24x24xf32>
    %848 = arith.addf %844, %847 : vector<24x24xf32>
    %c129 = arith.constant 129 : index
    %849 = memref.load %arg2[%c129] : memref<150xf32, #tpu.memory_space<smem>>
    %850 = vector.broadcast %849 : f32 to vector<24x24xf32>
    %851 = arith.mulf %6, %850 : vector<24x24xf32>
    %852 = arith.addf %848, %851 : vector<24x24xf32>
    %c130 = arith.constant 130 : index
    %853 = memref.load %arg2[%c130] : memref<150xf32, #tpu.memory_space<smem>>
    %854 = vector.broadcast %853 : f32 to vector<24x24xf32>
    %855 = arith.mulf %7, %854 : vector<24x24xf32>
    %856 = arith.addf %852, %855 : vector<24x24xf32>
    %c131 = arith.constant 131 : index
    %857 = memref.load %arg2[%c131] : memref<150xf32, #tpu.memory_space<smem>>
    %858 = vector.broadcast %857 : f32 to vector<24x24xf32>
    %859 = arith.mulf %8, %858 : vector<24x24xf32>
    %860 = arith.addf %856, %859 : vector<24x24xf32>
    %c132 = arith.constant 132 : index
    %861 = memref.load %arg2[%c132] : memref<150xf32, #tpu.memory_space<smem>>
    %862 = vector.broadcast %861 : f32 to vector<24x24xf32>
    %863 = arith.mulf %9, %862 : vector<24x24xf32>
    %864 = arith.addf %860, %863 : vector<24x24xf32>
    %c133 = arith.constant 133 : index
    %865 = memref.load %arg2[%c133] : memref<150xf32, #tpu.memory_space<smem>>
    %866 = vector.broadcast %865 : f32 to vector<24x24xf32>
    %867 = arith.mulf %10, %866 : vector<24x24xf32>
    %868 = arith.addf %864, %867 : vector<24x24xf32>
    %c134 = arith.constant 134 : index
    %869 = memref.load %arg2[%c134] : memref<150xf32, #tpu.memory_space<smem>>
    %870 = vector.broadcast %869 : f32 to vector<24x24xf32>
    %871 = arith.mulf %11, %870 : vector<24x24xf32>
    %872 = arith.addf %868, %871 : vector<24x24xf32>
    %c135 = arith.constant 135 : index
    %873 = memref.load %arg2[%c135] : memref<150xf32, #tpu.memory_space<smem>>
    %874 = vector.broadcast %873 : f32 to vector<24x24xf32>
    %875 = arith.mulf %12, %874 : vector<24x24xf32>
    %876 = arith.addf %872, %875 : vector<24x24xf32>
    %c136 = arith.constant 136 : index
    %877 = memref.load %arg2[%c136] : memref<150xf32, #tpu.memory_space<smem>>
    %878 = vector.broadcast %877 : f32 to vector<24x24xf32>
    %879 = arith.mulf %13, %878 : vector<24x24xf32>
    %880 = arith.addf %876, %879 : vector<24x24xf32>
    %c137 = arith.constant 137 : index
    %881 = memref.load %arg2[%c137] : memref<150xf32, #tpu.memory_space<smem>>
    %882 = vector.broadcast %881 : f32 to vector<24x24xf32>
    %883 = arith.mulf %14, %882 : vector<24x24xf32>
    %884 = arith.addf %880, %883 : vector<24x24xf32>
    %c138 = arith.constant 138 : index
    %885 = memref.load %arg2[%c138] : memref<150xf32, #tpu.memory_space<smem>>
    %886 = vector.broadcast %885 : f32 to vector<24x24xf32>
    %887 = arith.mulf %15, %886 : vector<24x24xf32>
    %888 = arith.addf %884, %887 : vector<24x24xf32>
    %c139 = arith.constant 139 : index
    %889 = memref.load %arg2[%c139] : memref<150xf32, #tpu.memory_space<smem>>
    %890 = vector.broadcast %889 : f32 to vector<24x24xf32>
    %891 = arith.mulf %16, %890 : vector<24x24xf32>
    %892 = arith.addf %888, %891 : vector<24x24xf32>
    %c140 = arith.constant 140 : index
    %893 = memref.load %arg2[%c140] : memref<150xf32, #tpu.memory_space<smem>>
    %894 = vector.broadcast %893 : f32 to vector<24x24xf32>
    %895 = arith.mulf %17, %894 : vector<24x24xf32>
    %896 = arith.addf %892, %895 : vector<24x24xf32>
    %c141 = arith.constant 141 : index
    %897 = memref.load %arg2[%c141] : memref<150xf32, #tpu.memory_space<smem>>
    %898 = vector.broadcast %897 : f32 to vector<24x24xf32>
    %899 = arith.mulf %18, %898 : vector<24x24xf32>
    %900 = arith.addf %896, %899 : vector<24x24xf32>
    %c142 = arith.constant 142 : index
    %901 = memref.load %arg2[%c142] : memref<150xf32, #tpu.memory_space<smem>>
    %902 = vector.broadcast %901 : f32 to vector<24x24xf32>
    %903 = arith.mulf %19, %902 : vector<24x24xf32>
    %904 = arith.addf %900, %903 : vector<24x24xf32>
    %c143 = arith.constant 143 : index
    %905 = memref.load %arg2[%c143] : memref<150xf32, #tpu.memory_space<smem>>
    %906 = vector.broadcast %905 : f32 to vector<24x24xf32>
    %907 = arith.mulf %20, %906 : vector<24x24xf32>
    %908 = arith.addf %904, %907 : vector<24x24xf32>
    %c144 = arith.constant 144 : index
    %909 = memref.load %arg2[%c144] : memref<150xf32, #tpu.memory_space<smem>>
    %910 = vector.broadcast %909 : f32 to vector<24x24xf32>
    %911 = arith.mulf %21, %910 : vector<24x24xf32>
    %912 = arith.addf %908, %911 : vector<24x24xf32>
    %c145 = arith.constant 145 : index
    %913 = memref.load %arg2[%c145] : memref<150xf32, #tpu.memory_space<smem>>
    %914 = vector.broadcast %913 : f32 to vector<24x24xf32>
    %915 = arith.mulf %22, %914 : vector<24x24xf32>
    %916 = arith.addf %912, %915 : vector<24x24xf32>
    %c146 = arith.constant 146 : index
    %917 = memref.load %arg2[%c146] : memref<150xf32, #tpu.memory_space<smem>>
    %918 = vector.broadcast %917 : f32 to vector<24x24xf32>
    %919 = arith.mulf %23, %918 : vector<24x24xf32>
    %920 = arith.addf %916, %919 : vector<24x24xf32>
    %c147 = arith.constant 147 : index
    %921 = memref.load %arg2[%c147] : memref<150xf32, #tpu.memory_space<smem>>
    %922 = vector.broadcast %921 : f32 to vector<24x24xf32>
    %923 = arith.mulf %24, %922 : vector<24x24xf32>
    %924 = arith.addf %920, %923 : vector<24x24xf32>
    %c148 = arith.constant 148 : index
    %925 = memref.load %arg2[%c148] : memref<150xf32, #tpu.memory_space<smem>>
    %926 = vector.broadcast %925 : f32 to vector<24x24xf32>
    %927 = arith.mulf %25, %926 : vector<24x24xf32>
    %928 = arith.addf %924, %927 : vector<24x24xf32>
    %c149 = arith.constant 149 : index
    %929 = memref.load %arg2[%c149] : memref<150xf32, #tpu.memory_space<smem>>
    %930 = vector.broadcast %929 : f32 to vector<24x24xf32>
    %931 = arith.mulf %26, %930 : vector<24x24xf32>
    %932 = arith.addf %928, %931 : vector<24x24xf32>
    %c5_18 = arith.constant 5 : index
    %933 = memref.load %arg3[%c5_18] : memref<6xf32, #tpu.memory_space<smem>>
    %934 = vector.broadcast %933 : f32 to vector<24x24xf32>
    %935 = arith.addf %932, %934 : vector<24x24xf32>
    %936 = vector.extract_strided_slice %935 {offsets = [0, 0], sizes = [1, 24], strides = [1, 1]} : vector<24x24xf32> to vector<1x24xf32>
    %937 = vector.extract_strided_slice %935 {offsets = [2, 0], sizes = [1, 24], strides = [1, 1]} : vector<24x24xf32> to vector<1x24xf32>
    %938 = vector.extract_strided_slice %935 {offsets = [4, 0], sizes = [1, 24], strides = [1, 1]} : vector<24x24xf32> to vector<1x24xf32>
    %939 = vector.extract_strided_slice %935 {offsets = [6, 0], sizes = [1, 24], strides = [1, 1]} : vector<24x24xf32> to vector<1x24xf32>
    %940 = vector.extract_strided_slice %935 {offsets = [8, 0], sizes = [1, 24], strides = [1, 1]} : vector<24x24xf32> to vector<1x24xf32>
    %941 = vector.extract_strided_slice %935 {offsets = [10, 0], sizes = [1, 24], strides = [1, 1]} : vector<24x24xf32> to vector<1x24xf32>
    %942 = vector.extract_strided_slice %935 {offsets = [12, 0], sizes = [1, 24], strides = [1, 1]} : vector<24x24xf32> to vector<1x24xf32>
    %943 = vector.extract_strided_slice %935 {offsets = [14, 0], sizes = [1, 24], strides = [1, 1]} : vector<24x24xf32> to vector<1x24xf32>
    %944 = vector.extract_strided_slice %935 {offsets = [16, 0], sizes = [1, 24], strides = [1, 1]} : vector<24x24xf32> to vector<1x24xf32>
    %945 = vector.extract_strided_slice %935 {offsets = [18, 0], sizes = [1, 24], strides = [1, 1]} : vector<24x24xf32> to vector<1x24xf32>
    %946 = vector.extract_strided_slice %935 {offsets = [20, 0], sizes = [1, 24], strides = [1, 1]} : vector<24x24xf32> to vector<1x24xf32>
    %947 = vector.extract_strided_slice %935 {offsets = [22, 0], sizes = [1, 24], strides = [1, 1]} : vector<24x24xf32> to vector<1x24xf32>
    %948 = tpu.concatenate %936, %937, %938, %939, %940, %941, %942, %943, %944, %945, %946, %947 in 0 : vector<1x24xf32>, vector<1x24xf32>, vector<1x24xf32>, vector<1x24xf32>, vector<1x24xf32>, vector<1x24xf32>, vector<1x24xf32>, vector<1x24xf32>, vector<1x24xf32>, vector<1x24xf32>, vector<1x24xf32>, vector<1x24xf32> -> vector<12x24xf32>
    %949 = vector.extract_strided_slice %935 {offsets = [1, 0], sizes = [1, 24], strides = [1, 1]} : vector<24x24xf32> to vector<1x24xf32>
    %950 = vector.extract_strided_slice %935 {offsets = [3, 0], sizes = [1, 24], strides = [1, 1]} : vector<24x24xf32> to vector<1x24xf32>
    %951 = vector.extract_strided_slice %935 {offsets = [5, 0], sizes = [1, 24], strides = [1, 1]} : vector<24x24xf32> to vector<1x24xf32>
    %952 = vector.extract_strided_slice %935 {offsets = [7, 0], sizes = [1, 24], strides = [1, 1]} : vector<24x24xf32> to vector<1x24xf32>
    %953 = vector.extract_strided_slice %935 {offsets = [9, 0], sizes = [1, 24], strides = [1, 1]} : vector<24x24xf32> to vector<1x24xf32>
    %954 = vector.extract_strided_slice %935 {offsets = [11, 0], sizes = [1, 24], strides = [1, 1]} : vector<24x24xf32> to vector<1x24xf32>
    %955 = vector.extract_strided_slice %935 {offsets = [13, 0], sizes = [1, 24], strides = [1, 1]} : vector<24x24xf32> to vector<1x24xf32>
    %956 = vector.extract_strided_slice %935 {offsets = [15, 0], sizes = [1, 24], strides = [1, 1]} : vector<24x24xf32> to vector<1x24xf32>
    %957 = vector.extract_strided_slice %935 {offsets = [17, 0], sizes = [1, 24], strides = [1, 1]} : vector<24x24xf32> to vector<1x24xf32>
    %958 = vector.extract_strided_slice %935 {offsets = [19, 0], sizes = [1, 24], strides = [1, 1]} : vector<24x24xf32> to vector<1x24xf32>
    %959 = vector.extract_strided_slice %935 {offsets = [21, 0], sizes = [1, 24], strides = [1, 1]} : vector<24x24xf32> to vector<1x24xf32>
    %960 = vector.extract_strided_slice %935 {offsets = [23, 0], sizes = [1, 24], strides = [1, 1]} : vector<24x24xf32> to vector<1x24xf32>
    %961 = tpu.concatenate %949, %950, %951, %952, %953, %954, %955, %956, %957, %958, %959, %960 in 0 : vector<1x24xf32>, vector<1x24xf32>, vector<1x24xf32>, vector<1x24xf32>, vector<1x24xf32>, vector<1x24xf32>, vector<1x24xf32>, vector<1x24xf32>, vector<1x24xf32>, vector<1x24xf32>, vector<1x24xf32>, vector<1x24xf32> -> vector<12x24xf32>
    %962 = arith.maximumf %948, %961 : vector<12x24xf32>
    %963 = vector.extract_strided_slice %962 {offsets = [0, 0], sizes = [12, 1], strides = [1, 1]} : vector<12x24xf32> to vector<12x1xf32>
    %964 = vector.extract_strided_slice %962 {offsets = [0, 2], sizes = [12, 1], strides = [1, 1]} : vector<12x24xf32> to vector<12x1xf32>
    %965 = vector.extract_strided_slice %962 {offsets = [0, 4], sizes = [12, 1], strides = [1, 1]} : vector<12x24xf32> to vector<12x1xf32>
    %966 = vector.extract_strided_slice %962 {offsets = [0, 6], sizes = [12, 1], strides = [1, 1]} : vector<12x24xf32> to vector<12x1xf32>
    %967 = vector.extract_strided_slice %962 {offsets = [0, 8], sizes = [12, 1], strides = [1, 1]} : vector<12x24xf32> to vector<12x1xf32>
    %968 = vector.extract_strided_slice %962 {offsets = [0, 10], sizes = [12, 1], strides = [1, 1]} : vector<12x24xf32> to vector<12x1xf32>
    %969 = vector.extract_strided_slice %962 {offsets = [0, 12], sizes = [12, 1], strides = [1, 1]} : vector<12x24xf32> to vector<12x1xf32>
    %970 = vector.extract_strided_slice %962 {offsets = [0, 14], sizes = [12, 1], strides = [1, 1]} : vector<12x24xf32> to vector<12x1xf32>
    %971 = vector.extract_strided_slice %962 {offsets = [0, 16], sizes = [12, 1], strides = [1, 1]} : vector<12x24xf32> to vector<12x1xf32>
    %972 = vector.extract_strided_slice %962 {offsets = [0, 18], sizes = [12, 1], strides = [1, 1]} : vector<12x24xf32> to vector<12x1xf32>
    %973 = vector.extract_strided_slice %962 {offsets = [0, 20], sizes = [12, 1], strides = [1, 1]} : vector<12x24xf32> to vector<12x1xf32>
    %974 = vector.extract_strided_slice %962 {offsets = [0, 22], sizes = [12, 1], strides = [1, 1]} : vector<12x24xf32> to vector<12x1xf32>
    %975 = tpu.concatenate %963, %964, %965, %966, %967, %968, %969, %970, %971, %972, %973, %974 in 1 : vector<12x1xf32>, vector<12x1xf32>, vector<12x1xf32>, vector<12x1xf32>, vector<12x1xf32>, vector<12x1xf32>, vector<12x1xf32>, vector<12x1xf32>, vector<12x1xf32>, vector<12x1xf32>, vector<12x1xf32>, vector<12x1xf32> -> vector<12x12xf32>
    %976 = vector.extract_strided_slice %962 {offsets = [0, 1], sizes = [12, 1], strides = [1, 1]} : vector<12x24xf32> to vector<12x1xf32>
    %977 = vector.extract_strided_slice %962 {offsets = [0, 3], sizes = [12, 1], strides = [1, 1]} : vector<12x24xf32> to vector<12x1xf32>
    %978 = vector.extract_strided_slice %962 {offsets = [0, 5], sizes = [12, 1], strides = [1, 1]} : vector<12x24xf32> to vector<12x1xf32>
    %979 = vector.extract_strided_slice %962 {offsets = [0, 7], sizes = [12, 1], strides = [1, 1]} : vector<12x24xf32> to vector<12x1xf32>
    %980 = vector.extract_strided_slice %962 {offsets = [0, 9], sizes = [12, 1], strides = [1, 1]} : vector<12x24xf32> to vector<12x1xf32>
    %981 = vector.extract_strided_slice %962 {offsets = [0, 11], sizes = [12, 1], strides = [1, 1]} : vector<12x24xf32> to vector<12x1xf32>
    %982 = vector.extract_strided_slice %962 {offsets = [0, 13], sizes = [12, 1], strides = [1, 1]} : vector<12x24xf32> to vector<12x1xf32>
    %983 = vector.extract_strided_slice %962 {offsets = [0, 15], sizes = [12, 1], strides = [1, 1]} : vector<12x24xf32> to vector<12x1xf32>
    %984 = vector.extract_strided_slice %962 {offsets = [0, 17], sizes = [12, 1], strides = [1, 1]} : vector<12x24xf32> to vector<12x1xf32>
    %985 = vector.extract_strided_slice %962 {offsets = [0, 19], sizes = [12, 1], strides = [1, 1]} : vector<12x24xf32> to vector<12x1xf32>
    %986 = vector.extract_strided_slice %962 {offsets = [0, 21], sizes = [12, 1], strides = [1, 1]} : vector<12x24xf32> to vector<12x1xf32>
    %987 = vector.extract_strided_slice %962 {offsets = [0, 23], sizes = [12, 1], strides = [1, 1]} : vector<12x24xf32> to vector<12x1xf32>
    %988 = tpu.concatenate %976, %977, %978, %979, %980, %981, %982, %983, %984, %985, %986, %987 in 1 : vector<12x1xf32>, vector<12x1xf32>, vector<12x1xf32>, vector<12x1xf32>, vector<12x1xf32>, vector<12x1xf32>, vector<12x1xf32>, vector<12x1xf32>, vector<12x1xf32>, vector<12x1xf32>, vector<12x1xf32>, vector<12x1xf32> -> vector<12x12xf32>
    %989 = arith.maximumf %975, %988 : vector<12x12xf32>
    %990 = math.tanh %989 : vector<12x12xf32>
    %cst_19 = arith.constant 0.000000e+00 : f32
    %991 = vector.broadcast %cst_19 : f32 to vector<12x12xf32>
    %992 = arith.maximumf %990, %991 : vector<12x12xf32>
    %c0_20 = arith.constant 0 : index
    %c0_21 = arith.constant 0 : index
    %993 = vector.load %arg4[%c0_20, %c0_21] : memref<14x54xf32, #tpu.memory_space<vmem>>, vector<14x54xf32>
    %c0_22 = arith.constant 0 : index
    %c0_23 = arith.constant 0 : index
    %994 = vector.load %arg5[%c0_22, %c0_23] : memref<14x1xf32, #tpu.memory_space<vmem>>, vector<14x1xf32>
    %995 = vector.extract_strided_slice %187 {offsets = [0, 0], sizes = [1, 12], strides = [1, 1]} : vector<12x12xf32> to vector<1x12xf32>
    %996 = vector.extract_strided_slice %348 {offsets = [0, 0], sizes = [1, 12], strides = [1, 1]} : vector<12x12xf32> to vector<1x12xf32>
    %997 = vector.extract_strided_slice %509 {offsets = [0, 0], sizes = [1, 12], strides = [1, 1]} : vector<12x12xf32> to vector<1x12xf32>
    %998 = vector.extract_strided_slice %670 {offsets = [0, 0], sizes = [1, 12], strides = [1, 1]} : vector<12x12xf32> to vector<1x12xf32>
    %999 = vector.extract_strided_slice %831 {offsets = [0, 0], sizes = [1, 12], strides = [1, 1]} : vector<12x12xf32> to vector<1x12xf32>
    %1000 = vector.extract_strided_slice %992 {offsets = [0, 0], sizes = [1, 12], strides = [1, 1]} : vector<12x12xf32> to vector<1x12xf32>
    %1001 = vector.extract_strided_slice %187 {offsets = [1, 0], sizes = [1, 12], strides = [1, 1]} : vector<12x12xf32> to vector<1x12xf32>
    %1002 = vector.extract_strided_slice %348 {offsets = [1, 0], sizes = [1, 12], strides = [1, 1]} : vector<12x12xf32> to vector<1x12xf32>
    %1003 = vector.extract_strided_slice %509 {offsets = [1, 0], sizes = [1, 12], strides = [1, 1]} : vector<12x12xf32> to vector<1x12xf32>
    %1004 = vector.extract_strided_slice %670 {offsets = [1, 0], sizes = [1, 12], strides = [1, 1]} : vector<12x12xf32> to vector<1x12xf32>
    %1005 = vector.extract_strided_slice %831 {offsets = [1, 0], sizes = [1, 12], strides = [1, 1]} : vector<12x12xf32> to vector<1x12xf32>
    %1006 = vector.extract_strided_slice %992 {offsets = [1, 0], sizes = [1, 12], strides = [1, 1]} : vector<12x12xf32> to vector<1x12xf32>
    %1007 = vector.extract_strided_slice %187 {offsets = [2, 0], sizes = [1, 12], strides = [1, 1]} : vector<12x12xf32> to vector<1x12xf32>
    %1008 = vector.extract_strided_slice %348 {offsets = [2, 0], sizes = [1, 12], strides = [1, 1]} : vector<12x12xf32> to vector<1x12xf32>
    %1009 = vector.extract_strided_slice %509 {offsets = [2, 0], sizes = [1, 12], strides = [1, 1]} : vector<12x12xf32> to vector<1x12xf32>
    %1010 = vector.extract_strided_slice %670 {offsets = [2, 0], sizes = [1, 12], strides = [1, 1]} : vector<12x12xf32> to vector<1x12xf32>
    %1011 = vector.extract_strided_slice %831 {offsets = [2, 0], sizes = [1, 12], strides = [1, 1]} : vector<12x12xf32> to vector<1x12xf32>
    %1012 = vector.extract_strided_slice %992 {offsets = [2, 0], sizes = [1, 12], strides = [1, 1]} : vector<12x12xf32> to vector<1x12xf32>
    %1013 = tpu.concatenate %995, %996, %997, %998, %999, %1000, %1001, %1002, %1003, %1004, %1005, %1006, %1007, %1008, %1009, %1010 in 0 : vector<1x12xf32>, vector<1x12xf32>, vector<1x12xf32>, vector<1x12xf32>, vector<1x12xf32>, vector<1x12xf32>, vector<1x12xf32>, vector<1x12xf32>, vector<1x12xf32>, vector<1x12xf32>, vector<1x12xf32>, vector<1x12xf32>, vector<1x12xf32>, vector<1x12xf32>, vector<1x12xf32>, vector<1x12xf32> -> vector<16x12xf32>
    %1014 = tpu.concatenate %1011, %1012 in 0 : vector<1x12xf32>, vector<1x12xf32> -> vector<2x12xf32>
    %1015 = tpu.concatenate %1013, %1014 in 0 : vector<16x12xf32>, vector<2x12xf32> -> vector<18x12xf32>
    %1016 = vector.extract_strided_slice %1015 {offsets = [0, 0], sizes = [18, 10], strides = [1, 1]} : vector<18x12xf32> to vector<18x10xf32>
    %1017 = vector.extract_strided_slice %1015 {offsets = [0, 1], sizes = [18, 10], strides = [1, 1]} : vector<18x12xf32> to vector<18x10xf32>
    %1018 = vector.extract_strided_slice %1015 {offsets = [0, 2], sizes = [18, 10], strides = [1, 1]} : vector<18x12xf32> to vector<18x10xf32>
    %1019 = tpu.concatenate %1016, %1017, %1018 in 0 : vector<18x10xf32>, vector<18x10xf32>, vector<18x10xf32> -> vector<54x10xf32>
    %cst_24 = arith.constant dense<0.000000e+00> : vector<14x10xf32>
    %1020 = tpu.matmul %993, %1019, %cst_24 {dimension_numbers = #tpu.dot_dimension_numbers<[1], [0], [0], [1], [0, 0, 1, 1], [], []>} : vector<14x54xf32>, vector<54x10xf32>, vector<14x10xf32> -> vector<14x10xf32>
    %1021 = vector.broadcast %994 : vector<14x1xf32> to vector<14x10xf32>
    %1022 = arith.addf %1020, %1021 : vector<14x10xf32>
    %1023 = vector.extract_strided_slice %187 {offsets = [1, 0], sizes = [1, 12], strides = [1, 1]} : vector<12x12xf32> to vector<1x12xf32>
    %1024 = vector.extract_strided_slice %348 {offsets = [1, 0], sizes = [1, 12], strides = [1, 1]} : vector<12x12xf32> to vector<1x12xf32>
    %1025 = vector.extract_strided_slice %509 {offsets = [1, 0], sizes = [1, 12], strides = [1, 1]} : vector<12x12xf32> to vector<1x12xf32>
    %1026 = vector.extract_strided_slice %670 {offsets = [1, 0], sizes = [1, 12], strides = [1, 1]} : vector<12x12xf32> to vector<1x12xf32>
    %1027 = vector.extract_strided_slice %831 {offsets = [1, 0], sizes = [1, 12], strides = [1, 1]} : vector<12x12xf32> to vector<1x12xf32>
    %1028 = vector.extract_strided_slice %992 {offsets = [1, 0], sizes = [1, 12], strides = [1, 1]} : vector<12x12xf32> to vector<1x12xf32>
    %1029 = vector.extract_strided_slice %187 {offsets = [2, 0], sizes = [1, 12], strides = [1, 1]} : vector<12x12xf32> to vector<1x12xf32>
    %1030 = vector.extract_strided_slice %348 {offsets = [2, 0], sizes = [1, 12], strides = [1, 1]} : vector<12x12xf32> to vector<1x12xf32>
    %1031 = vector.extract_strided_slice %509 {offsets = [2, 0], sizes = [1, 12], strides = [1, 1]} : vector<12x12xf32> to vector<1x12xf32>
    %1032 = vector.extract_strided_slice %670 {offsets = [2, 0], sizes = [1, 12], strides = [1, 1]} : vector<12x12xf32> to vector<1x12xf32>
    %1033 = vector.extract_strided_slice %831 {offsets = [2, 0], sizes = [1, 12], strides = [1, 1]} : vector<12x12xf32> to vector<1x12xf32>
    %1034 = vector.extract_strided_slice %992 {offsets = [2, 0], sizes = [1, 12], strides = [1, 1]} : vector<12x12xf32> to vector<1x12xf32>
    %1035 = vector.extract_strided_slice %187 {offsets = [3, 0], sizes = [1, 12], strides = [1, 1]} : vector<12x12xf32> to vector<1x12xf32>
    %1036 = vector.extract_strided_slice %348 {offsets = [3, 0], sizes = [1, 12], strides = [1, 1]} : vector<12x12xf32> to vector<1x12xf32>
    %1037 = vector.extract_strided_slice %509 {offsets = [3, 0], sizes = [1, 12], strides = [1, 1]} : vector<12x12xf32> to vector<1x12xf32>
    %1038 = vector.extract_strided_slice %670 {offsets = [3, 0], sizes = [1, 12], strides = [1, 1]} : vector<12x12xf32> to vector<1x12xf32>
    %1039 = vector.extract_strided_slice %831 {offsets = [3, 0], sizes = [1, 12], strides = [1, 1]} : vector<12x12xf32> to vector<1x12xf32>
    %1040 = vector.extract_strided_slice %992 {offsets = [3, 0], sizes = [1, 12], strides = [1, 1]} : vector<12x12xf32> to vector<1x12xf32>
    %1041 = tpu.concatenate %1023, %1024, %1025, %1026, %1027, %1028, %1029, %1030, %1031, %1032, %1033, %1034, %1035, %1036, %1037, %1038 in 0 : vector<1x12xf32>, vector<1x12xf32>, vector<1x12xf32>, vector<1x12xf32>, vector<1x12xf32>, vector<1x12xf32>, vector<1x12xf32>, vector<1x12xf32>, vector<1x12xf32>, vector<1x12xf32>, vector<1x12xf32>, vector<1x12xf32>, vector<1x12xf32>, vector<1x12xf32>, vector<1x12xf32>, vector<1x12xf32> -> vector<16x12xf32>
    %1042 = tpu.concatenate %1039, %1040 in 0 : vector<1x12xf32>, vector<1x12xf32> -> vector<2x12xf32>
    %1043 = tpu.concatenate %1041, %1042 in 0 : vector<16x12xf32>, vector<2x12xf32> -> vector<18x12xf32>
    %1044 = vector.extract_strided_slice %1043 {offsets = [0, 0], sizes = [18, 10], strides = [1, 1]} : vector<18x12xf32> to vector<18x10xf32>
    %1045 = vector.extract_strided_slice %1043 {offsets = [0, 1], sizes = [18, 10], strides = [1, 1]} : vector<18x12xf32> to vector<18x10xf32>
    %1046 = vector.extract_strided_slice %1043 {offsets = [0, 2], sizes = [18, 10], strides = [1, 1]} : vector<18x12xf32> to vector<18x10xf32>
    %1047 = tpu.concatenate %1044, %1045, %1046 in 0 : vector<18x10xf32>, vector<18x10xf32>, vector<18x10xf32> -> vector<54x10xf32>
    %cst_25 = arith.constant dense<0.000000e+00> : vector<14x10xf32>
    %1048 = tpu.matmul %993, %1047, %cst_25 {dimension_numbers = #tpu.dot_dimension_numbers<[1], [0], [0], [1], [0, 0, 1, 1], [], []>} : vector<14x54xf32>, vector<54x10xf32>, vector<14x10xf32> -> vector<14x10xf32>
    %1049 = vector.broadcast %994 : vector<14x1xf32> to vector<14x10xf32>
    %1050 = arith.addf %1048, %1049 : vector<14x10xf32>
    %1051 = arith.maximumf %1022, %1050 : vector<14x10xf32>
    %1052 = vector.extract_strided_slice %1051 {offsets = [0, 0], sizes = [14, 1], strides = [1, 1]} : vector<14x10xf32> to vector<14x1xf32>
    %1053 = vector.extract_strided_slice %1051 {offsets = [0, 2], sizes = [14, 1], strides = [1, 1]} : vector<14x10xf32> to vector<14x1xf32>
    %1054 = vector.extract_strided_slice %1051 {offsets = [0, 4], sizes = [14, 1], strides = [1, 1]} : vector<14x10xf32> to vector<14x1xf32>
    %1055 = vector.extract_strided_slice %1051 {offsets = [0, 6], sizes = [14, 1], strides = [1, 1]} : vector<14x10xf32> to vector<14x1xf32>
    %1056 = vector.extract_strided_slice %1051 {offsets = [0, 8], sizes = [14, 1], strides = [1, 1]} : vector<14x10xf32> to vector<14x1xf32>
    %1057 = tpu.concatenate %1052, %1053, %1054, %1055, %1056 in 1 : vector<14x1xf32>, vector<14x1xf32>, vector<14x1xf32>, vector<14x1xf32>, vector<14x1xf32> -> vector<14x5xf32>
    %1058 = vector.extract_strided_slice %1051 {offsets = [0, 1], sizes = [14, 1], strides = [1, 1]} : vector<14x10xf32> to vector<14x1xf32>
    %1059 = vector.extract_strided_slice %1051 {offsets = [0, 3], sizes = [14, 1], strides = [1, 1]} : vector<14x10xf32> to vector<14x1xf32>
    %1060 = vector.extract_strided_slice %1051 {offsets = [0, 5], sizes = [14, 1], strides = [1, 1]} : vector<14x10xf32> to vector<14x1xf32>
    %1061 = vector.extract_strided_slice %1051 {offsets = [0, 7], sizes = [14, 1], strides = [1, 1]} : vector<14x10xf32> to vector<14x1xf32>
    %1062 = vector.extract_strided_slice %1051 {offsets = [0, 9], sizes = [14, 1], strides = [1, 1]} : vector<14x10xf32> to vector<14x1xf32>
    %1063 = tpu.concatenate %1058, %1059, %1060, %1061, %1062 in 1 : vector<14x1xf32>, vector<14x1xf32>, vector<14x1xf32>, vector<14x1xf32>, vector<14x1xf32> -> vector<14x5xf32>
    %1064 = arith.maximumf %1057, %1063 : vector<14x5xf32>
    %1065 = math.tanh %1064 : vector<14x5xf32>
    %1066 = vector.extract_strided_slice %187 {offsets = [2, 0], sizes = [1, 12], strides = [1, 1]} : vector<12x12xf32> to vector<1x12xf32>
    %1067 = vector.extract_strided_slice %348 {offsets = [2, 0], sizes = [1, 12], strides = [1, 1]} : vector<12x12xf32> to vector<1x12xf32>
    %1068 = vector.extract_strided_slice %509 {offsets = [2, 0], sizes = [1, 12], strides = [1, 1]} : vector<12x12xf32> to vector<1x12xf32>
    %1069 = vector.extract_strided_slice %670 {offsets = [2, 0], sizes = [1, 12], strides = [1, 1]} : vector<12x12xf32> to vector<1x12xf32>
    %1070 = vector.extract_strided_slice %831 {offsets = [2, 0], sizes = [1, 12], strides = [1, 1]} : vector<12x12xf32> to vector<1x12xf32>
    %1071 = vector.extract_strided_slice %992 {offsets = [2, 0], sizes = [1, 12], strides = [1, 1]} : vector<12x12xf32> to vector<1x12xf32>
    %1072 = vector.extract_strided_slice %187 {offsets = [3, 0], sizes = [1, 12], strides = [1, 1]} : vector<12x12xf32> to vector<1x12xf32>
    %1073 = vector.extract_strided_slice %348 {offsets = [3, 0], sizes = [1, 12], strides = [1, 1]} : vector<12x12xf32> to vector<1x12xf32>
    %1074 = vector.extract_strided_slice %509 {offsets = [3, 0], sizes = [1, 12], strides = [1, 1]} : vector<12x12xf32> to vector<1x12xf32>
    %1075 = vector.extract_strided_slice %670 {offsets = [3, 0], sizes = [1, 12], strides = [1, 1]} : vector<12x12xf32> to vector<1x12xf32>
    %1076 = vector.extract_strided_slice %831 {offsets = [3, 0], sizes = [1, 12], strides = [1, 1]} : vector<12x12xf32> to vector<1x12xf32>
    %1077 = vector.extract_strided_slice %992 {offsets = [3, 0], sizes = [1, 12], strides = [1, 1]} : vector<12x12xf32> to vector<1x12xf32>
    %1078 = vector.extract_strided_slice %187 {offsets = [4, 0], sizes = [1, 12], strides = [1, 1]} : vector<12x12xf32> to vector<1x12xf32>
    %1079 = vector.extract_strided_slice %348 {offsets = [4, 0], sizes = [1, 12], strides = [1, 1]} : vector<12x12xf32> to vector<1x12xf32>
    %1080 = vector.extract_strided_slice %509 {offsets = [4, 0], sizes = [1, 12], strides = [1, 1]} : vector<12x12xf32> to vector<1x12xf32>
    %1081 = vector.extract_strided_slice %670 {offsets = [4, 0], sizes = [1, 12], strides = [1, 1]} : vector<12x12xf32> to vector<1x12xf32>
    %1082 = vector.extract_strided_slice %831 {offsets = [4, 0], sizes = [1, 12], strides = [1, 1]} : vector<12x12xf32> to vector<1x12xf32>
    %1083 = vector.extract_strided_slice %992 {offsets = [4, 0], sizes = [1, 12], strides = [1, 1]} : vector<12x12xf32> to vector<1x12xf32>
    %1084 = tpu.concatenate %1066, %1067, %1068, %1069, %1070, %1071, %1072, %1073, %1074, %1075, %1076, %1077, %1078, %1079, %1080, %1081 in 0 : vector<1x12xf32>, vector<1x12xf32>, vector<1x12xf32>, vector<1x12xf32>, vector<1x12xf32>, vector<1x12xf32>, vector<1x12xf32>, vector<1x12xf32>, vector<1x12xf32>, vector<1x12xf32>, vector<1x12xf32>, vector<1x12xf32>, vector<1x12xf32>, vector<1x12xf32>, vector<1x12xf32>, vector<1x12xf32> -> vector<16x12xf32>
    %1085 = tpu.concatenate %1082, %1083 in 0 : vector<1x12xf32>, vector<1x12xf32> -> vector<2x12xf32>
    %1086 = tpu.concatenate %1084, %1085 in 0 : vector<16x12xf32>, vector<2x12xf32> -> vector<18x12xf32>
    %1087 = vector.extract_strided_slice %1086 {offsets = [0, 0], sizes = [18, 10], strides = [1, 1]} : vector<18x12xf32> to vector<18x10xf32>
    %1088 = vector.extract_strided_slice %1086 {offsets = [0, 1], sizes = [18, 10], strides = [1, 1]} : vector<18x12xf32> to vector<18x10xf32>
    %1089 = vector.extract_strided_slice %1086 {offsets = [0, 2], sizes = [18, 10], strides = [1, 1]} : vector<18x12xf32> to vector<18x10xf32>
    %1090 = tpu.concatenate %1087, %1088, %1089 in 0 : vector<18x10xf32>, vector<18x10xf32>, vector<18x10xf32> -> vector<54x10xf32>
    %cst_26 = arith.constant dense<0.000000e+00> : vector<14x10xf32>
    %1091 = tpu.matmul %993, %1090, %cst_26 {dimension_numbers = #tpu.dot_dimension_numbers<[1], [0], [0], [1], [0, 0, 1, 1], [], []>} : vector<14x54xf32>, vector<54x10xf32>, vector<14x10xf32> -> vector<14x10xf32>
    %1092 = vector.broadcast %994 : vector<14x1xf32> to vector<14x10xf32>
    %1093 = arith.addf %1091, %1092 : vector<14x10xf32>
    %1094 = vector.extract_strided_slice %187 {offsets = [3, 0], sizes = [1, 12], strides = [1, 1]} : vector<12x12xf32> to vector<1x12xf32>
    %1095 = vector.extract_strided_slice %348 {offsets = [3, 0], sizes = [1, 12], strides = [1, 1]} : vector<12x12xf32> to vector<1x12xf32>
    %1096 = vector.extract_strided_slice %509 {offsets = [3, 0], sizes = [1, 12], strides = [1, 1]} : vector<12x12xf32> to vector<1x12xf32>
    %1097 = vector.extract_strided_slice %670 {offsets = [3, 0], sizes = [1, 12], strides = [1, 1]} : vector<12x12xf32> to vector<1x12xf32>
    %1098 = vector.extract_strided_slice %831 {offsets = [3, 0], sizes = [1, 12], strides = [1, 1]} : vector<12x12xf32> to vector<1x12xf32>
    %1099 = vector.extract_strided_slice %992 {offsets = [3, 0], sizes = [1, 12], strides = [1, 1]} : vector<12x12xf32> to vector<1x12xf32>
    %1100 = vector.extract_strided_slice %187 {offsets = [4, 0], sizes = [1, 12], strides = [1, 1]} : vector<12x12xf32> to vector<1x12xf32>
    %1101 = vector.extract_strided_slice %348 {offsets = [4, 0], sizes = [1, 12], strides = [1, 1]} : vector<12x12xf32> to vector<1x12xf32>
    %1102 = vector.extract_strided_slice %509 {offsets = [4, 0], sizes = [1, 12], strides = [1, 1]} : vector<12x12xf32> to vector<1x12xf32>
    %1103 = vector.extract_strided_slice %670 {offsets = [4, 0], sizes = [1, 12], strides = [1, 1]} : vector<12x12xf32> to vector<1x12xf32>
    %1104 = vector.extract_strided_slice %831 {offsets = [4, 0], sizes = [1, 12], strides = [1, 1]} : vector<12x12xf32> to vector<1x12xf32>
    %1105 = vector.extract_strided_slice %992 {offsets = [4, 0], sizes = [1, 12], strides = [1, 1]} : vector<12x12xf32> to vector<1x12xf32>
    %1106 = vector.extract_strided_slice %187 {offsets = [5, 0], sizes = [1, 12], strides = [1, 1]} : vector<12x12xf32> to vector<1x12xf32>
    %1107 = vector.extract_strided_slice %348 {offsets = [5, 0], sizes = [1, 12], strides = [1, 1]} : vector<12x12xf32> to vector<1x12xf32>
    %1108 = vector.extract_strided_slice %509 {offsets = [5, 0], sizes = [1, 12], strides = [1, 1]} : vector<12x12xf32> to vector<1x12xf32>
    %1109 = vector.extract_strided_slice %670 {offsets = [5, 0], sizes = [1, 12], strides = [1, 1]} : vector<12x12xf32> to vector<1x12xf32>
    %1110 = vector.extract_strided_slice %831 {offsets = [5, 0], sizes = [1, 12], strides = [1, 1]} : vector<12x12xf32> to vector<1x12xf32>
    %1111 = vector.extract_strided_slice %992 {offsets = [5, 0], sizes = [1, 12], strides = [1, 1]} : vector<12x12xf32> to vector<1x12xf32>
    %1112 = tpu.concatenate %1094, %1095, %1096, %1097, %1098, %1099, %1100, %1101, %1102, %1103, %1104, %1105, %1106, %1107, %1108, %1109 in 0 : vector<1x12xf32>, vector<1x12xf32>, vector<1x12xf32>, vector<1x12xf32>, vector<1x12xf32>, vector<1x12xf32>, vector<1x12xf32>, vector<1x12xf32>, vector<1x12xf32>, vector<1x12xf32>, vector<1x12xf32>, vector<1x12xf32>, vector<1x12xf32>, vector<1x12xf32>, vector<1x12xf32>, vector<1x12xf32> -> vector<16x12xf32>
    %1113 = tpu.concatenate %1110, %1111 in 0 : vector<1x12xf32>, vector<1x12xf32> -> vector<2x12xf32>
    %1114 = tpu.concatenate %1112, %1113 in 0 : vector<16x12xf32>, vector<2x12xf32> -> vector<18x12xf32>
    %1115 = vector.extract_strided_slice %1114 {offsets = [0, 0], sizes = [18, 10], strides = [1, 1]} : vector<18x12xf32> to vector<18x10xf32>
    %1116 = vector.extract_strided_slice %1114 {offsets = [0, 1], sizes = [18, 10], strides = [1, 1]} : vector<18x12xf32> to vector<18x10xf32>
    %1117 = vector.extract_strided_slice %1114 {offsets = [0, 2], sizes = [18, 10], strides = [1, 1]} : vector<18x12xf32> to vector<18x10xf32>
    %1118 = tpu.concatenate %1115, %1116, %1117 in 0 : vector<18x10xf32>, vector<18x10xf32>, vector<18x10xf32> -> vector<54x10xf32>
    %cst_27 = arith.constant dense<0.000000e+00> : vector<14x10xf32>
    %1119 = tpu.matmul %993, %1118, %cst_27 {dimension_numbers = #tpu.dot_dimension_numbers<[1], [0], [0], [1], [0, 0, 1, 1], [], []>} : vector<14x54xf32>, vector<54x10xf32>, vector<14x10xf32> -> vector<14x10xf32>
    %1120 = vector.broadcast %994 : vector<14x1xf32> to vector<14x10xf32>
    %1121 = arith.addf %1119, %1120 : vector<14x10xf32>
    %1122 = arith.maximumf %1093, %1121 : vector<14x10xf32>
    %1123 = vector.extract_strided_slice %1122 {offsets = [0, 0], sizes = [14, 1], strides = [1, 1]} : vector<14x10xf32> to vector<14x1xf32>
    %1124 = vector.extract_strided_slice %1122 {offsets = [0, 2], sizes = [14, 1], strides = [1, 1]} : vector<14x10xf32> to vector<14x1xf32>
    %1125 = vector.extract_strided_slice %1122 {offsets = [0, 4], sizes = [14, 1], strides = [1, 1]} : vector<14x10xf32> to vector<14x1xf32>
    %1126 = vector.extract_strided_slice %1122 {offsets = [0, 6], sizes = [14, 1], strides = [1, 1]} : vector<14x10xf32> to vector<14x1xf32>
    %1127 = vector.extract_strided_slice %1122 {offsets = [0, 8], sizes = [14, 1], strides = [1, 1]} : vector<14x10xf32> to vector<14x1xf32>
    %1128 = tpu.concatenate %1123, %1124, %1125, %1126, %1127 in 1 : vector<14x1xf32>, vector<14x1xf32>, vector<14x1xf32>, vector<14x1xf32>, vector<14x1xf32> -> vector<14x5xf32>
    %1129 = vector.extract_strided_slice %1122 {offsets = [0, 1], sizes = [14, 1], strides = [1, 1]} : vector<14x10xf32> to vector<14x1xf32>
    %1130 = vector.extract_strided_slice %1122 {offsets = [0, 3], sizes = [14, 1], strides = [1, 1]} : vector<14x10xf32> to vector<14x1xf32>
    %1131 = vector.extract_strided_slice %1122 {offsets = [0, 5], sizes = [14, 1], strides = [1, 1]} : vector<14x10xf32> to vector<14x1xf32>
    %1132 = vector.extract_strided_slice %1122 {offsets = [0, 7], sizes = [14, 1], strides = [1, 1]} : vector<14x10xf32> to vector<14x1xf32>
    %1133 = vector.extract_strided_slice %1122 {offsets = [0, 9], sizes = [14, 1], strides = [1, 1]} : vector<14x10xf32> to vector<14x1xf32>
    %1134 = tpu.concatenate %1129, %1130, %1131, %1132, %1133 in 1 : vector<14x1xf32>, vector<14x1xf32>, vector<14x1xf32>, vector<14x1xf32>, vector<14x1xf32> -> vector<14x5xf32>
    %1135 = arith.maximumf %1128, %1134 : vector<14x5xf32>
    %1136 = math.tanh %1135 : vector<14x5xf32>
    %1137 = vector.extract_strided_slice %187 {offsets = [4, 0], sizes = [1, 12], strides = [1, 1]} : vector<12x12xf32> to vector<1x12xf32>
    %1138 = vector.extract_strided_slice %348 {offsets = [4, 0], sizes = [1, 12], strides = [1, 1]} : vector<12x12xf32> to vector<1x12xf32>
    %1139 = vector.extract_strided_slice %509 {offsets = [4, 0], sizes = [1, 12], strides = [1, 1]} : vector<12x12xf32> to vector<1x12xf32>
    %1140 = vector.extract_strided_slice %670 {offsets = [4, 0], sizes = [1, 12], strides = [1, 1]} : vector<12x12xf32> to vector<1x12xf32>
    %1141 = vector.extract_strided_slice %831 {offsets = [4, 0], sizes = [1, 12], strides = [1, 1]} : vector<12x12xf32> to vector<1x12xf32>
    %1142 = vector.extract_strided_slice %992 {offsets = [4, 0], sizes = [1, 12], strides = [1, 1]} : vector<12x12xf32> to vector<1x12xf32>
    %1143 = vector.extract_strided_slice %187 {offsets = [5, 0], sizes = [1, 12], strides = [1, 1]} : vector<12x12xf32> to vector<1x12xf32>
    %1144 = vector.extract_strided_slice %348 {offsets = [5, 0], sizes = [1, 12], strides = [1, 1]} : vector<12x12xf32> to vector<1x12xf32>
    %1145 = vector.extract_strided_slice %509 {offsets = [5, 0], sizes = [1, 12], strides = [1, 1]} : vector<12x12xf32> to vector<1x12xf32>
    %1146 = vector.extract_strided_slice %670 {offsets = [5, 0], sizes = [1, 12], strides = [1, 1]} : vector<12x12xf32> to vector<1x12xf32>
    %1147 = vector.extract_strided_slice %831 {offsets = [5, 0], sizes = [1, 12], strides = [1, 1]} : vector<12x12xf32> to vector<1x12xf32>
    %1148 = vector.extract_strided_slice %992 {offsets = [5, 0], sizes = [1, 12], strides = [1, 1]} : vector<12x12xf32> to vector<1x12xf32>
    %1149 = vector.extract_strided_slice %187 {offsets = [6, 0], sizes = [1, 12], strides = [1, 1]} : vector<12x12xf32> to vector<1x12xf32>
    %1150 = vector.extract_strided_slice %348 {offsets = [6, 0], sizes = [1, 12], strides = [1, 1]} : vector<12x12xf32> to vector<1x12xf32>
    %1151 = vector.extract_strided_slice %509 {offsets = [6, 0], sizes = [1, 12], strides = [1, 1]} : vector<12x12xf32> to vector<1x12xf32>
    %1152 = vector.extract_strided_slice %670 {offsets = [6, 0], sizes = [1, 12], strides = [1, 1]} : vector<12x12xf32> to vector<1x12xf32>
    %1153 = vector.extract_strided_slice %831 {offsets = [6, 0], sizes = [1, 12], strides = [1, 1]} : vector<12x12xf32> to vector<1x12xf32>
    %1154 = vector.extract_strided_slice %992 {offsets = [6, 0], sizes = [1, 12], strides = [1, 1]} : vector<12x12xf32> to vector<1x12xf32>
    %1155 = tpu.concatenate %1137, %1138, %1139, %1140, %1141, %1142, %1143, %1144, %1145, %1146, %1147, %1148, %1149, %1150, %1151, %1152 in 0 : vector<1x12xf32>, vector<1x12xf32>, vector<1x12xf32>, vector<1x12xf32>, vector<1x12xf32>, vector<1x12xf32>, vector<1x12xf32>, vector<1x12xf32>, vector<1x12xf32>, vector<1x12xf32>, vector<1x12xf32>, vector<1x12xf32>, vector<1x12xf32>, vector<1x12xf32>, vector<1x12xf32>, vector<1x12xf32> -> vector<16x12xf32>
    %1156 = tpu.concatenate %1153, %1154 in 0 : vector<1x12xf32>, vector<1x12xf32> -> vector<2x12xf32>
    %1157 = tpu.concatenate %1155, %1156 in 0 : vector<16x12xf32>, vector<2x12xf32> -> vector<18x12xf32>
    %1158 = vector.extract_strided_slice %1157 {offsets = [0, 0], sizes = [18, 10], strides = [1, 1]} : vector<18x12xf32> to vector<18x10xf32>
    %1159 = vector.extract_strided_slice %1157 {offsets = [0, 1], sizes = [18, 10], strides = [1, 1]} : vector<18x12xf32> to vector<18x10xf32>
    %1160 = vector.extract_strided_slice %1157 {offsets = [0, 2], sizes = [18, 10], strides = [1, 1]} : vector<18x12xf32> to vector<18x10xf32>
    %1161 = tpu.concatenate %1158, %1159, %1160 in 0 : vector<18x10xf32>, vector<18x10xf32>, vector<18x10xf32> -> vector<54x10xf32>
    %cst_28 = arith.constant dense<0.000000e+00> : vector<14x10xf32>
    %1162 = tpu.matmul %993, %1161, %cst_28 {dimension_numbers = #tpu.dot_dimension_numbers<[1], [0], [0], [1], [0, 0, 1, 1], [], []>} : vector<14x54xf32>, vector<54x10xf32>, vector<14x10xf32> -> vector<14x10xf32>
    %1163 = vector.broadcast %994 : vector<14x1xf32> to vector<14x10xf32>
    %1164 = arith.addf %1162, %1163 : vector<14x10xf32>
    %1165 = vector.extract_strided_slice %187 {offsets = [5, 0], sizes = [1, 12], strides = [1, 1]} : vector<12x12xf32> to vector<1x12xf32>
    %1166 = vector.extract_strided_slice %348 {offsets = [5, 0], sizes = [1, 12], strides = [1, 1]} : vector<12x12xf32> to vector<1x12xf32>
    %1167 = vector.extract_strided_slice %509 {offsets = [5, 0], sizes = [1, 12], strides = [1, 1]} : vector<12x12xf32> to vector<1x12xf32>
    %1168 = vector.extract_strided_slice %670 {offsets = [5, 0], sizes = [1, 12], strides = [1, 1]} : vector<12x12xf32> to vector<1x12xf32>
    %1169 = vector.extract_strided_slice %831 {offsets = [5, 0], sizes = [1, 12], strides = [1, 1]} : vector<12x12xf32> to vector<1x12xf32>
    %1170 = vector.extract_strided_slice %992 {offsets = [5, 0], sizes = [1, 12], strides = [1, 1]} : vector<12x12xf32> to vector<1x12xf32>
    %1171 = vector.extract_strided_slice %187 {offsets = [6, 0], sizes = [1, 12], strides = [1, 1]} : vector<12x12xf32> to vector<1x12xf32>
    %1172 = vector.extract_strided_slice %348 {offsets = [6, 0], sizes = [1, 12], strides = [1, 1]} : vector<12x12xf32> to vector<1x12xf32>
    %1173 = vector.extract_strided_slice %509 {offsets = [6, 0], sizes = [1, 12], strides = [1, 1]} : vector<12x12xf32> to vector<1x12xf32>
    %1174 = vector.extract_strided_slice %670 {offsets = [6, 0], sizes = [1, 12], strides = [1, 1]} : vector<12x12xf32> to vector<1x12xf32>
    %1175 = vector.extract_strided_slice %831 {offsets = [6, 0], sizes = [1, 12], strides = [1, 1]} : vector<12x12xf32> to vector<1x12xf32>
    %1176 = vector.extract_strided_slice %992 {offsets = [6, 0], sizes = [1, 12], strides = [1, 1]} : vector<12x12xf32> to vector<1x12xf32>
    %1177 = vector.extract_strided_slice %187 {offsets = [7, 0], sizes = [1, 12], strides = [1, 1]} : vector<12x12xf32> to vector<1x12xf32>
    %1178 = vector.extract_strided_slice %348 {offsets = [7, 0], sizes = [1, 12], strides = [1, 1]} : vector<12x12xf32> to vector<1x12xf32>
    %1179 = vector.extract_strided_slice %509 {offsets = [7, 0], sizes = [1, 12], strides = [1, 1]} : vector<12x12xf32> to vector<1x12xf32>
    %1180 = vector.extract_strided_slice %670 {offsets = [7, 0], sizes = [1, 12], strides = [1, 1]} : vector<12x12xf32> to vector<1x12xf32>
    %1181 = vector.extract_strided_slice %831 {offsets = [7, 0], sizes = [1, 12], strides = [1, 1]} : vector<12x12xf32> to vector<1x12xf32>
    %1182 = vector.extract_strided_slice %992 {offsets = [7, 0], sizes = [1, 12], strides = [1, 1]} : vector<12x12xf32> to vector<1x12xf32>
    %1183 = tpu.concatenate %1165, %1166, %1167, %1168, %1169, %1170, %1171, %1172, %1173, %1174, %1175, %1176, %1177, %1178, %1179, %1180 in 0 : vector<1x12xf32>, vector<1x12xf32>, vector<1x12xf32>, vector<1x12xf32>, vector<1x12xf32>, vector<1x12xf32>, vector<1x12xf32>, vector<1x12xf32>, vector<1x12xf32>, vector<1x12xf32>, vector<1x12xf32>, vector<1x12xf32>, vector<1x12xf32>, vector<1x12xf32>, vector<1x12xf32>, vector<1x12xf32> -> vector<16x12xf32>
    %1184 = tpu.concatenate %1181, %1182 in 0 : vector<1x12xf32>, vector<1x12xf32> -> vector<2x12xf32>
    %1185 = tpu.concatenate %1183, %1184 in 0 : vector<16x12xf32>, vector<2x12xf32> -> vector<18x12xf32>
    %1186 = vector.extract_strided_slice %1185 {offsets = [0, 0], sizes = [18, 10], strides = [1, 1]} : vector<18x12xf32> to vector<18x10xf32>
    %1187 = vector.extract_strided_slice %1185 {offsets = [0, 1], sizes = [18, 10], strides = [1, 1]} : vector<18x12xf32> to vector<18x10xf32>
    %1188 = vector.extract_strided_slice %1185 {offsets = [0, 2], sizes = [18, 10], strides = [1, 1]} : vector<18x12xf32> to vector<18x10xf32>
    %1189 = tpu.concatenate %1186, %1187, %1188 in 0 : vector<18x10xf32>, vector<18x10xf32>, vector<18x10xf32> -> vector<54x10xf32>
    %cst_29 = arith.constant dense<0.000000e+00> : vector<14x10xf32>
    %1190 = tpu.matmul %993, %1189, %cst_29 {dimension_numbers = #tpu.dot_dimension_numbers<[1], [0], [0], [1], [0, 0, 1, 1], [], []>} : vector<14x54xf32>, vector<54x10xf32>, vector<14x10xf32> -> vector<14x10xf32>
    %1191 = vector.broadcast %994 : vector<14x1xf32> to vector<14x10xf32>
    %1192 = arith.addf %1190, %1191 : vector<14x10xf32>
    %1193 = arith.maximumf %1164, %1192 : vector<14x10xf32>
    %1194 = vector.extract_strided_slice %1193 {offsets = [0, 0], sizes = [14, 1], strides = [1, 1]} : vector<14x10xf32> to vector<14x1xf32>
    %1195 = vector.extract_strided_slice %1193 {offsets = [0, 2], sizes = [14, 1], strides = [1, 1]} : vector<14x10xf32> to vector<14x1xf32>
    %1196 = vector.extract_strided_slice %1193 {offsets = [0, 4], sizes = [14, 1], strides = [1, 1]} : vector<14x10xf32> to vector<14x1xf32>
    %1197 = vector.extract_strided_slice %1193 {offsets = [0, 6], sizes = [14, 1], strides = [1, 1]} : vector<14x10xf32> to vector<14x1xf32>
    %1198 = vector.extract_strided_slice %1193 {offsets = [0, 8], sizes = [14, 1], strides = [1, 1]} : vector<14x10xf32> to vector<14x1xf32>
    %1199 = tpu.concatenate %1194, %1195, %1196, %1197, %1198 in 1 : vector<14x1xf32>, vector<14x1xf32>, vector<14x1xf32>, vector<14x1xf32>, vector<14x1xf32> -> vector<14x5xf32>
    %1200 = vector.extract_strided_slice %1193 {offsets = [0, 1], sizes = [14, 1], strides = [1, 1]} : vector<14x10xf32> to vector<14x1xf32>
    %1201 = vector.extract_strided_slice %1193 {offsets = [0, 3], sizes = [14, 1], strides = [1, 1]} : vector<14x10xf32> to vector<14x1xf32>
    %1202 = vector.extract_strided_slice %1193 {offsets = [0, 5], sizes = [14, 1], strides = [1, 1]} : vector<14x10xf32> to vector<14x1xf32>
    %1203 = vector.extract_strided_slice %1193 {offsets = [0, 7], sizes = [14, 1], strides = [1, 1]} : vector<14x10xf32> to vector<14x1xf32>
    %1204 = vector.extract_strided_slice %1193 {offsets = [0, 9], sizes = [14, 1], strides = [1, 1]} : vector<14x10xf32> to vector<14x1xf32>
    %1205 = tpu.concatenate %1200, %1201, %1202, %1203, %1204 in 1 : vector<14x1xf32>, vector<14x1xf32>, vector<14x1xf32>, vector<14x1xf32>, vector<14x1xf32> -> vector<14x5xf32>
    %1206 = arith.maximumf %1199, %1205 : vector<14x5xf32>
    %1207 = math.tanh %1206 : vector<14x5xf32>
    %1208 = vector.extract_strided_slice %187 {offsets = [6, 0], sizes = [1, 12], strides = [1, 1]} : vector<12x12xf32> to vector<1x12xf32>
    %1209 = vector.extract_strided_slice %348 {offsets = [6, 0], sizes = [1, 12], strides = [1, 1]} : vector<12x12xf32> to vector<1x12xf32>
    %1210 = vector.extract_strided_slice %509 {offsets = [6, 0], sizes = [1, 12], strides = [1, 1]} : vector<12x12xf32> to vector<1x12xf32>
    %1211 = vector.extract_strided_slice %670 {offsets = [6, 0], sizes = [1, 12], strides = [1, 1]} : vector<12x12xf32> to vector<1x12xf32>
    %1212 = vector.extract_strided_slice %831 {offsets = [6, 0], sizes = [1, 12], strides = [1, 1]} : vector<12x12xf32> to vector<1x12xf32>
    %1213 = vector.extract_strided_slice %992 {offsets = [6, 0], sizes = [1, 12], strides = [1, 1]} : vector<12x12xf32> to vector<1x12xf32>
    %1214 = vector.extract_strided_slice %187 {offsets = [7, 0], sizes = [1, 12], strides = [1, 1]} : vector<12x12xf32> to vector<1x12xf32>
    %1215 = vector.extract_strided_slice %348 {offsets = [7, 0], sizes = [1, 12], strides = [1, 1]} : vector<12x12xf32> to vector<1x12xf32>
    %1216 = vector.extract_strided_slice %509 {offsets = [7, 0], sizes = [1, 12], strides = [1, 1]} : vector<12x12xf32> to vector<1x12xf32>
    %1217 = vector.extract_strided_slice %670 {offsets = [7, 0], sizes = [1, 12], strides = [1, 1]} : vector<12x12xf32> to vector<1x12xf32>
    %1218 = vector.extract_strided_slice %831 {offsets = [7, 0], sizes = [1, 12], strides = [1, 1]} : vector<12x12xf32> to vector<1x12xf32>
    %1219 = vector.extract_strided_slice %992 {offsets = [7, 0], sizes = [1, 12], strides = [1, 1]} : vector<12x12xf32> to vector<1x12xf32>
    %1220 = vector.extract_strided_slice %187 {offsets = [8, 0], sizes = [1, 12], strides = [1, 1]} : vector<12x12xf32> to vector<1x12xf32>
    %1221 = vector.extract_strided_slice %348 {offsets = [8, 0], sizes = [1, 12], strides = [1, 1]} : vector<12x12xf32> to vector<1x12xf32>
    %1222 = vector.extract_strided_slice %509 {offsets = [8, 0], sizes = [1, 12], strides = [1, 1]} : vector<12x12xf32> to vector<1x12xf32>
    %1223 = vector.extract_strided_slice %670 {offsets = [8, 0], sizes = [1, 12], strides = [1, 1]} : vector<12x12xf32> to vector<1x12xf32>
    %1224 = vector.extract_strided_slice %831 {offsets = [8, 0], sizes = [1, 12], strides = [1, 1]} : vector<12x12xf32> to vector<1x12xf32>
    %1225 = vector.extract_strided_slice %992 {offsets = [8, 0], sizes = [1, 12], strides = [1, 1]} : vector<12x12xf32> to vector<1x12xf32>
    %1226 = tpu.concatenate %1208, %1209, %1210, %1211, %1212, %1213, %1214, %1215, %1216, %1217, %1218, %1219, %1220, %1221, %1222, %1223 in 0 : vector<1x12xf32>, vector<1x12xf32>, vector<1x12xf32>, vector<1x12xf32>, vector<1x12xf32>, vector<1x12xf32>, vector<1x12xf32>, vector<1x12xf32>, vector<1x12xf32>, vector<1x12xf32>, vector<1x12xf32>, vector<1x12xf32>, vector<1x12xf32>, vector<1x12xf32>, vector<1x12xf32>, vector<1x12xf32> -> vector<16x12xf32>
    %1227 = tpu.concatenate %1224, %1225 in 0 : vector<1x12xf32>, vector<1x12xf32> -> vector<2x12xf32>
    %1228 = tpu.concatenate %1226, %1227 in 0 : vector<16x12xf32>, vector<2x12xf32> -> vector<18x12xf32>
    %1229 = vector.extract_strided_slice %1228 {offsets = [0, 0], sizes = [18, 10], strides = [1, 1]} : vector<18x12xf32> to vector<18x10xf32>
    %1230 = vector.extract_strided_slice %1228 {offsets = [0, 1], sizes = [18, 10], strides = [1, 1]} : vector<18x12xf32> to vector<18x10xf32>
    %1231 = vector.extract_strided_slice %1228 {offsets = [0, 2], sizes = [18, 10], strides = [1, 1]} : vector<18x12xf32> to vector<18x10xf32>
    %1232 = tpu.concatenate %1229, %1230, %1231 in 0 : vector<18x10xf32>, vector<18x10xf32>, vector<18x10xf32> -> vector<54x10xf32>
    %cst_30 = arith.constant dense<0.000000e+00> : vector<14x10xf32>
    %1233 = tpu.matmul %993, %1232, %cst_30 {dimension_numbers = #tpu.dot_dimension_numbers<[1], [0], [0], [1], [0, 0, 1, 1], [], []>} : vector<14x54xf32>, vector<54x10xf32>, vector<14x10xf32> -> vector<14x10xf32>
    %1234 = vector.broadcast %994 : vector<14x1xf32> to vector<14x10xf32>
    %1235 = arith.addf %1233, %1234 : vector<14x10xf32>
    %1236 = vector.extract_strided_slice %187 {offsets = [7, 0], sizes = [1, 12], strides = [1, 1]} : vector<12x12xf32> to vector<1x12xf32>
    %1237 = vector.extract_strided_slice %348 {offsets = [7, 0], sizes = [1, 12], strides = [1, 1]} : vector<12x12xf32> to vector<1x12xf32>
    %1238 = vector.extract_strided_slice %509 {offsets = [7, 0], sizes = [1, 12], strides = [1, 1]} : vector<12x12xf32> to vector<1x12xf32>
    %1239 = vector.extract_strided_slice %670 {offsets = [7, 0], sizes = [1, 12], strides = [1, 1]} : vector<12x12xf32> to vector<1x12xf32>
    %1240 = vector.extract_strided_slice %831 {offsets = [7, 0], sizes = [1, 12], strides = [1, 1]} : vector<12x12xf32> to vector<1x12xf32>
    %1241 = vector.extract_strided_slice %992 {offsets = [7, 0], sizes = [1, 12], strides = [1, 1]} : vector<12x12xf32> to vector<1x12xf32>
    %1242 = vector.extract_strided_slice %187 {offsets = [8, 0], sizes = [1, 12], strides = [1, 1]} : vector<12x12xf32> to vector<1x12xf32>
    %1243 = vector.extract_strided_slice %348 {offsets = [8, 0], sizes = [1, 12], strides = [1, 1]} : vector<12x12xf32> to vector<1x12xf32>
    %1244 = vector.extract_strided_slice %509 {offsets = [8, 0], sizes = [1, 12], strides = [1, 1]} : vector<12x12xf32> to vector<1x12xf32>
    %1245 = vector.extract_strided_slice %670 {offsets = [8, 0], sizes = [1, 12], strides = [1, 1]} : vector<12x12xf32> to vector<1x12xf32>
    %1246 = vector.extract_strided_slice %831 {offsets = [8, 0], sizes = [1, 12], strides = [1, 1]} : vector<12x12xf32> to vector<1x12xf32>
    %1247 = vector.extract_strided_slice %992 {offsets = [8, 0], sizes = [1, 12], strides = [1, 1]} : vector<12x12xf32> to vector<1x12xf32>
    %1248 = vector.extract_strided_slice %187 {offsets = [9, 0], sizes = [1, 12], strides = [1, 1]} : vector<12x12xf32> to vector<1x12xf32>
    %1249 = vector.extract_strided_slice %348 {offsets = [9, 0], sizes = [1, 12], strides = [1, 1]} : vector<12x12xf32> to vector<1x12xf32>
    %1250 = vector.extract_strided_slice %509 {offsets = [9, 0], sizes = [1, 12], strides = [1, 1]} : vector<12x12xf32> to vector<1x12xf32>
    %1251 = vector.extract_strided_slice %670 {offsets = [9, 0], sizes = [1, 12], strides = [1, 1]} : vector<12x12xf32> to vector<1x12xf32>
    %1252 = vector.extract_strided_slice %831 {offsets = [9, 0], sizes = [1, 12], strides = [1, 1]} : vector<12x12xf32> to vector<1x12xf32>
    %1253 = vector.extract_strided_slice %992 {offsets = [9, 0], sizes = [1, 12], strides = [1, 1]} : vector<12x12xf32> to vector<1x12xf32>
    %1254 = tpu.concatenate %1236, %1237, %1238, %1239, %1240, %1241, %1242, %1243, %1244, %1245, %1246, %1247, %1248, %1249, %1250, %1251 in 0 : vector<1x12xf32>, vector<1x12xf32>, vector<1x12xf32>, vector<1x12xf32>, vector<1x12xf32>, vector<1x12xf32>, vector<1x12xf32>, vector<1x12xf32>, vector<1x12xf32>, vector<1x12xf32>, vector<1x12xf32>, vector<1x12xf32>, vector<1x12xf32>, vector<1x12xf32>, vector<1x12xf32>, vector<1x12xf32> -> vector<16x12xf32>
    %1255 = tpu.concatenate %1252, %1253 in 0 : vector<1x12xf32>, vector<1x12xf32> -> vector<2x12xf32>
    %1256 = tpu.concatenate %1254, %1255 in 0 : vector<16x12xf32>, vector<2x12xf32> -> vector<18x12xf32>
    %1257 = vector.extract_strided_slice %1256 {offsets = [0, 0], sizes = [18, 10], strides = [1, 1]} : vector<18x12xf32> to vector<18x10xf32>
    %1258 = vector.extract_strided_slice %1256 {offsets = [0, 1], sizes = [18, 10], strides = [1, 1]} : vector<18x12xf32> to vector<18x10xf32>
    %1259 = vector.extract_strided_slice %1256 {offsets = [0, 2], sizes = [18, 10], strides = [1, 1]} : vector<18x12xf32> to vector<18x10xf32>
    %1260 = tpu.concatenate %1257, %1258, %1259 in 0 : vector<18x10xf32>, vector<18x10xf32>, vector<18x10xf32> -> vector<54x10xf32>
    %cst_31 = arith.constant dense<0.000000e+00> : vector<14x10xf32>
    %1261 = tpu.matmul %993, %1260, %cst_31 {dimension_numbers = #tpu.dot_dimension_numbers<[1], [0], [0], [1], [0, 0, 1, 1], [], []>} : vector<14x54xf32>, vector<54x10xf32>, vector<14x10xf32> -> vector<14x10xf32>
    %1262 = vector.broadcast %994 : vector<14x1xf32> to vector<14x10xf32>
    %1263 = arith.addf %1261, %1262 : vector<14x10xf32>
    %1264 = arith.maximumf %1235, %1263 : vector<14x10xf32>
    %1265 = vector.extract_strided_slice %1264 {offsets = [0, 0], sizes = [14, 1], strides = [1, 1]} : vector<14x10xf32> to vector<14x1xf32>
    %1266 = vector.extract_strided_slice %1264 {offsets = [0, 2], sizes = [14, 1], strides = [1, 1]} : vector<14x10xf32> to vector<14x1xf32>
    %1267 = vector.extract_strided_slice %1264 {offsets = [0, 4], sizes = [14, 1], strides = [1, 1]} : vector<14x10xf32> to vector<14x1xf32>
    %1268 = vector.extract_strided_slice %1264 {offsets = [0, 6], sizes = [14, 1], strides = [1, 1]} : vector<14x10xf32> to vector<14x1xf32>
    %1269 = vector.extract_strided_slice %1264 {offsets = [0, 8], sizes = [14, 1], strides = [1, 1]} : vector<14x10xf32> to vector<14x1xf32>
    %1270 = tpu.concatenate %1265, %1266, %1267, %1268, %1269 in 1 : vector<14x1xf32>, vector<14x1xf32>, vector<14x1xf32>, vector<14x1xf32>, vector<14x1xf32> -> vector<14x5xf32>
    %1271 = vector.extract_strided_slice %1264 {offsets = [0, 1], sizes = [14, 1], strides = [1, 1]} : vector<14x10xf32> to vector<14x1xf32>
    %1272 = vector.extract_strided_slice %1264 {offsets = [0, 3], sizes = [14, 1], strides = [1, 1]} : vector<14x10xf32> to vector<14x1xf32>
    %1273 = vector.extract_strided_slice %1264 {offsets = [0, 5], sizes = [14, 1], strides = [1, 1]} : vector<14x10xf32> to vector<14x1xf32>
    %1274 = vector.extract_strided_slice %1264 {offsets = [0, 7], sizes = [14, 1], strides = [1, 1]} : vector<14x10xf32> to vector<14x1xf32>
    %1275 = vector.extract_strided_slice %1264 {offsets = [0, 9], sizes = [14, 1], strides = [1, 1]} : vector<14x10xf32> to vector<14x1xf32>
    %1276 = tpu.concatenate %1271, %1272, %1273, %1274, %1275 in 1 : vector<14x1xf32>, vector<14x1xf32>, vector<14x1xf32>, vector<14x1xf32>, vector<14x1xf32> -> vector<14x5xf32>
    %1277 = arith.maximumf %1270, %1276 : vector<14x5xf32>
    %1278 = math.tanh %1277 : vector<14x5xf32>
    %1279 = vector.extract_strided_slice %187 {offsets = [8, 0], sizes = [1, 12], strides = [1, 1]} : vector<12x12xf32> to vector<1x12xf32>
    %1280 = vector.extract_strided_slice %348 {offsets = [8, 0], sizes = [1, 12], strides = [1, 1]} : vector<12x12xf32> to vector<1x12xf32>
    %1281 = vector.extract_strided_slice %509 {offsets = [8, 0], sizes = [1, 12], strides = [1, 1]} : vector<12x12xf32> to vector<1x12xf32>
    %1282 = vector.extract_strided_slice %670 {offsets = [8, 0], sizes = [1, 12], strides = [1, 1]} : vector<12x12xf32> to vector<1x12xf32>
    %1283 = vector.extract_strided_slice %831 {offsets = [8, 0], sizes = [1, 12], strides = [1, 1]} : vector<12x12xf32> to vector<1x12xf32>
    %1284 = vector.extract_strided_slice %992 {offsets = [8, 0], sizes = [1, 12], strides = [1, 1]} : vector<12x12xf32> to vector<1x12xf32>
    %1285 = vector.extract_strided_slice %187 {offsets = [9, 0], sizes = [1, 12], strides = [1, 1]} : vector<12x12xf32> to vector<1x12xf32>
    %1286 = vector.extract_strided_slice %348 {offsets = [9, 0], sizes = [1, 12], strides = [1, 1]} : vector<12x12xf32> to vector<1x12xf32>
    %1287 = vector.extract_strided_slice %509 {offsets = [9, 0], sizes = [1, 12], strides = [1, 1]} : vector<12x12xf32> to vector<1x12xf32>
    %1288 = vector.extract_strided_slice %670 {offsets = [9, 0], sizes = [1, 12], strides = [1, 1]} : vector<12x12xf32> to vector<1x12xf32>
    %1289 = vector.extract_strided_slice %831 {offsets = [9, 0], sizes = [1, 12], strides = [1, 1]} : vector<12x12xf32> to vector<1x12xf32>
    %1290 = vector.extract_strided_slice %992 {offsets = [9, 0], sizes = [1, 12], strides = [1, 1]} : vector<12x12xf32> to vector<1x12xf32>
    %1291 = vector.extract_strided_slice %187 {offsets = [10, 0], sizes = [1, 12], strides = [1, 1]} : vector<12x12xf32> to vector<1x12xf32>
    %1292 = vector.extract_strided_slice %348 {offsets = [10, 0], sizes = [1, 12], strides = [1, 1]} : vector<12x12xf32> to vector<1x12xf32>
    %1293 = vector.extract_strided_slice %509 {offsets = [10, 0], sizes = [1, 12], strides = [1, 1]} : vector<12x12xf32> to vector<1x12xf32>
    %1294 = vector.extract_strided_slice %670 {offsets = [10, 0], sizes = [1, 12], strides = [1, 1]} : vector<12x12xf32> to vector<1x12xf32>
    %1295 = vector.extract_strided_slice %831 {offsets = [10, 0], sizes = [1, 12], strides = [1, 1]} : vector<12x12xf32> to vector<1x12xf32>
    %1296 = vector.extract_strided_slice %992 {offsets = [10, 0], sizes = [1, 12], strides = [1, 1]} : vector<12x12xf32> to vector<1x12xf32>
    %1297 = tpu.concatenate %1279, %1280, %1281, %1282, %1283, %1284, %1285, %1286, %1287, %1288, %1289, %1290, %1291, %1292, %1293, %1294 in 0 : vector<1x12xf32>, vector<1x12xf32>, vector<1x12xf32>, vector<1x12xf32>, vector<1x12xf32>, vector<1x12xf32>, vector<1x12xf32>, vector<1x12xf32>, vector<1x12xf32>, vector<1x12xf32>, vector<1x12xf32>, vector<1x12xf32>, vector<1x12xf32>, vector<1x12xf32>, vector<1x12xf32>, vector<1x12xf32> -> vector<16x12xf32>
    %1298 = tpu.concatenate %1295, %1296 in 0 : vector<1x12xf32>, vector<1x12xf32> -> vector<2x12xf32>
    %1299 = tpu.concatenate %1297, %1298 in 0 : vector<16x12xf32>, vector<2x12xf32> -> vector<18x12xf32>
    %1300 = vector.extract_strided_slice %1299 {offsets = [0, 0], sizes = [18, 10], strides = [1, 1]} : vector<18x12xf32> to vector<18x10xf32>
    %1301 = vector.extract_strided_slice %1299 {offsets = [0, 1], sizes = [18, 10], strides = [1, 1]} : vector<18x12xf32> to vector<18x10xf32>
    %1302 = vector.extract_strided_slice %1299 {offsets = [0, 2], sizes = [18, 10], strides = [1, 1]} : vector<18x12xf32> to vector<18x10xf32>
    %1303 = tpu.concatenate %1300, %1301, %1302 in 0 : vector<18x10xf32>, vector<18x10xf32>, vector<18x10xf32> -> vector<54x10xf32>
    %cst_32 = arith.constant dense<0.000000e+00> : vector<14x10xf32>
    %1304 = tpu.matmul %993, %1303, %cst_32 {dimension_numbers = #tpu.dot_dimension_numbers<[1], [0], [0], [1], [0, 0, 1, 1], [], []>} : vector<14x54xf32>, vector<54x10xf32>, vector<14x10xf32> -> vector<14x10xf32>
    %1305 = vector.broadcast %994 : vector<14x1xf32> to vector<14x10xf32>
    %1306 = arith.addf %1304, %1305 : vector<14x10xf32>
    %1307 = vector.extract_strided_slice %187 {offsets = [9, 0], sizes = [1, 12], strides = [1, 1]} : vector<12x12xf32> to vector<1x12xf32>
    %1308 = vector.extract_strided_slice %348 {offsets = [9, 0], sizes = [1, 12], strides = [1, 1]} : vector<12x12xf32> to vector<1x12xf32>
    %1309 = vector.extract_strided_slice %509 {offsets = [9, 0], sizes = [1, 12], strides = [1, 1]} : vector<12x12xf32> to vector<1x12xf32>
    %1310 = vector.extract_strided_slice %670 {offsets = [9, 0], sizes = [1, 12], strides = [1, 1]} : vector<12x12xf32> to vector<1x12xf32>
    %1311 = vector.extract_strided_slice %831 {offsets = [9, 0], sizes = [1, 12], strides = [1, 1]} : vector<12x12xf32> to vector<1x12xf32>
    %1312 = vector.extract_strided_slice %992 {offsets = [9, 0], sizes = [1, 12], strides = [1, 1]} : vector<12x12xf32> to vector<1x12xf32>
    %1313 = vector.extract_strided_slice %187 {offsets = [10, 0], sizes = [1, 12], strides = [1, 1]} : vector<12x12xf32> to vector<1x12xf32>
    %1314 = vector.extract_strided_slice %348 {offsets = [10, 0], sizes = [1, 12], strides = [1, 1]} : vector<12x12xf32> to vector<1x12xf32>
    %1315 = vector.extract_strided_slice %509 {offsets = [10, 0], sizes = [1, 12], strides = [1, 1]} : vector<12x12xf32> to vector<1x12xf32>
    %1316 = vector.extract_strided_slice %670 {offsets = [10, 0], sizes = [1, 12], strides = [1, 1]} : vector<12x12xf32> to vector<1x12xf32>
    %1317 = vector.extract_strided_slice %831 {offsets = [10, 0], sizes = [1, 12], strides = [1, 1]} : vector<12x12xf32> to vector<1x12xf32>
    %1318 = vector.extract_strided_slice %992 {offsets = [10, 0], sizes = [1, 12], strides = [1, 1]} : vector<12x12xf32> to vector<1x12xf32>
    %1319 = vector.extract_strided_slice %187 {offsets = [11, 0], sizes = [1, 12], strides = [1, 1]} : vector<12x12xf32> to vector<1x12xf32>
    %1320 = vector.extract_strided_slice %348 {offsets = [11, 0], sizes = [1, 12], strides = [1, 1]} : vector<12x12xf32> to vector<1x12xf32>
    %1321 = vector.extract_strided_slice %509 {offsets = [11, 0], sizes = [1, 12], strides = [1, 1]} : vector<12x12xf32> to vector<1x12xf32>
    %1322 = vector.extract_strided_slice %670 {offsets = [11, 0], sizes = [1, 12], strides = [1, 1]} : vector<12x12xf32> to vector<1x12xf32>
    %1323 = vector.extract_strided_slice %831 {offsets = [11, 0], sizes = [1, 12], strides = [1, 1]} : vector<12x12xf32> to vector<1x12xf32>
    %1324 = vector.extract_strided_slice %992 {offsets = [11, 0], sizes = [1, 12], strides = [1, 1]} : vector<12x12xf32> to vector<1x12xf32>
    %1325 = tpu.concatenate %1307, %1308, %1309, %1310, %1311, %1312, %1313, %1314, %1315, %1316, %1317, %1318, %1319, %1320, %1321, %1322 in 0 : vector<1x12xf32>, vector<1x12xf32>, vector<1x12xf32>, vector<1x12xf32>, vector<1x12xf32>, vector<1x12xf32>, vector<1x12xf32>, vector<1x12xf32>, vector<1x12xf32>, vector<1x12xf32>, vector<1x12xf32>, vector<1x12xf32>, vector<1x12xf32>, vector<1x12xf32>, vector<1x12xf32>, vector<1x12xf32> -> vector<16x12xf32>
    %1326 = tpu.concatenate %1323, %1324 in 0 : vector<1x12xf32>, vector<1x12xf32> -> vector<2x12xf32>
    %1327 = tpu.concatenate %1325, %1326 in 0 : vector<16x12xf32>, vector<2x12xf32> -> vector<18x12xf32>
    %1328 = vector.extract_strided_slice %1327 {offsets = [0, 0], sizes = [18, 10], strides = [1, 1]} : vector<18x12xf32> to vector<18x10xf32>
    %1329 = vector.extract_strided_slice %1327 {offsets = [0, 1], sizes = [18, 10], strides = [1, 1]} : vector<18x12xf32> to vector<18x10xf32>
    %1330 = vector.extract_strided_slice %1327 {offsets = [0, 2], sizes = [18, 10], strides = [1, 1]} : vector<18x12xf32> to vector<18x10xf32>
    %1331 = tpu.concatenate %1328, %1329, %1330 in 0 : vector<18x10xf32>, vector<18x10xf32>, vector<18x10xf32> -> vector<54x10xf32>
    %cst_33 = arith.constant dense<0.000000e+00> : vector<14x10xf32>
    %1332 = tpu.matmul %993, %1331, %cst_33 {dimension_numbers = #tpu.dot_dimension_numbers<[1], [0], [0], [1], [0, 0, 1, 1], [], []>} : vector<14x54xf32>, vector<54x10xf32>, vector<14x10xf32> -> vector<14x10xf32>
    %1333 = vector.broadcast %994 : vector<14x1xf32> to vector<14x10xf32>
    %1334 = arith.addf %1332, %1333 : vector<14x10xf32>
    %1335 = arith.maximumf %1306, %1334 : vector<14x10xf32>
    %1336 = vector.extract_strided_slice %1335 {offsets = [0, 0], sizes = [14, 1], strides = [1, 1]} : vector<14x10xf32> to vector<14x1xf32>
    %1337 = vector.extract_strided_slice %1335 {offsets = [0, 2], sizes = [14, 1], strides = [1, 1]} : vector<14x10xf32> to vector<14x1xf32>
    %1338 = vector.extract_strided_slice %1335 {offsets = [0, 4], sizes = [14, 1], strides = [1, 1]} : vector<14x10xf32> to vector<14x1xf32>
    %1339 = vector.extract_strided_slice %1335 {offsets = [0, 6], sizes = [14, 1], strides = [1, 1]} : vector<14x10xf32> to vector<14x1xf32>
    %1340 = vector.extract_strided_slice %1335 {offsets = [0, 8], sizes = [14, 1], strides = [1, 1]} : vector<14x10xf32> to vector<14x1xf32>
    %1341 = tpu.concatenate %1336, %1337, %1338, %1339, %1340 in 1 : vector<14x1xf32>, vector<14x1xf32>, vector<14x1xf32>, vector<14x1xf32>, vector<14x1xf32> -> vector<14x5xf32>
    %1342 = vector.extract_strided_slice %1335 {offsets = [0, 1], sizes = [14, 1], strides = [1, 1]} : vector<14x10xf32> to vector<14x1xf32>
    %1343 = vector.extract_strided_slice %1335 {offsets = [0, 3], sizes = [14, 1], strides = [1, 1]} : vector<14x10xf32> to vector<14x1xf32>
    %1344 = vector.extract_strided_slice %1335 {offsets = [0, 5], sizes = [14, 1], strides = [1, 1]} : vector<14x10xf32> to vector<14x1xf32>
    %1345 = vector.extract_strided_slice %1335 {offsets = [0, 7], sizes = [14, 1], strides = [1, 1]} : vector<14x10xf32> to vector<14x1xf32>
    %1346 = vector.extract_strided_slice %1335 {offsets = [0, 9], sizes = [14, 1], strides = [1, 1]} : vector<14x10xf32> to vector<14x1xf32>
    %1347 = tpu.concatenate %1342, %1343, %1344, %1345, %1346 in 1 : vector<14x1xf32>, vector<14x1xf32>, vector<14x1xf32>, vector<14x1xf32>, vector<14x1xf32> -> vector<14x5xf32>
    %1348 = arith.maximumf %1341, %1347 : vector<14x5xf32>
    %1349 = math.tanh %1348 : vector<14x5xf32>
    %1350 = tpu.concatenate %1065, %1136, %1207, %1278, %1349 in 1 : vector<14x5xf32>, vector<14x5xf32>, vector<14x5xf32>, vector<14x5xf32>, vector<14x5xf32> -> vector<14x25xf32>
    %c0_34 = arith.constant 0 : index
    %c0_35 = arith.constant 0 : index
    %1351 = vector.load %arg7[%c0_34, %c0_35] : memref<1x150xf32, #tpu.memory_space<vmem>>, vector<1x150xf32>
    %1352 = vector.extract_strided_slice %1350 {offsets = [0, 0], sizes = [1, 25], strides = [1, 1]} : vector<14x25xf32> to vector<1x25xf32>
    %c0_36 = arith.constant 0 : index
    %c0_37 = arith.constant 0 : index
    %c0_38 = arith.constant 0 : index
    %1353 = vector.load %arg6[%c0_36, %c0_37, %c0_38] : memref<14x25x150xf32, #tpu.memory_space<vmem>>, vector<1x25x150xf32>
    %1354 = vector.shape_cast %1353 : vector<1x25x150xf32> to vector<25x150xf32>
    %cst_39 = arith.constant dense<0.000000e+00> : vector<1x150xf32>
    %1355 = tpu.matmul %1352, %1354, %cst_39 {dimension_numbers = #tpu.dot_dimension_numbers<[1], [0], [0], [1], [0, 0, 1, 1], [], []>} : vector<1x25xf32>, vector<25x150xf32>, vector<1x150xf32> -> vector<1x150xf32>
    %1356 = arith.addf %1351, %1355 : vector<1x150xf32>
    %1357 = vector.extract_strided_slice %1350 {offsets = [1, 0], sizes = [1, 25], strides = [1, 1]} : vector<14x25xf32> to vector<1x25xf32>
    %c1_40 = arith.constant 1 : index
    %c0_41 = arith.constant 0 : index
    %c0_42 = arith.constant 0 : index
    %1358 = vector.load %arg6[%c1_40, %c0_41, %c0_42] : memref<14x25x150xf32, #tpu.memory_space<vmem>>, vector<1x25x150xf32>
    %1359 = vector.shape_cast %1358 : vector<1x25x150xf32> to vector<25x150xf32>
    %cst_43 = arith.constant dense<0.000000e+00> : vector<1x150xf32>
    %1360 = tpu.matmul %1357, %1359, %cst_43 {dimension_numbers = #tpu.dot_dimension_numbers<[1], [0], [0], [1], [0, 0, 1, 1], [], []>} : vector<1x25xf32>, vector<25x150xf32>, vector<1x150xf32> -> vector<1x150xf32>
    %1361 = arith.addf %1356, %1360 : vector<1x150xf32>
    %1362 = vector.extract_strided_slice %1350 {offsets = [2, 0], sizes = [1, 25], strides = [1, 1]} : vector<14x25xf32> to vector<1x25xf32>
    %c2_44 = arith.constant 2 : index
    %c0_45 = arith.constant 0 : index
    %c0_46 = arith.constant 0 : index
    %1363 = vector.load %arg6[%c2_44, %c0_45, %c0_46] : memref<14x25x150xf32, #tpu.memory_space<vmem>>, vector<1x25x150xf32>
    %1364 = vector.shape_cast %1363 : vector<1x25x150xf32> to vector<25x150xf32>
    %cst_47 = arith.constant dense<0.000000e+00> : vector<1x150xf32>
    %1365 = tpu.matmul %1362, %1364, %cst_47 {dimension_numbers = #tpu.dot_dimension_numbers<[1], [0], [0], [1], [0, 0, 1, 1], [], []>} : vector<1x25xf32>, vector<25x150xf32>, vector<1x150xf32> -> vector<1x150xf32>
    %1366 = arith.addf %1361, %1365 : vector<1x150xf32>
    %1367 = vector.extract_strided_slice %1350 {offsets = [3, 0], sizes = [1, 25], strides = [1, 1]} : vector<14x25xf32> to vector<1x25xf32>
    %c3_48 = arith.constant 3 : index
    %c0_49 = arith.constant 0 : index
    %c0_50 = arith.constant 0 : index
    %1368 = vector.load %arg6[%c3_48, %c0_49, %c0_50] : memref<14x25x150xf32, #tpu.memory_space<vmem>>, vector<1x25x150xf32>
    %1369 = vector.shape_cast %1368 : vector<1x25x150xf32> to vector<25x150xf32>
    %cst_51 = arith.constant dense<0.000000e+00> : vector<1x150xf32>
    %1370 = tpu.matmul %1367, %1369, %cst_51 {dimension_numbers = #tpu.dot_dimension_numbers<[1], [0], [0], [1], [0, 0, 1, 1], [], []>} : vector<1x25xf32>, vector<25x150xf32>, vector<1x150xf32> -> vector<1x150xf32>
    %1371 = arith.addf %1366, %1370 : vector<1x150xf32>
    %1372 = vector.extract_strided_slice %1350 {offsets = [4, 0], sizes = [1, 25], strides = [1, 1]} : vector<14x25xf32> to vector<1x25xf32>
    %c4_52 = arith.constant 4 : index
    %c0_53 = arith.constant 0 : index
    %c0_54 = arith.constant 0 : index
    %1373 = vector.load %arg6[%c4_52, %c0_53, %c0_54] : memref<14x25x150xf32, #tpu.memory_space<vmem>>, vector<1x25x150xf32>
    %1374 = vector.shape_cast %1373 : vector<1x25x150xf32> to vector<25x150xf32>
    %cst_55 = arith.constant dense<0.000000e+00> : vector<1x150xf32>
    %1375 = tpu.matmul %1372, %1374, %cst_55 {dimension_numbers = #tpu.dot_dimension_numbers<[1], [0], [0], [1], [0, 0, 1, 1], [], []>} : vector<1x25xf32>, vector<25x150xf32>, vector<1x150xf32> -> vector<1x150xf32>
    %1376 = arith.addf %1371, %1375 : vector<1x150xf32>
    %1377 = vector.extract_strided_slice %1350 {offsets = [5, 0], sizes = [1, 25], strides = [1, 1]} : vector<14x25xf32> to vector<1x25xf32>
    %c5_56 = arith.constant 5 : index
    %c0_57 = arith.constant 0 : index
    %c0_58 = arith.constant 0 : index
    %1378 = vector.load %arg6[%c5_56, %c0_57, %c0_58] : memref<14x25x150xf32, #tpu.memory_space<vmem>>, vector<1x25x150xf32>
    %1379 = vector.shape_cast %1378 : vector<1x25x150xf32> to vector<25x150xf32>
    %cst_59 = arith.constant dense<0.000000e+00> : vector<1x150xf32>
    %1380 = tpu.matmul %1377, %1379, %cst_59 {dimension_numbers = #tpu.dot_dimension_numbers<[1], [0], [0], [1], [0, 0, 1, 1], [], []>} : vector<1x25xf32>, vector<25x150xf32>, vector<1x150xf32> -> vector<1x150xf32>
    %1381 = arith.addf %1376, %1380 : vector<1x150xf32>
    %1382 = vector.extract_strided_slice %1350 {offsets = [6, 0], sizes = [1, 25], strides = [1, 1]} : vector<14x25xf32> to vector<1x25xf32>
    %c6_60 = arith.constant 6 : index
    %c0_61 = arith.constant 0 : index
    %c0_62 = arith.constant 0 : index
    %1383 = vector.load %arg6[%c6_60, %c0_61, %c0_62] : memref<14x25x150xf32, #tpu.memory_space<vmem>>, vector<1x25x150xf32>
    %1384 = vector.shape_cast %1383 : vector<1x25x150xf32> to vector<25x150xf32>
    %cst_63 = arith.constant dense<0.000000e+00> : vector<1x150xf32>
    %1385 = tpu.matmul %1382, %1384, %cst_63 {dimension_numbers = #tpu.dot_dimension_numbers<[1], [0], [0], [1], [0, 0, 1, 1], [], []>} : vector<1x25xf32>, vector<25x150xf32>, vector<1x150xf32> -> vector<1x150xf32>
    %1386 = arith.addf %1381, %1385 : vector<1x150xf32>
    %1387 = vector.extract_strided_slice %1350 {offsets = [7, 0], sizes = [1, 25], strides = [1, 1]} : vector<14x25xf32> to vector<1x25xf32>
    %c7_64 = arith.constant 7 : index
    %c0_65 = arith.constant 0 : index
    %c0_66 = arith.constant 0 : index
    %1388 = vector.load %arg6[%c7_64, %c0_65, %c0_66] : memref<14x25x150xf32, #tpu.memory_space<vmem>>, vector<1x25x150xf32>
    %1389 = vector.shape_cast %1388 : vector<1x25x150xf32> to vector<25x150xf32>
    %cst_67 = arith.constant dense<0.000000e+00> : vector<1x150xf32>
    %1390 = tpu.matmul %1387, %1389, %cst_67 {dimension_numbers = #tpu.dot_dimension_numbers<[1], [0], [0], [1], [0, 0, 1, 1], [], []>} : vector<1x25xf32>, vector<25x150xf32>, vector<1x150xf32> -> vector<1x150xf32>
    %1391 = arith.addf %1386, %1390 : vector<1x150xf32>
    %1392 = vector.extract_strided_slice %1350 {offsets = [8, 0], sizes = [1, 25], strides = [1, 1]} : vector<14x25xf32> to vector<1x25xf32>
    %c8_68 = arith.constant 8 : index
    %c0_69 = arith.constant 0 : index
    %c0_70 = arith.constant 0 : index
    %1393 = vector.load %arg6[%c8_68, %c0_69, %c0_70] : memref<14x25x150xf32, #tpu.memory_space<vmem>>, vector<1x25x150xf32>
    %1394 = vector.shape_cast %1393 : vector<1x25x150xf32> to vector<25x150xf32>
    %cst_71 = arith.constant dense<0.000000e+00> : vector<1x150xf32>
    %1395 = tpu.matmul %1392, %1394, %cst_71 {dimension_numbers = #tpu.dot_dimension_numbers<[1], [0], [0], [1], [0, 0, 1, 1], [], []>} : vector<1x25xf32>, vector<25x150xf32>, vector<1x150xf32> -> vector<1x150xf32>
    %1396 = arith.addf %1391, %1395 : vector<1x150xf32>
    %1397 = vector.extract_strided_slice %1350 {offsets = [9, 0], sizes = [1, 25], strides = [1, 1]} : vector<14x25xf32> to vector<1x25xf32>
    %c9_72 = arith.constant 9 : index
    %c0_73 = arith.constant 0 : index
    %c0_74 = arith.constant 0 : index
    %1398 = vector.load %arg6[%c9_72, %c0_73, %c0_74] : memref<14x25x150xf32, #tpu.memory_space<vmem>>, vector<1x25x150xf32>
    %1399 = vector.shape_cast %1398 : vector<1x25x150xf32> to vector<25x150xf32>
    %cst_75 = arith.constant dense<0.000000e+00> : vector<1x150xf32>
    %1400 = tpu.matmul %1397, %1399, %cst_75 {dimension_numbers = #tpu.dot_dimension_numbers<[1], [0], [0], [1], [0, 0, 1, 1], [], []>} : vector<1x25xf32>, vector<25x150xf32>, vector<1x150xf32> -> vector<1x150xf32>
    %1401 = arith.addf %1396, %1400 : vector<1x150xf32>
    %1402 = vector.extract_strided_slice %1350 {offsets = [10, 0], sizes = [1, 25], strides = [1, 1]} : vector<14x25xf32> to vector<1x25xf32>
    %c10_76 = arith.constant 10 : index
    %c0_77 = arith.constant 0 : index
    %c0_78 = arith.constant 0 : index
    %1403 = vector.load %arg6[%c10_76, %c0_77, %c0_78] : memref<14x25x150xf32, #tpu.memory_space<vmem>>, vector<1x25x150xf32>
    %1404 = vector.shape_cast %1403 : vector<1x25x150xf32> to vector<25x150xf32>
    %cst_79 = arith.constant dense<0.000000e+00> : vector<1x150xf32>
    %1405 = tpu.matmul %1402, %1404, %cst_79 {dimension_numbers = #tpu.dot_dimension_numbers<[1], [0], [0], [1], [0, 0, 1, 1], [], []>} : vector<1x25xf32>, vector<25x150xf32>, vector<1x150xf32> -> vector<1x150xf32>
    %1406 = arith.addf %1401, %1405 : vector<1x150xf32>
    %1407 = vector.extract_strided_slice %1350 {offsets = [11, 0], sizes = [1, 25], strides = [1, 1]} : vector<14x25xf32> to vector<1x25xf32>
    %c11_80 = arith.constant 11 : index
    %c0_81 = arith.constant 0 : index
    %c0_82 = arith.constant 0 : index
    %1408 = vector.load %arg6[%c11_80, %c0_81, %c0_82] : memref<14x25x150xf32, #tpu.memory_space<vmem>>, vector<1x25x150xf32>
    %1409 = vector.shape_cast %1408 : vector<1x25x150xf32> to vector<25x150xf32>
    %cst_83 = arith.constant dense<0.000000e+00> : vector<1x150xf32>
    %1410 = tpu.matmul %1407, %1409, %cst_83 {dimension_numbers = #tpu.dot_dimension_numbers<[1], [0], [0], [1], [0, 0, 1, 1], [], []>} : vector<1x25xf32>, vector<25x150xf32>, vector<1x150xf32> -> vector<1x150xf32>
    %1411 = arith.addf %1406, %1410 : vector<1x150xf32>
    %1412 = vector.extract_strided_slice %1350 {offsets = [12, 0], sizes = [1, 25], strides = [1, 1]} : vector<14x25xf32> to vector<1x25xf32>
    %c12_84 = arith.constant 12 : index
    %c0_85 = arith.constant 0 : index
    %c0_86 = arith.constant 0 : index
    %1413 = vector.load %arg6[%c12_84, %c0_85, %c0_86] : memref<14x25x150xf32, #tpu.memory_space<vmem>>, vector<1x25x150xf32>
    %1414 = vector.shape_cast %1413 : vector<1x25x150xf32> to vector<25x150xf32>
    %cst_87 = arith.constant dense<0.000000e+00> : vector<1x150xf32>
    %1415 = tpu.matmul %1412, %1414, %cst_87 {dimension_numbers = #tpu.dot_dimension_numbers<[1], [0], [0], [1], [0, 0, 1, 1], [], []>} : vector<1x25xf32>, vector<25x150xf32>, vector<1x150xf32> -> vector<1x150xf32>
    %1416 = arith.addf %1411, %1415 : vector<1x150xf32>
    %1417 = vector.extract_strided_slice %1350 {offsets = [13, 0], sizes = [1, 25], strides = [1, 1]} : vector<14x25xf32> to vector<1x25xf32>
    %c13_88 = arith.constant 13 : index
    %c0_89 = arith.constant 0 : index
    %c0_90 = arith.constant 0 : index
    %1418 = vector.load %arg6[%c13_88, %c0_89, %c0_90] : memref<14x25x150xf32, #tpu.memory_space<vmem>>, vector<1x25x150xf32>
    %1419 = vector.shape_cast %1418 : vector<1x25x150xf32> to vector<25x150xf32>
    %cst_91 = arith.constant dense<0.000000e+00> : vector<1x150xf32>
    %1420 = tpu.matmul %1417, %1419, %cst_91 {dimension_numbers = #tpu.dot_dimension_numbers<[1], [0], [0], [1], [0, 0, 1, 1], [], []>} : vector<1x25xf32>, vector<25x150xf32>, vector<1x150xf32> -> vector<1x150xf32>
    %1421 = arith.addf %1416, %1420 : vector<1x150xf32>
    %1422 = math.tanh %1421 : vector<1x150xf32>
    %c0_92 = arith.constant 0 : index
    %c0_93 = arith.constant 0 : index
    %1423 = vector.load %arg8[%c0_92, %c0_93] : memref<150x10xf32, #tpu.memory_space<vmem>>, vector<150x10xf32>
    %cst_94 = arith.constant dense<0.000000e+00> : vector<1x10xf32>
    %1424 = tpu.matmul %1422, %1423, %cst_94 {dimension_numbers = #tpu.dot_dimension_numbers<[1], [0], [0], [1], [0, 0, 1, 1], [], []>} : vector<1x150xf32>, vector<150x10xf32>, vector<1x10xf32> -> vector<1x10xf32>
    %c0_95 = arith.constant 0 : index
    %c0_96 = arith.constant 0 : index
    %1425 = vector.load %arg9[%c0_95, %c0_96] : memref<1x10xf32, #tpu.memory_space<vmem>>, vector<1x10xf32>
    %1426 = arith.addf %1424, %1425 : vector<1x10xf32>
    %c0_97 = arith.constant 0 : index
    %c0_98 = arith.constant 0 : index
    %c0_99 = arith.constant 0 : index
    %1427 = vector.load %arg10[%c0_97, %c0_98, %c0_99] : memref<1x1x10xf32, #tpu.memory_space<vmem>>, vector<1x1x10xf32>
    %1428 = vector.shape_cast %1427 : vector<1x1x10xf32> to vector<1x10xf32>
    %1429 = vector.shape_cast %1426 : vector<1x10xf32> to vector<1x1x10xf32>
    tpu.vector_store %arg10[%c0_97, %c0_98, %c0_99], %1429 {strides = array<i32>} : memref<1x1x10xf32, #tpu.memory_space<vmem>>, vector<1x1x10xf32>,
    return
  }
  func.func @transform_0(%arg0: i32) -> (i32, i32, i32) {
    %c0_i32 = arith.constant 0 : i32
    %c0_i32_0 = arith.constant 0 : i32
    %c0_i32_1 = arith.constant 0 : i32
    return %arg0, %c0_i32, %c0_i32_0 : i32, i32, i32
  }
  func.func @transform_1(%arg0: i32) -> i32 {
    %c0_i32 = arith.constant 0 : i32
    %c0_i32_0 = arith.constant 0 : i32
    return %c0_i32 : i32
  }
  func.func @transform_2(%arg0: i32) -> i32 {
    %c0_i32 = arith.constant 0 : i32
    %c0_i32_0 = arith.constant 0 : i32
    return %c0_i32 : i32
  }
  func.func @transform_3(%arg0: i32) -> (i32, i32) {
    %c0_i32 = arith.constant 0 : i32
    %c0_i32_0 = arith.constant 0 : i32
    %c0_i32_1 = arith.constant 0 : i32
    return %c0_i32, %c0_i32_0 : i32, i32
  }
  func.func @transform_4(%arg0: i32) -> (i32, i32) {
    %c0_i32 = arith.constant 0 : i32
    %c0_i32_0 = arith.constant 0 : i32
    %c0_i32_1 = arith.constant 0 : i32
    return %c0_i32, %c0_i32_0 : i32, i32
  }
  func.func @transform_5(%arg0: i32) -> (i32, i32, i32) {
    %c0_i32 = arith.constant 0 : i32
    %c0_i32_0 = arith.constant 0 : i32
    %c0_i32_1 = arith.constant 0 : i32
    %c0_i32_2 = arith.constant 0 : i32
    return %c0_i32, %c0_i32_0, %c0_i32_1 : i32, i32, i32
  }
  func.func @transform_6(%arg0: i32) -> (i32, i32) {
    %c0_i32 = arith.constant 0 : i32
    %c0_i32_0 = arith.constant 0 : i32
    %c0_i32_1 = arith.constant 0 : i32
    return %c0_i32, %c0_i32_0 : i32, i32
  }
  func.func @transform_7(%arg0: i32) -> (i32, i32) {
    %c0_i32 = arith.constant 0 : i32
    %c0_i32_0 = arith.constant 0 : i32
    %c0_i32_1 = arith.constant 0 : i32
    return %c0_i32, %c0_i32_0 : i32, i32
  }
  func.func @transform_8(%arg0: i32) -> (i32, i32) {
    %c0_i32 = arith.constant 0 : i32
    %c0_i32_0 = arith.constant 0 : i32
    %c0_i32_1 = arith.constant 0 : i32
    return %c0_i32, %c0_i32_0 : i32, i32
  }
  func.func @transform_9(%arg0: i32) -> (i32, i32, i32) {
    %c0_i32 = arith.constant 0 : i32
    %c0_i32_0 = arith.constant 0 : i32
    %c0_i32_1 = arith.constant 0 : i32
    return %arg0, %c0_i32, %c0_i32_0 : i32, i32, i32
  }
}

</mosaic_0001>

<llo_original>
// kernel: robust_conv_net.1
$region0: #{robust_conv_net.1}
  #allocation0 [shape = 'u32[]', space=smem, size = 0x4, offset = 0x4, fixed_abs, tag = 'smem constant byte address 0x4 - core index']
  #allocation1 [shape = 'u32[144,128]{1,0:T(1,128)}', space=vmem, size = 0x12000, scoped, tag = 'internal scratch']
  %s0 = inlined_call_operand.vmem [shape: f32[2,28,28], index: 0, kind: input, shape index: {}]
  %s1 = inlined_call_operand.vmem [shape: f32[150], index: 1, kind: input, shape index: {}]
  %s2 = inlined_call_operand.vmem [shape: f32[6], index: 2, kind: input, shape index: {}]
  %s3 = inlined_call_operand.vmem [shape: f32[14,54], index: 3, kind: input, shape index: {}]
  %s4 = inlined_call_operand.vmem [shape: f32[14,1], index: 4, kind: input, shape index: {}]
  %s5 = inlined_call_operand.vmem [shape: f32[14,25,150], index: 5, kind: input, shape index: {}]
  %s6 = inlined_call_operand.vmem [shape: f32[1,150], index: 6, kind: input, shape index: {}]
  %s7 = inlined_call_operand.vmem [shape: f32[150,10], index: 7, kind: input, shape index: {}]
  %s8 = inlined_call_operand.vmem [shape: f32[1,10], index: 8, kind: input, shape index: {}]
  %s9 = inlined_call_operand.hbm [shape: f32[2,1,10], index: 9, kind: output, shape index: {}]
  %s10 = sld [smem:[#allocation0]]
  $region77: #{robust_conv_net.1} parent=0
    _
  %s12 = ssub.s32 1, %s10
  %s13 = scalar_select 0, %s12, %s10
  $region1: #{robust_conv_net.1} parent=0
    #allocation2 [shape = 'u8[1024]{0}', space=smem, size = 0x400, scoped, tag = 'input window, operand 1, single buffered']
    #allocation3 [shape = 's32[2]{0}', space=sflag, size = 0x8, scoped, tag = 'scoped memory for robust_conv_net.1']
    #allocation4 [shape = 's32[2]{0}', space=sflag, size = 0x8, scoped, tag = 'scoped memory for robust_conv_net.1']
    #allocation5 [shape = 'u8[512]{0}', space=smem, size = 0x200, scoped, tag = 'input window, operand 2, single buffered']
    #allocation6 [shape = 's32[1]{0}', space=sflag, size = 0x4, scoped, tag = 'scoped memory for robust_conv_net.1']
    #allocation7 [shape = 'u8[1024]{0}', space=vmem, size = 0x400, scoped, tag = 'output window, operand 0']
    %14 = vsyncpa [#allocation4], 0
    %15 = vsyncpa [#allocation6], 0
    %16 = vsyncpa [#allocation3], 0
    %s17 = scalar_lea.sflag [#allocation3], 1
    %18 = vsyncpa %s17, 0
    loop: start=0, step=1, limit=4
    $region2: #{robust_conv_net.1} parent=1 // loop_pre_header
      _
    $region3: #{robust_conv_net.1} parent=1 // loop_header
      %s20 = sphi 0, %s24
      %p21 = scmp.ge.s32.totalorder %s20, 4
      %s30 = sphi 0, %s32
      %s33 = sphi 0, %s30
      %s34 = sphi 0, %s33
      %s50 = sphi 0, %s34
      %s54 = sphi 0, %s54
      %s56 = sphi 0, %s54
      %s57 = sphi 0, %s56
      %s71 = sphi 0, %s57
      %s75 = sphi 0, %s75
      %s77 = sphi 0, %s75
      %s78 = sphi 0, %s77
      %s92 = sphi 0, %s78
      %s96 = sphi 0, %s96
      %s98 = sphi 0, %s96
      %s99 = sphi 0, %s98
      %s113 = sphi 0, %s99
      %s117 = sphi 0, %s117
      %s119 = sphi 0, %s117
      %s120 = sphi 0, %s119
      %s134 = sphi 0, %s120
      %s138 = sphi 0, %s138
      %s140 = sphi 0, %s138
      %s141 = sphi 0, %s140
      %s155 = sphi 0, %s141
      %s159 = sphi 0, %s159
      %s161 = sphi 0, %s159
      %s162 = sphi 0, %s161
      %s176 = sphi 0, %s162
      %s180 = sphi 0, %s180
      %s182 = sphi 0, %s180
      %s183 = sphi 0, %s182
      %s197 = sphi 0, %s183
      %s201 = sphi 0, %s201
      %s203 = sphi 0, %s201
      %s204 = sphi 0, %s203
      %s218 = sphi 0, %s204
      %s224 = sphi 0, %s226
      %s227 = sphi 0, %s224
      %s228 = sphi 0, %s227
      %s244 = sphi 0, %s228
    $region4: #{robust_conv_net.1} parent=1 // loop_header_branch
      %23 = sbr.rel (%p21) target = $region8
    $region5: #{robust_conv_net.1} parent=1 // loop_body
      %s25 = ssub.s32 %s20, 1
      %s26 = ssub.s32 %s20, 2
      %s27 = sadd.s32 %s20, 1
      %s28 = ssub.s32 %s20, %s27
      %p29 = scmp.eq.s32.totalorder %s28, 0
      %s31 = sadd.s32 %s30, 1
      %s32 = scalar_select %p29, %s30, %s31
      %p35 = pneg %p29
      %p36 = scmp.eq.s32.totalorder %s20, 1
      %p37 = por %p35, %p36
      %p38 = scmp.ne.s32.totalorder %s30, %s33
      %p39 = scmp.eq.s32.totalorder %s20, 0
      %p40 = por %p38, %p39
      %p41 = scmp.ne.s32.totalorder %s30, %s33
      %p42 = scmp.eq.s32.totalorder %s25, 1
      %p43 = por %p41, %p42
      %p44 = scmp.ne.s32.totalorder %s33, %s34
      %p45 = scmp.eq.s32.totalorder %s25, 0
      %p46 = por %p44, %p45
      %p47 = scmp.ne.s32.totalorder %s33, %s34
      %p48 = scmp.eq.s32.totalorder %s26, 1
      %p49 = por %p47, %p48
      %p51 = scmp.ne.s32.totalorder %s34, %s50
      %p52 = scmp.eq.s32.totalorder %s26, 0
      %p53 = por %p51, %p52
      %s55 = sadd.s32 %s54, 1
      %p58 = scmp.eq.s32.totalorder %s20, 1
      %p59 = scmp.ne.s32.totalorder %s54, %s56
      %p60 = scmp.eq.s32.totalorder %s20, 0
      %p61 = por %p59, %p60
      %p62 = scmp.ne.s32.totalorder %s54, %s56
      %p63 = scmp.eq.s32.totalorder %s25, 1
      %p64 = por %p62, %p63
      %p65 = scmp.ne.s32.totalorder %s56, %s57
      %p66 = scmp.eq.s32.totalorder %s25, 0
      %p67 = por %p65, %p66
      %p68 = scmp.ne.s32.totalorder %s56, %s57
      %p69 = scmp.eq.s32.totalorder %s26, 1
      %p70 = por %p68, %p69
      %p72 = scmp.ne.s32.totalorder %s57, %s71
      %p73 = scmp.eq.s32.totalorder %s26, 0
      %p74 = por %p72, %p73
      %s76 = sadd.s32 %s75, 1
      %p79 = scmp.eq.s32.totalorder %s20, 1
      %p80 = scmp.ne.s32.totalorder %s75, %s77
      %p81 = scmp.eq.s32.totalorder %s20, 0
      %p82 = por %p80, %p81
      %p83 = scmp.ne.s32.totalorder %s75, %s77
      %p84 = scmp.eq.s32.totalorder %s25, 1
      %p85 = por %p83, %p84
      %p86 = scmp.ne.s32.totalorder %s77, %s78
      %p87 = scmp.eq.s32.totalorder %s25, 0
      %p88 = por %p86, %p87
      %p89 = scmp.ne.s32.totalorder %s77, %s78
      %p90 = scmp.eq.s32.totalorder %s26, 1
      %p91 = por %p89, %p90
      %p93 = scmp.ne.s32.totalorder %s78, %s92
      %p94 = scmp.eq.s32.totalorder %s26, 0
      %p95 = por %p93, %p94
      %s97 = sadd.s32 %s96, 1
      %p100 = scmp.eq.s32.totalorder %s20, 1
      %p101 = scmp.ne.s32.totalorder %s96, %s98
      %p102 = scmp.eq.s32.totalorder %s20, 0
      %p103 = por %p101, %p102
      %p104 = scmp.ne.s32.totalorder %s96, %s98
      %p105 = scmp.eq.s32.totalorder %s25, 1
      %p106 = por %p104, %p105
      %p107 = scmp.ne.s32.totalorder %s98, %s99
      %p108 = scmp.eq.s32.totalorder %s25, 0
      %p109 = por %p107, %p108
      %p110 = scmp.ne.s32.totalorder %s98, %s99
      %p111 = scmp.eq.s32.totalorder %s26, 1
      %p112 = por %p110, %p111
      %p114 = scmp.ne.s32.totalorder %s99, %s113
      %p115 = scmp.eq.s32.totalorder %s26, 0
      %p116 = por %p114, %p115
      %s118 = sadd.s32 %s117, 1
      %p121 = scmp.eq.s32.totalorder %s20, 1
      %p122 = scmp.ne.s32.totalorder %s117, %s119
      %p123 = scmp.eq.s32.totalorder %s20, 0
      %p124 = por %p122, %p123
      %p125 = scmp.ne.s32.totalorder %s117, %s119
      %p126 = scmp.eq.s32.totalorder %s25, 1
      %p127 = por %p125, %p126
      %p128 = scmp.ne.s32.totalorder %s119, %s120
      %p129 = scmp.eq.s32.totalorder %s25, 0
      %p130 = por %p128, %p129
      %p131 = scmp.ne.s32.totalorder %s119, %s120
      %p132 = scmp.eq.s32.totalorder %s26, 1
      %p133 = por %p131, %p132
      %p135 = scmp.ne.s32.totalorder %s120, %s134
      %p136 = scmp.eq.s32.totalorder %s26, 0
      %p137 = por %p135, %p136
      %s139 = sadd.s32 %s138, 1
      %p142 = scmp.eq.s32.totalorder %s20, 1
      %p143 = scmp.ne.s32.totalorder %s138, %s140
      %p144 = scmp.eq.s32.totalorder %s20, 0
      %p145 = por %p143, %p144
      %p146 = scmp.ne.s32.totalorder %s138, %s140
      %p147 = scmp.eq.s32.totalorder %s25, 1
      %p148 = por %p146, %p147
      %p149 = scmp.ne.s32.totalorder %s140, %s141
      %p150 = scmp.eq.s32.totalorder %s25, 0
      %p151 = por %p149, %p150
      %p152 = scmp.ne.s32.totalorder %s140, %s141
      %p153 = scmp.eq.s32.totalorder %s26, 1
      %p154 = por %p152, %p153
      %p156 = scmp.ne.s32.totalorder %s141, %s155
      %p157 = scmp.eq.s32.totalorder %s26, 0
      %p158 = por %p156, %p157
      %s160 = sadd.s32 %s159, 1
      %p163 = scmp.eq.s32.totalorder %s20, 1
      %p164 = scmp.ne.s32.totalorder %s159, %s161
      %p165 = scmp.eq.s32.totalorder %s20, 0
      %p166 = por %p164, %p165
      %p167 = scmp.ne.s32.totalorder %s159, %s161
      %p168 = scmp.eq.s32.totalorder %s25, 1
      %p169 = por %p167, %p168
      %p170 = scmp.ne.s32.totalorder %s161, %s162
      %p171 = scmp.eq.s32.totalorder %s25, 0
      %p172 = por %p170, %p171
      %p173 = scmp.ne.s32.totalorder %s161, %s162
      %p174 = scmp.eq.s32.totalorder %s26, 1
      %p175 = por %p173, %p174
      %p177 = scmp.ne.s32.totalorder %s162, %s176
      %p178 = scmp.eq.s32.totalorder %s26, 0
      %p179 = por %p177, %p178
      %s181 = sadd.s32 %s180, 1
      %p184 = scmp.eq.s32.totalorder %s20, 1
      %p185 = scmp.ne.s32.totalorder %s180, %s182
      %p186 = scmp.eq.s32.totalorder %s20, 0
      %p187 = por %p185, %p186
      %p188 = scmp.ne.s32.totalorder %s180, %s182
      %p189 = scmp.eq.s32.totalorder %s25, 1
      %p190 = por %p188, %p189
      %p191 = scmp.ne.s32.totalorder %s182, %s183
      %p192 = scmp.eq.s32.totalorder %s25, 0
      %p193 = por %p191, %p192
      %p194 = scmp.ne.s32.totalorder %s182, %s183
      %p195 = scmp.eq.s32.totalorder %s26, 1
      %p196 = por %p194, %p195
      %p198 = scmp.ne.s32.totalorder %s183, %s197
      %p199 = scmp.eq.s32.totalorder %s26, 0
      %p200 = por %p198, %p199
      %s202 = sadd.s32 %s201, 1
      %p205 = scmp.eq.s32.totalorder %s20, 1
      %p206 = scmp.ne.s32.totalorder %s201, %s203
      %p207 = scmp.eq.s32.totalorder %s20, 0
      %p208 = por %p206, %p207
      %p209 = scmp.ne.s32.totalorder %s201, %s203
      %p210 = scmp.eq.s32.totalorder %s25, 1
      %p211 = por %p209, %p210
      %p212 = scmp.ne.s32.totalorder %s203, %s204
      %p213 = scmp.eq.s32.totalorder %s25, 0
      %p214 = por %p212, %p213
      %p215 = scmp.ne.s32.totalorder %s203, %s204
      %p216 = scmp.eq.s32.totalorder %s26, 1
      %p217 = por %p215, %p216
      %p219 = scmp.ne.s32.totalorder %s204, %s218
      %p220 = scmp.eq.s32.totalorder %s26, 0
      %p221 = por %p219, %p220
      %s222 = ssub.s32 %s20, %s27
      %p223 = scmp.eq.s32.totalorder %s222, 0
      %s225 = sadd.s32 %s224, 1
      %s226 = scalar_select %p223, %s224, %s225
      %p229 = pneg %p223
      %p230 = scmp.eq.s32.totalorder %s20, 1
      %p231 = por %p229, %p230
      %p232 = scmp.ne.s32.totalorder %s224, %s227
      %p233 = scmp.eq.s32.totalorder %s20, 0
      %p234 = por %p232, %p233
      %p235 = scmp.ne.s32.totalorder %s224, %s227
      %p236 = scmp.eq.s32.totalorder %s25, 1
      %p237 = por %p235, %p236
      %p238 = scmp.ne.s32.totalorder %s227, %s228
      %p239 = scmp.eq.s32.totalorder %s25, 0
      %p240 = por %p238, %p239
      %p241 = scmp.ne.s32.totalorder %s227, %s228
      %p242 = scmp.eq.s32.totalorder %s26, 1
      %p243 = por %p241, %p242
      %p245 = scmp.ne.s32.totalorder %s228, %s244
      %p246 = scmp.eq.s32.totalorder %s26, 0
      %p247 = por %p245, %p246
      %p248 = scmp.le.s32.totalorder 1, %s20
      %p249 = scmp.lt.s32.totalorder %s20, 3
      %p250 = pnand %p248, %p249
      %p251 = pneg %p250
      // Predicated region
      $region9: #{robust_conv_net.1} parent=5 // pred_check
        _
      $region10: #{robust_conv_net.1} parent=5 // pred_check_branch
        %253 = sbr.rel (%p250) target = $region12
      $region11: #{robust_conv_net.1} parent=5 // pred_region
        %s254 = ssub.s32 %s20, 1
        // Predicated region
        $region13: #{robust_conv_net.1} parent=11 // pred_check
          %p255 = pneg %p67
        $region14: #{robust_conv_net.1} parent=11 // pred_check_branch
          %257 = sbr.rel (%p255) target = $region16
        $region15: #{robust_conv_net.1} parent=11 // pred_region
          %s259 = ssub.s32 32, 32
          %260 = vsyncadd [#allocation4], %s259
          %s262 = sshll.u32 %s1, 4
          %s263 = int_to_ptr.vmem [resolvable:$true] %s262
          %265 = dma.vmem_to_smem %s263, 32, [#allocation2], [#allocation4]
        $region16: #{robust_conv_net.1} parent=11 // pred_fallthru
          _
        // Predicated region
        $region17: #{robust_conv_net.1} parent=11 // pred_check
          %p266 = pneg %p88
        $region18: #{robust_conv_net.1} parent=11 // pred_check_branch
          %268 = sbr.rel (%p266) target = $region20
        $region19: #{robust_conv_net.1} parent=11 // pred_region
          %s270 = ssub.s32 16, 16
          %271 = vsyncadd [#allocation6], %s270
          %s273 = sshll.u32 %s2, 4
          %s274 = int_to_ptr.vmem [resolvable:$true] %s273
          %276 = dma.vmem_to_smem %s274, 16, [#allocation5], [#allocation6]
        $region20: #{robust_conv_net.1} parent=11 // pred_fallthru
          _
        // Predicated region
        $region21: #{robust_conv_net.1} parent=11 // pred_check
          %p277 = pneg %p109
        $region22: #{robust_conv_net.1} parent=11 // pred_check_branch
          %279 = sbr.rel (%p277) target = $region24
        $region23: #{robust_conv_net.1} parent=11 // pred_region
          _
        $region24: #{robust_conv_net.1} parent=11 // pred_fallthru
          _
        // Predicated region
        $region25: #{robust_conv_net.1} parent=11 // pred_check
          %p280 = pneg %p130
        $region26: #{robust_conv_net.1} parent=11 // pred_check_branch
          %282 = sbr.rel (%p280) target = $region28
        $region27: #{robust_conv_net.1} parent=11 // pred_region
          _
        $region28: #{robust_conv_net.1} parent=11 // pred_fallthru
          _
        // Predicated region
        $region29: #{robust_conv_net.1} parent=11 // pred_check
          %p283 = pneg %p151
        $region30: #{robust_conv_net.1} parent=11 // pred_check_branch
          %285 = sbr.rel (%p283) target = $region32
        $region31: #{robust_conv_net.1} parent=11 // pred_region
          _
        $region32: #{robust_conv_net.1} parent=11 // pred_fallthru
          _
        // Predicated region
        $region33: #{robust_conv_net.1} parent=11 // pred_check
          %p286 = pneg %p172
        $region34: #{robust_conv_net.1} parent=11 // pred_check_branch
          %288 = sbr.rel (%p286) target = $region36
        $region35: #{robust_conv_net.1} parent=11 // pred_region
          _
        $region36: #{robust_conv_net.1} parent=11 // pred_fallthru
          _
        // Predicated region
        $region37: #{robust_conv_net.1} parent=11 // pred_check
          %p289 = pneg %p193
        $region38: #{robust_conv_net.1} parent=11 // pred_check_branch
          %291 = sbr.rel (%p289) target = $region40
        $region39: #{robust_conv_net.1} parent=11 // pred_region
          _
        $region40: #{robust_conv_net.1} parent=11 // pred_fallthru
          _
        // Predicated region
        $region41: #{robust_conv_net.1} parent=11 // pred_check
          %p292 = pneg %p214
        $region42: #{robust_conv_net.1} parent=11 // pred_check_branch
          %294 = sbr.rel (%p292) target = $region44
        $region43: #{robust_conv_net.1} parent=11 // pred_region
          _
        $region44: #{robust_conv_net.1} parent=11 // pred_fallthru
          _
      $region12: #{robust_conv_net.1} parent=5 // pred_fallthru
        _
      %p295 = scmp.lt.s32.totalorder %s20, 2
      // Predicated region
      $region45: #{robust_conv_net.1} parent=5 // pred_check
        %p296 = pneg %p295
      $region46: #{robust_conv_net.1} parent=5 // pred_check_branch
        %298 = sbr.rel (%p296) target = $region48
      $region47: #{robust_conv_net.1} parent=5 // pred_region
        // Predicated region
        $region49: #{robust_conv_net.1} parent=47 // pred_check
          %p299 = pneg %p40
        $region50: #{robust_conv_net.1} parent=47 // pred_check_branch
          %301 = sbr.rel (%p299) target = $region52
        $region51: #{robust_conv_net.1} parent=47 // pred_region
          %p302 = scmp.lt.s32.totalorder %s20, 1
          %s303 = scalar_select %p302, %s20, 1
          %s304 = smul.addr %s303, 4
          %s305 = smul.addr %s304, 8
          %s306 = scalar_lea.vmem %s0, %s305
        $region52: #{robust_conv_net.1} parent=47 // pred_fallthru
          _
      $region48: #{robust_conv_net.1} parent=5 // pred_fallthru
        _
      %p307 = scmp.le.s32.totalorder 1, %s20
      %p308 = scmp.lt.s32.totalorder %s20, 3
      %p309 = pnand %p307, %p308
      %p310 = pneg %p309
      // Predicated region
      $region53: #{robust_conv_net.1} parent=5 // pred_check
        _
      $region54: #{robust_conv_net.1} parent=5 // pred_check_branch
        %312 = sbr.rel (%p309) target = $region56
      $region55: #{robust_conv_net.1} parent=5 // pred_region
        %s313 = ssub.s32 %s20, 1
        // Predicated region
        $region57: #{robust_conv_net.1} parent=55 // pred_check
          %p314 = pneg %p67
        $region58: #{robust_conv_net.1} parent=55 // pred_check_branch
          %316 = sbr.rel (%p314) target = $region60
        $region59: #{robust_conv_net.1} parent=55 // pred_region
          %317 = dma.done [#allocation4], 32
        $region60: #{robust_conv_net.1} parent=55 // pred_fallthru
          _
        // Predicated region
        $region61: #{robust_conv_net.1} parent=55 // pred_check
          %p318 = pneg %p88
        $region62: #{robust_conv_net.1} parent=55 // pred_check_branch
          %320 = sbr.rel (%p318) target = $region64
        $region63: #{robust_conv_net.1} parent=55 // pred_region
          %321 = dma.done [#allocation6], 16
        $region64: #{robust_conv_net.1} parent=55 // pred_fallthru
          _
        %322 = sfence
        %p323 = scmp.lt.s32.totalorder %s25, 1
        %s324 = scalar_select %p323, %s25, 1
        %s325 = smul.addr %s324, 4
        %s326 = smul.addr %s325, 8
        %s327 = scalar_lea.vmem %s0, %s326
        %p328 = pneg %p46
        %p329 = pneg %p43
        %p330 = pneg %p67
        %p331 = pneg %p64
        %p332 = pneg %p88
        %p333 = pneg %p85
        %p334 = pneg %p109
        %p335 = pneg %p106
        %p336 = pneg %p130
        %p337 = pneg %p127
        %p338 = pneg %p151
        %p339 = pneg %p148
        %p340 = pneg %p172
        %p341 = pneg %p169
        %p342 = pneg %p193
        %p343 = pneg %p190
        %p344 = pneg %p214
        %p345 = pneg %p211
        %p346 = pneg %p240
        %p347 = pneg %p237
        %s348 = sand.u32 %s227, 1
        %s349 = scalar_lea.sflag [#allocation3], %s348
        %s350 = sand.u32 %s227, 1
        %s351 = scalar_lea.vmem [#allocation7], %s350
        %p352 = scmp.lt.s32.totalorder %s25, 1
        %s353 = scalar_select %p352, %s25, 1
        %s354 = smul.addr %s353, 4
        %s355 = smul.addr %s354, 8
        %s356 = scalar_lea.vmem %s0, %s355
        %v357 = vld [vmem:[%s356] sm:$0xff]
        %v358 = vld [vmem:[%s356 + $0x8] sm:$0xff]
        %v359 = vld [vmem:[%s356 + $0x10] sm:$0xff]
        %v360 = vld [vmem:[%s356 + $0x18] sm:$0xf]
        %s361 = sld [smem:[#allocation2]]
        %v362 = vstv %s361
        %v363 = vmul.f32 %v357, %v362
        %v364 = vmul.f32 %v358, %v362
        %v365 = vmul.f32 %v359, %v362
        %v366 = vadd.f32 %v363, 0.0
        %v367 = vadd.f32 %v364, 0.0
        %v368 = vadd.f32 %v365, 0.0
        %s369 = sld [smem:[#allocation2 + $0x1]]
        %v370 = vstv %s369
        %v371 = vmul.f32 %v357, %v370
        %v372 = vmul.f32 %v358, %v370
        %v373 = vmul.f32 %v359, %v370
        %377 = vrot.lane.b32.xlu0 %v371, 127
        %v378 = vpop.permute.xlu0 %377
        %379 = vrot.lane.b32.xlu0 %v372, 127
        %v380 = vpop.permute.xlu0 %379
        %381 = vrot.lane.b32.xlu0 %v373, 127
        %v382 = vpop.permute.xlu0 %381
        %v386 = vadd.f32 %v366, %v378
        %v387 = vadd.f32 %v367, %v380
        %v388 = vadd.f32 %v368, %v382
        %s389 = sld [smem:[#allocation2 + $0x2]]
        %v390 = vstv %s389
        %v391 = vmul.f32 %v357, %v390
        %v392 = vmul.f32 %v358, %v390
        %v393 = vmul.f32 %v359, %v390
        %397 = vrot.lane.b32.xlu0 %v391, 126
        %v398 = vpop.permute.xlu0 %397
        %399 = vrot.lane.b32.xlu0 %v392, 126
        %v400 = vpop.permute.xlu0 %399
        %401 = vrot.lane.b32.xlu0 %v393, 126
        %v402 = vpop.permute.xlu0 %401
        %v406 = vadd.f32 %v386, %v398
        %v407 = vadd.f32 %v387, %v400
        %v408 = vadd.f32 %v388, %v402
        %s409 = sld [smem:[#allocation2 + $0x3]]
        %v410 = vstv %s409
        %v411 = vmul.f32 %v357, %v410
        %v412 = vmul.f32 %v358, %v410
        %v413 = vmul.f32 %v359, %v410
        %417 = vrot.lane.b32.xlu0 %v411, 125
        %v418 = vpop.permute.xlu0 %417
        %419 = vrot.lane.b32.xlu0 %v412, 125
        %v420 = vpop.permute.xlu0 %419
        %421 = vrot.lane.b32.xlu0 %v413, 125
        %v422 = vpop.permute.xlu0 %421
        %v426 = vadd.f32 %v406, %v418
        %v427 = vadd.f32 %v407, %v420
        %v428 = vadd.f32 %v408, %v422
        %s429 = sld [smem:[#allocation2 + $0x4]]
        %v430 = vstv %s429
        %v431 = vmul.f32 %v357, %v430
        %v432 = vmul.f32 %v358, %v430
        %v433 = vmul.f32 %v359, %v430
        %437 = vrot.lane.b32.xlu0 %v431, 124
        %v438 = vpop.permute.xlu0 %437
        %439 = vrot.lane.b32.xlu0 %v432, 124
        %v440 = vpop.permute.xlu0 %439
        %441 = vrot.lane.b32.xlu0 %v433, 124
        %v442 = vpop.permute.xlu0 %441
        %v446 = vadd.f32 %v426, %v438
        %v447 = vadd.f32 %v427, %v440
        %v448 = vadd.f32 %v428, %v442
        %s449 = sld [smem:[#allocation2 + $0x5]]
        %v450 = vstv %s449
        %v451 = vmul.f32 %v357, %v450
        %v452 = vmul.f32 %v358, %v450
        %v453 = vmul.f32 %v359, %v450
        %v454 = vmul.f32 %v360, %v450
        %vm459 = vcmask 1046528
        %v460 = vrot.slane %v451, 1
        %v461 = vrot.slane %v452, 1
        %v462 = vsel %vm459, %v460, %v461
        %v463 = vrot.slane %v453, 1
        %v464 = vsel %vm459, %v461, %v463
        %v465 = vrot.slane %v454, 1
        %v466 = vsel %vm459, %v463, %v465
        %v470 = vadd.f32 %v446, %v462
        %v471 = vadd.f32 %v447, %v464
        %v472 = vadd.f32 %v448, %v466
        %s473 = sld [smem:[#allocation2 + $0x6]]
        %v474 = vstv %s473
        %v475 = vmul.f32 %v357, %v474
        %v476 = vmul.f32 %v358, %v474
        %v477 = vmul.f32 %v359, %v474
        %v478 = vmul.f32 %v360, %v474
        %v483 = vrot.slane %v475, 1
        %v484 = vrot.slane %v476, 1
        %v485 = vsel %vm459, %v483, %v484
        %v486 = vrot.slane %v477, 1
        %v487 = vsel %vm459, %v484, %v486
        %v488 = vrot.slane %v478, 1
        %v489 = vsel %vm459, %v486, %v488
        %490 = vrot.lane.b32.xlu0 %v485, 127
        %v491 = vpop.permute.xlu0 %490
        %492 = vrot.lane.b32.xlu0 %v487, 127
        %v493 = vpop.permute.xlu0 %492
        %494 = vrot.lane.b32.xlu0 %v489, 127
        %v495 = vpop.permute.xlu0 %494
        %v499 = vadd.f32 %v470, %v491
        %v500 = vadd.f32 %v471, %v493
        %v501 = vadd.f32 %v472, %v495
        %s502 = sld [smem:[#allocation2 + $0x7]]
        %v503 = vstv %s502
        %v504 = vmul.f32 %v357, %v503
        %v505 = vmul.f32 %v358, %v503
        %v506 = vmul.f32 %v359, %v503
        %v507 = vmul.f32 %v360, %v503
        %v512 = vrot.slane %v504, 1
        %v513 = vrot.slane %v505, 1
        %v514 = vsel %vm459, %v512, %v513
        %v515 = vrot.slane %v506, 1
        %v516 = vsel %vm459, %v513, %v515
        %v517 = vrot.slane %v507, 1
        %v518 = vsel %vm459, %v515, %v517
        %519 = vrot.lane.b32.xlu0 %v514, 126
        %v520 = vpop.permute.xlu0 %519
        %521 = vrot.lane.b32.xlu0 %v516, 126
        %v522 = vpop.permute.xlu0 %521
        %523 = vrot.lane.b32.xlu0 %v518, 126
        %v524 = vpop.permute.xlu0 %523
        %v528 = vadd.f32 %v499, %v520
        %v529 = vadd.f32 %v500, %v522
        %v530 = vadd.f32 %v501, %v524
        %s531 = sld [smem:[#allocation2 + $0x8]]
        %v532 = vstv %s531
        %v533 = vmul.f32 %v357, %v532
        %v534 = vmul.f32 %v358, %v532
        %v535 = vmul.f32 %v359, %v532
        %v536 = vmul.f32 %v360, %v532
        %v541 = vrot.slane %v533, 1
        %v542 = vrot.slane %v534, 1
        %v543 = vsel %vm459, %v541, %v542
        %v544 = vrot.slane %v535, 1
        %v545 = vsel %vm459, %v542, %v544
        %v546 = vrot.slane %v536, 1
        %v547 = vsel %vm459, %v544, %v546
        %548 = vrot.lane.b32.xlu0 %v543, 125
        %v549 = vpop.permute.xlu0 %548
        %550 = vrot.lane.b32.xlu0 %v545, 125
        %v551 = vpop.permute.xlu0 %550
        %552 = vrot.lane.b32.xlu0 %v547, 125
        %v553 = vpop.permute.xlu0 %552
        %v557 = vadd.f32 %v528, %v549
        %v558 = vadd.f32 %v529, %v551
        %v559 = vadd.f32 %v530, %v553
        %s560 = sld [smem:[#allocation2 + $0x9]]
        %v561 = vstv %s560
        %v562 = vmul.f32 %v357, %v561
        %v563 = vmul.f32 %v358, %v561
        %v564 = vmul.f32 %v359, %v561
        %v565 = vmul.f32 %v360, %v561
        %v570 = vrot.slane %v562, 1
        %v571 = vrot.slane %v563, 1
        %v572 = vsel %vm459, %v570, %v571
        %v573 = vrot.slane %v564, 1
        %v574 = vsel %vm459, %v571, %v573
        %v575 = vrot.slane %v565, 1
        %v576 = vsel %vm459, %v573, %v575
        %577 = vrot.lane.b32.xlu0 %v572, 124
        %v578 = vpop.permute.xlu0 %577
        %579 = vrot.lane.b32.xlu0 %v574, 124
        %v580 = vpop.permute.xlu0 %579
        %581 = vrot.lane.b32.xlu0 %v576, 124
        %v582 = vpop.permute.xlu0 %581
        %v586 = vadd.f32 %v557, %v578
        %v587 = vadd.f32 %v558, %v580
        %v588 = vadd.f32 %v559, %v582
        %s589 = sld [smem:[#allocation2 + $0xa]]
        %v590 = vstv %s589
        %v591 = vmul.f32 %v357, %v590
        %v592 = vmul.f32 %v358, %v590
        %v593 = vmul.f32 %v359, %v590
        %v594 = vmul.f32 %v360, %v590
        %vm599 = vcmask 1045504
        %v600 = vrot.slane %v591, 2
        %v601 = vrot.slane %v592, 2
        %v602 = vsel %vm599, %v600, %v601
        %v603 = vrot.slane %v593, 2
        %v604 = vsel %vm599, %v601, %v603
        %v605 = vrot.slane %v594, 2
        %v606 = vsel %vm599, %v603, %v605
        %v610 = vadd.f32 %v586, %v602
        %v611 = vadd.f32 %v587, %v604
        %v612 = vadd.f32 %v588, %v606
        %s613 = sld [smem:[#allocation2 + $0xb]]
        %v614 = vstv %s613
        %v615 = vmul.f32 %v357, %v614
        %v616 = vmul.f32 %v358, %v614
        %v617 = vmul.f32 %v359, %v614
        %v618 = vmul.f32 %v360, %v614
        %v623 = vrot.slane %v615, 2
        %v624 = vrot.slane %v616, 2
        %v625 = vsel %vm599, %v623, %v624
        %v626 = vrot.slane %v617, 2
        %v627 = vsel %vm599, %v624, %v626
        %v628 = vrot.slane %v618, 2
        %v629 = vsel %vm599, %v626, %v628
        %630 = vrot.lane.b32.xlu0 %v625, 127
        %v631 = vpop.permute.xlu0 %630
        %632 = vrot.lane.b32.xlu0 %v627, 127
        %v633 = vpop.permute.xlu0 %632
        %634 = vrot.lane.b32.xlu0 %v629, 127
        %v635 = vpop.permute.xlu0 %634
        %v639 = vadd.f32 %v610, %v631
        %v640 = vadd.f32 %v611, %v633
        %v641 = vadd.f32 %v612, %v635
        %s642 = sld [smem:[#allocation2 + $0xc]]
        %v643 = vstv %s642
        %v644 = vmul.f32 %v357, %v643
        %v645 = vmul.f32 %v358, %v643
        %v646 = vmul.f32 %v359, %v643
        %v647 = vmul.f32 %v360, %v643
        %v652 = vrot.slane %v644, 2
        %v653 = vrot.slane %v645, 2
        %v654 = vsel %vm599, %v652, %v653
        %v655 = vrot.slane %v646, 2
        %v656 = vsel %vm599, %v653, %v655
        %v657 = vrot.slane %v647, 2
        %v658 = vsel %vm599, %v655, %v657
        %659 = vrot.lane.b32.xlu0 %v654, 126
        %v660 = vpop.permute.xlu0 %659
        %661 = vrot.lane.b32.xlu0 %v656, 126
        %v662 = vpop.permute.xlu0 %661
        %663 = vrot.lane.b32.xlu0 %v658, 126
        %v664 = vpop.permute.xlu0 %663
        %v668 = vadd.f32 %v639, %v660
        %v669 = vadd.f32 %v640, %v662
        %v670 = vadd.f32 %v641, %v664
        %s671 = sld [smem:[#allocation2 + $0xd]]
        %v672 = vstv %s671
        %v673 = vmul.f32 %v357, %v672
        %v674 = vmul.f32 %v358, %v672
        %v675 = vmul.f32 %v359, %v672
        %v676 = vmul.f32 %v360, %v672
        %v681 = vrot.slane %v673, 2
        %v682 = vrot.slane %v674, 2
        %v683 = vsel %vm599, %v681, %v682
        %v684 = vrot.slane %v675, 2
        %v685 = vsel %vm599, %v682, %v684
        %v686 = vrot.slane %v676, 2
        %v687 = vsel %vm599, %v684, %v686
        %688 = vrot.lane.b32.xlu0 %v683, 125
        %v689 = vpop.permute.xlu0 %688
        %690 = vrot.lane.b32.xlu0 %v685, 125
        %v691 = vpop.permute.xlu0 %690
        %692 = vrot.lane.b32.xlu0 %v687, 125
        %v693 = vpop.permute.xlu0 %692
        %v697 = vadd.f32 %v668, %v689
        %v698 = vadd.f32 %v669, %v691
        %v699 = vadd.f32 %v670, %v693
        %s700 = sld [smem:[#allocation2 + $0xe]]
        %v701 = vstv %s700
        %v702 = vmul.f32 %v357, %v701
        %v703 = vmul.f32 %v358, %v701
        %v704 = vmul.f32 %v359, %v701
        %v705 = vmul.f32 %v360, %v701
        %v710 = vrot.slane %v702, 2
        %v711 = vrot.slane %v703, 2
        %v712 = vsel %vm599, %v710, %v711
        %v713 = vrot.slane %v704, 2
        %v714 = vsel %vm599, %v711, %v713
        %v715 = vrot.slane %v705, 2
        %v716 = vsel %vm599, %v713, %v715
        %717 = vrot.lane.b32.xlu0 %v712, 124
        %v718 = vpop.permute.xlu0 %717
        %719 = vrot.lane.b32.xlu0 %v714, 124
        %v720 = vpop.permute.xlu0 %719
        %721 = vrot.lane.b32.xlu0 %v716, 124
        %v722 = vpop.permute.xlu0 %721
        %v726 = vadd.f32 %v697, %v718
        %v727 = vadd.f32 %v698, %v720
        %v728 = vadd.f32 %v699, %v722
        %s729 = sld [smem:[#allocation2 + $0xf]]
        %v730 = vstv %s729
        %v731 = vmul.f32 %v357, %v730
        %v732 = vmul.f32 %v358, %v730
        %v733 = vmul.f32 %v359, %v730
        %v734 = vmul.f32 %v360, %v730
        %vm739 = vcmask 1044480
        %v740 = vrot.slane %v731, 3
        %v741 = vrot.slane %v732, 3
        %v742 = vsel %vm739, %v740, %v741
        %v743 = vrot.slane %v733, 3
        %v744 = vsel %vm739, %v741, %v743
        %v745 = vrot.slane %v734, 3
        %v746 = vsel %vm739, %v743, %v745
        %v750 = vadd.f32 %v726, %v742
        %v751 = vadd.f32 %v727, %v744
        %v752 = vadd.f32 %v728, %v746
        %s753 = sld [smem:[#allocation2 + $0x10]]
        %v754 = vstv %s753
        %v755 = vmul.f32 %v357, %v754
        %v756 = vmul.f32 %v358, %v754
        %v757 = vmul.f32 %v359, %v754
        %v758 = vmul.f32 %v360, %v754
        %v763 = vrot.slane %v755, 3
        %v764 = vrot.slane %v756, 3
        %v765 = vsel %vm739, %v763, %v764
        %v766 = vrot.slane %v757, 3
        %v767 = vsel %vm739, %v764, %v766
        %v768 = vrot.slane %v758, 3
        %v769 = vsel %vm739, %v766, %v768
        %770 = vrot.lane.b32.xlu0 %v765, 127
        %v771 = vpop.permute.xlu0 %770
        %772 = vrot.lane.b32.xlu0 %v767, 127
        %v773 = vpop.permute.xlu0 %772
        %774 = vrot.lane.b32.xlu0 %v769, 127
        %v775 = vpop.permute.xlu0 %774
        %v779 = vadd.f32 %v750, %v771
        %v780 = vadd.f32 %v751, %v773
        %v781 = vadd.f32 %v752, %v775
        %s782 = sld [smem:[#allocation2 + $0x11]]
        %v783 = vstv %s782
        %v784 = vmul.f32 %v357, %v783
        %v785 = vmul.f32 %v358, %v783
        %v786 = vmul.f32 %v359, %v783
        %v787 = vmul.f32 %v360, %v783
        %v792 = vrot.slane %v784, 3
        %v793 = vrot.slane %v785, 3
        %v794 = vsel %vm739, %v792, %v793
        %v795 = vrot.slane %v786, 3
        %v796 = vsel %vm739, %v793, %v795
        %v797 = vrot.slane %v787, 3
        %v798 = vsel %vm739, %v795, %v797
        %799 = vrot.lane.b32.xlu0 %v794, 126
        %v800 = vpop.permute.xlu0 %799
        %801 = vrot.lane.b32.xlu0 %v796, 126
        %v802 = vpop.permute.xlu0 %801
        %803 = vrot.lane.b32.xlu0 %v798, 126
        %v804 = vpop.permute.xlu0 %803
        %v808 = vadd.f32 %v779, %v800
        %v809 = vadd.f32 %v780, %v802
        %v810 = vadd.f32 %v781, %v804
        %s811 = sld [smem:[#allocation2 + $0x12]]
        %v812 = vstv %s811
        %v813 = vmul.f32 %v357, %v812
        %v814 = vmul.f32 %v358, %v812
        %v815 = vmul.f32 %v359, %v812
        %v816 = vmul.f32 %v360, %v812
        %v821 = vrot.slane %v813, 3
        %v822 = vrot.slane %v814, 3
        %v823 = vsel %vm739, %v821, %v822
        %v824 = vrot.slane %v815, 3
        %v825 = vsel %vm739, %v822, %v824
        %v826 = vrot.slane %v816, 3
        %v827 = vsel %vm739, %v824, %v826
        %828 = vrot.lane.b32.xlu0 %v823, 125
        %v829 = vpop.permute.xlu0 %828
        %830 = vrot.lane.b32.xlu0 %v825, 125
        %v831 = vpop.permute.xlu0 %830
        %832 = vrot.lane.b32.xlu0 %v827, 125
        %v833 = vpop.permute.xlu0 %832
        %v837 = vadd.f32 %v808, %v829
        %v838 = vadd.f32 %v809, %v831
        %v839 = vadd.f32 %v810, %v833
        %s840 = sld [smem:[#allocation2 + $0x13]]
        %v841 = vstv %s840
        %v842 = vmul.f32 %v357, %v841
        %v843 = vmul.f32 %v358, %v841
        %v844 = vmul.f32 %v359, %v841
        %v845 = vmul.f32 %v360, %v841
        %v850 = vrot.slane %v842, 3
        %v851 = vrot.slane %v843, 3
        %v852 = vsel %vm739, %v850, %v851
        %v853 = vrot.slane %v844, 3
        %v854 = vsel %vm739, %v851, %v853
        %v855 = vrot.slane %v845, 3
        %v856 = vsel %vm739, %v853, %v855
        %857 = vrot.lane.b32.xlu0 %v852, 124
        %v858 = vpop.permute.xlu0 %857
        %859 = vrot.lane.b32.xlu0 %v854, 124
        %v860 = vpop.permute.xlu0 %859
        %861 = vrot.lane.b32.xlu0 %v856, 124
        %v862 = vpop.permute.xlu0 %861
        %v866 = vadd.f32 %v837, %v858
        %v867 = vadd.f32 %v838, %v860
        %v868 = vadd.f32 %v839, %v862
        %s869 = sld [smem:[#allocation2 + $0x14]]
        %v870 = vstv %s869
        %v871 = vmul.f32 %v357, %v870
        %v872 = vmul.f32 %v358, %v870
        %v873 = vmul.f32 %v359, %v870
        %v874 = vmul.f32 %v360, %v870
        %vm879 = vcmask 1043456
        %v880 = vrot.slane %v871, 4
        %v881 = vrot.slane %v872, 4
        %v882 = vsel %vm879, %v880, %v881
        %v883 = vrot.slane %v873, 4
        %v884 = vsel %vm879, %v881, %v883
        %v885 = vrot.slane %v874, 4
        %v886 = vsel %vm879, %v883, %v885
        %v890 = vadd.f32 %v866, %v882
        %v891 = vadd.f32 %v867, %v884
        %v892 = vadd.f32 %v868, %v886
        %s893 = sld [smem:[#allocation2 + $0x15]]
        %v894 = vstv %s893
        %v895 = vmul.f32 %v357, %v894
        %v896 = vmul.f32 %v358, %v894
        %v897 = vmul.f32 %v359, %v894
        %v898 = vmul.f32 %v360, %v894
        %v903 = vrot.slane %v895, 4
        %v904 = vrot.slane %v896, 4
        %v905 = vsel %vm879, %v903, %v904
        %v906 = vrot.slane %v897, 4
        %v907 = vsel %vm879, %v904, %v906
        %v908 = vrot.slane %v898, 4
        %v909 = vsel %vm879, %v906, %v908
        %910 = vrot.lane.b32.xlu0 %v905, 127
        %v911 = vpop.permute.xlu0 %910
        %912 = vrot.lane.b32.xlu0 %v907, 127
        %v913 = vpop.permute.xlu0 %912
        %914 = vrot.lane.b32.xlu0 %v909, 127
        %v915 = vpop.permute.xlu0 %914
        %v919 = vadd.f32 %v890, %v911
        %v920 = vadd.f32 %v891, %v913
        %v921 = vadd.f32 %v892, %v915
        %s922 = sld [smem:[#allocation2 + $0x16]]
        %v923 = vstv %s922
        %v924 = vmul.f32 %v357, %v923
        %v925 = vmul.f32 %v358, %v923
        %v926 = vmul.f32 %v359, %v923
        %v927 = vmul.f32 %v360, %v923
        %v932 = vrot.slane %v924, 4
        %v933 = vrot.slane %v925, 4
        %v934 = vsel %vm879, %v932, %v933
        %v935 = vrot.slane %v926, 4
        %v936 = vsel %vm879, %v933, %v935
        %v937 = vrot.slane %v927, 4
        %v938 = vsel %vm879, %v935, %v937
        %939 = vrot.lane.b32.xlu0 %v934, 126
        %v940 = vpop.permute.xlu0 %939
        %941 = vrot.lane.b32.xlu0 %v936, 126
        %v942 = vpop.permute.xlu0 %941
        %943 = vrot.lane.b32.xlu0 %v938, 126
        %v944 = vpop.permute.xlu0 %943
        %v948 = vadd.f32 %v919, %v940
        %v949 = vadd.f32 %v920, %v942
        %v950 = vadd.f32 %v921, %v944
        %s951 = sld [smem:[#allocation2 + $0x17]]
        %v952 = vstv %s951
        %v953 = vmul.f32 %v357, %v952
        %v954 = vmul.f32 %v358, %v952
        %v955 = vmul.f32 %v359, %v952
        %v956 = vmul.f32 %v360, %v952
        %v961 = vrot.slane %v953, 4
        %v962 = vrot.slane %v954, 4
        %v963 = vsel %vm879, %v961, %v962
        %v964 = vrot.slane %v955, 4
        %v965 = vsel %vm879, %v962, %v964
        %v966 = vrot.slane %v956, 4
        %v967 = vsel %vm879, %v964, %v966
        %968 = vrot.lane.b32.xlu0 %v963, 125
        %v969 = vpop.permute.xlu0 %968
        %970 = vrot.lane.b32.xlu0 %v965, 125
        %v971 = vpop.permute.xlu0 %970
        %972 = vrot.lane.b32.xlu0 %v967, 125
        %v973 = vpop.permute.xlu0 %972
        %v977 = vadd.f32 %v948, %v969
        %v978 = vadd.f32 %v949, %v971
        %v979 = vadd.f32 %v950, %v973
        %s980 = sld [smem:[#allocation2 + $0x18]]
        %v981 = vstv %s980
        %v982 = vmul.f32 %v357, %v981
        %v983 = vmul.f32 %v358, %v981
        %v984 = vmul.f32 %v359, %v981
        %v985 = vmul.f32 %v360, %v981
        %v990 = vrot.slane %v982, 4
        %v991 = vrot.slane %v983, 4
        %v992 = vsel %vm879, %v990, %v991
        %v993 = vrot.slane %v984, 4
        %v994 = vsel %vm879, %v991, %v993
        %v995 = vrot.slane %v985, 4
        %v996 = vsel %vm879, %v993, %v995
        %997 = vrot.lane.b32.xlu0 %v992, 124
        %v998 = vpop.permute.xlu0 %997
        %999 = vrot.lane.b32.xlu0 %v994, 124
        %v1000 = vpop.permute.xlu0 %999
        %1001 = vrot.lane.b32.xlu0 %v996, 124
        %v1002 = vpop.permute.xlu0 %1001
        %v1006 = vadd.f32 %v977, %v998
        %v1007 = vadd.f32 %v978, %v1000
        %v1008 = vadd.f32 %v979, %v1002
        %s1009 = sld [smem:[#allocation5]]
        %v1010 = vstv %s1009
        %v1011 = vadd.f32 %v1006, %v1010
        %v1012 = vadd.f32 %v1007, %v1010
        %v1013 = vadd.f32 %v1008, %v1010
        %v1015 = vrot.slane %v1011, 1
        %v1017 = vrot.slane %v1011, 2
        %v1019 = vrot.slane %v1011, 3
        %v1022 = vrot.slane %v1012, 4
        %v1024 = vrot.slane %v1012, 5
        %v1026 = vrot.slane %v1012, 6
        %v1028 = vrot.slane %v1012, 7
        %v1031 = vrot.slane %v1013, 1
        %v1033 = vrot.slane %v1013, 2
        %v1035 = vrot.slane %v1013, 3
        %vm1037 = vcmask 1040384
        %v1038 = vsel %vm1037, %v1011, %v1015
        %vm1039 = vcmask 1041408
        %v1040 = vsel %vm1039, %v1038, %v1017
        %vm1041 = vcmask 1042432
        %v1042 = vsel %vm1041, %v1040, %v1019
        %v1043 = vsel %vm879, %v1042, %v1022
        %v1044 = vsel %vm739, %v1043, %v1024
        %v1045 = vsel %vm599, %v1044, %v1026
        %v1046 = vsel %vm459, %v1045, %v1028
        %v1047 = vsel %vm1037, %v1013, %v1031
        %v1048 = vsel %vm1039, %v1047, %v1033
        %v1049 = vsel %vm1041, %v1048, %v1035
        %v1050 = vrot.slane %v1011, 4
        %v1052 = vrot.slane %v1013, 4
        %v1054 = vsel %vm1037, %v1015, %v1017
        %v1055 = vsel %vm1039, %v1054, %v1019
        %v1056 = vsel %vm1041, %v1055, %v1050
        %v1057 = vsel %vm879, %v1056, %v1024
        %v1058 = vsel %vm739, %v1057, %v1026
        %v1059 = vsel %vm599, %v1058, %v1028
        %v1060 = vsel %vm459, %v1059, %v1012
        %v1061 = vsel %vm1037, %v1031, %v1033
        %v1062 = vsel %vm1039, %v1061, %v1035
        %v1063 = vsel %vm1041, %v1062, %v1052
        %v1064 = vmax.f32 %v1046, %v1060
        %v1065 = vmax.f32 %v1049, %v1063
        %1068 = vrot.lane.b32.xlu0 %v1064, 127
        %v1069 = vpop.permute.xlu0 %1068
        %1070 = vrot.lane.b32.xlu0 %v1065, 127
        %v1071 = vpop.permute.xlu0 %1070
        %1074 = vrot.lane.b32.xlu0 %v1064, 126
        %v1075 = vpop.permute.xlu0 %1074
        %1076 = vrot.lane.b32.xlu0 %v1065, 126
        %v1077 = vpop.permute.xlu0 %1076
        %1080 = vrot.lane.b32.xlu0 %v1064, 125
        %v1081 = vpop.permute.xlu0 %1080
        %1082 = vrot.lane.b32.xlu0 %v1065, 125
        %v1083 = vpop.permute.xlu0 %1082
        %1086 = vrot.lane.b32.xlu0 %v1064, 124
        %v1087 = vpop.permute.xlu0 %1086
        %1088 = vrot.lane.b32.xlu0 %v1065, 124
        %v1089 = vpop.permute.xlu0 %1088
        %1092 = vrot.lane.b32.xlu0 %v1064, 123
        %v1093 = vpop.permute.xlu0 %1092
        %1094 = vrot.lane.b32.xlu0 %v1065, 123
        %v1095 = vpop.permute.xlu0 %1094
        %1098 = vrot.lane.b32.xlu0 %v1064, 122
        %v1099 = vpop.permute.xlu0 %1098
        %1100 = vrot.lane.b32.xlu0 %v1065, 122
        %v1101 = vpop.permute.xlu0 %1100
        %1104 = vrot.lane.b32.xlu0 %v1064, 121
        %v1105 = vpop.permute.xlu0 %1104
        %1106 = vrot.lane.b32.xlu0 %v1065, 121
        %v1107 = vpop.permute.xlu0 %1106
        %1110 = vrot.lane.b32.xlu0 %v1064, 120
        %v1111 = vpop.permute.xlu0 %1110
        %1112 = vrot.lane.b32.xlu0 %v1065, 120
        %v1113 = vpop.permute.xlu0 %1112
        %1116 = vrot.lane.b32.xlu0 %v1064, 119
        %v1117 = vpop.permute.xlu0 %1116
        %1118 = vrot.lane.b32.xlu0 %v1065, 119
        %v1119 = vpop.permute.xlu0 %1118
        %1122 = vrot.lane.b32.xlu0 %v1064, 118
        %v1123 = vpop.permute.xlu0 %1122
        %1124 = vrot.lane.b32.xlu0 %v1065, 118
        %v1125 = vpop.permute.xlu0 %1124
        %1128 = vrot.lane.b32.xlu0 %v1064, 117
        %v1129 = vpop.permute.xlu0 %1128
        %1130 = vrot.lane.b32.xlu0 %v1065, 117
        %v1131 = vpop.permute.xlu0 %1130
        %vm1134 = vcmask 7168
        %v1135 = vsel %vm1134, %v1064, %v1069
        %v1136 = vsel %vm1134, %v1065, %v1071
        %vm1137 = vcmask 15360
        %v1138 = vsel %vm1137, %v1135, %v1075
        %v1139 = vsel %vm1137, %v1136, %v1077
        %vm1140 = vcmask 23552
        %v1141 = vsel %vm1140, %v1138, %v1081
        %v1142 = vsel %vm1140, %v1139, %v1083
        %vm1143 = vcmask 31744
        %v1144 = vsel %vm1143, %v1141, %v1087
        %v1145 = vsel %vm1143, %v1142, %v1089
        %vm1146 = vcmask 39936
        %v1147 = vsel %vm1146, %v1144, %v1093
        %v1148 = vsel %vm1146, %v1145, %v1095
        %vm1149 = vcmask 48128
        %v1150 = vsel %vm1149, %v1147, %v1099
        %v1151 = vsel %vm1149, %v1148, %v1101
        %vm1152 = vcmask 56320
        %v1153 = vsel %vm1152, %v1150, %v1105
        %v1154 = vsel %vm1152, %v1151, %v1107
        %vm1155 = vcmask 64512
        %v1156 = vsel %vm1155, %v1153, %v1111
        %v1157 = vsel %vm1155, %v1154, %v1113
        %vm1158 = vcmask 72704
        %v1159 = vsel %vm1158, %v1156, %v1117
        %v1160 = vsel %vm1158, %v1157, %v1119
        %vm1161 = vcmask 80896
        %v1162 = vsel %vm1161, %v1159, %v1123
        %v1163 = vsel %vm1161, %v1160, %v1125
        %vm1164 = vcmask 89088
        %v1165 = vsel %vm1164, %v1162, %v1129
        %v1166 = vsel %vm1164, %v1163, %v1131
        %1167 = vrot.lane.b32.xlu0 %v1064, 116
        %v1168 = vpop.permute.xlu0 %1167
        %1169 = vrot.lane.b32.xlu0 %v1065, 116
        %v1170 = vpop.permute.xlu0 %1169
        %v1173 = vsel %vm1134, %v1069, %v1075
        %v1174 = vsel %vm1134, %v1071, %v1077
        %v1175 = vsel %vm1137, %v1173, %v1081
        %v1176 = vsel %vm1137, %v1174, %v1083
        %v1177 = vsel %vm1140, %v1175, %v1087
        %v1178 = vsel %vm1140, %v1176, %v1089
        %v1179 = vsel %vm1143, %v1177, %v1093
        %v1180 = vsel %vm1143, %v1178, %v1095
        %v1181 = vsel %vm1146, %v1179, %v1099
        %v1182 = vsel %vm1146, %v1180, %v1101
        %v1183 = vsel %vm1149, %v1181, %v1105
        %v1184 = vsel %vm1149, %v1182, %v1107
        %v1185 = vsel %vm1152, %v1183, %v1111
        %v1186 = vsel %vm1152, %v1184, %v1113
        %v1187 = vsel %vm1155, %v1185, %v1117
        %v1188 = vsel %vm1155, %v1186, %v1119
        %v1189 = vsel %vm1158, %v1187, %v1123
        %v1190 = vsel %vm1158, %v1188, %v1125
        %v1191 = vsel %vm1161, %v1189, %v1129
        %v1192 = vsel %vm1161, %v1190, %v1131
        %v1193 = vsel %vm1164, %v1191, %v1168
        %v1194 = vsel %vm1164, %v1192, %v1170
        %v1195 = vmax.f32 %v1165, %v1193
        %v1196 = vmax.f32 %v1166, %v1194
        %v1197 = vtanh.pop %v1195
        %v1198 = vtanh.pop %v1196
        %v1199 = vmax.f32 %v1197, 0.0
        %v1200 = vmax.f32 %v1198, 0.0
        %s1201 = sld [smem:[#allocation2 + $0x19]]
        %v1202 = vstv %s1201
        %v1203 = vmul.f32 %v357, %v1202
        %v1204 = vmul.f32 %v358, %v1202
        %v1205 = vmul.f32 %v359, %v1202
        %v1206 = vadd.f32 %v1203, 0.0
        %v1207 = vadd.f32 %v1204, 0.0
        %v1208 = vadd.f32 %v1205, 0.0
        %s1209 = sld [smem:[#allocation2 + $0x1a]]
        %v1210 = vstv %s1209
        %v1211 = vmul.f32 %v357, %v1210
        %v1212 = vmul.f32 %v358, %v1210
        %v1213 = vmul.f32 %v359, %v1210
        %1217 = vrot.lane.b32.xlu0 %v1211, 127
        %v1218 = vpop.permute.xlu0 %1217
        %1219 = vrot.lane.b32.xlu0 %v1212, 127
        %v1220 = vpop.permute.xlu0 %1219
        %1221 = vrot.lane.b32.xlu0 %v1213, 127
        %v1222 = vpop.permute.xlu0 %1221
        %v1226 = vadd.f32 %v1206, %v1218
        %v1227 = vadd.f32 %v1207, %v1220
        %v1228 = vadd.f32 %v1208, %v1222
        %s1229 = sld [smem:[#allocation2 + $0x1b]]
        %v1230 = vstv %s1229
        %v1231 = vmul.f32 %v357, %v1230
        %v1232 = vmul.f32 %v358, %v1230
        %v1233 = vmul.f32 %v359, %v1230
        %1237 = vrot.lane.b32.xlu0 %v1231, 126
        %v1238 = vpop.permute.xlu0 %1237
        %1239 = vrot.lane.b32.xlu0 %v1232, 126
        %v1240 = vpop.permute.xlu0 %1239
        %1241 = vrot.lane.b32.xlu0 %v1233, 126
        %v1242 = vpop.permute.xlu0 %1241
        %v1246 = vadd.f32 %v1226, %v1238
        %v1247 = vadd.f32 %v1227, %v1240
        %v1248 = vadd.f32 %v1228, %v1242
        %s1249 = sld [smem:[#allocation2 + $0x1c]]
        %v1250 = vstv %s1249
        %v1251 = vmul.f32 %v357, %v1250
        %v1252 = vmul.f32 %v358, %v1250
        %v1253 = vmul.f32 %v359, %v1250
        %1257 = vrot.lane.b32.xlu0 %v1251, 125
        %v1258 = vpop.permute.xlu0 %1257
        %1259 = vrot.lane.b32.xlu0 %v1252, 125
        %v1260 = vpop.permute.xlu0 %1259
        %1261 = vrot.lane.b32.xlu0 %v1253, 125
        %v1262 = vpop.permute.xlu0 %1261
        %v1266 = vadd.f32 %v1246, %v1258
        %v1267 = vadd.f32 %v1247, %v1260
        %v1268 = vadd.f32 %v1248, %v1262
        %s1269 = sld [smem:[#allocation2 + $0x1d]]
        %v1270 = vstv %s1269
        %v1271 = vmul.f32 %v357, %v1270
        %v1272 = vmul.f32 %v358, %v1270
        %v1273 = vmul.f32 %v359, %v1270
        %1277 = vrot.lane.b32.xlu0 %v1271, 124
        %v1278 = vpop.permute.xlu0 %1277
        %1279 = vrot.lane.b32.xlu0 %v1272, 124
        %v1280 = vpop.permute.xlu0 %1279
        %1281 = vrot.lane.b32.xlu0 %v1273, 124
        %v1282 = vpop.permute.xlu0 %1281
        %v1286 = vadd.f32 %v1266, %v1278
        %v1287 = vadd.f32 %v1267, %v1280
        %v1288 = vadd.f32 %v1268, %v1282
        %s1289 = sld [smem:[#allocation2 + $0x1e]]
        %v1290 = vstv %s1289
        %v1291 = vmul.f32 %v357, %v1290
        %v1292 = vmul.f32 %v358, %v1290
        %v1293 = vmul.f32 %v359, %v1290
        %v1294 = vmul.f32 %v360, %v1290
        %v1299 = vrot.slane %v1291, 1
        %v1300 = vrot.slane %v1292, 1
        %v1301 = vsel %vm459, %v1299, %v1300
        %v1302 = vrot.slane %v1293, 1
        %v1303 = vsel %vm459, %v1300, %v1302
        %v1304 = vrot.slane %v1294, 1
        %v1305 = vsel %vm459, %v1302, %v1304
        %v1309 = vadd.f32 %v1286, %v1301
        %v1310 = vadd.f32 %v1287, %v1303
        %v1311 = vadd.f32 %v1288, %v1305
        %s1312 = sld [smem:[#allocation2 + $0x1f]]
        %v1313 = vstv %s1312
        %v1314 = vmul.f32 %v357, %v1313
        %v1315 = vmul.f32 %v358, %v1313
        %v1316 = vmul.f32 %v359, %v1313
        %v1317 = vmul.f32 %v360, %v1313
        %v1322 = vrot.slane %v1314, 1
        %v1323 = vrot.slane %v1315, 1
        %v1324 = vsel %vm459, %v1322, %v1323
        %v1325 = vrot.slane %v1316, 1
        %v1326 = vsel %vm459, %v1323, %v1325
        %v1327 = vrot.slane %v1317, 1
        %v1328 = vsel %vm459, %v1325, %v1327
        %1329 = vrot.lane.b32.xlu0 %v1324, 127
        %v1330 = vpop.permute.xlu0 %1329
        %1331 = vrot.lane.b32.xlu0 %v1326, 127
        %v1332 = vpop.permute.xlu0 %1331
        %1333 = vrot.lane.b32.xlu0 %v1328, 127
        %v1334 = vpop.permute.xlu0 %1333
        %v1338 = vadd.f32 %v1309, %v1330
        %v1339 = vadd.f32 %v1310, %v1332
        %v1340 = vadd.f32 %v1311, %v1334
        %s1341 = sld [smem:[#allocation2 + $0x20]]
        %v1342 = vstv %s1341
        %v1343 = vmul.f32 %v357, %v1342
        %v1344 = vmul.f32 %v358, %v1342
        %v1345 = vmul.f32 %v359, %v1342
        %v1346 = vmul.f32 %v360, %v1342
        %v1351 = vrot.slane %v1343, 1
        %v1352 = vrot.slane %v1344, 1
        %v1353 = vsel %vm459, %v1351, %v1352
        %v1354 = vrot.slane %v1345, 1
        %v1355 = vsel %vm459, %v1352, %v1354
        %v1356 = vrot.slane %v1346, 1
        %v1357 = vsel %vm459, %v1354, %v1356
        %1358 = vrot.lane.b32.xlu0 %v1353, 126
        %v1359 = vpop.permute.xlu0 %1358
        %1360 = vrot.lane.b32.xlu0 %v1355, 126
        %v1361 = vpop.permute.xlu0 %1360
        %1362 = vrot.lane.b32.xlu0 %v1357, 126
        %v1363 = vpop.permute.xlu0 %1362
        %v1367 = vadd.f32 %v1338, %v1359
        %v1368 = vadd.f32 %v1339, %v1361
        %v1369 = vadd.f32 %v1340, %v1363
        %s1370 = sld [smem:[#allocation2 + $0x21]]
        %v1371 = vstv %s1370
        %v1372 = vmul.f32 %v357, %v1371
        %v1373 = vmul.f32 %v358, %v1371
        %v1374 = vmul.f32 %v359, %v1371
        %v1375 = vmul.f32 %v360, %v1371
        %v1380 = vrot.slane %v1372, 1
        %v1381 = vrot.slane %v1373, 1
        %v1382 = vsel %vm459, %v1380, %v1381
        %v1383 = vrot.slane %v1374, 1
        %v1384 = vsel %vm459, %v1381, %v1383
        %v1385 = vrot.slane %v1375, 1
        %v1386 = vsel %vm459, %v1383, %v1385
        %1387 = vrot.lane.b32.xlu0 %v1382, 125
        %v1388 = vpop.permute.xlu0 %1387
        %1389 = vrot.lane.b32.xlu0 %v1384, 125
        %v1390 = vpop.permute.xlu0 %1389
        %1391 = vrot.lane.b32.xlu0 %v1386, 125
        %v1392 = vpop.permute.xlu0 %1391
        %v1396 = vadd.f32 %v1367, %v1388
        %v1397 = vadd.f32 %v1368, %v1390
        %v1398 = vadd.f32 %v1369, %v1392
        %s1399 = sld [smem:[#allocation2 + $0x22]]
        %v1400 = vstv %s1399
        %v1401 = vmul.f32 %v357, %v1400
        %v1402 = vmul.f32 %v358, %v1400
        %v1403 = vmul.f32 %v359, %v1400
        %v1404 = vmul.f32 %v360, %v1400
        %v1409 = vrot.slane %v1401, 1
        %v1410 = vrot.slane %v1402, 1
        %v1411 = vsel %vm459, %v1409, %v1410
        %v1412 = vrot.slane %v1403, 1
        %v1413 = vsel %vm459, %v1410, %v1412
        %v1414 = vrot.slane %v1404, 1
        %v1415 = vsel %vm459, %v1412, %v1414
        %1416 = vrot.lane.b32.xlu0 %v1411, 124
        %v1417 = vpop.permute.xlu0 %1416
        %1418 = vrot.lane.b32.xlu0 %v1413, 124
        %v1419 = vpop.permute.xlu0 %1418
        %1420 = vrot.lane.b32.xlu0 %v1415, 124
        %v1421 = vpop.permute.xlu0 %1420
        %v1425 = vadd.f32 %v1396, %v1417
        %v1426 = vadd.f32 %v1397, %v1419
        %v1427 = vadd.f32 %v1398, %v1421
        %s1428 = sld [smem:[#allocation2 + $0x23]]
        %v1429 = vstv %s1428
        %v1430 = vmul.f32 %v357, %v1429
        %v1431 = vmul.f32 %v358, %v1429
        %v1432 = vmul.f32 %v359, %v1429
        %v1433 = vmul.f32 %v360, %v1429
        %v1438 = vrot.slane %v1430, 2
        %v1439 = vrot.slane %v1431, 2
        %v1440 = vsel %vm599, %v1438, %v1439
        %v1441 = vrot.slane %v1432, 2
        %v1442 = vsel %vm599, %v1439, %v1441
        %v1443 = vrot.slane %v1433, 2
        %v1444 = vsel %vm599, %v1441, %v1443
        %v1448 = vadd.f32 %v1425, %v1440
        %v1449 = vadd.f32 %v1426, %v1442
        %v1450 = vadd.f32 %v1427, %v1444
        %s1451 = sld [smem:[#allocation2 + $0x24]]
        %v1452 = vstv %s1451
        %v1453 = vmul.f32 %v357, %v1452
        %v1454 = vmul.f32 %v358, %v1452
        %v1455 = vmul.f32 %v359, %v1452
        %v1456 = vmul.f32 %v360, %v1452
        %v1461 = vrot.slane %v1453, 2
        %v1462 = vrot.slane %v1454, 2
        %v1463 = vsel %vm599, %v1461, %v1462
        %v1464 = vrot.slane %v1455, 2
        %v1465 = vsel %vm599, %v1462, %v1464
        %v1466 = vrot.slane %v1456, 2
        %v1467 = vsel %vm599, %v1464, %v1466
        %1468 = vrot.lane.b32.xlu0 %v1463, 127
        %v1469 = vpop.permute.xlu0 %1468
        %1470 = vrot.lane.b32.xlu0 %v1465, 127
        %v1471 = vpop.permute.xlu0 %1470
        %1472 = vrot.lane.b32.xlu0 %v1467, 127
        %v1473 = vpop.permute.xlu0 %1472
        %v1477 = vadd.f32 %v1448, %v1469
        %v1478 = vadd.f32 %v1449, %v1471
        %v1479 = vadd.f32 %v1450, %v1473
        %s1480 = sld [smem:[#allocation2 + $0x25]]
        %v1481 = vstv %s1480
        %v1482 = vmul.f32 %v357, %v1481
        %v1483 = vmul.f32 %v358, %v1481
        %v1484 = vmul.f32 %v359, %v1481
        %v1485 = vmul.f32 %v360, %v1481
        %v1490 = vrot.slane %v1482, 2
        %v1491 = vrot.slane %v1483, 2
        %v1492 = vsel %vm599, %v1490, %v1491
        %v1493 = vrot.slane %v1484, 2
        %v1494 = vsel %vm599, %v1491, %v1493
        %v1495 = vrot.slane %v1485, 2
        %v1496 = vsel %vm599, %v1493, %v1495
        %1497 = vrot.lane.b32.xlu0 %v1492, 126
        %v1498 = vpop.permute.xlu0 %1497
        %1499 = vrot.lane.b32.xlu0 %v1494, 126
        %v1500 = vpop.permute.xlu0 %1499
        %1501 = vrot.lane.b32.xlu0 %v1496, 126
        %v1502 = vpop.permute.xlu0 %1501
        %v1506 = vadd.f32 %v1477, %v1498
        %v1507 = vadd.f32 %v1478, %v1500
        %v1508 = vadd.f32 %v1479, %v1502
        %s1509 = sld [smem:[#allocation2 + $0x26]]
        %v1510 = vstv %s1509
        %v1511 = vmul.f32 %v357, %v1510
        %v1512 = vmul.f32 %v358, %v1510
        %v1513 = vmul.f32 %v359, %v1510
        %v1514 = vmul.f32 %v360, %v1510
        %v1519 = vrot.slane %v1511, 2
        %v1520 = vrot.slane %v1512, 2
        %v1521 = vsel %vm599, %v1519, %v1520
        %v1522 = vrot.slane %v1513, 2
        %v1523 = vsel %vm599, %v1520, %v1522
        %v1524 = vrot.slane %v1514, 2
        %v1525 = vsel %vm599, %v1522, %v1524
        %1526 = vrot.lane.b32.xlu0 %v1521, 125
        %v1527 = vpop.permute.xlu0 %1526
        %1528 = vrot.lane.b32.xlu0 %v1523, 125
        %v1529 = vpop.permute.xlu0 %1528
        %1530 = vrot.lane.b32.xlu0 %v1525, 125
        %v1531 = vpop.permute.xlu0 %1530
        %v1535 = vadd.f32 %v1506, %v1527
        %v1536 = vadd.f32 %v1507, %v1529
        %v1537 = vadd.f32 %v1508, %v1531
        %s1538 = sld [smem:[#allocation2 + $0x27]]
        %v1539 = vstv %s1538
        %v1540 = vmul.f32 %v357, %v1539
        %v1541 = vmul.f32 %v358, %v1539
        %v1542 = vmul.f32 %v359, %v1539
        %v1543 = vmul.f32 %v360, %v1539
        %v1548 = vrot.slane %v1540, 2
        %v1549 = vrot.slane %v1541, 2
        %v1550 = vsel %vm599, %v1548, %v1549
        %v1551 = vrot.slane %v1542, 2
        %v1552 = vsel %vm599, %v1549, %v1551
        %v1553 = vrot.slane %v1543, 2
        %v1554 = vsel %vm599, %v1551, %v1553
        %1555 = vrot.lane.b32.xlu0 %v1550, 124
        %v1556 = vpop.permute.xlu0 %1555
        %1557 = vrot.lane.b32.xlu0 %v1552, 124
        %v1558 = vpop.permute.xlu0 %1557
        %1559 = vrot.lane.b32.xlu0 %v1554, 124
        %v1560 = vpop.permute.xlu0 %1559
        %v1564 = vadd.f32 %v1535, %v1556
        %v1565 = vadd.f32 %v1536, %v1558
        %v1566 = vadd.f32 %v1537, %v1560
        %s1567 = sld [smem:[#allocation2 + $0x28]]
        %v1568 = vstv %s1567
        %v1569 = vmul.f32 %v357, %v1568
        %v1570 = vmul.f32 %v358, %v1568
        %v1571 = vmul.f32 %v359, %v1568
        %v1572 = vmul.f32 %v360, %v1568
        %v1577 = vrot.slane %v1569, 3
        %v1578 = vrot.slane %v1570, 3
        %v1579 = vsel %vm739, %v1577, %v1578
        %v1580 = vrot.slane %v1571, 3
        %v1581 = vsel %vm739, %v1578, %v1580
        %v1582 = vrot.slane %v1572, 3
        %v1583 = vsel %vm739, %v1580, %v1582
        %v1587 = vadd.f32 %v1564, %v1579
        %v1588 = vadd.f32 %v1565, %v1581
        %v1589 = vadd.f32 %v1566, %v1583
        %s1590 = sld [smem:[#allocation2 + $0x29]]
        %v1591 = vstv %s1590
        %v1592 = vmul.f32 %v357, %v1591
        %v1593 = vmul.f32 %v358, %v1591
        %v1594 = vmul.f32 %v359, %v1591
        %v1595 = vmul.f32 %v360, %v1591
        %v1600 = vrot.slane %v1592, 3
        %v1601 = vrot.slane %v1593, 3
        %v1602 = vsel %vm739, %v1600, %v1601
        %v1603 = vrot.slane %v1594, 3
        %v1604 = vsel %vm739, %v1601, %v1603
        %v1605 = vrot.slane %v1595, 3
        %v1606 = vsel %vm739, %v1603, %v1605
        %1607 = vrot.lane.b32.xlu0 %v1602, 127
        %v1608 = vpop.permute.xlu0 %1607
        %1609 = vrot.lane.b32.xlu0 %v1604, 127
        %v1610 = vpop.permute.xlu0 %1609
        %1611 = vrot.lane.b32.xlu0 %v1606, 127
        %v1612 = vpop.permute.xlu0 %1611
        %v1616 = vadd.f32 %v1587, %v1608
        %v1617 = vadd.f32 %v1588, %v1610
        %v1618 = vadd.f32 %v1589, %v1612
        %s1619 = sld [smem:[#allocation2 + $0x2a]]
        %v1620 = vstv %s1619
        %v1621 = vmul.f32 %v357, %v1620
        %v1622 = vmul.f32 %v358, %v1620
        %v1623 = vmul.f32 %v359, %v1620
        %v1624 = vmul.f32 %v360, %v1620
        %v1629 = vrot.slane %v1621, 3
        %v1630 = vrot.slane %v1622, 3
        %v1631 = vsel %vm739, %v1629, %v1630
        %v1632 = vrot.slane %v1623, 3
        %v1633 = vsel %vm739, %v1630, %v1632
        %v1634 = vrot.slane %v1624, 3
        %v1635 = vsel %vm739, %v1632, %v1634
        %1636 = vrot.lane.b32.xlu0 %v1631, 126
        %v1637 = vpop.permute.xlu0 %1636
        %1638 = vrot.lane.b32.xlu0 %v1633, 126
        %v1639 = vpop.permute.xlu0 %1638
        %1640 = vrot.lane.b32.xlu0 %v1635, 126
        %v1641 = vpop.permute.xlu0 %1640
        %v1645 = vadd.f32 %v1616, %v1637
        %v1646 = vadd.f32 %v1617, %v1639
        %v1647 = vadd.f32 %v1618, %v1641
        %s1648 = sld [smem:[#allocation2 + $0x2b]]
        %v1649 = vstv %s1648
        %v1650 = vmul.f32 %v357, %v1649
        %v1651 = vmul.f32 %v358, %v1649
        %v1652 = vmul.f32 %v359, %v1649
        %v1653 = vmul.f32 %v360, %v1649
        %v1658 = vrot.slane %v1650, 3
        %v1659 = vrot.slane %v1651, 3
        %v1660 = vsel %vm739, %v1658, %v1659
        %v1661 = vrot.slane %v1652, 3
        %v1662 = vsel %vm739, %v1659, %v1661
        %v1663 = vrot.slane %v1653, 3
        %v1664 = vsel %vm739, %v1661, %v1663
        %1665 = vrot.lane.b32.xlu0 %v1660, 125
        %v1666 = vpop.permute.xlu0 %1665
        %1667 = vrot.lane.b32.xlu0 %v1662, 125
        %v1668 = vpop.permute.xlu0 %1667
        %1669 = vrot.lane.b32.xlu0 %v1664, 125
        %v1670 = vpop.permute.xlu0 %1669
        %v1674 = vadd.f32 %v1645, %v1666
        %v1675 = vadd.f32 %v1646, %v1668
        %v1676 = vadd.f32 %v1647, %v1670
        %s1677 = sld [smem:[#allocation2 + $0x2c]]
        %v1678 = vstv %s1677
        %v1679 = vmul.f32 %v357, %v1678
        %v1680 = vmul.f32 %v358, %v1678
        %v1681 = vmul.f32 %v359, %v1678
        %v1682 = vmul.f32 %v360, %v1678
        %v1687 = vrot.slane %v1679, 3
        %v1688 = vrot.slane %v1680, 3
        %v1689 = vsel %vm739, %v1687, %v1688
        %v1690 = vrot.slane %v1681, 3
        %v1691 = vsel %vm739, %v1688, %v1690
        %v1692 = vrot.slane %v1682, 3
        %v1693 = vsel %vm739, %v1690, %v1692
        %1694 = vrot.lane.b32.xlu0 %v1689, 124
        %v1695 = vpop.permute.xlu0 %1694
        %1696 = vrot.lane.b32.xlu0 %v1691, 124
        %v1697 = vpop.permute.xlu0 %1696
        %1698 = vrot.lane.b32.xlu0 %v1693, 124
        %v1699 = vpop.permute.xlu0 %1698
        %v1703 = vadd.f32 %v1674, %v1695
        %v1704 = vadd.f32 %v1675, %v1697
        %v1705 = vadd.f32 %v1676, %v1699
        %s1706 = sld [smem:[#allocation2 + $0x2d]]
        %v1707 = vstv %s1706
        %v1708 = vmul.f32 %v357, %v1707
        %v1709 = vmul.f32 %v358, %v1707
        %v1710 = vmul.f32 %v359, %v1707
        %v1711 = vmul.f32 %v360, %v1707
        %v1716 = vrot.slane %v1708, 4
        %v1717 = vrot.slane %v1709, 4
        %v1718 = vsel %vm879, %v1716, %v1717
        %v1719 = vrot.slane %v1710, 4
        %v1720 = vsel %vm879, %v1717, %v1719
        %v1721 = vrot.slane %v1711, 4
        %v1722 = vsel %vm879, %v1719, %v1721
        %v1726 = vadd.f32 %v1703, %v1718
        %v1727 = vadd.f32 %v1704, %v1720
        %v1728 = vadd.f32 %v1705, %v1722
        %s1729 = sld [smem:[#allocation2 + $0x2e]]
        %v1730 = vstv %s1729
        %v1731 = vmul.f32 %v357, %v1730
        %v1732 = vmul.f32 %v358, %v1730
        %v1733 = vmul.f32 %v359, %v1730
        %v1734 = vmul.f32 %v360, %v1730
        %v1739 = vrot.slane %v1731, 4
        %v1740 = vrot.slane %v1732, 4
        %v1741 = vsel %vm879, %v1739, %v1740
        %v1742 = vrot.slane %v1733, 4
        %v1743 = vsel %vm879, %v1740, %v1742
        %v1744 = vrot.slane %v1734, 4
        %v1745 = vsel %vm879, %v1742, %v1744
        %1746 = vrot.lane.b32.xlu0 %v1741, 127
        %v1747 = vpop.permute.xlu0 %1746
        %1748 = vrot.lane.b32.xlu0 %v1743, 127
        %v1749 = vpop.permute.xlu0 %1748
        %1750 = vrot.lane.b32.xlu0 %v1745, 127
        %v1751 = vpop.permute.xlu0 %1750
        %v1755 = vadd.f32 %v1726, %v1747
        %v1756 = vadd.f32 %v1727, %v1749
        %v1757 = vadd.f32 %v1728, %v1751
        %s1758 = sld [smem:[#allocation2 + $0x2f]]
        %v1759 = vstv %s1758
        %v1760 = vmul.f32 %v357, %v1759
        %v1761 = vmul.f32 %v358, %v1759
        %v1762 = vmul.f32 %v359, %v1759
        %v1763 = vmul.f32 %v360, %v1759
        %v1768 = vrot.slane %v1760, 4
        %v1769 = vrot.slane %v1761, 4
        %v1770 = vsel %vm879, %v1768, %v1769
        %v1771 = vrot.slane %v1762, 4
        %v1772 = vsel %vm879, %v1769, %v1771
        %v1773 = vrot.slane %v1763, 4
        %v1774 = vsel %vm879, %v1771, %v1773
        %1775 = vrot.lane.b32.xlu0 %v1770, 126
        %v1776 = vpop.permute.xlu0 %1775
        %1777 = vrot.lane.b32.xlu0 %v1772, 126
        %v1778 = vpop.permute.xlu0 %1777
        %1779 = vrot.lane.b32.xlu0 %v1774, 126
        %v1780 = vpop.permute.xlu0 %1779
        %v1784 = vadd.f32 %v1755, %v1776
        %v1785 = vadd.f32 %v1756, %v1778
        %v1786 = vadd.f32 %v1757, %v1780
        %s1787 = sld [smem:[#allocation2 + $0x30]]
        %v1788 = vstv %s1787
        %v1789 = vmul.f32 %v357, %v1788
        %v1790 = vmul.f32 %v358, %v1788
        %v1791 = vmul.f32 %v359, %v1788
        %v1792 = vmul.f32 %v360, %v1788
        %v1797 = vrot.slane %v1789, 4
        %v1798 = vrot.slane %v1790, 4
        %v1799 = vsel %vm879, %v1797, %v1798
        %v1800 = vrot.slane %v1791, 4
        %v1801 = vsel %vm879, %v1798, %v1800
        %v1802 = vrot.slane %v1792, 4
        %v1803 = vsel %vm879, %v1800, %v1802
        %1804 = vrot.lane.b32.xlu0 %v1799, 125
        %v1805 = vpop.permute.xlu0 %1804
        %1806 = vrot.lane.b32.xlu0 %v1801, 125
        %v1807 = vpop.permute.xlu0 %1806
        %1808 = vrot.lane.b32.xlu0 %v1803, 125
        %v1809 = vpop.permute.xlu0 %1808
        %v1813 = vadd.f32 %v1784, %v1805
        %v1814 = vadd.f32 %v1785, %v1807
        %v1815 = vadd.f32 %v1786, %v1809
        %s1816 = sld [smem:[#allocation2 + $0x31]]
        %v1817 = vstv %s1816
        %v1818 = vmul.f32 %v357, %v1817
        %v1819 = vmul.f32 %v358, %v1817
        %v1820 = vmul.f32 %v359, %v1817
        %v1821 = vmul.f32 %v360, %v1817
        %v1826 = vrot.slane %v1818, 4
        %v1827 = vrot.slane %v1819, 4
        %v1828 = vsel %vm879, %v1826, %v1827
        %v1829 = vrot.slane %v1820, 4
        %v1830 = vsel %vm879, %v1827, %v1829
        %v1831 = vrot.slane %v1821, 4
        %v1832 = vsel %vm879, %v1829, %v1831
        %1833 = vrot.lane.b32.xlu0 %v1828, 124
        %v1834 = vpop.permute.xlu0 %1833
        %1835 = vrot.lane.b32.xlu0 %v1830, 124
        %v1836 = vpop.permute.xlu0 %1835
        %1837 = vrot.lane.b32.xlu0 %v1832, 124
        %v1838 = vpop.permute.xlu0 %1837
        %v1842 = vadd.f32 %v1813, %v1834
        %v1843 = vadd.f32 %v1814, %v1836
        %v1844 = vadd.f32 %v1815, %v1838
        %s1845 = sld [smem:[#allocation5 + $0x1]]
        %v1846 = vstv %s1845
        %v1847 = vadd.f32 %v1842, %v1846
        %v1848 = vadd.f32 %v1843, %v1846
        %v1849 = vadd.f32 %v1844, %v1846
        %v1851 = vrot.slane %v1847, 1
        %v1853 = vrot.slane %v1847, 2
        %v1855 = vrot.slane %v1847, 3
        %v1858 = vrot.slane %v1848, 4
        %v1860 = vrot.slane %v1848, 5
        %v1862 = vrot.slane %v1848, 6
        %v1864 = vrot.slane %v1848, 7
        %v1867 = vrot.slane %v1849, 1
        %v1869 = vrot.slane %v1849, 2
        %v1871 = vrot.slane %v1849, 3
        %v1873 = vsel %vm1037, %v1847, %v1851
        %v1874 = vsel %vm1039, %v1873, %v1853
        %v1875 = vsel %vm1041, %v1874, %v1855
        %v1876 = vsel %vm879, %v1875, %v1858
        %v1877 = vsel %vm739, %v1876, %v1860
        %v1878 = vsel %vm599, %v1877, %v1862
        %v1879 = vsel %vm459, %v1878, %v1864
        %v1880 = vsel %vm1037, %v1849, %v1867
        %v1881 = vsel %vm1039, %v1880, %v1869
        %v1882 = vsel %vm1041, %v1881, %v1871
        %v1883 = vrot.slane %v1847, 4
        %v1885 = vrot.slane %v1849, 4
        %v1887 = vsel %vm1037, %v1851, %v1853
        %v1888 = vsel %vm1039, %v1887, %v1855
        %v1889 = vsel %vm1041, %v1888, %v1883
        %v1890 = vsel %vm879, %v1889, %v1860
        %v1891 = vsel %vm739, %v1890, %v1862
        %v1892 = vsel %vm599, %v1891, %v1864
        %v1893 = vsel %vm459, %v1892, %v1848
        %v1894 = vsel %vm1037, %v1867, %v1869
        %v1895 = vsel %vm1039, %v1894, %v1871
        %v1896 = vsel %vm1041, %v1895, %v1885
        %v1897 = vmax.f32 %v1879, %v1893
        %v1898 = vmax.f32 %v1882, %v1896
        %1901 = vrot.lane.b32.xlu0 %v1897, 127
        %v1902 = vpop.permute.xlu0 %1901
        %1903 = vrot.lane.b32.xlu0 %v1898, 127
        %v1904 = vpop.permute.xlu0 %1903
        %1907 = vrot.lane.b32.xlu0 %v1897, 126
        %v1908 = vpop.permute.xlu0 %1907
        %1909 = vrot.lane.b32.xlu0 %v1898, 126
        %v1910 = vpop.permute.xlu0 %1909
        %1913 = vrot.lane.b32.xlu0 %v1897, 125
        %v1914 = vpop.permute.xlu0 %1913
        %1915 = vrot.lane.b32.xlu0 %v1898, 125
        %v1916 = vpop.permute.xlu0 %1915
        %1919 = vrot.lane.b32.xlu0 %v1897, 124
        %v1920 = vpop.permute.xlu0 %1919
        %1921 = vrot.lane.b32.xlu0 %v1898, 124
        %v1922 = vpop.permute.xlu0 %1921
        %1925 = vrot.lane.b32.xlu0 %v1897, 123
        %v1926 = vpop.permute.xlu0 %1925
        %1927 = vrot.lane.b32.xlu0 %v1898, 123
        %v1928 = vpop.permute.xlu0 %1927
        %1931 = vrot.lane.b32.xlu0 %v1897, 122
        %v1932 = vpop.permute.xlu0 %1931
        %1933 = vrot.lane.b32.xlu0 %v1898, 122
        %v1934 = vpop.permute.xlu0 %1933
        %1937 = vrot.lane.b32.xlu0 %v1897, 121
        %v1938 = vpop.permute.xlu0 %1937
        %1939 = vrot.lane.b32.xlu0 %v1898, 121
        %v1940 = vpop.permute.xlu0 %1939
        %1943 = vrot.lane.b32.xlu0 %v1897, 120
        %v1944 = vpop.permute.xlu0 %1943
        %1945 = vrot.lane.b32.xlu0 %v1898, 120
        %v1946 = vpop.permute.xlu0 %1945
        %1949 = vrot.lane.b32.xlu0 %v1897, 119
        %v1950 = vpop.permute.xlu0 %1949
        %1951 = vrot.lane.b32.xlu0 %v1898, 119
        %v1952 = vpop.permute.xlu0 %1951
        %1955 = vrot.lane.b32.xlu0 %v1897, 118
        %v1956 = vpop.permute.xlu0 %1955
        %1957 = vrot.lane.b32.xlu0 %v1898, 118
        %v1958 = vpop.permute.xlu0 %1957
        %1961 = vrot.lane.b32.xlu0 %v1897, 117
        %v1962 = vpop.permute.xlu0 %1961
        %1963 = vrot.lane.b32.xlu0 %v1898, 117
        %v1964 = vpop.permute.xlu0 %1963
        %v1967 = vsel %vm1134, %v1897, %v1902
        %v1968 = vsel %vm1134, %v1898, %v1904
        %v1969 = vsel %vm1137, %v1967, %v1908
        %v1970 = vsel %vm1137, %v1968, %v1910
        %v1971 = vsel %vm1140, %v1969, %v1914
        %v1972 = vsel %vm1140, %v1970, %v1916
        %v1973 = vsel %vm1143, %v1971, %v1920
        %v1974 = vsel %vm1143, %v1972, %v1922
        %v1975 = vsel %vm1146, %v1973, %v1926
        %v1976 = vsel %vm1146, %v1974, %v1928
        %v1977 = vsel %vm1149, %v1975, %v1932
        %v1978 = vsel %vm1149, %v1976, %v1934
        %v1979 = vsel %vm1152, %v1977, %v1938
        %v1980 = vsel %vm1152, %v1978, %v1940
        %v1981 = vsel %vm1155, %v1979, %v1944
        %v1982 = vsel %vm1155, %v1980, %v1946
        %v1983 = vsel %vm1158, %v1981, %v1950
        %v1984 = vsel %vm1158, %v1982, %v1952
        %v1985 = vsel %vm1161, %v1983, %v1956
        %v1986 = vsel %vm1161, %v1984, %v1958
        %v1987 = vsel %vm1164, %v1985, %v1962
        %v1988 = vsel %vm1164, %v1986, %v1964
        %1989 = vrot.lane.b32.xlu0 %v1897, 116
        %v1990 = vpop.permute.xlu0 %1989
        %1991 = vrot.lane.b32.xlu0 %v1898, 116
        %v1992 = vpop.permute.xlu0 %1991
        %v1995 = vsel %vm1134, %v1902, %v1908
        %v1996 = vsel %vm1134, %v1904, %v1910
        %v1997 = vsel %vm1137, %v1995, %v1914
        %v1998 = vsel %vm1137, %v1996, %v1916
        %v1999 = vsel %vm1140, %v1997, %v1920
        %v2000 = vsel %vm1140, %v1998, %v1922
        %v2001 = vsel %vm1143, %v1999, %v1926
        %v2002 = vsel %vm1143, %v2000, %v1928
        %v2003 = vsel %vm1146, %v2001, %v1932
        %v2004 = vsel %vm1146, %v2002, %v1934
        %v2005 = vsel %vm1149, %v2003, %v1938
        %v2006 = vsel %vm1149, %v2004, %v1940
        %v2007 = vsel %vm1152, %v2005, %v1944
        %v2008 = vsel %vm1152, %v2006, %v1946
        %v2009 = vsel %vm1155, %v2007, %v1950
        %v2010 = vsel %vm1155, %v2008, %v1952
        %v2011 = vsel %vm1158, %v2009, %v1956
        %v2012 = vsel %vm1158, %v2010, %v1958
        %v2013 = vsel %vm1161, %v2011, %v1962
        %v2014 = vsel %vm1161, %v2012, %v1964
        %v2015 = vsel %vm1164, %v2013, %v1990
        %v2016 = vsel %vm1164, %v2014, %v1992
        %v2017 = vmax.f32 %v1987, %v2015
        %v2018 = vmax.f32 %v1988, %v2016
        %v2019 = vtanh.pop %v2017
        %v2020 = vtanh.pop %v2018
        %v2021 = vmax.f32 %v2019, 0.0
        %v2022 = vmax.f32 %v2020, 0.0
        %s2023 = sld [smem:[#allocation2 + $0x32]]
        %v2024 = vstv %s2023
        %v2025 = vmul.f32 %v357, %v2024
        %v2026 = vmul.f32 %v358, %v2024
        %v2027 = vmul.f32 %v359, %v2024
        %v2028 = vadd.f32 %v2025, 0.0
        %v2029 = vadd.f32 %v2026, 0.0
        %v2030 = vadd.f32 %v2027, 0.0
        %s2031 = sld [smem:[#allocation2 + $0x33]]
        %v2032 = vstv %s2031
        %v2033 = vmul.f32 %v357, %v2032
        %v2034 = vmul.f32 %v358, %v2032
        %v2035 = vmul.f32 %v359, %v2032
        %2039 = vrot.lane.b32.xlu0 %v2033, 127
        %v2040 = vpop.permute.xlu0 %2039
        %2041 = vrot.lane.b32.xlu0 %v2034, 127
        %v2042 = vpop.permute.xlu0 %2041
        %2043 = vrot.lane.b32.xlu0 %v2035, 127
        %v2044 = vpop.permute.xlu0 %2043
        %v2048 = vadd.f32 %v2028, %v2040
        %v2049 = vadd.f32 %v2029, %v2042
        %v2050 = vadd.f32 %v2030, %v2044
        %s2051 = sld [smem:[#allocation2 + $0x34]]
        %v2052 = vstv %s2051
        %v2053 = vmul.f32 %v357, %v2052
        %v2054 = vmul.f32 %v358, %v2052
        %v2055 = vmul.f32 %v359, %v2052
        %2059 = vrot.lane.b32.xlu0 %v2053, 126
        %v2060 = vpop.permute.xlu0 %2059
        %2061 = vrot.lane.b32.xlu0 %v2054, 126
        %v2062 = vpop.permute.xlu0 %2061
        %2063 = vrot.lane.b32.xlu0 %v2055, 126
        %v2064 = vpop.permute.xlu0 %2063
        %v2068 = vadd.f32 %v2048, %v2060
        %v2069 = vadd.f32 %v2049, %v2062
        %v2070 = vadd.f32 %v2050, %v2064
        %s2071 = sld [smem:[#allocation2 + $0x35]]
        %v2072 = vstv %s2071
        %v2073 = vmul.f32 %v357, %v2072
        %v2074 = vmul.f32 %v358, %v2072
        %v2075 = vmul.f32 %v359, %v2072
        %2079 = vrot.lane.b32.xlu0 %v2073, 125
        %v2080 = vpop.permute.xlu0 %2079
        %2081 = vrot.lane.b32.xlu0 %v2074, 125
        %v2082 = vpop.permute.xlu0 %2081
        %2083 = vrot.lane.b32.xlu0 %v2075, 125
        %v2084 = vpop.permute.xlu0 %2083
        %v2088 = vadd.f32 %v2068, %v2080
        %v2089 = vadd.f32 %v2069, %v2082
        %v2090 = vadd.f32 %v2070, %v2084
        %s2091 = sld [smem:[#allocation2 + $0x36]]
        %v2092 = vstv %s2091
        %v2093 = vmul.f32 %v357, %v2092
        %v2094 = vmul.f32 %v358, %v2092
        %v2095 = vmul.f32 %v359, %v2092
        %2099 = vrot.lane.b32.xlu0 %v2093, 124
        %v2100 = vpop.permute.xlu0 %2099
        %2101 = vrot.lane.b32.xlu0 %v2094, 124
        %v2102 = vpop.permute.xlu0 %2101
        %2103 = vrot.lane.b32.xlu0 %v2095, 124
        %v2104 = vpop.permute.xlu0 %2103
        %v2108 = vadd.f32 %v2088, %v2100
        %v2109 = vadd.f32 %v2089, %v2102
        %v2110 = vadd.f32 %v2090, %v2104
        %s2111 = sld [smem:[#allocation2 + $0x37]]
        %v2112 = vstv %s2111
        %v2113 = vmul.f32 %v357, %v2112
        %v2114 = vmul.f32 %v358, %v2112
        %v2115 = vmul.f32 %v359, %v2112
        %v2116 = vmul.f32 %v360, %v2112
        %v2121 = vrot.slane %v2113, 1
        %v2122 = vrot.slane %v2114, 1
        %v2123 = vsel %vm459, %v2121, %v2122
        %v2124 = vrot.slane %v2115, 1
        %v2125 = vsel %vm459, %v2122, %v2124
        %v2126 = vrot.slane %v2116, 1
        %v2127 = vsel %vm459, %v2124, %v2126
        %v2131 = vadd.f32 %v2108, %v2123
        %v2132 = vadd.f32 %v2109, %v2125
        %v2133 = vadd.f32 %v2110, %v2127
        %s2134 = sld [smem:[#allocation2 + $0x38]]
        %v2135 = vstv %s2134
        %v2136 = vmul.f32 %v357, %v2135
        %v2137 = vmul.f32 %v358, %v2135
        %v2138 = vmul.f32 %v359, %v2135
        %v2139 = vmul.f32 %v360, %v2135
        %v2144 = vrot.slane %v2136, 1
        %v2145 = vrot.slane %v2137, 1
        %v2146 = vsel %vm459, %v2144, %v2145
        %v2147 = vrot.slane %v2138, 1
        %v2148 = vsel %vm459, %v2145, %v2147
        %v2149 = vrot.slane %v2139, 1
        %v2150 = vsel %vm459, %v2147, %v2149
        %2151 = vrot.lane.b32.xlu0 %v2146, 127
        %v2152 = vpop.permute.xlu0 %2151
        %2153 = vrot.lane.b32.xlu0 %v2148, 127
        %v2154 = vpop.permute.xlu0 %2153
        %2155 = vrot.lane.b32.xlu0 %v2150, 127
        %v2156 = vpop.permute.xlu0 %2155
        %v2160 = vadd.f32 %v2131, %v2152
        %v2161 = vadd.f32 %v2132, %v2154
        %v2162 = vadd.f32 %v2133, %v2156
        %s2163 = sld [smem:[#allocation2 + $0x39]]
        %v2164 = vstv %s2163
        %v2165 = vmul.f32 %v357, %v2164
        %v2166 = vmul.f32 %v358, %v2164
        %v2167 = vmul.f32 %v359, %v2164
        %v2168 = vmul.f32 %v360, %v2164
        %v2173 = vrot.slane %v2165, 1
        %v2174 = vrot.slane %v2166, 1
        %v2175 = vsel %vm459, %v2173, %v2174
        %v2176 = vrot.slane %v2167, 1
        %v2177 = vsel %vm459, %v2174, %v2176
        %v2178 = vrot.slane %v2168, 1
        %v2179 = vsel %vm459, %v2176, %v2178
        %2180 = vrot.lane.b32.xlu0 %v2175, 126
        %v2181 = vpop.permute.xlu0 %2180
        %2182 = vrot.lane.b32.xlu0 %v2177, 126
        %v2183 = vpop.permute.xlu0 %2182
        %2184 = vrot.lane.b32.xlu0 %v2179, 126
        %v2185 = vpop.permute.xlu0 %2184
        %v2189 = vadd.f32 %v2160, %v2181
        %v2190 = vadd.f32 %v2161, %v2183
        %v2191 = vadd.f32 %v2162, %v2185
        %s2192 = sld [smem:[#allocation2 + $0x3a]]
        %v2193 = vstv %s2192
        %v2194 = vmul.f32 %v357, %v2193
        %v2195 = vmul.f32 %v358, %v2193
        %v2196 = vmul.f32 %v359, %v2193
        %v2197 = vmul.f32 %v360, %v2193
        %v2202 = vrot.slane %v2194, 1
        %v2203 = vrot.slane %v2195, 1
        %v2204 = vsel %vm459, %v2202, %v2203
        %v2205 = vrot.slane %v2196, 1
        %v2206 = vsel %vm459, %v2203, %v2205
        %v2207 = vrot.slane %v2197, 1
        %v2208 = vsel %vm459, %v2205, %v2207
        %2209 = vrot.lane.b32.xlu0 %v2204, 125
        %v2210 = vpop.permute.xlu0 %2209
        %2211 = vrot.lane.b32.xlu0 %v2206, 125
        %v2212 = vpop.permute.xlu0 %2211
        %2213 = vrot.lane.b32.xlu0 %v2208, 125
        %v2214 = vpop.permute.xlu0 %2213
        %v2218 = vadd.f32 %v2189, %v2210
        %v2219 = vadd.f32 %v2190, %v2212
        %v2220 = vadd.f32 %v2191, %v2214
        %s2221 = sld [smem:[#allocation2 + $0x3b]]
        %v2222 = vstv %s2221
        %v2223 = vmul.f32 %v357, %v2222
        %v2224 = vmul.f32 %v358, %v2222
        %v2225 = vmul.f32 %v359, %v2222
        %v2226 = vmul.f32 %v360, %v2222
        %v2231 = vrot.slane %v2223, 1
        %v2232 = vrot.slane %v2224, 1
        %v2233 = vsel %vm459, %v2231, %v2232
        %v2234 = vrot.slane %v2225, 1
        %v2235 = vsel %vm459, %v2232, %v2234
        %v2236 = vrot.slane %v2226, 1
        %v2237 = vsel %vm459, %v2234, %v2236
        %2238 = vrot.lane.b32.xlu0 %v2233, 124
        %v2239 = vpop.permute.xlu0 %2238
        %2240 = vrot.lane.b32.xlu0 %v2235, 124
        %v2241 = vpop.permute.xlu0 %2240
        %2242 = vrot.lane.b32.xlu0 %v2237, 124
        %v2243 = vpop.permute.xlu0 %2242
        %v2247 = vadd.f32 %v2218, %v2239
        %v2248 = vadd.f32 %v2219, %v2241
        %v2249 = vadd.f32 %v2220, %v2243
        %s2250 = sld [smem:[#allocation2 + $0x3c]]
        %v2251 = vstv %s2250
        %v2252 = vmul.f32 %v357, %v2251
        %v2253 = vmul.f32 %v358, %v2251
        %v2254 = vmul.f32 %v359, %v2251
        %v2255 = vmul.f32 %v360, %v2251
        %v2260 = vrot.slane %v2252, 2
        %v2261 = vrot.slane %v2253, 2
        %v2262 = vsel %vm599, %v2260, %v2261
        %v2263 = vrot.slane %v2254, 2
        %v2264 = vsel %vm599, %v2261, %v2263
        %v2265 = vrot.slane %v2255, 2
        %v2266 = vsel %vm599, %v2263, %v2265
        %v2270 = vadd.f32 %v2247, %v2262
        %v2271 = vadd.f32 %v2248, %v2264
        %v2272 = vadd.f32 %v2249, %v2266
        %s2273 = sld [smem:[#allocation2 + $0x3d]]
        %v2274 = vstv %s2273
        %v2275 = vmul.f32 %v357, %v2274
        %v2276 = vmul.f32 %v358, %v2274
        %v2277 = vmul.f32 %v359, %v2274
        %v2278 = vmul.f32 %v360, %v2274
        %v2283 = vrot.slane %v2275, 2
        %v2284 = vrot.slane %v2276, 2
        %v2285 = vsel %vm599, %v2283, %v2284
        %v2286 = vrot.slane %v2277, 2
        %v2287 = vsel %vm599, %v2284, %v2286
        %v2288 = vrot.slane %v2278, 2
        %v2289 = vsel %vm599, %v2286, %v2288
        %2290 = vrot.lane.b32.xlu0 %v2285, 127
        %v2291 = vpop.permute.xlu0 %2290
        %2292 = vrot.lane.b32.xlu0 %v2287, 127
        %v2293 = vpop.permute.xlu0 %2292
        %2294 = vrot.lane.b32.xlu0 %v2289, 127
        %v2295 = vpop.permute.xlu0 %2294
        %v2299 = vadd.f32 %v2270, %v2291
        %v2300 = vadd.f32 %v2271, %v2293
        %v2301 = vadd.f32 %v2272, %v2295
        %s2302 = sld [smem:[#allocation2 + $0x3e]]
        %v2303 = vstv %s2302
        %v2304 = vmul.f32 %v357, %v2303
        %v2305 = vmul.f32 %v358, %v2303
        %v2306 = vmul.f32 %v359, %v2303
        %v2307 = vmul.f32 %v360, %v2303
        %v2312 = vrot.slane %v2304, 2
        %v2313 = vrot.slane %v2305, 2
        %v2314 = vsel %vm599, %v2312, %v2313
        %v2315 = vrot.slane %v2306, 2
        %v2316 = vsel %vm599, %v2313, %v2315
        %v2317 = vrot.slane %v2307, 2
        %v2318 = vsel %vm599, %v2315, %v2317
        %2319 = vrot.lane.b32.xlu0 %v2314, 126
        %v2320 = vpop.permute.xlu0 %2319
        %2321 = vrot.lane.b32.xlu0 %v2316, 126
        %v2322 = vpop.permute.xlu0 %2321
        %2323 = vrot.lane.b32.xlu0 %v2318, 126
        %v2324 = vpop.permute.xlu0 %2323
        %v2328 = vadd.f32 %v2299, %v2320
        %v2329 = vadd.f32 %v2300, %v2322
        %v2330 = vadd.f32 %v2301, %v2324
        %s2331 = sld [smem:[#allocation2 + $0x3f]]
        %v2332 = vstv %s2331
        %v2333 = vmul.f32 %v357, %v2332
        %v2334 = vmul.f32 %v358, %v2332
        %v2335 = vmul.f32 %v359, %v2332
        %v2336 = vmul.f32 %v360, %v2332
        %v2341 = vrot.slane %v2333, 2
        %v2342 = vrot.slane %v2334, 2
        %v2343 = vsel %vm599, %v2341, %v2342
        %v2344 = vrot.slane %v2335, 2
        %v2345 = vsel %vm599, %v2342, %v2344
        %v2346 = vrot.slane %v2336, 2
        %v2347 = vsel %vm599, %v2344, %v2346
        %2348 = vrot.lane.b32.xlu0 %v2343, 125
        %v2349 = vpop.permute.xlu0 %2348
        %2350 = vrot.lane.b32.xlu0 %v2345, 125
        %v2351 = vpop.permute.xlu0 %2350
        %2352 = vrot.lane.b32.xlu0 %v2347, 125
        %v2353 = vpop.permute.xlu0 %2352
        %v2357 = vadd.f32 %v2328, %v2349
        %v2358 = vadd.f32 %v2329, %v2351
        %v2359 = vadd.f32 %v2330, %v2353
        %s2360 = sld [smem:[#allocation2 + $0x40]]
        %v2361 = vstv %s2360
        %v2362 = vmul.f32 %v357, %v2361
        %v2363 = vmul.f32 %v358, %v2361
        %v2364 = vmul.f32 %v359, %v2361
        %v2365 = vmul.f32 %v360, %v2361
        %v2370 = vrot.slane %v2362, 2
        %v2371 = vrot.slane %v2363, 2
        %v2372 = vsel %vm599, %v2370, %v2371
        %v2373 = vrot.slane %v2364, 2
        %v2374 = vsel %vm599, %v2371, %v2373
        %v2375 = vrot.slane %v2365, 2
        %v2376 = vsel %vm599, %v2373, %v2375
        %2377 = vrot.lane.b32.xlu0 %v2372, 124
        %v2378 = vpop.permute.xlu0 %2377
        %2379 = vrot.lane.b32.xlu0 %v2374, 124
        %v2380 = vpop.permute.xlu0 %2379
        %2381 = vrot.lane.b32.xlu0 %v2376, 124
        %v2382 = vpop.permute.xlu0 %2381
        %v2386 = vadd.f32 %v2357, %v2378
        %v2387 = vadd.f32 %v2358, %v2380
        %v2388 = vadd.f32 %v2359, %v2382
        %s2389 = sld [smem:[#allocation2 + $0x41]]
        %v2390 = vstv %s2389
        %v2391 = vmul.f32 %v357, %v2390
        %v2392 = vmul.f32 %v358, %v2390
        %v2393 = vmul.f32 %v359, %v2390
        %v2394 = vmul.f32 %v360, %v2390
        %v2399 = vrot.slane %v2391, 3
        %v2400 = vrot.slane %v2392, 3
        %v2401 = vsel %vm739, %v2399, %v2400
        %v2402 = vrot.slane %v2393, 3
        %v2403 = vsel %vm739, %v2400, %v2402
        %v2404 = vrot.slane %v2394, 3
        %v2405 = vsel %vm739, %v2402, %v2404
        %v2409 = vadd.f32 %v2386, %v2401
        %v2410 = vadd.f32 %v2387, %v2403
        %v2411 = vadd.f32 %v2388, %v2405
        %s2412 = sld [smem:[#allocation2 + $0x42]]
        %v2413 = vstv %s2412
        %v2414 = vmul.f32 %v357, %v2413
        %v2415 = vmul.f32 %v358, %v2413
        %v2416 = vmul.f32 %v359, %v2413
        %v2417 = vmul.f32 %v360, %v2413
        %v2422 = vrot.slane %v2414, 3
        %v2423 = vrot.slane %v2415, 3
        %v2424 = vsel %vm739, %v2422, %v2423
        %v2425 = vrot.slane %v2416, 3
        %v2426 = vsel %vm739, %v2423, %v2425
        %v2427 = vrot.slane %v2417, 3
        %v2428 = vsel %vm739, %v2425, %v2427
        %2429 = vrot.lane.b32.xlu0 %v2424, 127
        %v2430 = vpop.permute.xlu0 %2429
        %2431 = vrot.lane.b32.xlu0 %v2426, 127
        %v2432 = vpop.permute.xlu0 %2431
        %2433 = vrot.lane.b32.xlu0 %v2428, 127
        %v2434 = vpop.permute.xlu0 %2433
        %v2438 = vadd.f32 %v2409, %v2430
        %v2439 = vadd.f32 %v2410, %v2432
        %v2440 = vadd.f32 %v2411, %v2434
        %s2441 = sld [smem:[#allocation2 + $0x43]]
        %v2442 = vstv %s2441
        %v2443 = vmul.f32 %v357, %v2442
        %v2444 = vmul.f32 %v358, %v2442
        %v2445 = vmul.f32 %v359, %v2442
        %v2446 = vmul.f32 %v360, %v2442
        %v2451 = vrot.slane %v2443, 3
        %v2452 = vrot.slane %v2444, 3
        %v2453 = vsel %vm739, %v2451, %v2452
        %v2454 = vrot.slane %v2445, 3
        %v2455 = vsel %vm739, %v2452, %v2454
        %v2456 = vrot.slane %v2446, 3
        %v2457 = vsel %vm739, %v2454, %v2456
        %2458 = vrot.lane.b32.xlu0 %v2453, 126
        %v2459 = vpop.permute.xlu0 %2458
        %2460 = vrot.lane.b32.xlu0 %v2455, 126
        %v2461 = vpop.permute.xlu0 %2460
        %2462 = vrot.lane.b32.xlu0 %v2457, 126
        %v2463 = vpop.permute.xlu0 %2462
        %v2467 = vadd.f32 %v2438, %v2459
        %v2468 = vadd.f32 %v2439, %v2461
        %v2469 = vadd.f32 %v2440, %v2463
        %s2470 = sld [smem:[#allocation2 + $0x44]]
        %v2471 = vstv %s2470
        %v2472 = vmul.f32 %v357, %v2471
        %v2473 = vmul.f32 %v358, %v2471
        %v2474 = vmul.f32 %v359, %v2471
        %v2475 = vmul.f32 %v360, %v2471
        %v2480 = vrot.slane %v2472, 3
        %v2481 = vrot.slane %v2473, 3
        %v2482 = vsel %vm739, %v2480, %v2481
        %v2483 = vrot.slane %v2474, 3
        %v2484 = vsel %vm739, %v2481, %v2483
        %v2485 = vrot.slane %v2475, 3
        %v2486 = vsel %vm739, %v2483, %v2485
        %2487 = vrot.lane.b32.xlu0 %v2482, 125
        %v2488 = vpop.permute.xlu0 %2487
        %2489 = vrot.lane.b32.xlu0 %v2484, 125
        %v2490 = vpop.permute.xlu0 %2489
        %2491 = vrot.lane.b32.xlu0 %v2486, 125
        %v2492 = vpop.permute.xlu0 %2491
        %v2496 = vadd.f32 %v2467, %v2488
        %v2497 = vadd.f32 %v2468, %v2490
        %v2498 = vadd.f32 %v2469, %v2492
        %s2499 = sld [smem:[#allocation2 + $0x45]]
        %v2500 = vstv %s2499
        %v2501 = vmul.f32 %v357, %v2500
        %v2502 = vmul.f32 %v358, %v2500
        %v2503 = vmul.f32 %v359, %v2500
        %v2504 = vmul.f32 %v360, %v2500
        %v2509 = vrot.slane %v2501, 3
        %v2510 = vrot.slane %v2502, 3
        %v2511 = vsel %vm739, %v2509, %v2510
        %v2512 = vrot.slane %v2503, 3
        %v2513 = vsel %vm739, %v2510, %v2512
        %v2514 = vrot.slane %v2504, 3
        %v2515 = vsel %vm739, %v2512, %v2514
        %2516 = vrot.lane.b32.xlu0 %v2511, 124
        %v2517 = vpop.permute.xlu0 %2516
        %2518 = vrot.lane.b32.xlu0 %v2513, 124
        %v2519 = vpop.permute.xlu0 %2518
        %2520 = vrot.lane.b32.xlu0 %v2515, 124
        %v2521 = vpop.permute.xlu0 %2520
        %v2525 = vadd.f32 %v2496, %v2517
        %v2526 = vadd.f32 %v2497, %v2519
        %v2527 = vadd.f32 %v2498, %v2521
        %s2528 = sld [smem:[#allocation2 + $0x46]]
        %v2529 = vstv %s2528
        %v2530 = vmul.f32 %v357, %v2529
        %v2531 = vmul.f32 %v358, %v2529
        %v2532 = vmul.f32 %v359, %v2529
        %v2533 = vmul.f32 %v360, %v2529
        %v2538 = vrot.slane %v2530, 4
        %v2539 = vrot.slane %v2531, 4
        %v2540 = vsel %vm879, %v2538, %v2539
        %v2541 = vrot.slane %v2532, 4
        %v2542 = vsel %vm879, %v2539, %v2541
        %v2543 = vrot.slane %v2533, 4
        %v2544 = vsel %vm879, %v2541, %v2543
        %v2548 = vadd.f32 %v2525, %v2540
        %v2549 = vadd.f32 %v2526, %v2542
        %v2550 = vadd.f32 %v2527, %v2544
        %s2551 = sld [smem:[#allocation2 + $0x47]]
        %v2552 = vstv %s2551
        %v2553 = vmul.f32 %v357, %v2552
        %v2554 = vmul.f32 %v358, %v2552
        %v2555 = vmul.f32 %v359, %v2552
        %v2556 = vmul.f32 %v360, %v2552
        %v2561 = vrot.slane %v2553, 4
        %v2562 = vrot.slane %v2554, 4
        %v2563 = vsel %vm879, %v2561, %v2562
        %v2564 = vrot.slane %v2555, 4
        %v2565 = vsel %vm879, %v2562, %v2564
        %v2566 = vrot.slane %v2556, 4
        %v2567 = vsel %vm879, %v2564, %v2566
        %2568 = vrot.lane.b32.xlu0 %v2563, 127
        %v2569 = vpop.permute.xlu0 %2568
        %2570 = vrot.lane.b32.xlu0 %v2565, 127
        %v2571 = vpop.permute.xlu0 %2570
        %2572 = vrot.lane.b32.xlu0 %v2567, 127
        %v2573 = vpop.permute.xlu0 %2572
        %v2577 = vadd.f32 %v2548, %v2569
        %v2578 = vadd.f32 %v2549, %v2571
        %v2579 = vadd.f32 %v2550, %v2573
        %s2580 = sld [smem:[#allocation2 + $0x48]]
        %v2581 = vstv %s2580
        %v2582 = vmul.f32 %v357, %v2581
        %v2583 = vmul.f32 %v358, %v2581
        %v2584 = vmul.f32 %v359, %v2581
        %v2585 = vmul.f32 %v360, %v2581
        %v2590 = vrot.slane %v2582, 4
        %v2591 = vrot.slane %v2583, 4
        %v2592 = vsel %vm879, %v2590, %v2591
        %v2593 = vrot.slane %v2584, 4
        %v2594 = vsel %vm879, %v2591, %v2593
        %v2595 = vrot.slane %v2585, 4
        %v2596 = vsel %vm879, %v2593, %v2595
        %2597 = vrot.lane.b32.xlu0 %v2592, 126
        %v2598 = vpop.permute.xlu0 %2597
        %2599 = vrot.lane.b32.xlu0 %v2594, 126
        %v2600 = vpop.permute.xlu0 %2599
        %2601 = vrot.lane.b32.xlu0 %v2596, 126
        %v2602 = vpop.permute.xlu0 %2601
        %v2606 = vadd.f32 %v2577, %v2598
        %v2607 = vadd.f32 %v2578, %v2600
        %v2608 = vadd.f32 %v2579, %v2602
        %s2609 = sld [smem:[#allocation2 + $0x49]]
        %v2610 = vstv %s2609
        %v2611 = vmul.f32 %v357, %v2610
        %v2612 = vmul.f32 %v358, %v2610
        %v2613 = vmul.f32 %v359, %v2610
        %v2614 = vmul.f32 %v360, %v2610
        %v2619 = vrot.slane %v2611, 4
        %v2620 = vrot.slane %v2612, 4
        %v2621 = vsel %vm879, %v2619, %v2620
        %v2622 = vrot.slane %v2613, 4
        %v2623 = vsel %vm879, %v2620, %v2622
        %v2624 = vrot.slane %v2614, 4
        %v2625 = vsel %vm879, %v2622, %v2624
        %2626 = vrot.lane.b32.xlu0 %v2621, 125
        %v2627 = vpop.permute.xlu0 %2626
        %2628 = vrot.lane.b32.xlu0 %v2623, 125
        %v2629 = vpop.permute.xlu0 %2628
        %2630 = vrot.lane.b32.xlu0 %v2625, 125
        %v2631 = vpop.permute.xlu0 %2630
        %v2635 = vadd.f32 %v2606, %v2627
        %v2636 = vadd.f32 %v2607, %v2629
        %v2637 = vadd.f32 %v2608, %v2631
        %s2638 = sld [smem:[#allocation2 + $0x4a]]
        %v2639 = vstv %s2638
        %v2640 = vmul.f32 %v357, %v2639
        %v2641 = vmul.f32 %v358, %v2639
        %v2642 = vmul.f32 %v359, %v2639
        %v2643 = vmul.f32 %v360, %v2639
        %v2648 = vrot.slane %v2640, 4
        %v2649 = vrot.slane %v2641, 4
        %v2650 = vsel %vm879, %v2648, %v2649
        %v2651 = vrot.slane %v2642, 4
        %v2652 = vsel %vm879, %v2649, %v2651
        %v2653 = vrot.slane %v2643, 4
        %v2654 = vsel %vm879, %v2651, %v2653
        %2655 = vrot.lane.b32.xlu0 %v2650, 124
        %v2656 = vpop.permute.xlu0 %2655
        %2657 = vrot.lane.b32.xlu0 %v2652, 124
        %v2658 = vpop.permute.xlu0 %2657
        %2659 = vrot.lane.b32.xlu0 %v2654, 124
        %v2660 = vpop.permute.xlu0 %2659
        %v2664 = vadd.f32 %v2635, %v2656
        %v2665 = vadd.f32 %v2636, %v2658
        %v2666 = vadd.f32 %v2637, %v2660
        %s2667 = sld [smem:[#allocation5 + $0x2]]
        %v2668 = vstv %s2667
        %v2669 = vadd.f32 %v2664, %v2668
        %v2670 = vadd.f32 %v2665, %v2668
        %v2671 = vadd.f32 %v2666, %v2668
        %v2673 = vrot.slane %v2669, 1
        %v2675 = vrot.slane %v2669, 2
        %v2677 = vrot.slane %v2669, 3
        %v2680 = vrot.slane %v2670, 4
        %v2682 = vrot.slane %v2670, 5
        %v2684 = vrot.slane %v2670, 6
        %v2686 = vrot.slane %v2670, 7
        %v2689 = vrot.slane %v2671, 1
        %v2691 = vrot.slane %v2671, 2
        %v2693 = vrot.slane %v2671, 3
        %v2695 = vsel %vm1037, %v2669, %v2673
        %v2696 = vsel %vm1039, %v2695, %v2675
        %v2697 = vsel %vm1041, %v2696, %v2677
        %v2698 = vsel %vm879, %v2697, %v2680
        %v2699 = vsel %vm739, %v2698, %v2682
        %v2700 = vsel %vm599, %v2699, %v2684
        %v2701 = vsel %vm459, %v2700, %v2686
        %v2702 = vsel %vm1037, %v2671, %v2689
        %v2703 = vsel %vm1039, %v2702, %v2691
        %v2704 = vsel %vm1041, %v2703, %v2693
        %v2705 = vrot.slane %v2669, 4
        %v2707 = vrot.slane %v2671, 4
        %v2709 = vsel %vm1037, %v2673, %v2675
        %v2710 = vsel %vm1039, %v2709, %v2677
        %v2711 = vsel %vm1041, %v2710, %v2705
        %v2712 = vsel %vm879, %v2711, %v2682
        %v2713 = vsel %vm739, %v2712, %v2684
        %v2714 = vsel %vm599, %v2713, %v2686
        %v2715 = vsel %vm459, %v2714, %v2670
        %v2716 = vsel %vm1037, %v2689, %v2691
        %v2717 = vsel %vm1039, %v2716, %v2693
        %v2718 = vsel %vm1041, %v2717, %v2707
        %v2719 = vmax.f32 %v2701, %v2715
        %v2720 = vmax.f32 %v2704, %v2718
        %2723 = vrot.lane.b32.xlu0 %v2719, 127
        %v2724 = vpop.permute.xlu0 %2723
        %2725 = vrot.lane.b32.xlu0 %v2720, 127
        %v2726 = vpop.permute.xlu0 %2725
        %2729 = vrot.lane.b32.xlu0 %v2719, 126
        %v2730 = vpop.permute.xlu0 %2729
        %2731 = vrot.lane.b32.xlu0 %v2720, 126
        %v2732 = vpop.permute.xlu0 %2731
        %2735 = vrot.lane.b32.xlu0 %v2719, 125
        %v2736 = vpop.permute.xlu0 %2735
        %2737 = vrot.lane.b32.xlu0 %v2720, 125
        %v2738 = vpop.permute.xlu0 %2737
        %2741 = vrot.lane.b32.xlu0 %v2719, 124
        %v2742 = vpop.permute.xlu0 %2741
        %2743 = vrot.lane.b32.xlu0 %v2720, 124
        %v2744 = vpop.permute.xlu0 %2743
        %2747 = vrot.lane.b32.xlu0 %v2719, 123
        %v2748 = vpop.permute.xlu0 %2747
        %2749 = vrot.lane.b32.xlu0 %v2720, 123
        %v2750 = vpop.permute.xlu0 %2749
        %2753 = vrot.lane.b32.xlu0 %v2719, 122
        %v2754 = vpop.permute.xlu0 %2753
        %2755 = vrot.lane.b32.xlu0 %v2720, 122
        %v2756 = vpop.permute.xlu0 %2755
        %2759 = vrot.lane.b32.xlu0 %v2719, 121
        %v2760 = vpop.permute.xlu0 %2759
        %2761 = vrot.lane.b32.xlu0 %v2720, 121
        %v2762 = vpop.permute.xlu0 %2761
        %2765 = vrot.lane.b32.xlu0 %v2719, 120
        %v2766 = vpop.permute.xlu0 %2765
        %2767 = vrot.lane.b32.xlu0 %v2720, 120
        %v2768 = vpop.permute.xlu0 %2767
        %2771 = vrot.lane.b32.xlu0 %v2719, 119
        %v2772 = vpop.permute.xlu0 %2771
        %2773 = vrot.lane.b32.xlu0 %v2720, 119
        %v2774 = vpop.permute.xlu0 %2773
        %2777 = vrot.lane.b32.xlu0 %v2719, 118
        %v2778 = vpop.permute.xlu0 %2777
        %2779 = vrot.lane.b32.xlu0 %v2720, 118
        %v2780 = vpop.permute.xlu0 %2779
        %2783 = vrot.lane.b32.xlu0 %v2719, 117
        %v2784 = vpop.permute.xlu0 %2783
        %2785 = vrot.lane.b32.xlu0 %v2720, 117
        %v2786 = vpop.permute.xlu0 %2785
        %v2789 = vsel %vm1134, %v2719, %v2724
        %v2790 = vsel %vm1134, %v2720, %v2726
        %v2791 = vsel %vm1137, %v2789, %v2730
        %v2792 = vsel %vm1137, %v2790, %v2732
        %v2793 = vsel %vm1140, %v2791, %v2736
        %v2794 = vsel %vm1140, %v2792, %v2738
        %v2795 = vsel %vm1143, %v2793, %v2742
        %v2796 = vsel %vm1143, %v2794, %v2744
        %v2797 = vsel %vm1146, %v2795, %v2748
        %v2798 = vsel %vm1146, %v2796, %v2750
        %v2799 = vsel %vm1149, %v2797, %v2754
        %v2800 = vsel %vm1149, %v2798, %v2756
        %v2801 = vsel %vm1152, %v2799, %v2760
        %v2802 = vsel %vm1152, %v2800, %v2762
        %v2803 = vsel %vm1155, %v2801, %v2766
        %v2804 = vsel %vm1155, %v2802, %v2768
        %v2805 = vsel %vm1158, %v2803, %v2772
        %v2806 = vsel %vm1158, %v2804, %v2774
        %v2807 = vsel %vm1161, %v2805, %v2778
        %v2808 = vsel %vm1161, %v2806, %v2780
        %v2809 = vsel %vm1164, %v2807, %v2784
        %v2810 = vsel %vm1164, %v2808, %v2786
        %2811 = vrot.lane.b32.xlu0 %v2719, 116
        %v2812 = vpop.permute.xlu0 %2811
        %2813 = vrot.lane.b32.xlu0 %v2720, 116
        %v2814 = vpop.permute.xlu0 %2813
        %v2817 = vsel %vm1134, %v2724, %v2730
        %v2818 = vsel %vm1134, %v2726, %v2732
        %v2819 = vsel %vm1137, %v2817, %v2736
        %v2820 = vsel %vm1137, %v2818, %v2738
        %v2821 = vsel %vm1140, %v2819, %v2742
        %v2822 = vsel %vm1140, %v2820, %v2744
        %v2823 = vsel %vm1143, %v2821, %v2748
        %v2824 = vsel %vm1143, %v2822, %v2750
        %v2825 = vsel %vm1146, %v2823, %v2754
        %v2826 = vsel %vm1146, %v2824, %v2756
        %v2827 = vsel %vm1149, %v2825, %v2760
        %v2828 = vsel %vm1149, %v2826, %v2762
        %v2829 = vsel %vm1152, %v2827, %v2766
        %v2830 = vsel %vm1152, %v2828, %v2768
        %v2831 = vsel %vm1155, %v2829, %v2772
        %v2832 = vsel %vm1155, %v2830, %v2774
        %v2833 = vsel %vm1158, %v2831, %v2778
        %v2834 = vsel %vm1158, %v2832, %v2780
        %v2835 = vsel %vm1161, %v2833, %v2784
        %v2836 = vsel %vm1161, %v2834, %v2786
        %v2837 = vsel %vm1164, %v2835, %v2812
        %v2838 = vsel %vm1164, %v2836, %v2814
        %v2839 = vmax.f32 %v2809, %v2837
        %v2840 = vmax.f32 %v2810, %v2838
        %v2841 = vtanh.pop %v2839
        %v2842 = vtanh.pop %v2840
        %v2843 = vmax.f32 %v2841, 0.0
        %v2844 = vmax.f32 %v2842, 0.0
        %s2845 = sld [smem:[#allocation2 + $0x4b]]
        %v2846 = vstv %s2845
        %v2847 = vmul.f32 %v357, %v2846
        %v2848 = vmul.f32 %v358, %v2846
        %v2849 = vmul.f32 %v359, %v2846
        %v2850 = vadd.f32 %v2847, 0.0
        %v2851 = vadd.f32 %v2848, 0.0
        %v2852 = vadd.f32 %v2849, 0.0
        %s2853 = sld [smem:[#allocation2 + $0x4c]]
        %v2854 = vstv %s2853
        %v2855 = vmul.f32 %v357, %v2854
        %v2856 = vmul.f32 %v358, %v2854
        %v2857 = vmul.f32 %v359, %v2854
        %2861 = vrot.lane.b32.xlu0 %v2855, 127
        %v2862 = vpop.permute.xlu0 %2861
        %2863 = vrot.lane.b32.xlu0 %v2856, 127
        %v2864 = vpop.permute.xlu0 %2863
        %2865 = vrot.lane.b32.xlu0 %v2857, 127
        %v2866 = vpop.permute.xlu0 %2865
        %v2870 = vadd.f32 %v2850, %v2862
        %v2871 = vadd.f32 %v2851, %v2864
        %v2872 = vadd.f32 %v2852, %v2866
        %s2873 = sld [smem:[#allocation2 + $0x4d]]
        %v2874 = vstv %s2873
        %v2875 = vmul.f32 %v357, %v2874
        %v2876 = vmul.f32 %v358, %v2874
        %v2877 = vmul.f32 %v359, %v2874
        %2881 = vrot.lane.b32.xlu0 %v2875, 126
        %v2882 = vpop.permute.xlu0 %2881
        %2883 = vrot.lane.b32.xlu0 %v2876, 126
        %v2884 = vpop.permute.xlu0 %2883
        %2885 = vrot.lane.b32.xlu0 %v2877, 126
        %v2886 = vpop.permute.xlu0 %2885
        %v2890 = vadd.f32 %v2870, %v2882
        %v2891 = vadd.f32 %v2871, %v2884
        %v2892 = vadd.f32 %v2872, %v2886
        %s2893 = sld [smem:[#allocation2 + $0x4e]]
        %v2894 = vstv %s2893
        %v2895 = vmul.f32 %v357, %v2894
        %v2896 = vmul.f32 %v358, %v2894
        %v2897 = vmul.f32 %v359, %v2894
        %2901 = vrot.lane.b32.xlu0 %v2895, 125
        %v2902 = vpop.permute.xlu0 %2901
        %2903 = vrot.lane.b32.xlu0 %v2896, 125
        %v2904 = vpop.permute.xlu0 %2903
        %2905 = vrot.lane.b32.xlu0 %v2897, 125
        %v2906 = vpop.permute.xlu0 %2905
        %v2910 = vadd.f32 %v2890, %v2902
        %v2911 = vadd.f32 %v2891, %v2904
        %v2912 = vadd.f32 %v2892, %v2906
        %s2913 = sld [smem:[#allocation2 + $0x4f]]
        %v2914 = vstv %s2913
        %v2915 = vmul.f32 %v357, %v2914
        %v2916 = vmul.f32 %v358, %v2914
        %v2917 = vmul.f32 %v359, %v2914
        %2921 = vrot.lane.b32.xlu0 %v2915, 124
        %v2922 = vpop.permute.xlu0 %2921
        %2923 = vrot.lane.b32.xlu0 %v2916, 124
        %v2924 = vpop.permute.xlu0 %2923
        %2925 = vrot.lane.b32.xlu0 %v2917, 124
        %v2926 = vpop.permute.xlu0 %2925
        %v2930 = vadd.f32 %v2910, %v2922
        %v2931 = vadd.f32 %v2911, %v2924
        %v2932 = vadd.f32 %v2912, %v2926
        %s2933 = sld [smem:[#allocation2 + $0x50]]
        %v2934 = vstv %s2933
        %v2935 = vmul.f32 %v357, %v2934
        %v2936 = vmul.f32 %v358, %v2934
        %v2937 = vmul.f32 %v359, %v2934
        %v2938 = vmul.f32 %v360, %v2934
        %v2943 = vrot.slane %v2935, 1
        %v2944 = vrot.slane %v2936, 1
        %v2945 = vsel %vm459, %v2943, %v2944
        %v2946 = vrot.slane %v2937, 1
        %v2947 = vsel %vm459, %v2944, %v2946
        %v2948 = vrot.slane %v2938, 1
        %v2949 = vsel %vm459, %v2946, %v2948
        %v2953 = vadd.f32 %v2930, %v2945
        %v2954 = vadd.f32 %v2931, %v2947
        %v2955 = vadd.f32 %v2932, %v2949
        %s2956 = sld [smem:[#allocation2 + $0x51]]
        %v2957 = vstv %s2956
        %v2958 = vmul.f32 %v357, %v2957
        %v2959 = vmul.f32 %v358, %v2957
        %v2960 = vmul.f32 %v359, %v2957
        %v2961 = vmul.f32 %v360, %v2957
        %v2966 = vrot.slane %v2958, 1
        %v2967 = vrot.slane %v2959, 1
        %v2968 = vsel %vm459, %v2966, %v2967
        %v2969 = vrot.slane %v2960, 1
        %v2970 = vsel %vm459, %v2967, %v2969
        %v2971 = vrot.slane %v2961, 1
        %v2972 = vsel %vm459, %v2969, %v2971
        %2973 = vrot.lane.b32.xlu0 %v2968, 127
        %v2974 = vpop.permute.xlu0 %2973
        %2975 = vrot.lane.b32.xlu0 %v2970, 127
        %v2976 = vpop.permute.xlu0 %2975
        %2977 = vrot.lane.b32.xlu0 %v2972, 127
        %v2978 = vpop.permute.xlu0 %2977
        %v2982 = vadd.f32 %v2953, %v2974
        %v2983 = vadd.f32 %v2954, %v2976
        %v2984 = vadd.f32 %v2955, %v2978
        %s2985 = sld [smem:[#allocation2 + $0x52]]
        %v2986 = vstv %s2985
        %v2987 = vmul.f32 %v357, %v2986
        %v2988 = vmul.f32 %v358, %v2986
        %v2989 = vmul.f32 %v359, %v2986
        %v2990 = vmul.f32 %v360, %v2986
        %v2995 = vrot.slane %v2987, 1
        %v2996 = vrot.slane %v2988, 1
        %v2997 = vsel %vm459, %v2995, %v2996
        %v2998 = vrot.slane %v2989, 1
        %v2999 = vsel %vm459, %v2996, %v2998
        %v3000 = vrot.slane %v2990, 1
        %v3001 = vsel %vm459, %v2998, %v3000
        %3002 = vrot.lane.b32.xlu0 %v2997, 126
        %v3003 = vpop.permute.xlu0 %3002
        %3004 = vrot.lane.b32.xlu0 %v2999, 126
        %v3005 = vpop.permute.xlu0 %3004
        %3006 = vrot.lane.b32.xlu0 %v3001, 126
        %v3007 = vpop.permute.xlu0 %3006
        %v3011 = vadd.f32 %v2982, %v3003
        %v3012 = vadd.f32 %v2983, %v3005
        %v3013 = vadd.f32 %v2984, %v3007
        %s3014 = sld [smem:[#allocation2 + $0x53]]
        %v3015 = vstv %s3014
        %v3016 = vmul.f32 %v357, %v3015
        %v3017 = vmul.f32 %v358, %v3015
        %v3018 = vmul.f32 %v359, %v3015
        %v3019 = vmul.f32 %v360, %v3015
        %v3024 = vrot.slane %v3016, 1
        %v3025 = vrot.slane %v3017, 1
        %v3026 = vsel %vm459, %v3024, %v3025
        %v3027 = vrot.slane %v3018, 1
        %v3028 = vsel %vm459, %v3025, %v3027
        %v3029 = vrot.slane %v3019, 1
        %v3030 = vsel %vm459, %v3027, %v3029
        %3031 = vrot.lane.b32.xlu0 %v3026, 125
        %v3032 = vpop.permute.xlu0 %3031
        %3033 = vrot.lane.b32.xlu0 %v3028, 125
        %v3034 = vpop.permute.xlu0 %3033
        %3035 = vrot.lane.b32.xlu0 %v3030, 125
        %v3036 = vpop.permute.xlu0 %3035
        %v3040 = vadd.f32 %v3011, %v3032
        %v3041 = vadd.f32 %v3012, %v3034
        %v3042 = vadd.f32 %v3013, %v3036
        %s3043 = sld [smem:[#allocation2 + $0x54]]
        %v3044 = vstv %s3043
        %v3045 = vmul.f32 %v357, %v3044
        %v3046 = vmul.f32 %v358, %v3044
        %v3047 = vmul.f32 %v359, %v3044
        %v3048 = vmul.f32 %v360, %v3044
        %v3053 = vrot.slane %v3045, 1
        %v3054 = vrot.slane %v3046, 1
        %v3055 = vsel %vm459, %v3053, %v3054
        %v3056 = vrot.slane %v3047, 1
        %v3057 = vsel %vm459, %v3054, %v3056
        %v3058 = vrot.slane %v3048, 1
        %v3059 = vsel %vm459, %v3056, %v3058
        %3060 = vrot.lane.b32.xlu0 %v3055, 124
        %v3061 = vpop.permute.xlu0 %3060
        %3062 = vrot.lane.b32.xlu0 %v3057, 124
        %v3063 = vpop.permute.xlu0 %3062
        %3064 = vrot.lane.b32.xlu0 %v3059, 124
        %v3065 = vpop.permute.xlu0 %3064
        %v3069 = vadd.f32 %v3040, %v3061
        %v3070 = vadd.f32 %v3041, %v3063
        %v3071 = vadd.f32 %v3042, %v3065
        %s3072 = sld [smem:[#allocation2 + $0x55]]
        %v3073 = vstv %s3072
        %v3074 = vmul.f32 %v357, %v3073
        %v3075 = vmul.f32 %v358, %v3073
        %v3076 = vmul.f32 %v359, %v3073
        %v3077 = vmul.f32 %v360, %v3073
        %v3082 = vrot.slane %v3074, 2
        %v3083 = vrot.slane %v3075, 2
        %v3084 = vsel %vm599, %v3082, %v3083
        %v3085 = vrot.slane %v3076, 2
        %v3086 = vsel %vm599, %v3083, %v3085
        %v3087 = vrot.slane %v3077, 2
        %v3088 = vsel %vm599, %v3085, %v3087
        %v3092 = vadd.f32 %v3069, %v3084
        %v3093 = vadd.f32 %v3070, %v3086
        %v3094 = vadd.f32 %v3071, %v3088
        %s3095 = sld [smem:[#allocation2 + $0x56]]
        %v3096 = vstv %s3095
        %v3097 = vmul.f32 %v357, %v3096
        %v3098 = vmul.f32 %v358, %v3096
        %v3099 = vmul.f32 %v359, %v3096
        %v3100 = vmul.f32 %v360, %v3096
        %v3105 = vrot.slane %v3097, 2
        %v3106 = vrot.slane %v3098, 2
        %v3107 = vsel %vm599, %v3105, %v3106
        %v3108 = vrot.slane %v3099, 2
        %v3109 = vsel %vm599, %v3106, %v3108
        %v3110 = vrot.slane %v3100, 2
        %v3111 = vsel %vm599, %v3108, %v3110
        %3112 = vrot.lane.b32.xlu0 %v3107, 127
        %v3113 = vpop.permute.xlu0 %3112
        %3114 = vrot.lane.b32.xlu0 %v3109, 127
        %v3115 = vpop.permute.xlu0 %3114
        %3116 = vrot.lane.b32.xlu0 %v3111, 127
        %v3117 = vpop.permute.xlu0 %3116
        %v3121 = vadd.f32 %v3092, %v3113
        %v3122 = vadd.f32 %v3093, %v3115
        %v3123 = vadd.f32 %v3094, %v3117
        %s3124 = sld [smem:[#allocation2 + $0x57]]
        %v3125 = vstv %s3124
        %v3126 = vmul.f32 %v357, %v3125
        %v3127 = vmul.f32 %v358, %v3125
        %v3128 = vmul.f32 %v359, %v3125
        %v3129 = vmul.f32 %v360, %v3125
        %v3134 = vrot.slane %v3126, 2
        %v3135 = vrot.slane %v3127, 2
        %v3136 = vsel %vm599, %v3134, %v3135
        %v3137 = vrot.slane %v3128, 2
        %v3138 = vsel %vm599, %v3135, %v3137
        %v3139 = vrot.slane %v3129, 2
        %v3140 = vsel %vm599, %v3137, %v3139
        %3141 = vrot.lane.b32.xlu0 %v3136, 126
        %v3142 = vpop.permute.xlu0 %3141
        %3143 = vrot.lane.b32.xlu0 %v3138, 126
        %v3144 = vpop.permute.xlu0 %3143
        %3145 = vrot.lane.b32.xlu0 %v3140, 126
        %v3146 = vpop.permute.xlu0 %3145
        %v3150 = vadd.f32 %v3121, %v3142
        %v3151 = vadd.f32 %v3122, %v3144
        %v3152 = vadd.f32 %v3123, %v3146
        %s3153 = sld [smem:[#allocation2 + $0x58]]
        %v3154 = vstv %s3153
        %v3155 = vmul.f32 %v357, %v3154
        %v3156 = vmul.f32 %v358, %v3154
        %v3157 = vmul.f32 %v359, %v3154
        %v3158 = vmul.f32 %v360, %v3154
        %v3163 = vrot.slane %v3155, 2
        %v3164 = vrot.slane %v3156, 2
        %v3165 = vsel %vm599, %v3163, %v3164
        %v3166 = vrot.slane %v3157, 2
        %v3167 = vsel %vm599, %v3164, %v3166
        %v3168 = vrot.slane %v3158, 2
        %v3169 = vsel %vm599, %v3166, %v3168
        %3170 = vrot.lane.b32.xlu0 %v3165, 125
        %v3171 = vpop.permute.xlu0 %3170
        %3172 = vrot.lane.b32.xlu0 %v3167, 125
        %v3173 = vpop.permute.xlu0 %3172
        %3174 = vrot.lane.b32.xlu0 %v3169, 125
        %v3175 = vpop.permute.xlu0 %3174
        %v3179 = vadd.f32 %v3150, %v3171
        %v3180 = vadd.f32 %v3151, %v3173
        %v3181 = vadd.f32 %v3152, %v3175
        %s3182 = sld [smem:[#allocation2 + $0x59]]
        %v3183 = vstv %s3182
        %v3184 = vmul.f32 %v357, %v3183
        %v3185 = vmul.f32 %v358, %v3183
        %v3186 = vmul.f32 %v359, %v3183
        %v3187 = vmul.f32 %v360, %v3183
        %v3192 = vrot.slane %v3184, 2
        %v3193 = vrot.slane %v3185, 2
        %v3194 = vsel %vm599, %v3192, %v3193
        %v3195 = vrot.slane %v3186, 2
        %v3196 = vsel %vm599, %v3193, %v3195
        %v3197 = vrot.slane %v3187, 2
        %v3198 = vsel %vm599, %v3195, %v3197
        %3199 = vrot.lane.b32.xlu0 %v3194, 124
        %v3200 = vpop.permute.xlu0 %3199
        %3201 = vrot.lane.b32.xlu0 %v3196, 124
        %v3202 = vpop.permute.xlu0 %3201
        %3203 = vrot.lane.b32.xlu0 %v3198, 124
        %v3204 = vpop.permute.xlu0 %3203
        %v3208 = vadd.f32 %v3179, %v3200
        %v3209 = vadd.f32 %v3180, %v3202
        %v3210 = vadd.f32 %v3181, %v3204
        %s3211 = sld [smem:[#allocation2 + $0x5a]]
        %v3212 = vstv %s3211
        %v3213 = vmul.f32 %v357, %v3212
        %v3214 = vmul.f32 %v358, %v3212
        %v3215 = vmul.f32 %v359, %v3212
        %v3216 = vmul.f32 %v360, %v3212
        %v3221 = vrot.slane %v3213, 3
        %v3222 = vrot.slane %v3214, 3
        %v3223 = vsel %vm739, %v3221, %v3222
        %v3224 = vrot.slane %v3215, 3
        %v3225 = vsel %vm739, %v3222, %v3224
        %v3226 = vrot.slane %v3216, 3
        %v3227 = vsel %vm739, %v3224, %v3226
        %v3231 = vadd.f32 %v3208, %v3223
        %v3232 = vadd.f32 %v3209, %v3225
        %v3233 = vadd.f32 %v3210, %v3227
        %s3234 = sld [smem:[#allocation2 + $0x5b]]
        %v3235 = vstv %s3234
        %v3236 = vmul.f32 %v357, %v3235
        %v3237 = vmul.f32 %v358, %v3235
        %v3238 = vmul.f32 %v359, %v3235
        %v3239 = vmul.f32 %v360, %v3235
        %v3244 = vrot.slane %v3236, 3
        %v3245 = vrot.slane %v3237, 3
        %v3246 = vsel %vm739, %v3244, %v3245
        %v3247 = vrot.slane %v3238, 3
        %v3248 = vsel %vm739, %v3245, %v3247
        %v3249 = vrot.slane %v3239, 3
        %v3250 = vsel %vm739, %v3247, %v3249
        %3251 = vrot.lane.b32.xlu0 %v3246, 127
        %v3252 = vpop.permute.xlu0 %3251
        %3253 = vrot.lane.b32.xlu0 %v3248, 127
        %v3254 = vpop.permute.xlu0 %3253
        %3255 = vrot.lane.b32.xlu0 %v3250, 127
        %v3256 = vpop.permute.xlu0 %3255
        %v3260 = vadd.f32 %v3231, %v3252
        %v3261 = vadd.f32 %v3232, %v3254
        %v3262 = vadd.f32 %v3233, %v3256
        %s3263 = sld [smem:[#allocation2 + $0x5c]]
        %v3264 = vstv %s3263
        %v3265 = vmul.f32 %v357, %v3264
        %v3266 = vmul.f32 %v358, %v3264
        %v3267 = vmul.f32 %v359, %v3264
        %v3268 = vmul.f32 %v360, %v3264
        %v3273 = vrot.slane %v3265, 3
        %v3274 = vrot.slane %v3266, 3
        %v3275 = vsel %vm739, %v3273, %v3274
        %v3276 = vrot.slane %v3267, 3
        %v3277 = vsel %vm739, %v3274, %v3276
        %v3278 = vrot.slane %v3268, 3
        %v3279 = vsel %vm739, %v3276, %v3278
        %3280 = vrot.lane.b32.xlu0 %v3275, 126
        %v3281 = vpop.permute.xlu0 %3280
        %3282 = vrot.lane.b32.xlu0 %v3277, 126
        %v3283 = vpop.permute.xlu0 %3282
        %3284 = vrot.lane.b32.xlu0 %v3279, 126
        %v3285 = vpop.permute.xlu0 %3284
        %v3289 = vadd.f32 %v3260, %v3281
        %v3290 = vadd.f32 %v3261, %v3283
        %v3291 = vadd.f32 %v3262, %v3285
        %s3292 = sld [smem:[#allocation2 + $0x5d]]
        %v3293 = vstv %s3292
        %v3294 = vmul.f32 %v357, %v3293
        %v3295 = vmul.f32 %v358, %v3293
        %v3296 = vmul.f32 %v359, %v3293
        %v3297 = vmul.f32 %v360, %v3293
        %v3302 = vrot.slane %v3294, 3
        %v3303 = vrot.slane %v3295, 3
        %v3304 = vsel %vm739, %v3302, %v3303
        %v3305 = vrot.slane %v3296, 3
        %v3306 = vsel %vm739, %v3303, %v3305
        %v3307 = vrot.slane %v3297, 3
        %v3308 = vsel %vm739, %v3305, %v3307
        %3309 = vrot.lane.b32.xlu0 %v3304, 125
        %v3310 = vpop.permute.xlu0 %3309
        %3311 = vrot.lane.b32.xlu0 %v3306, 125
        %v3312 = vpop.permute.xlu0 %3311
        %3313 = vrot.lane.b32.xlu0 %v3308, 125
        %v3314 = vpop.permute.xlu0 %3313
        %v3318 = vadd.f32 %v3289, %v3310
        %v3319 = vadd.f32 %v3290, %v3312
        %v3320 = vadd.f32 %v3291, %v3314
        %s3321 = sld [smem:[#allocation2 + $0x5e]]
        %v3322 = vstv %s3321
        %v3323 = vmul.f32 %v357, %v3322
        %v3324 = vmul.f32 %v358, %v3322
        %v3325 = vmul.f32 %v359, %v3322
        %v3326 = vmul.f32 %v360, %v3322
        %v3331 = vrot.slane %v3323, 3
        %v3332 = vrot.slane %v3324, 3
        %v3333 = vsel %vm739, %v3331, %v3332
        %v3334 = vrot.slane %v3325, 3
        %v3335 = vsel %vm739, %v3332, %v3334
        %v3336 = vrot.slane %v3326, 3
        %v3337 = vsel %vm739, %v3334, %v3336
        %3338 = vrot.lane.b32.xlu0 %v3333, 124
        %v3339 = vpop.permute.xlu0 %3338
        %3340 = vrot.lane.b32.xlu0 %v3335, 124
        %v3341 = vpop.permute.xlu0 %3340
        %3342 = vrot.lane.b32.xlu0 %v3337, 124
        %v3343 = vpop.permute.xlu0 %3342
        %v3347 = vadd.f32 %v3318, %v3339
        %v3348 = vadd.f32 %v3319, %v3341
        %v3349 = vadd.f32 %v3320, %v3343
        %s3350 = sld [smem:[#allocation2 + $0x5f]]
        %v3351 = vstv %s3350
        %v3352 = vmul.f32 %v357, %v3351
        %v3353 = vmul.f32 %v358, %v3351
        %v3354 = vmul.f32 %v359, %v3351
        %v3355 = vmul.f32 %v360, %v3351
        %v3360 = vrot.slane %v3352, 4
        %v3361 = vrot.slane %v3353, 4
        %v3362 = vsel %vm879, %v3360, %v3361
        %v3363 = vrot.slane %v3354, 4
        %v3364 = vsel %vm879, %v3361, %v3363
        %v3365 = vrot.slane %v3355, 4
        %v3366 = vsel %vm879, %v3363, %v3365
        %v3370 = vadd.f32 %v3347, %v3362
        %v3371 = vadd.f32 %v3348, %v3364
        %v3372 = vadd.f32 %v3349, %v3366
        %s3373 = sld [smem:[#allocation2 + $0x60]]
        %v3374 = vstv %s3373
        %v3375 = vmul.f32 %v357, %v3374
        %v3376 = vmul.f32 %v358, %v3374
        %v3377 = vmul.f32 %v359, %v3374
        %v3378 = vmul.f32 %v360, %v3374
        %v3383 = vrot.slane %v3375, 4
        %v3384 = vrot.slane %v3376, 4
        %v3385 = vsel %vm879, %v3383, %v3384
        %v3386 = vrot.slane %v3377, 4
        %v3387 = vsel %vm879, %v3384, %v3386
        %v3388 = vrot.slane %v3378, 4
        %v3389 = vsel %vm879, %v3386, %v3388
        %3390 = vrot.lane.b32.xlu0 %v3385, 127
        %v3391 = vpop.permute.xlu0 %3390
        %3392 = vrot.lane.b32.xlu0 %v3387, 127
        %v3393 = vpop.permute.xlu0 %3392
        %3394 = vrot.lane.b32.xlu0 %v3389, 127
        %v3395 = vpop.permute.xlu0 %3394
        %v3399 = vadd.f32 %v3370, %v3391
        %v3400 = vadd.f32 %v3371, %v3393
        %v3401 = vadd.f32 %v3372, %v3395
        %s3402 = sld [smem:[#allocation2 + $0x61]]
        %v3403 = vstv %s3402
        %v3404 = vmul.f32 %v357, %v3403
        %v3405 = vmul.f32 %v358, %v3403
        %v3406 = vmul.f32 %v359, %v3403
        %v3407 = vmul.f32 %v360, %v3403
        %v3412 = vrot.slane %v3404, 4
        %v3413 = vrot.slane %v3405, 4
        %v3414 = vsel %vm879, %v3412, %v3413
        %v3415 = vrot.slane %v3406, 4
        %v3416 = vsel %vm879, %v3413, %v3415
        %v3417 = vrot.slane %v3407, 4
        %v3418 = vsel %vm879, %v3415, %v3417
        %3419 = vrot.lane.b32.xlu0 %v3414, 126
        %v3420 = vpop.permute.xlu0 %3419
        %3421 = vrot.lane.b32.xlu0 %v3416, 126
        %v3422 = vpop.permute.xlu0 %3421
        %3423 = vrot.lane.b32.xlu0 %v3418, 126
        %v3424 = vpop.permute.xlu0 %3423
        %v3428 = vadd.f32 %v3399, %v3420
        %v3429 = vadd.f32 %v3400, %v3422
        %v3430 = vadd.f32 %v3401, %v3424
        %s3431 = sld [smem:[#allocation2 + $0x62]]
        %v3432 = vstv %s3431
        %v3433 = vmul.f32 %v357, %v3432
        %v3434 = vmul.f32 %v358, %v3432
        %v3435 = vmul.f32 %v359, %v3432
        %v3436 = vmul.f32 %v360, %v3432
        %v3441 = vrot.slane %v3433, 4
        %v3442 = vrot.slane %v3434, 4
        %v3443 = vsel %vm879, %v3441, %v3442
        %v3444 = vrot.slane %v3435, 4
        %v3445 = vsel %vm879, %v3442, %v3444
        %v3446 = vrot.slane %v3436, 4
        %v3447 = vsel %vm879, %v3444, %v3446
        %3448 = vrot.lane.b32.xlu0 %v3443, 125
        %v3449 = vpop.permute.xlu0 %3448
        %3450 = vrot.lane.b32.xlu0 %v3445, 125
        %v3451 = vpop.permute.xlu0 %3450
        %3452 = vrot.lane.b32.xlu0 %v3447, 125
        %v3453 = vpop.permute.xlu0 %3452
        %v3457 = vadd.f32 %v3428, %v3449
        %v3458 = vadd.f32 %v3429, %v3451
        %v3459 = vadd.f32 %v3430, %v3453
        %s3460 = sld [smem:[#allocation2 + $0x63]]
        %v3461 = vstv %s3460
        %v3462 = vmul.f32 %v357, %v3461
        %v3463 = vmul.f32 %v358, %v3461
        %v3464 = vmul.f32 %v359, %v3461
        %v3465 = vmul.f32 %v360, %v3461
        %v3470 = vrot.slane %v3462, 4
        %v3471 = vrot.slane %v3463, 4
        %v3472 = vsel %vm879, %v3470, %v3471
        %v3473 = vrot.slane %v3464, 4
        %v3474 = vsel %vm879, %v3471, %v3473
        %v3475 = vrot.slane %v3465, 4
        %v3476 = vsel %vm879, %v3473, %v3475
        %3477 = vrot.lane.b32.xlu0 %v3472, 124
        %v3478 = vpop.permute.xlu0 %3477
        %3479 = vrot.lane.b32.xlu0 %v3474, 124
        %v3480 = vpop.permute.xlu0 %3479
        %3481 = vrot.lane.b32.xlu0 %v3476, 124
        %v3482 = vpop.permute.xlu0 %3481
        %v3486 = vadd.f32 %v3457, %v3478
        %v3487 = vadd.f32 %v3458, %v3480
        %v3488 = vadd.f32 %v3459, %v3482
        %s3489 = sld [smem:[#allocation5 + $0x3]]
        %v3490 = vstv %s3489
        %v3491 = vadd.f32 %v3486, %v3490
        %v3492 = vadd.f32 %v3487, %v3490
        %v3493 = vadd.f32 %v3488, %v3490
        %v3495 = vrot.slane %v3491, 1
        %v3497 = vrot.slane %v3491, 2
        %v3499 = vrot.slane %v3491, 3
        %v3502 = vrot.slane %v3492, 4
        %v3504 = vrot.slane %v3492, 5
        %v3506 = vrot.slane %v3492, 6
        %v3508 = vrot.slane %v3492, 7
        %v3511 = vrot.slane %v3493, 1
        %v3513 = vrot.slane %v3493, 2
        %v3515 = vrot.slane %v3493, 3
        %v3517 = vsel %vm1037, %v3491, %v3495
        %v3518 = vsel %vm1039, %v3517, %v3497
        %v3519 = vsel %vm1041, %v3518, %v3499
        %v3520 = vsel %vm879, %v3519, %v3502
        %v3521 = vsel %vm739, %v3520, %v3504
        %v3522 = vsel %vm599, %v3521, %v3506
        %v3523 = vsel %vm459, %v3522, %v3508
        %v3524 = vsel %vm1037, %v3493, %v3511
        %v3525 = vsel %vm1039, %v3524, %v3513
        %v3526 = vsel %vm1041, %v3525, %v3515
        %v3527 = vrot.slane %v3491, 4
        %v3529 = vrot.slane %v3493, 4
        %v3531 = vsel %vm1037, %v3495, %v3497
        %v3532 = vsel %vm1039, %v3531, %v3499
        %v3533 = vsel %vm1041, %v3532, %v3527
        %v3534 = vsel %vm879, %v3533, %v3504
        %v3535 = vsel %vm739, %v3534, %v3506
        %v3536 = vsel %vm599, %v3535, %v3508
        %v3537 = vsel %vm459, %v3536, %v3492
        %v3538 = vsel %vm1037, %v3511, %v3513
        %v3539 = vsel %vm1039, %v3538, %v3515
        %v3540 = vsel %vm1041, %v3539, %v3529
        %v3541 = vmax.f32 %v3523, %v3537
        %v3542 = vmax.f32 %v3526, %v3540
        %3545 = vrot.lane.b32.xlu0 %v3541, 127
        %v3546 = vpop.permute.xlu0 %3545
        %3547 = vrot.lane.b32.xlu0 %v3542, 127
        %v3548 = vpop.permute.xlu0 %3547
        %3551 = vrot.lane.b32.xlu0 %v3541, 126
        %v3552 = vpop.permute.xlu0 %3551
        %3553 = vrot.lane.b32.xlu0 %v3542, 126
        %v3554 = vpop.permute.xlu0 %3553
        %3557 = vrot.lane.b32.xlu0 %v3541, 125
        %v3558 = vpop.permute.xlu0 %3557
        %3559 = vrot.lane.b32.xlu0 %v3542, 125
        %v3560 = vpop.permute.xlu0 %3559
        %3563 = vrot.lane.b32.xlu0 %v3541, 124
        %v3564 = vpop.permute.xlu0 %3563
        %3565 = vrot.lane.b32.xlu0 %v3542, 124
        %v3566 = vpop.permute.xlu0 %3565
        %3569 = vrot.lane.b32.xlu0 %v3541, 123
        %v3570 = vpop.permute.xlu0 %3569
        %3571 = vrot.lane.b32.xlu0 %v3542, 123
        %v3572 = vpop.permute.xlu0 %3571
        %3575 = vrot.lane.b32.xlu0 %v3541, 122
        %v3576 = vpop.permute.xlu0 %3575
        %3577 = vrot.lane.b32.xlu0 %v3542, 122
        %v3578 = vpop.permute.xlu0 %3577
        %3581 = vrot.lane.b32.xlu0 %v3541, 121
        %v3582 = vpop.permute.xlu0 %3581
        %3583 = vrot.lane.b32.xlu0 %v3542, 121
        %v3584 = vpop.permute.xlu0 %3583
        %3587 = vrot.lane.b32.xlu0 %v3541, 120
        %v3588 = vpop.permute.xlu0 %3587
        %3589 = vrot.lane.b32.xlu0 %v3542, 120
        %v3590 = vpop.permute.xlu0 %3589
        %3593 = vrot.lane.b32.xlu0 %v3541, 119
        %v3594 = vpop.permute.xlu0 %3593
        %3595 = vrot.lane.b32.xlu0 %v3542, 119
        %v3596 = vpop.permute.xlu0 %3595
        %3599 = vrot.lane.b32.xlu0 %v3541, 118
        %v3600 = vpop.permute.xlu0 %3599
        %3601 = vrot.lane.b32.xlu0 %v3542, 118
        %v3602 = vpop.permute.xlu0 %3601
        %3605 = vrot.lane.b32.xlu0 %v3541, 117
        %v3606 = vpop.permute.xlu0 %3605
        %3607 = vrot.lane.b32.xlu0 %v3542, 117
        %v3608 = vpop.permute.xlu0 %3607
        %v3611 = vsel %vm1134, %v3541, %v3546
        %v3612 = vsel %vm1134, %v3542, %v3548
        %v3613 = vsel %vm1137, %v3611, %v3552
        %v3614 = vsel %vm1137, %v3612, %v3554
        %v3615 = vsel %vm1140, %v3613, %v3558
        %v3616 = vsel %vm1140, %v3614, %v3560
        %v3617 = vsel %vm1143, %v3615, %v3564
        %v3618 = vsel %vm1143, %v3616, %v3566
        %v3619 = vsel %vm1146, %v3617, %v3570
        %v3620 = vsel %vm1146, %v3618, %v3572
        %v3621 = vsel %vm1149, %v3619, %v3576
        %v3622 = vsel %vm1149, %v3620, %v3578
        %v3623 = vsel %vm1152, %v3621, %v3582
        %v3624 = vsel %vm1152, %v3622, %v3584
        %v3625 = vsel %vm1155, %v3623, %v3588
        %v3626 = vsel %vm1155, %v3624, %v3590
        %v3627 = vsel %vm1158, %v3625, %v3594
        %v3628 = vsel %vm1158, %v3626, %v3596
        %v3629 = vsel %vm1161, %v3627, %v3600
        %v3630 = vsel %vm1161, %v3628, %v3602
        %v3631 = vsel %vm1164, %v3629, %v3606
        %v3632 = vsel %vm1164, %v3630, %v3608
        %3633 = vrot.lane.b32.xlu0 %v3541, 116
        %v3634 = vpop.permute.xlu0 %3633
        %3635 = vrot.lane.b32.xlu0 %v3542, 116
        %v3636 = vpop.permute.xlu0 %3635
        %v3639 = vsel %vm1134, %v3546, %v3552
        %v3640 = vsel %vm1134, %v3548, %v3554
        %v3641 = vsel %vm1137, %v3639, %v3558
        %v3642 = vsel %vm1137, %v3640, %v3560
        %v3643 = vsel %vm1140, %v3641, %v3564
        %v3644 = vsel %vm1140, %v3642, %v3566
        %v3645 = vsel %vm1143, %v3643, %v3570
        %v3646 = vsel %vm1143, %v3644, %v3572
        %v3647 = vsel %vm1146, %v3645, %v3576
        %v3648 = vsel %vm1146, %v3646, %v3578
        %v3649 = vsel %vm1149, %v3647, %v3582
        %v3650 = vsel %vm1149, %v3648, %v3584
        %v3651 = vsel %vm1152, %v3649, %v3588
        %v3652 = vsel %vm1152, %v3650, %v3590
        %v3653 = vsel %vm1155, %v3651, %v3594
        %v3654 = vsel %vm1155, %v3652, %v3596
        %v3655 = vsel %vm1158, %v3653, %v3600
        %v3656 = vsel %vm1158, %v3654, %v3602
        %v3657 = vsel %vm1161, %v3655, %v3606
        %v3658 = vsel %vm1161, %v3656, %v3608
        %v3659 = vsel %vm1164, %v3657, %v3634
        %v3660 = vsel %vm1164, %v3658, %v3636
        %v3661 = vmax.f32 %v3631, %v3659
        %v3662 = vmax.f32 %v3632, %v3660
        %v3663 = vtanh.pop %v3661
        %v3664 = vtanh.pop %v3662
        %v3665 = vmax.f32 %v3663, 0.0
        %v3666 = vmax.f32 %v3664, 0.0
        %s3667 = sld [smem:[#allocation2 + $0x64]]
        %v3668 = vstv %s3667
        %v3669 = vmul.f32 %v357, %v3668
        %v3670 = vmul.f32 %v358, %v3668
        %v3671 = vmul.f32 %v359, %v3668
        %v3672 = vadd.f32 %v3669, 0.0
        %v3673 = vadd.f32 %v3670, 0.0
        %v3674 = vadd.f32 %v3671, 0.0
        %s3675 = sld [smem:[#allocation2 + $0x65]]
        %v3676 = vstv %s3675
        %v3677 = vmul.f32 %v357, %v3676
        %v3678 = vmul.f32 %v358, %v3676
        %v3679 = vmul.f32 %v359, %v3676
        %3683 = vrot.lane.b32.xlu0 %v3677, 127
        %v3684 = vpop.permute.xlu0 %3683
        %3685 = vrot.lane.b32.xlu0 %v3678, 127
        %v3686 = vpop.permute.xlu0 %3685
        %3687 = vrot.lane.b32.xlu0 %v3679, 127
        %v3688 = vpop.permute.xlu0 %3687
        %v3692 = vadd.f32 %v3672, %v3684
        %v3693 = vadd.f32 %v3673, %v3686
        %v3694 = vadd.f32 %v3674, %v3688
        %s3695 = sld [smem:[#allocation2 + $0x66]]
        %v3696 = vstv %s3695
        %v3697 = vmul.f32 %v357, %v3696
        %v3698 = vmul.f32 %v358, %v3696
        %v3699 = vmul.f32 %v359, %v3696
        %3703 = vrot.lane.b32.xlu0 %v3697, 126
        %v3704 = vpop.permute.xlu0 %3703
        %3705 = vrot.lane.b32.xlu0 %v3698, 126
        %v3706 = vpop.permute.xlu0 %3705
        %3707 = vrot.lane.b32.xlu0 %v3699, 126
        %v3708 = vpop.permute.xlu0 %3707
        %v3712 = vadd.f32 %v3692, %v3704
        %v3713 = vadd.f32 %v3693, %v3706
        %v3714 = vadd.f32 %v3694, %v3708
        %s3715 = sld [smem:[#allocation2 + $0x67]]
        %v3716 = vstv %s3715
        %v3717 = vmul.f32 %v357, %v3716
        %v3718 = vmul.f32 %v358, %v3716
        %v3719 = vmul.f32 %v359, %v3716
        %3723 = vrot.lane.b32.xlu0 %v3717, 125
        %v3724 = vpop.permute.xlu0 %3723
        %3725 = vrot.lane.b32.xlu0 %v3718, 125
        %v3726 = vpop.permute.xlu0 %3725
        %3727 = vrot.lane.b32.xlu0 %v3719, 125
        %v3728 = vpop.permute.xlu0 %3727
        %v3732 = vadd.f32 %v3712, %v3724
        %v3733 = vadd.f32 %v3713, %v3726
        %v3734 = vadd.f32 %v3714, %v3728
        %s3735 = sld [smem:[#allocation2 + $0x68]]
        %v3736 = vstv %s3735
        %v3737 = vmul.f32 %v357, %v3736
        %v3738 = vmul.f32 %v358, %v3736
        %v3739 = vmul.f32 %v359, %v3736
        %3743 = vrot.lane.b32.xlu0 %v3737, 124
        %v3744 = vpop.permute.xlu0 %3743
        %3745 = vrot.lane.b32.xlu0 %v3738, 124
        %v3746 = vpop.permute.xlu0 %3745
        %3747 = vrot.lane.b32.xlu0 %v3739, 124
        %v3748 = vpop.permute.xlu0 %3747
        %v3752 = vadd.f32 %v3732, %v3744
        %v3753 = vadd.f32 %v3733, %v3746
        %v3754 = vadd.f32 %v3734, %v3748
        %s3755 = sld [smem:[#allocation2 + $0x69]]
        %v3756 = vstv %s3755
        %v3757 = vmul.f32 %v357, %v3756
        %v3758 = vmul.f32 %v358, %v3756
        %v3759 = vmul.f32 %v359, %v3756
        %v3760 = vmul.f32 %v360, %v3756
        %v3765 = vrot.slane %v3757, 1
        %v3766 = vrot.slane %v3758, 1
        %v3767 = vsel %vm459, %v3765, %v3766
        %v3768 = vrot.slane %v3759, 1
        %v3769 = vsel %vm459, %v3766, %v3768
        %v3770 = vrot.slane %v3760, 1
        %v3771 = vsel %vm459, %v3768, %v3770
        %v3775 = vadd.f32 %v3752, %v3767
        %v3776 = vadd.f32 %v3753, %v3769
        %v3777 = vadd.f32 %v3754, %v3771
        %s3778 = sld [smem:[#allocation2 + $0x6a]]
        %v3779 = vstv %s3778
        %v3780 = vmul.f32 %v357, %v3779
        %v3781 = vmul.f32 %v358, %v3779
        %v3782 = vmul.f32 %v359, %v3779
        %v3783 = vmul.f32 %v360, %v3779
        %v3788 = vrot.slane %v3780, 1
        %v3789 = vrot.slane %v3781, 1
        %v3790 = vsel %vm459, %v3788, %v3789
        %v3791 = vrot.slane %v3782, 1
        %v3792 = vsel %vm459, %v3789, %v3791
        %v3793 = vrot.slane %v3783, 1
        %v3794 = vsel %vm459, %v3791, %v3793
        %3795 = vrot.lane.b32.xlu0 %v3790, 127
        %v3796 = vpop.permute.xlu0 %3795
        %3797 = vrot.lane.b32.xlu0 %v3792, 127
        %v3798 = vpop.permute.xlu0 %3797
        %3799 = vrot.lane.b32.xlu0 %v3794, 127
        %v3800 = vpop.permute.xlu0 %3799
        %v3804 = vadd.f32 %v3775, %v3796
        %v3805 = vadd.f32 %v3776, %v3798
        %v3806 = vadd.f32 %v3777, %v3800
        %s3807 = sld [smem:[#allocation2 + $0x6b]]
        %v3808 = vstv %s3807
        %v3809 = vmul.f32 %v357, %v3808
        %v3810 = vmul.f32 %v358, %v3808
        %v3811 = vmul.f32 %v359, %v3808
        %v3812 = vmul.f32 %v360, %v3808
        %v3817 = vrot.slane %v3809, 1
        %v3818 = vrot.slane %v3810, 1
        %v3819 = vsel %vm459, %v3817, %v3818
        %v3820 = vrot.slane %v3811, 1
        %v3821 = vsel %vm459, %v3818, %v3820
        %v3822 = vrot.slane %v3812, 1
        %v3823 = vsel %vm459, %v3820, %v3822
        %3824 = vrot.lane.b32.xlu0 %v3819, 126
        %v3825 = vpop.permute.xlu0 %3824
        %3826 = vrot.lane.b32.xlu0 %v3821, 126
        %v3827 = vpop.permute.xlu0 %3826
        %3828 = vrot.lane.b32.xlu0 %v3823, 126
        %v3829 = vpop.permute.xlu0 %3828
        %v3833 = vadd.f32 %v3804, %v3825
        %v3834 = vadd.f32 %v3805, %v3827
        %v3835 = vadd.f32 %v3806, %v3829
        %s3836 = sld [smem:[#allocation2 + $0x6c]]
        %v3837 = vstv %s3836
        %v3838 = vmul.f32 %v357, %v3837
        %v3839 = vmul.f32 %v358, %v3837
        %v3840 = vmul.f32 %v359, %v3837
        %v3841 = vmul.f32 %v360, %v3837
        %v3846 = vrot.slane %v3838, 1
        %v3847 = vrot.slane %v3839, 1
        %v3848 = vsel %vm459, %v3846, %v3847
        %v3849 = vrot.slane %v3840, 1
        %v3850 = vsel %vm459, %v3847, %v3849
        %v3851 = vrot.slane %v3841, 1
        %v3852 = vsel %vm459, %v3849, %v3851
        %3853 = vrot.lane.b32.xlu0 %v3848, 125
        %v3854 = vpop.permute.xlu0 %3853
        %3855 = vrot.lane.b32.xlu0 %v3850, 125
        %v3856 = vpop.permute.xlu0 %3855
        %3857 = vrot.lane.b32.xlu0 %v3852, 125
        %v3858 = vpop.permute.xlu0 %3857
        %v3862 = vadd.f32 %v3833, %v3854
        %v3863 = vadd.f32 %v3834, %v3856
        %v3864 = vadd.f32 %v3835, %v3858
        %s3865 = sld [smem:[#allocation2 + $0x6d]]
        %v3866 = vstv %s3865
        %v3867 = vmul.f32 %v357, %v3866
        %v3868 = vmul.f32 %v358, %v3866
        %v3869 = vmul.f32 %v359, %v3866
        %v3870 = vmul.f32 %v360, %v3866
        %v3875 = vrot.slane %v3867, 1
        %v3876 = vrot.slane %v3868, 1
        %v3877 = vsel %vm459, %v3875, %v3876
        %v3878 = vrot.slane %v3869, 1
        %v3879 = vsel %vm459, %v3876, %v3878
        %v3880 = vrot.slane %v3870, 1
        %v3881 = vsel %vm459, %v3878, %v3880
        %3882 = vrot.lane.b32.xlu0 %v3877, 124
        %v3883 = vpop.permute.xlu0 %3882
        %3884 = vrot.lane.b32.xlu0 %v3879, 124
        %v3885 = vpop.permute.xlu0 %3884
        %3886 = vrot.lane.b32.xlu0 %v3881, 124
        %v3887 = vpop.permute.xlu0 %3886
        %v3891 = vadd.f32 %v3862, %v3883
        %v3892 = vadd.f32 %v3863, %v3885
        %v3893 = vadd.f32 %v3864, %v3887
        %s3894 = sld [smem:[#allocation2 + $0x6e]]
        %v3895 = vstv %s3894
        %v3896 = vmul.f32 %v357, %v3895
        %v3897 = vmul.f32 %v358, %v3895
        %v3898 = vmul.f32 %v359, %v3895
        %v3899 = vmul.f32 %v360, %v3895
        %v3904 = vrot.slane %v3896, 2
        %v3905 = vrot.slane %v3897, 2
        %v3906 = vsel %vm599, %v3904, %v3905
        %v3907 = vrot.slane %v3898, 2
        %v3908 = vsel %vm599, %v3905, %v3907
        %v3909 = vrot.slane %v3899, 2
        %v3910 = vsel %vm599, %v3907, %v3909
        %v3914 = vadd.f32 %v3891, %v3906
        %v3915 = vadd.f32 %v3892, %v3908
        %v3916 = vadd.f32 %v3893, %v3910
        %s3917 = sld [smem:[#allocation2 + $0x6f]]
        %v3918 = vstv %s3917
        %v3919 = vmul.f32 %v357, %v3918
        %v3920 = vmul.f32 %v358, %v3918
        %v3921 = vmul.f32 %v359, %v3918
        %v3922 = vmul.f32 %v360, %v3918
        %v3927 = vrot.slane %v3919, 2
        %v3928 = vrot.slane %v3920, 2
        %v3929 = vsel %vm599, %v3927, %v3928
        %v3930 = vrot.slane %v3921, 2
        %v3931 = vsel %vm599, %v3928, %v3930
        %v3932 = vrot.slane %v3922, 2
        %v3933 = vsel %vm599, %v3930, %v3932
        %3934 = vrot.lane.b32.xlu0 %v3929, 127
        %v3935 = vpop.permute.xlu0 %3934
        %3936 = vrot.lane.b32.xlu0 %v3931, 127
        %v3937 = vpop.permute.xlu0 %3936
        %3938 = vrot.lane.b32.xlu0 %v3933, 127
        %v3939 = vpop.permute.xlu0 %3938
        %v3943 = vadd.f32 %v3914, %v3935
        %v3944 = vadd.f32 %v3915, %v3937
        %v3945 = vadd.f32 %v3916, %v3939
        %s3946 = sld [smem:[#allocation2 + $0x70]]
        %v3947 = vstv %s3946
        %v3948 = vmul.f32 %v357, %v3947
        %v3949 = vmul.f32 %v358, %v3947
        %v3950 = vmul.f32 %v359, %v3947
        %v3951 = vmul.f32 %v360, %v3947
        %v3956 = vrot.slane %v3948, 2
        %v3957 = vrot.slane %v3949, 2
        %v3958 = vsel %vm599, %v3956, %v3957
        %v3959 = vrot.slane %v3950, 2
        %v3960 = vsel %vm599, %v3957, %v3959
        %v3961 = vrot.slane %v3951, 2
        %v3962 = vsel %vm599, %v3959, %v3961
        %3963 = vrot.lane.b32.xlu0 %v3958, 126
        %v3964 = vpop.permute.xlu0 %3963
        %3965 = vrot.lane.b32.xlu0 %v3960, 126
        %v3966 = vpop.permute.xlu0 %3965
        %3967 = vrot.lane.b32.xlu0 %v3962, 126
        %v3968 = vpop.permute.xlu0 %3967
        %v3972 = vadd.f32 %v3943, %v3964
        %v3973 = vadd.f32 %v3944, %v3966
        %v3974 = vadd.f32 %v3945, %v3968
        %s3975 = sld [smem:[#allocation2 + $0x71]]
        %v3976 = vstv %s3975
        %v3977 = vmul.f32 %v357, %v3976
        %v3978 = vmul.f32 %v358, %v3976
        %v3979 = vmul.f32 %v359, %v3976
        %v3980 = vmul.f32 %v360, %v3976
        %v3985 = vrot.slane %v3977, 2
        %v3986 = vrot.slane %v3978, 2
        %v3987 = vsel %vm599, %v3985, %v3986
        %v3988 = vrot.slane %v3979, 2
        %v3989 = vsel %vm599, %v3986, %v3988
        %v3990 = vrot.slane %v3980, 2
        %v3991 = vsel %vm599, %v3988, %v3990
        %3992 = vrot.lane.b32.xlu0 %v3987, 125
        %v3993 = vpop.permute.xlu0 %3992
        %3994 = vrot.lane.b32.xlu0 %v3989, 125
        %v3995 = vpop.permute.xlu0 %3994
        %3996 = vrot.lane.b32.xlu0 %v3991, 125
        %v3997 = vpop.permute.xlu0 %3996
        %v4001 = vadd.f32 %v3972, %v3993
        %v4002 = vadd.f32 %v3973, %v3995
        %v4003 = vadd.f32 %v3974, %v3997
        %s4004 = sld [smem:[#allocation2 + $0x72]]
        %v4005 = vstv %s4004
        %v4006 = vmul.f32 %v357, %v4005
        %v4007 = vmul.f32 %v358, %v4005
        %v4008 = vmul.f32 %v359, %v4005
        %v4009 = vmul.f32 %v360, %v4005
        %v4014 = vrot.slane %v4006, 2
        %v4015 = vrot.slane %v4007, 2
        %v4016 = vsel %vm599, %v4014, %v4015
        %v4017 = vrot.slane %v4008, 2
        %v4018 = vsel %vm599, %v4015, %v4017
        %v4019 = vrot.slane %v4009, 2
        %v4020 = vsel %vm599, %v4017, %v4019
        %4021 = vrot.lane.b32.xlu0 %v4016, 124
        %v4022 = vpop.permute.xlu0 %4021
        %4023 = vrot.lane.b32.xlu0 %v4018, 124
        %v4024 = vpop.permute.xlu0 %4023
        %4025 = vrot.lane.b32.xlu0 %v4020, 124
        %v4026 = vpop.permute.xlu0 %4025
        %v4030 = vadd.f32 %v4001, %v4022
        %v4031 = vadd.f32 %v4002, %v4024
        %v4032 = vadd.f32 %v4003, %v4026
        %s4033 = sld [smem:[#allocation2 + $0x73]]
        %v4034 = vstv %s4033
        %v4035 = vmul.f32 %v357, %v4034
        %v4036 = vmul.f32 %v358, %v4034
        %v4037 = vmul.f32 %v359, %v4034
        %v4038 = vmul.f32 %v360, %v4034
        %v4043 = vrot.slane %v4035, 3
        %v4044 = vrot.slane %v4036, 3
        %v4045 = vsel %vm739, %v4043, %v4044
        %v4046 = vrot.slane %v4037, 3
        %v4047 = vsel %vm739, %v4044, %v4046
        %v4048 = vrot.slane %v4038, 3
        %v4049 = vsel %vm739, %v4046, %v4048
        %v4053 = vadd.f32 %v4030, %v4045
        %v4054 = vadd.f32 %v4031, %v4047
        %v4055 = vadd.f32 %v4032, %v4049
        %s4056 = sld [smem:[#allocation2 + $0x74]]
        %v4057 = vstv %s4056
        %v4058 = vmul.f32 %v357, %v4057
        %v4059 = vmul.f32 %v358, %v4057
        %v4060 = vmul.f32 %v359, %v4057
        %v4061 = vmul.f32 %v360, %v4057
        %v4066 = vrot.slane %v4058, 3
        %v4067 = vrot.slane %v4059, 3
        %v4068 = vsel %vm739, %v4066, %v4067
        %v4069 = vrot.slane %v4060, 3
        %v4070 = vsel %vm739, %v4067, %v4069
        %v4071 = vrot.slane %v4061, 3
        %v4072 = vsel %vm739, %v4069, %v4071
        %4073 = vrot.lane.b32.xlu0 %v4068, 127
        %v4074 = vpop.permute.xlu0 %4073
        %4075 = vrot.lane.b32.xlu0 %v4070, 127
        %v4076 = vpop.permute.xlu0 %4075
        %4077 = vrot.lane.b32.xlu0 %v4072, 127
        %v4078 = vpop.permute.xlu0 %4077
        %v4082 = vadd.f32 %v4053, %v4074
        %v4083 = vadd.f32 %v4054, %v4076
        %v4084 = vadd.f32 %v4055, %v4078
        %s4085 = sld [smem:[#allocation2 + $0x75]]
        %v4086 = vstv %s4085
        %v4087 = vmul.f32 %v357, %v4086
        %v4088 = vmul.f32 %v358, %v4086
        %v4089 = vmul.f32 %v359, %v4086
        %v4090 = vmul.f32 %v360, %v4086
        %v4095 = vrot.slane %v4087, 3
        %v4096 = vrot.slane %v4088, 3
        %v4097 = vsel %vm739, %v4095, %v4096
        %v4098 = vrot.slane %v4089, 3
        %v4099 = vsel %vm739, %v4096, %v4098
        %v4100 = vrot.slane %v4090, 3
        %v4101 = vsel %vm739, %v4098, %v4100
        %4102 = vrot.lane.b32.xlu0 %v4097, 126
        %v4103 = vpop.permute.xlu0 %4102
        %4104 = vrot.lane.b32.xlu0 %v4099, 126
        %v4105 = vpop.permute.xlu0 %4104
        %4106 = vrot.lane.b32.xlu0 %v4101, 126
        %v4107 = vpop.permute.xlu0 %4106
        %v4111 = vadd.f32 %v4082, %v4103
        %v4112 = vadd.f32 %v4083, %v4105
        %v4113 = vadd.f32 %v4084, %v4107
        %s4114 = sld [smem:[#allocation2 + $0x76]]
        %v4115 = vstv %s4114
        %v4116 = vmul.f32 %v357, %v4115
        %v4117 = vmul.f32 %v358, %v4115
        %v4118 = vmul.f32 %v359, %v4115
        %v4119 = vmul.f32 %v360, %v4115
        %v4124 = vrot.slane %v4116, 3
        %v4125 = vrot.slane %v4117, 3
        %v4126 = vsel %vm739, %v4124, %v4125
        %v4127 = vrot.slane %v4118, 3
        %v4128 = vsel %vm739, %v4125, %v4127
        %v4129 = vrot.slane %v4119, 3
        %v4130 = vsel %vm739, %v4127, %v4129
        %4131 = vrot.lane.b32.xlu0 %v4126, 125
        %v4132 = vpop.permute.xlu0 %4131
        %4133 = vrot.lane.b32.xlu0 %v4128, 125
        %v4134 = vpop.permute.xlu0 %4133
        %4135 = vrot.lane.b32.xlu0 %v4130, 125
        %v4136 = vpop.permute.xlu0 %4135
        %v4140 = vadd.f32 %v4111, %v4132
        %v4141 = vadd.f32 %v4112, %v4134
        %v4142 = vadd.f32 %v4113, %v4136
        %s4143 = sld [smem:[#allocation2 + $0x77]]
        %v4144 = vstv %s4143
        %v4145 = vmul.f32 %v357, %v4144
        %v4146 = vmul.f32 %v358, %v4144
        %v4147 = vmul.f32 %v359, %v4144
        %v4148 = vmul.f32 %v360, %v4144
        %v4153 = vrot.slane %v4145, 3
        %v4154 = vrot.slane %v4146, 3
        %v4155 = vsel %vm739, %v4153, %v4154
        %v4156 = vrot.slane %v4147, 3
        %v4157 = vsel %vm739, %v4154, %v4156
        %v4158 = vrot.slane %v4148, 3
        %v4159 = vsel %vm739, %v4156, %v4158
        %4160 = vrot.lane.b32.xlu0 %v4155, 124
        %v4161 = vpop.permute.xlu0 %4160
        %4162 = vrot.lane.b32.xlu0 %v4157, 124
        %v4163 = vpop.permute.xlu0 %4162
        %4164 = vrot.lane.b32.xlu0 %v4159, 124
        %v4165 = vpop.permute.xlu0 %4164
        %v4169 = vadd.f32 %v4140, %v4161
        %v4170 = vadd.f32 %v4141, %v4163
        %v4171 = vadd.f32 %v4142, %v4165
        %s4172 = sld [smem:[#allocation2 + $0x78]]
        %v4173 = vstv %s4172
        %v4174 = vmul.f32 %v357, %v4173
        %v4175 = vmul.f32 %v358, %v4173
        %v4176 = vmul.f32 %v359, %v4173
        %v4177 = vmul.f32 %v360, %v4173
        %v4182 = vrot.slane %v4174, 4
        %v4183 = vrot.slane %v4175, 4
        %v4184 = vsel %vm879, %v4182, %v4183
        %v4185 = vrot.slane %v4176, 4
        %v4186 = vsel %vm879, %v4183, %v4185
        %v4187 = vrot.slane %v4177, 4
        %v4188 = vsel %vm879, %v4185, %v4187
        %v4192 = vadd.f32 %v4169, %v4184
        %v4193 = vadd.f32 %v4170, %v4186
        %v4194 = vadd.f32 %v4171, %v4188
        %s4195 = sld [smem:[#allocation2 + $0x79]]
        %v4196 = vstv %s4195
        %v4197 = vmul.f32 %v357, %v4196
        %v4198 = vmul.f32 %v358, %v4196
        %v4199 = vmul.f32 %v359, %v4196
        %v4200 = vmul.f32 %v360, %v4196
        %v4205 = vrot.slane %v4197, 4
        %v4206 = vrot.slane %v4198, 4
        %v4207 = vsel %vm879, %v4205, %v4206
        %v4208 = vrot.slane %v4199, 4
        %v4209 = vsel %vm879, %v4206, %v4208
        %v4210 = vrot.slane %v4200, 4
        %v4211 = vsel %vm879, %v4208, %v4210
        %4212 = vrot.lane.b32.xlu0 %v4207, 127
        %v4213 = vpop.permute.xlu0 %4212
        %4214 = vrot.lane.b32.xlu0 %v4209, 127
        %v4215 = vpop.permute.xlu0 %4214
        %4216 = vrot.lane.b32.xlu0 %v4211, 127
        %v4217 = vpop.permute.xlu0 %4216
        %v4221 = vadd.f32 %v4192, %v4213
        %v4222 = vadd.f32 %v4193, %v4215
        %v4223 = vadd.f32 %v4194, %v4217
        %s4224 = sld [smem:[#allocation2 + $0x7a]]
        %v4225 = vstv %s4224
        %v4226 = vmul.f32 %v357, %v4225
        %v4227 = vmul.f32 %v358, %v4225
        %v4228 = vmul.f32 %v359, %v4225
        %v4229 = vmul.f32 %v360, %v4225
        %v4234 = vrot.slane %v4226, 4
        %v4235 = vrot.slane %v4227, 4
        %v4236 = vsel %vm879, %v4234, %v4235
        %v4237 = vrot.slane %v4228, 4
        %v4238 = vsel %vm879, %v4235, %v4237
        %v4239 = vrot.slane %v4229, 4
        %v4240 = vsel %vm879, %v4237, %v4239
        %4241 = vrot.lane.b32.xlu0 %v4236, 126
        %v4242 = vpop.permute.xlu0 %4241
        %4243 = vrot.lane.b32.xlu0 %v4238, 126
        %v4244 = vpop.permute.xlu0 %4243
        %4245 = vrot.lane.b32.xlu0 %v4240, 126
        %v4246 = vpop.permute.xlu0 %4245
        %v4250 = vadd.f32 %v4221, %v4242
        %v4251 = vadd.f32 %v4222, %v4244
        %v4252 = vadd.f32 %v4223, %v4246
        %s4253 = sld [smem:[#allocation2 + $0x7b]]
        %v4254 = vstv %s4253
        %v4255 = vmul.f32 %v357, %v4254
        %v4256 = vmul.f32 %v358, %v4254
        %v4257 = vmul.f32 %v359, %v4254
        %v4258 = vmul.f32 %v360, %v4254
        %v4263 = vrot.slane %v4255, 4
        %v4264 = vrot.slane %v4256, 4
        %v4265 = vsel %vm879, %v4263, %v4264
        %v4266 = vrot.slane %v4257, 4
        %v4267 = vsel %vm879, %v4264, %v4266
        %v4268 = vrot.slane %v4258, 4
        %v4269 = vsel %vm879, %v4266, %v4268
        %4270 = vrot.lane.b32.xlu0 %v4265, 125
        %v4271 = vpop.permute.xlu0 %4270
        %4272 = vrot.lane.b32.xlu0 %v4267, 125
        %v4273 = vpop.permute.xlu0 %4272
        %4274 = vrot.lane.b32.xlu0 %v4269, 125
        %v4275 = vpop.permute.xlu0 %4274
        %v4279 = vadd.f32 %v4250, %v4271
        %v4280 = vadd.f32 %v4251, %v4273
        %v4281 = vadd.f32 %v4252, %v4275
        %s4282 = sld [smem:[#allocation2 + $0x7c]]
        %v4283 = vstv %s4282
        %v4284 = vmul.f32 %v357, %v4283
        %v4285 = vmul.f32 %v358, %v4283
        %v4286 = vmul.f32 %v359, %v4283
        %v4287 = vmul.f32 %v360, %v4283
        %v4292 = vrot.slane %v4284, 4
        %v4293 = vrot.slane %v4285, 4
        %v4294 = vsel %vm879, %v4292, %v4293
        %v4295 = vrot.slane %v4286, 4
        %v4296 = vsel %vm879, %v4293, %v4295
        %v4297 = vrot.slane %v4287, 4
        %v4298 = vsel %vm879, %v4295, %v4297
        %4299 = vrot.lane.b32.xlu0 %v4294, 124
        %v4300 = vpop.permute.xlu0 %4299
        %4301 = vrot.lane.b32.xlu0 %v4296, 124
        %v4302 = vpop.permute.xlu0 %4301
        %4303 = vrot.lane.b32.xlu0 %v4298, 124
        %v4304 = vpop.permute.xlu0 %4303
        %v4308 = vadd.f32 %v4279, %v4300
        %v4309 = vadd.f32 %v4280, %v4302
        %v4310 = vadd.f32 %v4281, %v4304
        %s4311 = sld [smem:[#allocation5 + $0x4]]
        %v4312 = vstv %s4311
        %v4313 = vadd.f32 %v4308, %v4312
        %v4314 = vadd.f32 %v4309, %v4312
        %v4315 = vadd.f32 %v4310, %v4312
        %v4317 = vrot.slane %v4313, 1
        %v4319 = vrot.slane %v4313, 2
        %v4321 = vrot.slane %v4313, 3
        %v4324 = vrot.slane %v4314, 4
        %v4326 = vrot.slane %v4314, 5
        %v4328 = vrot.slane %v4314, 6
        %v4330 = vrot.slane %v4314, 7
        %v4333 = vrot.slane %v4315, 1
        %v4335 = vrot.slane %v4315, 2
        %v4337 = vrot.slane %v4315, 3
        %v4339 = vsel %vm1037, %v4313, %v4317
        %v4340 = vsel %vm1039, %v4339, %v4319
        %v4341 = vsel %vm1041, %v4340, %v4321
        %v4342 = vsel %vm879, %v4341, %v4324
        %v4343 = vsel %vm739, %v4342, %v4326
        %v4344 = vsel %vm599, %v4343, %v4328
        %v4345 = vsel %vm459, %v4344, %v4330
        %v4346 = vsel %vm1037, %v4315, %v4333
        %v4347 = vsel %vm1039, %v4346, %v4335
        %v4348 = vsel %vm1041, %v4347, %v4337
        %v4349 = vrot.slane %v4313, 4
        %v4351 = vrot.slane %v4315, 4
        %v4353 = vsel %vm1037, %v4317, %v4319
        %v4354 = vsel %vm1039, %v4353, %v4321
        %v4355 = vsel %vm1041, %v4354, %v4349
        %v4356 = vsel %vm879, %v4355, %v4326
        %v4357 = vsel %vm739, %v4356, %v4328
        %v4358 = vsel %vm599, %v4357, %v4330
        %v4359 = vsel %vm459, %v4358, %v4314
        %v4360 = vsel %vm1037, %v4333, %v4335
        %v4361 = vsel %vm1039, %v4360, %v4337
        %v4362 = vsel %vm1041, %v4361, %v4351
        %v4363 = vmax.f32 %v4345, %v4359
        %v4364 = vmax.f32 %v4348, %v4362
        %4367 = vrot.lane.b32.xlu0 %v4363, 127
        %v4368 = vpop.permute.xlu0 %4367
        %4369 = vrot.lane.b32.xlu0 %v4364, 127
        %v4370 = vpop.permute.xlu0 %4369
        %4373 = vrot.lane.b32.xlu0 %v4363, 126
        %v4374 = vpop.permute.xlu0 %4373
        %4375 = vrot.lane.b32.xlu0 %v4364, 126
        %v4376 = vpop.permute.xlu0 %4375
        %4379 = vrot.lane.b32.xlu0 %v4363, 125
        %v4380 = vpop.permute.xlu0 %4379
        %4381 = vrot.lane.b32.xlu0 %v4364, 125
        %v4382 = vpop.permute.xlu0 %4381
        %4385 = vrot.lane.b32.xlu0 %v4363, 124
        %v4386 = vpop.permute.xlu0 %4385
        %4387 = vrot.lane.b32.xlu0 %v4364, 124
        %v4388 = vpop.permute.xlu0 %4387
        %4391 = vrot.lane.b32.xlu0 %v4363, 123
        %v4392 = vpop.permute.xlu0 %4391
        %4393 = vrot.lane.b32.xlu0 %v4364, 123
        %v4394 = vpop.permute.xlu0 %4393
        %4397 = vrot.lane.b32.xlu0 %v4363, 122
        %v4398 = vpop.permute.xlu0 %4397
        %4399 = vrot.lane.b32.xlu0 %v4364, 122
        %v4400 = vpop.permute.xlu0 %4399
        %4403 = vrot.lane.b32.xlu0 %v4363, 121
        %v4404 = vpop.permute.xlu0 %4403
        %4405 = vrot.lane.b32.xlu0 %v4364, 121
        %v4406 = vpop.permute.xlu0 %4405
        %4409 = vrot.lane.b32.xlu0 %v4363, 120
        %v4410 = vpop.permute.xlu0 %4409
        %4411 = vrot.lane.b32.xlu0 %v4364, 120
        %v4412 = vpop.permute.xlu0 %4411
        %4415 = vrot.lane.b32.xlu0 %v4363, 119
        %v4416 = vpop.permute.xlu0 %4415
        %4417 = vrot.lane.b32.xlu0 %v4364, 119
        %v4418 = vpop.permute.xlu0 %4417
        %4421 = vrot.lane.b32.xlu0 %v4363, 118
        %v4422 = vpop.permute.xlu0 %4421
        %4423 = vrot.lane.b32.xlu0 %v4364, 118
        %v4424 = vpop.permute.xlu0 %4423
        %4427 = vrot.lane.b32.xlu0 %v4363, 117
        %v4428 = vpop.permute.xlu0 %4427
        %4429 = vrot.lane.b32.xlu0 %v4364, 117
        %v4430 = vpop.permute.xlu0 %4429
        %v4433 = vsel %vm1134, %v4363, %v4368
        %v4434 = vsel %vm1134, %v4364, %v4370
        %v4435 = vsel %vm1137, %v4433, %v4374
        %v4436 = vsel %vm1137, %v4434, %v4376
        %v4437 = vsel %vm1140, %v4435, %v4380
        %v4438 = vsel %vm1140, %v4436, %v4382
        %v4439 = vsel %vm1143, %v4437, %v4386
        %v4440 = vsel %vm1143, %v4438, %v4388
        %v4441 = vsel %vm1146, %v4439, %v4392
        %v4442 = vsel %vm1146, %v4440, %v4394
        %v4443 = vsel %vm1149, %v4441, %v4398
        %v4444 = vsel %vm1149, %v4442, %v4400
        %v4445 = vsel %vm1152, %v4443, %v4404
        %v4446 = vsel %vm1152, %v4444, %v4406
        %v4447 = vsel %vm1155, %v4445, %v4410
        %v4448 = vsel %vm1155, %v4446, %v4412
        %v4449 = vsel %vm1158, %v4447, %v4416
        %v4450 = vsel %vm1158, %v4448, %v4418
        %v4451 = vsel %vm1161, %v4449, %v4422
        %v4452 = vsel %vm1161, %v4450, %v4424
        %v4453 = vsel %vm1164, %v4451, %v4428
        %v4454 = vsel %vm1164, %v4452, %v4430
        %4455 = vrot.lane.b32.xlu0 %v4363, 116
        %v4456 = vpop.permute.xlu0 %4455
        %4457 = vrot.lane.b32.xlu0 %v4364, 116
        %v4458 = vpop.permute.xlu0 %4457
        %v4461 = vsel %vm1134, %v4368, %v4374
        %v4462 = vsel %vm1134, %v4370, %v4376
        %v4463 = vsel %vm1137, %v4461, %v4380
        %v4464 = vsel %vm1137, %v4462, %v4382
        %v4465 = vsel %vm1140, %v4463, %v4386
        %v4466 = vsel %vm1140, %v4464, %v4388
        %v4467 = vsel %vm1143, %v4465, %v4392
        %v4468 = vsel %vm1143, %v4466, %v4394
        %v4469 = vsel %vm1146, %v4467, %v4398
        %v4470 = vsel %vm1146, %v4468, %v4400
        %v4471 = vsel %vm1149, %v4469, %v4404
        %v4472 = vsel %vm1149, %v4470, %v4406
        %v4473 = vsel %vm1152, %v4471, %v4410
        %v4474 = vsel %vm1152, %v4472, %v4412
        %v4475 = vsel %vm1155, %v4473, %v4416
        %v4476 = vsel %vm1155, %v4474, %v4418
        %v4477 = vsel %vm1158, %v4475, %v4422
        %v4478 = vsel %vm1158, %v4476, %v4424
        %v4479 = vsel %vm1161, %v4477, %v4428
        %v4480 = vsel %vm1161, %v4478, %v4430
        %v4481 = vsel %vm1164, %v4479, %v4456
        %v4482 = vsel %vm1164, %v4480, %v4458
        %v4483 = vmax.f32 %v4453, %v4481
        %v4484 = vmax.f32 %v4454, %v4482
        %v4485 = vtanh.pop %v4483
        %v4486 = vtanh.pop %v4484
        %v4487 = vmax.f32 %v4485, 0.0
        %v4488 = vmax.f32 %v4486, 0.0
        %s4489 = sld [smem:[#allocation2 + $0x7d]]
        %v4490 = vstv %s4489
        %v4491 = vmul.f32 %v357, %v4490
        %v4492 = vmul.f32 %v358, %v4490
        %v4493 = vmul.f32 %v359, %v4490
        %v4494 = vadd.f32 %v4491, 0.0
        %v4495 = vadd.f32 %v4492, 0.0
        %v4496 = vadd.f32 %v4493, 0.0
        %s4497 = sld [smem:[#allocation2 + $0x7e]]
        %v4498 = vstv %s4497
        %v4499 = vmul.f32 %v357, %v4498
        %v4500 = vmul.f32 %v358, %v4498
        %v4501 = vmul.f32 %v359, %v4498
        %4505 = vrot.lane.b32.xlu0 %v4499, 127
        %v4506 = vpop.permute.xlu0 %4505
        %4507 = vrot.lane.b32.xlu0 %v4500, 127
        %v4508 = vpop.permute.xlu0 %4507
        %4509 = vrot.lane.b32.xlu0 %v4501, 127
        %v4510 = vpop.permute.xlu0 %4509
        %v4514 = vadd.f32 %v4494, %v4506
        %v4515 = vadd.f32 %v4495, %v4508
        %v4516 = vadd.f32 %v4496, %v4510
        %s4517 = sld [smem:[#allocation2 + $0x7f]]
        %v4518 = vstv %s4517
        %v4519 = vmul.f32 %v357, %v4518
        %v4520 = vmul.f32 %v358, %v4518
        %v4521 = vmul.f32 %v359, %v4518
        %4525 = vrot.lane.b32.xlu0 %v4519, 126
        %v4526 = vpop.permute.xlu0 %4525
        %4527 = vrot.lane.b32.xlu0 %v4520, 126
        %v4528 = vpop.permute.xlu0 %4527
        %4529 = vrot.lane.b32.xlu0 %v4521, 126
        %v4530 = vpop.permute.xlu0 %4529
        %v4534 = vadd.f32 %v4514, %v4526
        %v4535 = vadd.f32 %v4515, %v4528
        %v4536 = vadd.f32 %v4516, %v4530
        %s4537 = sld [smem:[#allocation2 + $0x80]]
        %v4538 = vstv %s4537
        %v4539 = vmul.f32 %v357, %v4538
        %v4540 = vmul.f32 %v358, %v4538
        %v4541 = vmul.f32 %v359, %v4538
        %4545 = vrot.lane.b32.xlu0 %v4539, 125
        %v4546 = vpop.permute.xlu0 %4545
        %4547 = vrot.lane.b32.xlu0 %v4540, 125
        %v4548 = vpop.permute.xlu0 %4547
        %4549 = vrot.lane.b32.xlu0 %v4541, 125
        %v4550 = vpop.permute.xlu0 %4549
        %v4554 = vadd.f32 %v4534, %v4546
        %v4555 = vadd.f32 %v4535, %v4548
        %v4556 = vadd.f32 %v4536, %v4550
        %s4557 = sld [smem:[#allocation2 + $0x81]]
        %v4558 = vstv %s4557
        %v4559 = vmul.f32 %v357, %v4558
        %v4560 = vmul.f32 %v358, %v4558
        %v4561 = vmul.f32 %v359, %v4558
        %4565 = vrot.lane.b32.xlu0 %v4559, 124
        %v4566 = vpop.permute.xlu0 %4565
        %4567 = vrot.lane.b32.xlu0 %v4560, 124
        %v4568 = vpop.permute.xlu0 %4567
        %4569 = vrot.lane.b32.xlu0 %v4561, 124
        %v4570 = vpop.permute.xlu0 %4569
        %v4574 = vadd.f32 %v4554, %v4566
        %v4575 = vadd.f32 %v4555, %v4568
        %v4576 = vadd.f32 %v4556, %v4570
        %s4577 = sld [smem:[#allocation2 + $0x82]]
        %v4578 = vstv %s4577
        %v4579 = vmul.f32 %v357, %v4578
        %v4580 = vmul.f32 %v358, %v4578
        %v4581 = vmul.f32 %v359, %v4578
        %v4582 = vmul.f32 %v360, %v4578
        %v4587 = vrot.slane %v4579, 1
        %v4588 = vrot.slane %v4580, 1
        %v4589 = vsel %vm459, %v4587, %v4588
        %v4590 = vrot.slane %v4581, 1
        %v4591 = vsel %vm459, %v4588, %v4590
        %v4592 = vrot.slane %v4582, 1
        %v4593 = vsel %vm459, %v4590, %v4592
        %v4597 = vadd.f32 %v4574, %v4589
        %v4598 = vadd.f32 %v4575, %v4591
        %v4599 = vadd.f32 %v4576, %v4593
        %s4600 = sld [smem:[#allocation2 + $0x83]]
        %v4601 = vstv %s4600
        %v4602 = vmul.f32 %v357, %v4601
        %v4603 = vmul.f32 %v358, %v4601
        %v4604 = vmul.f32 %v359, %v4601
        %v4605 = vmul.f32 %v360, %v4601
        %v4610 = vrot.slane %v4602, 1
        %v4611 = vrot.slane %v4603, 1
        %v4612 = vsel %vm459, %v4610, %v4611
        %v4613 = vrot.slane %v4604, 1
        %v4614 = vsel %vm459, %v4611, %v4613
        %v4615 = vrot.slane %v4605, 1
        %v4616 = vsel %vm459, %v4613, %v4615
        %4617 = vrot.lane.b32.xlu0 %v4612, 127
        %v4618 = vpop.permute.xlu0 %4617
        %4619 = vrot.lane.b32.xlu0 %v4614, 127
        %v4620 = vpop.permute.xlu0 %4619
        %4621 = vrot.lane.b32.xlu0 %v4616, 127
        %v4622 = vpop.permute.xlu0 %4621
        %v4626 = vadd.f32 %v4597, %v4618
        %v4627 = vadd.f32 %v4598, %v4620
        %v4628 = vadd.f32 %v4599, %v4622
        %s4629 = sld [smem:[#allocation2 + $0x84]]
        %v4630 = vstv %s4629
        %v4631 = vmul.f32 %v357, %v4630
        %v4632 = vmul.f32 %v358, %v4630
        %v4633 = vmul.f32 %v359, %v4630
        %v4634 = vmul.f32 %v360, %v4630
        %v4639 = vrot.slane %v4631, 1
        %v4640 = vrot.slane %v4632, 1
        %v4641 = vsel %vm459, %v4639, %v4640
        %v4642 = vrot.slane %v4633, 1
        %v4643 = vsel %vm459, %v4640, %v4642
        %v4644 = vrot.slane %v4634, 1
        %v4645 = vsel %vm459, %v4642, %v4644
        %4646 = vrot.lane.b32.xlu0 %v4641, 126
        %v4647 = vpop.permute.xlu0 %4646
        %4648 = vrot.lane.b32.xlu0 %v4643, 126
        %v4649 = vpop.permute.xlu0 %4648
        %4650 = vrot.lane.b32.xlu0 %v4645, 126
        %v4651 = vpop.permute.xlu0 %4650
        %v4655 = vadd.f32 %v4626, %v4647
        %v4656 = vadd.f32 %v4627, %v4649
        %v4657 = vadd.f32 %v4628, %v4651
        %s4658 = sld [smem:[#allocation2 + $0x85]]
        %v4659 = vstv %s4658
        %v4660 = vmul.f32 %v357, %v4659
        %v4661 = vmul.f32 %v358, %v4659
        %v4662 = vmul.f32 %v359, %v4659
        %v4663 = vmul.f32 %v360, %v4659
        %v4668 = vrot.slane %v4660, 1
        %v4669 = vrot.slane %v4661, 1
        %v4670 = vsel %vm459, %v4668, %v4669
        %v4671 = vrot.slane %v4662, 1
        %v4672 = vsel %vm459, %v4669, %v4671
        %v4673 = vrot.slane %v4663, 1
        %v4674 = vsel %vm459, %v4671, %v4673
        %4675 = vrot.lane.b32.xlu0 %v4670, 125
        %v4676 = vpop.permute.xlu0 %4675
        %4677 = vrot.lane.b32.xlu0 %v4672, 125
        %v4678 = vpop.permute.xlu0 %4677
        %4679 = vrot.lane.b32.xlu0 %v4674, 125
        %v4680 = vpop.permute.xlu0 %4679
        %v4684 = vadd.f32 %v4655, %v4676
        %v4685 = vadd.f32 %v4656, %v4678
        %v4686 = vadd.f32 %v4657, %v4680
        %s4687 = sld [smem:[#allocation2 + $0x86]]
        %v4688 = vstv %s4687
        %v4689 = vmul.f32 %v357, %v4688
        %v4690 = vmul.f32 %v358, %v4688
        %v4691 = vmul.f32 %v359, %v4688
        %v4692 = vmul.f32 %v360, %v4688
        %v4697 = vrot.slane %v4689, 1
        %v4698 = vrot.slane %v4690, 1
        %v4699 = vsel %vm459, %v4697, %v4698
        %v4700 = vrot.slane %v4691, 1
        %v4701 = vsel %vm459, %v4698, %v4700
        %v4702 = vrot.slane %v4692, 1
        %v4703 = vsel %vm459, %v4700, %v4702
        %4704 = vrot.lane.b32.xlu0 %v4699, 124
        %v4705 = vpop.permute.xlu0 %4704
        %4706 = vrot.lane.b32.xlu0 %v4701, 124
        %v4707 = vpop.permute.xlu0 %4706
        %4708 = vrot.lane.b32.xlu0 %v4703, 124
        %v4709 = vpop.permute.xlu0 %4708
        %v4713 = vadd.f32 %v4684, %v4705
        %v4714 = vadd.f32 %v4685, %v4707
        %v4715 = vadd.f32 %v4686, %v4709
        %s4716 = sld [smem:[#allocation2 + $0x87]]
        %v4717 = vstv %s4716
        %v4718 = vmul.f32 %v357, %v4717
        %v4719 = vmul.f32 %v358, %v4717
        %v4720 = vmul.f32 %v359, %v4717
        %v4721 = vmul.f32 %v360, %v4717
        %v4726 = vrot.slane %v4718, 2
        %v4727 = vrot.slane %v4719, 2
        %v4728 = vsel %vm599, %v4726, %v4727
        %v4729 = vrot.slane %v4720, 2
        %v4730 = vsel %vm599, %v4727, %v4729
        %v4731 = vrot.slane %v4721, 2
        %v4732 = vsel %vm599, %v4729, %v4731
        %v4736 = vadd.f32 %v4713, %v4728
        %v4737 = vadd.f32 %v4714, %v4730
        %v4738 = vadd.f32 %v4715, %v4732
        %s4739 = sld [smem:[#allocation2 + $0x88]]
        %v4740 = vstv %s4739
        %v4741 = vmul.f32 %v357, %v4740
        %v4742 = vmul.f32 %v358, %v4740
        %v4743 = vmul.f32 %v359, %v4740
        %v4744 = vmul.f32 %v360, %v4740
        %v4749 = vrot.slane %v4741, 2
        %v4750 = vrot.slane %v4742, 2
        %v4751 = vsel %vm599, %v4749, %v4750
        %v4752 = vrot.slane %v4743, 2
        %v4753 = vsel %vm599, %v4750, %v4752
        %v4754 = vrot.slane %v4744, 2
        %v4755 = vsel %vm599, %v4752, %v4754
        %4756 = vrot.lane.b32.xlu0 %v4751, 127
        %v4757 = vpop.permute.xlu0 %4756
        %4758 = vrot.lane.b32.xlu0 %v4753, 127
        %v4759 = vpop.permute.xlu0 %4758
        %4760 = vrot.lane.b32.xlu0 %v4755, 127
        %v4761 = vpop.permute.xlu0 %4760
        %v4765 = vadd.f32 %v4736, %v4757
        %v4766 = vadd.f32 %v4737, %v4759
        %v4767 = vadd.f32 %v4738, %v4761
        %s4768 = sld [smem:[#allocation2 + $0x89]]
        %v4769 = vstv %s4768
        %v4770 = vmul.f32 %v357, %v4769
        %v4771 = vmul.f32 %v358, %v4769
        %v4772 = vmul.f32 %v359, %v4769
        %v4773 = vmul.f32 %v360, %v4769
        %v4778 = vrot.slane %v4770, 2
        %v4779 = vrot.slane %v4771, 2
        %v4780 = vsel %vm599, %v4778, %v4779
        %v4781 = vrot.slane %v4772, 2
        %v4782 = vsel %vm599, %v4779, %v4781
        %v4783 = vrot.slane %v4773, 2
        %v4784 = vsel %vm599, %v4781, %v4783
        %4785 = vrot.lane.b32.xlu0 %v4780, 126
        %v4786 = vpop.permute.xlu0 %4785
        %4787 = vrot.lane.b32.xlu0 %v4782, 126
        %v4788 = vpop.permute.xlu0 %4787
        %4789 = vrot.lane.b32.xlu0 %v4784, 126
        %v4790 = vpop.permute.xlu0 %4789
        %v4794 = vadd.f32 %v4765, %v4786
        %v4795 = vadd.f32 %v4766, %v4788
        %v4796 = vadd.f32 %v4767, %v4790
        %s4797 = sld [smem:[#allocation2 + $0x8a]]
        %v4798 = vstv %s4797
        %v4799 = vmul.f32 %v357, %v4798
        %v4800 = vmul.f32 %v358, %v4798
        %v4801 = vmul.f32 %v359, %v4798
        %v4802 = vmul.f32 %v360, %v4798
        %v4807 = vrot.slane %v4799, 2
        %v4808 = vrot.slane %v4800, 2
        %v4809 = vsel %vm599, %v4807, %v4808
        %v4810 = vrot.slane %v4801, 2
        %v4811 = vsel %vm599, %v4808, %v4810
        %v4812 = vrot.slane %v4802, 2
        %v4813 = vsel %vm599, %v4810, %v4812
        %4814 = vrot.lane.b32.xlu0 %v4809, 125
        %v4815 = vpop.permute.xlu0 %4814
        %4816 = vrot.lane.b32.xlu0 %v4811, 125
        %v4817 = vpop.permute.xlu0 %4816
        %4818 = vrot.lane.b32.xlu0 %v4813, 125
        %v4819 = vpop.permute.xlu0 %4818
        %v4823 = vadd.f32 %v4794, %v4815
        %v4824 = vadd.f32 %v4795, %v4817
        %v4825 = vadd.f32 %v4796, %v4819
        %s4826 = sld [smem:[#allocation2 + $0x8b]]
        %v4827 = vstv %s4826
        %v4828 = vmul.f32 %v357, %v4827
        %v4829 = vmul.f32 %v358, %v4827
        %v4830 = vmul.f32 %v359, %v4827
        %v4831 = vmul.f32 %v360, %v4827
        %v4836 = vrot.slane %v4828, 2
        %v4837 = vrot.slane %v4829, 2
        %v4838 = vsel %vm599, %v4836, %v4837
        %v4839 = vrot.slane %v4830, 2
        %v4840 = vsel %vm599, %v4837, %v4839
        %v4841 = vrot.slane %v4831, 2
        %v4842 = vsel %vm599, %v4839, %v4841
        %4843 = vrot.lane.b32.xlu0 %v4838, 124
        %v4844 = vpop.permute.xlu0 %4843
        %4845 = vrot.lane.b32.xlu0 %v4840, 124
        %v4846 = vpop.permute.xlu0 %4845
        %4847 = vrot.lane.b32.xlu0 %v4842, 124
        %v4848 = vpop.permute.xlu0 %4847
        %v4852 = vadd.f32 %v4823, %v4844
        %v4853 = vadd.f32 %v4824, %v4846
        %v4854 = vadd.f32 %v4825, %v4848
        %s4855 = sld [smem:[#allocation2 + $0x8c]]
        %v4856 = vstv %s4855
        %v4857 = vmul.f32 %v357, %v4856
        %v4858 = vmul.f32 %v358, %v4856
        %v4859 = vmul.f32 %v359, %v4856
        %v4860 = vmul.f32 %v360, %v4856
        %v4865 = vrot.slane %v4857, 3
        %v4866 = vrot.slane %v4858, 3
        %v4867 = vsel %vm739, %v4865, %v4866
        %v4868 = vrot.slane %v4859, 3
        %v4869 = vsel %vm739, %v4866, %v4868
        %v4870 = vrot.slane %v4860, 3
        %v4871 = vsel %vm739, %v4868, %v4870
        %v4875 = vadd.f32 %v4852, %v4867
        %v4876 = vadd.f32 %v4853, %v4869
        %v4877 = vadd.f32 %v4854, %v4871
        %s4878 = sld [smem:[#allocation2 + $0x8d]]
        %v4879 = vstv %s4878
        %v4880 = vmul.f32 %v357, %v4879
        %v4881 = vmul.f32 %v358, %v4879
        %v4882 = vmul.f32 %v359, %v4879
        %v4883 = vmul.f32 %v360, %v4879
        %v4888 = vrot.slane %v4880, 3
        %v4889 = vrot.slane %v4881, 3
        %v4890 = vsel %vm739, %v4888, %v4889
        %v4891 = vrot.slane %v4882, 3
        %v4892 = vsel %vm739, %v4889, %v4891
        %v4893 = vrot.slane %v4883, 3
        %v4894 = vsel %vm739, %v4891, %v4893
        %4895 = vrot.lane.b32.xlu0 %v4890, 127
        %v4896 = vpop.permute.xlu0 %4895
        %4897 = vrot.lane.b32.xlu0 %v4892, 127
        %v4898 = vpop.permute.xlu0 %4897
        %4899 = vrot.lane.b32.xlu0 %v4894, 127
        %v4900 = vpop.permute.xlu0 %4899
        %v4904 = vadd.f32 %v4875, %v4896
        %v4905 = vadd.f32 %v4876, %v4898
        %v4906 = vadd.f32 %v4877, %v4900
        %s4907 = sld [smem:[#allocation2 + $0x8e]]
        %v4908 = vstv %s4907
        %v4909 = vmul.f32 %v357, %v4908
        %v4910 = vmul.f32 %v358, %v4908
        %v4911 = vmul.f32 %v359, %v4908
        %v4912 = vmul.f32 %v360, %v4908
        %v4917 = vrot.slane %v4909, 3
        %v4918 = vrot.slane %v4910, 3
        %v4919 = vsel %vm739, %v4917, %v4918
        %v4920 = vrot.slane %v4911, 3
        %v4921 = vsel %vm739, %v4918, %v4920
        %v4922 = vrot.slane %v4912, 3
        %v4923 = vsel %vm739, %v4920, %v4922
        %4924 = vrot.lane.b32.xlu0 %v4919, 126
        %v4925 = vpop.permute.xlu0 %4924
        %4926 = vrot.lane.b32.xlu0 %v4921, 126
        %v4927 = vpop.permute.xlu0 %4926
        %4928 = vrot.lane.b32.xlu0 %v4923, 126
        %v4929 = vpop.permute.xlu0 %4928
        %v4933 = vadd.f32 %v4904, %v4925
        %v4934 = vadd.f32 %v4905, %v4927
        %v4935 = vadd.f32 %v4906, %v4929
        %s4936 = sld [smem:[#allocation2 + $0x8f]]
        %v4937 = vstv %s4936
        %v4938 = vmul.f32 %v357, %v4937
        %v4939 = vmul.f32 %v358, %v4937
        %v4940 = vmul.f32 %v359, %v4937
        %v4941 = vmul.f32 %v360, %v4937
        %v4946 = vrot.slane %v4938, 3
        %v4947 = vrot.slane %v4939, 3
        %v4948 = vsel %vm739, %v4946, %v4947
        %v4949 = vrot.slane %v4940, 3
        %v4950 = vsel %vm739, %v4947, %v4949
        %v4951 = vrot.slane %v4941, 3
        %v4952 = vsel %vm739, %v4949, %v4951
        %4953 = vrot.lane.b32.xlu0 %v4948, 125
        %v4954 = vpop.permute.xlu0 %4953
        %4955 = vrot.lane.b32.xlu0 %v4950, 125
        %v4956 = vpop.permute.xlu0 %4955
        %4957 = vrot.lane.b32.xlu0 %v4952, 125
        %v4958 = vpop.permute.xlu0 %4957
        %v4962 = vadd.f32 %v4933, %v4954
        %v4963 = vadd.f32 %v4934, %v4956
        %v4964 = vadd.f32 %v4935, %v4958
        %s4965 = sld [smem:[#allocation2 + $0x90]]
        %v4966 = vstv %s4965
        %v4967 = vmul.f32 %v357, %v4966
        %v4968 = vmul.f32 %v358, %v4966
        %v4969 = vmul.f32 %v359, %v4966
        %v4970 = vmul.f32 %v360, %v4966
        %v4975 = vrot.slane %v4967, 3
        %v4976 = vrot.slane %v4968, 3
        %v4977 = vsel %vm739, %v4975, %v4976
        %v4978 = vrot.slane %v4969, 3
        %v4979 = vsel %vm739, %v4976, %v4978
        %v4980 = vrot.slane %v4970, 3
        %v4981 = vsel %vm739, %v4978, %v4980
        %4982 = vrot.lane.b32.xlu0 %v4977, 124
        %v4983 = vpop.permute.xlu0 %4982
        %4984 = vrot.lane.b32.xlu0 %v4979, 124
        %v4985 = vpop.permute.xlu0 %4984
        %4986 = vrot.lane.b32.xlu0 %v4981, 124
        %v4987 = vpop.permute.xlu0 %4986
        %v4991 = vadd.f32 %v4962, %v4983
        %v4992 = vadd.f32 %v4963, %v4985
        %v4993 = vadd.f32 %v4964, %v4987
        %s4994 = sld [smem:[#allocation2 + $0x91]]
        %v4995 = vstv %s4994
        %v4996 = vmul.f32 %v357, %v4995
        %v4997 = vmul.f32 %v358, %v4995
        %v4998 = vmul.f32 %v359, %v4995
        %v4999 = vmul.f32 %v360, %v4995
        %v5004 = vrot.slane %v4996, 4
        %v5005 = vrot.slane %v4997, 4
        %v5006 = vsel %vm879, %v5004, %v5005
        %v5007 = vrot.slane %v4998, 4
        %v5008 = vsel %vm879, %v5005, %v5007
        %v5009 = vrot.slane %v4999, 4
        %v5010 = vsel %vm879, %v5007, %v5009
        %v5014 = vadd.f32 %v4991, %v5006
        %v5015 = vadd.f32 %v4992, %v5008
        %v5016 = vadd.f32 %v4993, %v5010
        %s5017 = sld [smem:[#allocation2 + $0x92]]
        %v5018 = vstv %s5017
        %v5019 = vmul.f32 %v357, %v5018
        %v5020 = vmul.f32 %v358, %v5018
        %v5021 = vmul.f32 %v359, %v5018
        %v5022 = vmul.f32 %v360, %v5018
        %v5027 = vrot.slane %v5019, 4
        %v5028 = vrot.slane %v5020, 4
        %v5029 = vsel %vm879, %v5027, %v5028
        %v5030 = vrot.slane %v5021, 4
        %v5031 = vsel %vm879, %v5028, %v5030
        %v5032 = vrot.slane %v5022, 4
        %v5033 = vsel %vm879, %v5030, %v5032
        %5034 = vrot.lane.b32.xlu0 %v5029, 127
        %v5035 = vpop.permute.xlu0 %5034
        %5036 = vrot.lane.b32.xlu0 %v5031, 127
        %v5037 = vpop.permute.xlu0 %5036
        %5038 = vrot.lane.b32.xlu0 %v5033, 127
        %v5039 = vpop.permute.xlu0 %5038
        %v5043 = vadd.f32 %v5014, %v5035
        %v5044 = vadd.f32 %v5015, %v5037
        %v5045 = vadd.f32 %v5016, %v5039
        %s5046 = sld [smem:[#allocation2 + $0x93]]
        %v5047 = vstv %s5046
        %v5048 = vmul.f32 %v357, %v5047
        %v5049 = vmul.f32 %v358, %v5047
        %v5050 = vmul.f32 %v359, %v5047
        %v5051 = vmul.f32 %v360, %v5047
        %v5056 = vrot.slane %v5048, 4
        %v5057 = vrot.slane %v5049, 4
        %v5058 = vsel %vm879, %v5056, %v5057
        %v5059 = vrot.slane %v5050, 4
        %v5060 = vsel %vm879, %v5057, %v5059
        %v5061 = vrot.slane %v5051, 4
        %v5062 = vsel %vm879, %v5059, %v5061
        %5063 = vrot.lane.b32.xlu0 %v5058, 126
        %v5064 = vpop.permute.xlu0 %5063
        %5065 = vrot.lane.b32.xlu0 %v5060, 126
        %v5066 = vpop.permute.xlu0 %5065
        %5067 = vrot.lane.b32.xlu0 %v5062, 126
        %v5068 = vpop.permute.xlu0 %5067
        %v5072 = vadd.f32 %v5043, %v5064
        %v5073 = vadd.f32 %v5044, %v5066
        %v5074 = vadd.f32 %v5045, %v5068
        %s5075 = sld [smem:[#allocation2 + $0x94]]
        %v5076 = vstv %s5075
        %v5077 = vmul.f32 %v357, %v5076
        %v5078 = vmul.f32 %v358, %v5076
        %v5079 = vmul.f32 %v359, %v5076
        %v5080 = vmul.f32 %v360, %v5076
        %v5085 = vrot.slane %v5077, 4
        %v5086 = vrot.slane %v5078, 4
        %v5087 = vsel %vm879, %v5085, %v5086
        %v5088 = vrot.slane %v5079, 4
        %v5089 = vsel %vm879, %v5086, %v5088
        %v5090 = vrot.slane %v5080, 4
        %v5091 = vsel %vm879, %v5088, %v5090
        %5092 = vrot.lane.b32.xlu0 %v5087, 125
        %v5093 = vpop.permute.xlu0 %5092
        %5094 = vrot.lane.b32.xlu0 %v5089, 125
        %v5095 = vpop.permute.xlu0 %5094
        %5096 = vrot.lane.b32.xlu0 %v5091, 125
        %v5097 = vpop.permute.xlu0 %5096
        %v5101 = vadd.f32 %v5072, %v5093
        %v5102 = vadd.f32 %v5073, %v5095
        %v5103 = vadd.f32 %v5074, %v5097
        %s5104 = sld [smem:[#allocation2 + $0x95]]
        %v5105 = vstv %s5104
        %v5106 = vmul.f32 %v357, %v5105
        %v5107 = vmul.f32 %v358, %v5105
        %v5108 = vmul.f32 %v359, %v5105
        %v5109 = vmul.f32 %v360, %v5105
        %v5114 = vrot.slane %v5106, 4
        %v5115 = vrot.slane %v5107, 4
        %v5116 = vsel %vm879, %v5114, %v5115
        %v5117 = vrot.slane %v5108, 4
        %v5118 = vsel %vm879, %v5115, %v5117
        %v5119 = vrot.slane %v5109, 4
        %v5120 = vsel %vm879, %v5117, %v5119
        %5121 = vrot.lane.b32.xlu0 %v5116, 124
        %v5122 = vpop.permute.xlu0 %5121
        %5123 = vrot.lane.b32.xlu0 %v5118, 124
        %v5124 = vpop.permute.xlu0 %5123
        %5125 = vrot.lane.b32.xlu0 %v5120, 124
        %v5126 = vpop.permute.xlu0 %5125
        %v5130 = vadd.f32 %v5101, %v5122
        %v5131 = vadd.f32 %v5102, %v5124
        %v5132 = vadd.f32 %v5103, %v5126
        %s5133 = sld [smem:[#allocation5 + $0x5]]
        %v5134 = vstv %s5133
        %v5135 = vadd.f32 %v5130, %v5134
        %v5136 = vadd.f32 %v5131, %v5134
        %v5137 = vadd.f32 %v5132, %v5134
        %v5139 = vrot.slane %v5135, 1
        %v5141 = vrot.slane %v5135, 2
        %v5143 = vrot.slane %v5135, 3
        %v5146 = vrot.slane %v5136, 4
        %v5148 = vrot.slane %v5136, 5
        %v5150 = vrot.slane %v5136, 6
        %v5152 = vrot.slane %v5136, 7
        %v5155 = vrot.slane %v5137, 1
        %v5157 = vrot.slane %v5137, 2
        %v5159 = vrot.slane %v5137, 3
        %v5161 = vsel %vm1037, %v5135, %v5139
        %v5162 = vsel %vm1039, %v5161, %v5141
        %v5163 = vsel %vm1041, %v5162, %v5143
        %v5164 = vsel %vm879, %v5163, %v5146
        %v5165 = vsel %vm739, %v5164, %v5148
        %v5166 = vsel %vm599, %v5165, %v5150
        %v5167 = vsel %vm459, %v5166, %v5152
        %v5168 = vsel %vm1037, %v5137, %v5155
        %v5169 = vsel %vm1039, %v5168, %v5157
        %v5170 = vsel %vm1041, %v5169, %v5159
        %v5171 = vrot.slane %v5135, 4
        %v5173 = vrot.slane %v5137, 4
        %v5175 = vsel %vm1037, %v5139, %v5141
        %v5176 = vsel %vm1039, %v5175, %v5143
        %v5177 = vsel %vm1041, %v5176, %v5171
        %v5178 = vsel %vm879, %v5177, %v5148
        %v5179 = vsel %vm739, %v5178, %v5150
        %v5180 = vsel %vm599, %v5179, %v5152
        %v5181 = vsel %vm459, %v5180, %v5136
        %v5182 = vsel %vm1037, %v5155, %v5157
        %v5183 = vsel %vm1039, %v5182, %v5159
        %v5184 = vsel %vm1041, %v5183, %v5173
        %v5185 = vmax.f32 %v5167, %v5181
        %v5186 = vmax.f32 %v5170, %v5184
        %5189 = vrot.lane.b32.xlu0 %v5185, 127
        %v5190 = vpop.permute.xlu0 %5189
        %5191 = vrot.lane.b32.xlu0 %v5186, 127
        %v5192 = vpop.permute.xlu0 %5191
        %5195 = vrot.lane.b32.xlu0 %v5185, 126
        %v5196 = vpop.permute.xlu0 %5195
        %5197 = vrot.lane.b32.xlu0 %v5186, 126
        %v5198 = vpop.permute.xlu0 %5197
        %5201 = vrot.lane.b32.xlu0 %v5185, 125
        %v5202 = vpop.permute.xlu0 %5201
        %5203 = vrot.lane.b32.xlu0 %v5186, 125
        %v5204 = vpop.permute.xlu0 %5203
        %5207 = vrot.lane.b32.xlu0 %v5185, 124
        %v5208 = vpop.permute.xlu0 %5207
        %5209 = vrot.lane.b32.xlu0 %v5186, 124
        %v5210 = vpop.permute.xlu0 %5209
        %5213 = vrot.lane.b32.xlu0 %v5185, 123
        %v5214 = vpop.permute.xlu0 %5213
        %5215 = vrot.lane.b32.xlu0 %v5186, 123
        %v5216 = vpop.permute.xlu0 %5215
        %5219 = vrot.lane.b32.xlu0 %v5185, 122
        %v5220 = vpop.permute.xlu0 %5219
        %5221 = vrot.lane.b32.xlu0 %v5186, 122
        %v5222 = vpop.permute.xlu0 %5221
        %5225 = vrot.lane.b32.xlu0 %v5185, 121
        %v5226 = vpop.permute.xlu0 %5225
        %5227 = vrot.lane.b32.xlu0 %v5186, 121
        %v5228 = vpop.permute.xlu0 %5227
        %5231 = vrot.lane.b32.xlu0 %v5185, 120
        %v5232 = vpop.permute.xlu0 %5231
        %5233 = vrot.lane.b32.xlu0 %v5186, 120
        %v5234 = vpop.permute.xlu0 %5233
        %5237 = vrot.lane.b32.xlu0 %v5185, 119
        %v5238 = vpop.permute.xlu0 %5237
        %5239 = vrot.lane.b32.xlu0 %v5186, 119
        %v5240 = vpop.permute.xlu0 %5239
        %5243 = vrot.lane.b32.xlu0 %v5185, 118
        %v5244 = vpop.permute.xlu0 %5243
        %5245 = vrot.lane.b32.xlu0 %v5186, 118
        %v5246 = vpop.permute.xlu0 %5245
        %5249 = vrot.lane.b32.xlu0 %v5185, 117
        %v5250 = vpop.permute.xlu0 %5249
        %5251 = vrot.lane.b32.xlu0 %v5186, 117
        %v5252 = vpop.permute.xlu0 %5251
        %v5255 = vsel %vm1134, %v5185, %v5190
        %v5256 = vsel %vm1134, %v5186, %v5192
        %v5257 = vsel %vm1137, %v5255, %v5196
        %v5258 = vsel %vm1137, %v5256, %v5198
        %v5259 = vsel %vm1140, %v5257, %v5202
        %v5260 = vsel %vm1140, %v5258, %v5204
        %v5261 = vsel %vm1143, %v5259, %v5208
        %v5262 = vsel %vm1143, %v5260, %v5210
        %v5263 = vsel %vm1146, %v5261, %v5214
        %v5264 = vsel %vm1146, %v5262, %v5216
        %v5265 = vsel %vm1149, %v5263, %v5220
        %v5266 = vsel %vm1149, %v5264, %v5222
        %v5267 = vsel %vm1152, %v5265, %v5226
        %v5268 = vsel %vm1152, %v5266, %v5228
        %v5269 = vsel %vm1155, %v5267, %v5232
        %v5270 = vsel %vm1155, %v5268, %v5234
        %v5271 = vsel %vm1158, %v5269, %v5238
        %v5272 = vsel %vm1158, %v5270, %v5240
        %v5273 = vsel %vm1161, %v5271, %v5244
        %v5274 = vsel %vm1161, %v5272, %v5246
        %v5275 = vsel %vm1164, %v5273, %v5250
        %v5276 = vsel %vm1164, %v5274, %v5252
        %5277 = vrot.lane.b32.xlu0 %v5185, 116
        %v5278 = vpop.permute.xlu0 %5277
        %5279 = vrot.lane.b32.xlu0 %v5186, 116
        %v5280 = vpop.permute.xlu0 %5279
        %v5283 = vsel %vm1134, %v5190, %v5196
        %v5284 = vsel %vm1134, %v5192, %v5198
        %v5285 = vsel %vm1137, %v5283, %v5202
        %v5286 = vsel %vm1137, %v5284, %v5204
        %v5287 = vsel %vm1140, %v5285, %v5208
        %v5288 = vsel %vm1140, %v5286, %v5210
        %v5289 = vsel %vm1143, %v5287, %v5214
        %v5290 = vsel %vm1143, %v5288, %v5216
        %v5291 = vsel %vm1146, %v5289, %v5220
        %v5292 = vsel %vm1146, %v5290, %v5222
        %v5293 = vsel %vm1149, %v5291, %v5226
        %v5294 = vsel %vm1149, %v5292, %v5228
        %v5295 = vsel %vm1152, %v5293, %v5232
        %v5296 = vsel %vm1152, %v5294, %v5234
        %v5297 = vsel %vm1155, %v5295, %v5238
        %v5298 = vsel %vm1155, %v5296, %v5240
        %v5299 = vsel %vm1158, %v5297, %v5244
        %v5300 = vsel %vm1158, %v5298, %v5246
        %v5301 = vsel %vm1161, %v5299, %v5250
        %v5302 = vsel %vm1161, %v5300, %v5252
        %v5303 = vsel %vm1164, %v5301, %v5278
        %v5304 = vsel %vm1164, %v5302, %v5280
        %v5305 = vmax.f32 %v5275, %v5303
        %v5306 = vmax.f32 %v5276, %v5304
        %v5307 = vtanh.pop %v5305
        %v5308 = vtanh.pop %v5306
        %v5309 = vmax.f32 %v5307, 0.0
        %v5310 = vmax.f32 %v5308, 0.0
        %v5311 = vld [vmem:[%s3] sm:$0xff]
        %v5312 = vld [vmem:[%s3 + $0x8] sm:$0x3f]
        %v5313 = vld [vmem:[%s4] sm:$0xff]
        %v5314 = vld [vmem:[%s4 + $0x8] sm:$0x3f]
        %v5316 = vrot.slane %v2021, 7
        %v5319 = vrot.slane %v2843, 6
        %v5322 = vrot.slane %v3665, 5
        %v5325 = vrot.slane %v4487, 4
        %v5328 = vrot.slane %v5309, 3
        %v5331 = vrot.slane %v1199, 3
        %v5333 = vrot.slane %v2021, 2
        %v5335 = vrot.slane %v2843, 1
        %v5337 = vrot.slane %v4487, 7
        %v5339 = vrot.slane %v5309, 6
        %v5341 = vrot.slane %v1199, 6
        %v5343 = vrot.slane %v2021, 5
        %v5345 = vrot.slane %v2843, 4
        %v5347 = vrot.slane %v3665, 3
        %v5349 = vsel %vm1037, %v1199, %v5316
        %v5350 = vsel %vm1039, %v5349, %v5319
        %v5351 = vsel %vm1041, %v5350, %v5322
        %v5352 = vsel %vm879, %v5351, %v5325
        %v5353 = vsel %vm739, %v5352, %v5328
        %v5354 = vsel %vm599, %v5353, %v5331
        %v5355 = vsel %vm459, %v5354, %v5333
        %v5356 = vsel %vm1037, %v5335, %v3665
        %v5357 = vsel %vm1039, %v5356, %v5337
        %v5358 = vsel %vm1041, %v5357, %v5339
        %v5359 = vsel %vm879, %v5358, %v5341
        %v5360 = vsel %vm739, %v5359, %v5343
        %v5361 = vsel %vm599, %v5360, %v5345
        %v5362 = vsel %vm459, %v5361, %v5347
        %v5363 = vrot.slane %v4487, 2
        %v5365 = vrot.slane %v5309, 1
        %v5367 = vsel %vm1037, %v5363, %v5365
        %v5371 = vrot.slane %v5355, 6
        %v5372 = vrot.slane %v5362, 6
        %v5373 = vsel %vm1039, %v5371, %v5372
        %v5374 = vrot.slane %v5367, 6
        %v5375 = vsel %vm1039, %v5372, %v5374
        %5376 = vrot.lane.b32.xlu0 %v5371, 127
        %v5377 = vpop.permute.xlu0 %5376
        %5378 = vrot.lane.b32.xlu0 %v5373, 127
        %v5379 = vpop.permute.xlu0 %5378
        %5380 = vrot.lane.b32.xlu0 %v5375, 127
        %v5381 = vpop.permute.xlu0 %5380
        %v5385 = vrot.slane %v5355, 4
        %v5386 = vrot.slane %v5362, 4
        %v5387 = vsel %vm879, %v5385, %v5386
        %v5388 = vrot.slane %v5367, 4
        %v5389 = vsel %vm879, %v5386, %v5388
        %5390 = vrot.lane.b32.xlu0 %v5385, 126
        %v5391 = vpop.permute.xlu0 %5390
        %5392 = vrot.lane.b32.xlu0 %v5387, 126
        %v5393 = vpop.permute.xlu0 %5392
        %5394 = vrot.lane.b32.xlu0 %v5389, 126
        %v5395 = vpop.permute.xlu0 %5394
        %v5398 = vsel %vm1039, %v5367, %v5377
        %v5399 = vsel %vm879, %v5381, %v5391
        %5401 = vset.pattern.permute.xlu0 0
        %5402 = vperm.xlu0 %5401, %v5313
        %v5403 = vpop.permute.xlu0 %5402
        %5406 = vset.pattern.permute.xlu0 0
        %5407 = vperm.xlu0 %5406, %v5314
        %v5408 = vpop.permute.xlu0 %5407
        %vm5410 = vcmask 441344
        %v5412 = vsel %vm5410, %v5311, 0
        %v5415 = vsel %vm5410, %v5312, 0
        %v5417 = vsel %vm599, %v5395, 0
        %5419 = vmatprep.subr.mxu0 0.0
        %5420 = vmatpush1.msra.mxu0 %v5355
        %5421 = vmatprep.subr.mxu0 0.0
        %5422 = vmatpush1.msra.mxu0 %v5362
        %5423 = vmatprep.subr.mxu0 0.0
        %5424 = vmatpush1.msra.mxu0 %v5398
        %5425 = vmatprep.subr.mxu0 0.0
        %5426 = vmatpush1.msra.mxu0 %v5379
        %5427 = vmatprep.subr.mxu0 0.0
        %5428 = vmatpush1.msra.mxu0 %v5399
        %5429 = vmatprep.subr.mxu0 0.0
        %5430 = vmatpush1.msra.mxu0 %v5393
        %5431 = vmatprep.subr.mxu0 0.0
        %5432 = vmatpush1.msra.mxu0 %v5417
        %5433 = vmatprep.subr.mxu0 0.0
        %5434 = vmatpush1.msra.mxu0 0.0
        %5435 = vmatprep.subr.mxu0 0.0
        %5436 = vmatpush1.msra.mxu0 0.0
        %5437 = vmatprep.subr.mxu0 0.0
        %5438 = vmatpush1.msra.mxu0 0.0
        %5439 = vmatprep.subr.mxu0 0.0
        %5440 = vmatpush1.msra.mxu0 0.0
        %5441 = vmatprep.subr.mxu0 0.0
        %5442 = vmatpush1.msra.mxu0 0.0
        %5443 = vmatprep.subr.mxu0 0.0
        %5444 = vmatpush1.msra.mxu0 0.0
        %5445 = vmatprep.subr.mxu0 0.0
        %5446 = vmatpush1.msra.mxu0 0.0
        %5447 = vmatprep.subr.mxu0 0.0
        %5448 = vmatpush1.msra.mxu0 0.0
        %5449 = vmatprep.subr.mxu0 0.0
        %5450 = vmatpush1.msra.mxu0 0.0
        %5451 = vmatprep.subr.mxu0 0.0
        %5452 = vmatpush1.msra.mxu0 0.0
        %5453 = vmatprep.subr.mxu0 0.0
        %5454 = vmatpush1.msra.mxu0 0.0
        %5455 = vmatprep.subr.mxu0 0.0
        %5456 = vmatpush1.msra.mxu0 0.0
        %5457 = vmatprep.subr.mxu0 0.0
        %5458 = vmatpush1.msra.mxu0 0.0
        %5459 = vmatprep.subr.mxu0 0.0
        %5460 = vmatpush1.msra.mxu0 0.0
        %5461 = vmatprep.subr.mxu0 0.0
        %5462 = vmatpush1.msra.mxu0 0.0
        %5463 = vmatprep.subr.mxu0 0.0
        %5464 = vmatpush1.msra.mxu0 0.0
        %5465 = vmatprep.subr.mxu0 0.0
        %5466 = vmatpush1.msra.mxu0 0.0
        %5467 = vmatprep.subr.mxu0 0.0
        %5468 = vmatpush1.msra.mxu0 0.0
        %5469 = vmatprep.subr.mxu0 0.0
        %5470 = vmatpush1.msra.mxu0 0.0
        %5471 = vmatprep.subr.mxu0 0.0
        %5472 = vmatpush1.msra.mxu0 0.0
        %5473 = vmatprep.subr.mxu0 0.0
        %5474 = vmatpush1.msra.mxu0 0.0
        %5475 = vmatprep.subr.mxu0 0.0
        %5476 = vmatpush1.msra.mxu0 0.0
        %5477 = vmatprep.subr.mxu0 0.0
        %5478 = vmatpush1.msra.mxu0 0.0
        %5479 = vmatprep.subr.mxu0 0.0
        %5480 = vmatpush1.msra.mxu0 0.0
        %5481 = vmatprep.subr.mxu0 0.0
        %5482 = vmatpush1.msra.mxu0 0.0
        %5483 = vmatprep.mubr.f32.mxu0 0.0
        %5484 = vmatmul.mubr.f32.gmra.mrb[0].mxu0 %v5412
        %v5485 = vpop.f32.mrb[0].mxu0
        %v5486 = vadd.f32 %v5403, %v5485
        %v5487 = vpop.f32.mrb[0].mxu0
        %5488 = vmatprep.mubr.f32.mxu0 0.0
        %5489 = vmatmul.mubr.f32.gmra.mrb[0].mxu0 %v5415
        %v5490 = vpop.f32.mrb[0].mxu0
        %v5491 = vadd.f32 %v5408, %v5490
        %v5492 = vpop.f32.mrb[0].mxu0
        %5493 = vdwg.mxu0
        %v5494 = vrot.slane %v1199, 1
        %v5496 = vrot.slane %v2843, 7
        %v5498 = vrot.slane %v3665, 6
        %v5500 = vrot.slane %v4487, 5
        %v5502 = vrot.slane %v5309, 4
        %v5504 = vrot.slane %v1199, 4
        %v5506 = vrot.slane %v2021, 3
        %v5508 = vrot.slane %v2843, 2
        %v5510 = vrot.slane %v3665, 1
        %v5512 = vrot.slane %v5309, 7
        %v5514 = vrot.slane %v1199, 7
        %v5516 = vrot.slane %v2021, 6
        %v5518 = vrot.slane %v2843, 5
        %v5520 = vrot.slane %v3665, 4
        %v5522 = vsel %vm1037, %v5494, %v2021
        %v5523 = vsel %vm1039, %v5522, %v5496
        %v5524 = vsel %vm1041, %v5523, %v5498
        %v5525 = vsel %vm879, %v5524, %v5500
        %v5526 = vsel %vm739, %v5525, %v5502
        %v5527 = vsel %vm599, %v5526, %v5504
        %v5528 = vsel %vm459, %v5527, %v5506
        %v5529 = vsel %vm1037, %v5508, %v5510
        %v5530 = vsel %vm1039, %v5529, %v4487
        %v5531 = vsel %vm1041, %v5530, %v5512
        %v5532 = vsel %vm879, %v5531, %v5514
        %v5533 = vsel %vm739, %v5532, %v5516
        %v5534 = vsel %vm599, %v5533, %v5518
        %v5535 = vsel %vm459, %v5534, %v5520
        %v5536 = vrot.slane %v4487, 3
        %v5538 = vrot.slane %v5309, 2
        %v5540 = vsel %vm1037, %v5536, %v5538
        %v5544 = vrot.slane %v5528, 6
        %v5545 = vrot.slane %v5535, 6
        %v5546 = vsel %vm1039, %v5544, %v5545
        %v5547 = vrot.slane %v5540, 6
        %v5548 = vsel %vm1039, %v5545, %v5547
        %5549 = vrot.lane.b32.xlu0 %v5544, 127
        %v5550 = vpop.permute.xlu0 %5549
        %5551 = vrot.lane.b32.xlu0 %v5546, 127
        %v5552 = vpop.permute.xlu0 %5551
        %5553 = vrot.lane.b32.xlu0 %v5548, 127
        %v5554 = vpop.permute.xlu0 %5553
        %v5558 = vrot.slane %v5528, 4
        %v5559 = vrot.slane %v5535, 4
        %v5560 = vsel %vm879, %v5558, %v5559
        %v5561 = vrot.slane %v5540, 4
        %v5562 = vsel %vm879, %v5559, %v5561
        %5563 = vrot.lane.b32.xlu0 %v5558, 126
        %v5564 = vpop.permute.xlu0 %5563
        %5565 = vrot.lane.b32.xlu0 %v5560, 126
        %v5566 = vpop.permute.xlu0 %5565
        %5567 = vrot.lane.b32.xlu0 %v5562, 126
        %v5568 = vpop.permute.xlu0 %5567
        %v5571 = vsel %vm1039, %v5540, %v5550
        %v5572 = vsel %vm879, %v5554, %v5564
        %v5573 = vsel %vm599, %v5568, 0
        %5575 = vmatprep.subr.mxu0 0.0
        %5576 = vmatpush1.msra.mxu0 %v5528
        %5577 = vmatprep.subr.mxu0 0.0
        %5578 = vmatpush1.msra.mxu0 %v5535
        %5579 = vmatprep.subr.mxu0 0.0
        %5580 = vmatpush1.msra.mxu0 %v5571
        %5581 = vmatprep.subr.mxu0 0.0
        %5582 = vmatpush1.msra.mxu0 %v5552
        %5583 = vmatprep.subr.mxu0 0.0
        %5584 = vmatpush1.msra.mxu0 %v5572
        %5585 = vmatprep.subr.mxu0 0.0
        %5586 = vmatpush1.msra.mxu0 %v5566
        %5587 = vmatprep.subr.mxu0 0.0
        %5588 = vmatpush1.msra.mxu0 %v5573
        %5589 = vmatprep.subr.mxu0 0.0
        %5590 = vmatpush1.msra.mxu0 0.0
        %5591 = vmatprep.subr.mxu0 0.0
        %5592 = vmatpush1.msra.mxu0 0.0
        %5593 = vmatprep.subr.mxu0 0.0
        %5594 = vmatpush1.msra.mxu0 0.0
        %5595 = vmatprep.subr.mxu0 0.0
        %5596 = vmatpush1.msra.mxu0 0.0
        %5597 = vmatprep.subr.mxu0 0.0
        %5598 = vmatpush1.msra.mxu0 0.0
        %5599 = vmatprep.subr.mxu0 0.0
        %5600 = vmatpush1.msra.mxu0 0.0
        %5601 = vmatprep.subr.mxu0 0.0
        %5602 = vmatpush1.msra.mxu0 0.0
        %5603 = vmatprep.subr.mxu0 0.0
        %5604 = vmatpush1.msra.mxu0 0.0
        %5605 = vmatprep.subr.mxu0 0.0
        %5606 = vmatpush1.msra.mxu0 0.0
        %5607 = vmatprep.subr.mxu0 0.0
        %5608 = vmatpush1.msra.mxu0 0.0
        %5609 = vmatprep.subr.mxu0 0.0
        %5610 = vmatpush1.msra.mxu0 0.0
        %5611 = vmatprep.subr.mxu0 0.0
        %5612 = vmatpush1.msra.mxu0 0.0
        %5613 = vmatprep.subr.mxu0 0.0
        %5614 = vmatpush1.msra.mxu0 0.0
        %5615 = vmatprep.subr.mxu0 0.0
        %5616 = vmatpush1.msra.mxu0 0.0
        %5617 = vmatprep.subr.mxu0 0.0
        %5618 = vmatpush1.msra.mxu0 0.0
        %5619 = vmatprep.subr.mxu0 0.0
        %5620 = vmatpush1.msra.mxu0 0.0
        %5621 = vmatprep.subr.mxu0 0.0
        %5622 = vmatpush1.msra.mxu0 0.0
        %5623 = vmatprep.subr.mxu0 0.0
        %5624 = vmatpush1.msra.mxu0 0.0
        %5625 = vmatprep.subr.mxu0 0.0
        %5626 = vmatpush1.msra.mxu0 0.0
        %5627 = vmatprep.subr.mxu0 0.0
        %5628 = vmatpush1.msra.mxu0 0.0
        %5629 = vmatprep.subr.mxu0 0.0
        %5630 = vmatpush1.msra.mxu0 0.0
        %5631 = vmatprep.subr.mxu0 0.0
        %5632 = vmatpush1.msra.mxu0 0.0
        %5633 = vmatprep.subr.mxu0 0.0
        %5634 = vmatpush1.msra.mxu0 0.0
        %5635 = vmatprep.subr.mxu0 0.0
        %5636 = vmatpush1.msra.mxu0 0.0
        %5637 = vmatprep.subr.mxu0 0.0
        %5638 = vmatpush1.msra.mxu0 0.0
        %5639 = vmatprep.mubr.f32.mxu0 0.0
        %5640 = vmatmul.mubr.f32.gmra.mrb[0].mxu0 %v5412
        %v5641 = vpop.f32.mrb[0].mxu0
        %v5642 = vadd.f32 %v5403, %v5641
        %v5643 = vpop.f32.mrb[0].mxu0
        %5644 = vmatprep.mubr.f32.mxu0 0.0
        %5645 = vmatmul.mubr.f32.gmra.mrb[0].mxu0 %v5415
        %v5646 = vpop.f32.mrb[0].mxu0
        %v5647 = vadd.f32 %v5408, %v5646
        %v5648 = vpop.f32.mrb[0].mxu0
        %5649 = vdwg.mxu0
        %v5650 = vmax.f32 %v5486, %v5642
        %v5651 = vmax.f32 %v5491, %v5647
        %5654 = vrot.lane.b32.xlu0 %v5650, 127
        %v5655 = vpop.permute.xlu0 %5654
        %5656 = vrot.lane.b32.xlu0 %v5651, 127
        %v5657 = vpop.permute.xlu0 %5656
        %5660 = vrot.lane.b32.xlu0 %v5650, 126
        %v5661 = vpop.permute.xlu0 %5660
        %5662 = vrot.lane.b32.xlu0 %v5651, 126
        %v5663 = vpop.permute.xlu0 %5662
        %5666 = vrot.lane.b32.xlu0 %v5650, 125
        %v5667 = vpop.permute.xlu0 %5666
        %5668 = vrot.lane.b32.xlu0 %v5651, 125
        %v5669 = vpop.permute.xlu0 %5668
        %5672 = vrot.lane.b32.xlu0 %v5650, 124
        %v5673 = vpop.permute.xlu0 %5672
        %5674 = vrot.lane.b32.xlu0 %v5651, 124
        %v5675 = vpop.permute.xlu0 %5674
        %v5678 = vsel %vm1134, %v5650, %v5655
        %v5679 = vsel %vm1134, %v5651, %v5657
        %v5680 = vsel %vm1137, %v5678, %v5661
        %v5681 = vsel %vm1137, %v5679, %v5663
        %v5682 = vsel %vm1140, %v5680, %v5667
        %v5683 = vsel %vm1140, %v5681, %v5669
        %v5684 = vsel %vm1143, %v5682, %v5673
        %v5685 = vsel %vm1143, %v5683, %v5675
        %5686 = vrot.lane.b32.xlu0 %v5650, 123
        %v5687 = vpop.permute.xlu0 %5686
        %5688 = vrot.lane.b32.xlu0 %v5651, 123
        %v5689 = vpop.permute.xlu0 %5688
        %v5692 = vsel %vm1134, %v5655, %v5661
        %v5693 = vsel %vm1134, %v5657, %v5663
        %v5694 = vsel %vm1137, %v5692, %v5667
        %v5695 = vsel %vm1137, %v5693, %v5669
        %v5696 = vsel %vm1140, %v5694, %v5673
        %v5697 = vsel %vm1140, %v5695, %v5675
        %v5698 = vsel %vm1143, %v5696, %v5687
        %v5699 = vsel %vm1143, %v5697, %v5689
        %v5700 = vmax.f32 %v5684, %v5698
        %v5701 = vmax.f32 %v5685, %v5699
        %v5702 = vtanh.pop %v5700
        %v5703 = vtanh.pop %v5701
        %v5704 = vrot.slane %v1199, 2
        %v5706 = vrot.slane %v2021, 1
        %v5708 = vrot.slane %v3665, 7
        %v5710 = vrot.slane %v4487, 6
        %v5712 = vrot.slane %v5309, 5
        %v5714 = vrot.slane %v1199, 5
        %v5716 = vrot.slane %v2021, 4
        %v5718 = vrot.slane %v2843, 3
        %v5720 = vrot.slane %v3665, 2
        %v5722 = vrot.slane %v4487, 1
        %v5724 = vsel %vm1037, %v5704, %v5706
        %v5725 = vsel %vm1039, %v5724, %v2843
        %v5726 = vsel %vm1041, %v5725, %v5708
        %v5727 = vsel %vm879, %v5726, %v5710
        %v5728 = vsel %vm739, %v5727, %v5712
        %v5729 = vsel %vm599, %v5728, %v5714
        %v5730 = vsel %vm459, %v5729, %v5716
        %v5731 = vsel %vm1037, %v5718, %v5720
        %v5732 = vsel %vm1039, %v5731, %v5722
        %v5733 = vsel %vm1041, %v5732, %v5309
        %v5734 = vsel %vm879, %v5733, %v1199
        %v5735 = vsel %vm739, %v5734, %v5316
        %v5736 = vsel %vm599, %v5735, %v5319
        %v5737 = vsel %vm459, %v5736, %v5322
        %v5738 = vsel %vm1037, %v5325, %v5328
        %v5742 = vrot.slane %v5730, 6
        %v5743 = vrot.slane %v5737, 6
        %v5744 = vsel %vm1039, %v5742, %v5743
        %v5745 = vrot.slane %v5738, 6
        %v5746 = vsel %vm1039, %v5743, %v5745
        %5747 = vrot.lane.b32.xlu0 %v5742, 127
        %v5748 = vpop.permute.xlu0 %5747
        %5749 = vrot.lane.b32.xlu0 %v5744, 127
        %v5750 = vpop.permute.xlu0 %5749
        %5751 = vrot.lane.b32.xlu0 %v5746, 127
        %v5752 = vpop.permute.xlu0 %5751
        %v5756 = vrot.slane %v5730, 4
        %v5757 = vrot.slane %v5737, 4
        %v5758 = vsel %vm879, %v5756, %v5757
        %v5759 = vrot.slane %v5738, 4
        %v5760 = vsel %vm879, %v5757, %v5759
        %5761 = vrot.lane.b32.xlu0 %v5756, 126
        %v5762 = vpop.permute.xlu0 %5761
        %5763 = vrot.lane.b32.xlu0 %v5758, 126
        %v5764 = vpop.permute.xlu0 %5763
        %5765 = vrot.lane.b32.xlu0 %v5760, 126
        %v5766 = vpop.permute.xlu0 %5765
        %v5769 = vsel %vm1039, %v5738, %v5748
        %v5770 = vsel %vm879, %v5752, %v5762
        %v5771 = vsel %vm599, %v5766, 0
        %5773 = vmatprep.subr.mxu0 0.0
        %5774 = vmatpush1.msra.mxu0 %v5730
        %5775 = vmatprep.subr.mxu0 0.0
        %5776 = vmatpush1.msra.mxu0 %v5737
        %5777 = vmatprep.subr.mxu0 0.0
        %5778 = vmatpush1.msra.mxu0 %v5769
        %5779 = vmatprep.subr.mxu0 0.0
        %5780 = vmatpush1.msra.mxu0 %v5750
        %5781 = vmatprep.subr.mxu0 0.0
        %5782 = vmatpush1.msra.mxu0 %v5770
        %5783 = vmatprep.subr.mxu0 0.0
        %5784 = vmatpush1.msra.mxu0 %v5764
        %5785 = vmatprep.subr.mxu0 0.0
        %5786 = vmatpush1.msra.mxu0 %v5771
        %5787 = vmatprep.subr.mxu0 0.0
        %5788 = vmatpush1.msra.mxu0 0.0
        %5789 = vmatprep.subr.mxu0 0.0
        %5790 = vmatpush1.msra.mxu0 0.0
        %5791 = vmatprep.subr.mxu0 0.0
        %5792 = vmatpush1.msra.mxu0 0.0
        %5793 = vmatprep.subr.mxu0 0.0
        %5794 = vmatpush1.msra.mxu0 0.0
        %5795 = vmatprep.subr.mxu0 0.0
        %5796 = vmatpush1.msra.mxu0 0.0
        %5797 = vmatprep.subr.mxu0 0.0
        %5798 = vmatpush1.msra.mxu0 0.0
        %5799 = vmatprep.subr.mxu0 0.0
        %5800 = vmatpush1.msra.mxu0 0.0
        %5801 = vmatprep.subr.mxu0 0.0
        %5802 = vmatpush1.msra.mxu0 0.0
        %5803 = vmatprep.subr.mxu0 0.0
        %5804 = vmatpush1.msra.mxu0 0.0
        %5805 = vmatprep.subr.mxu0 0.0
        %5806 = vmatpush1.msra.mxu0 0.0
        %5807 = vmatprep.subr.mxu0 0.0
        %5808 = vmatpush1.msra.mxu0 0.0
        %5809 = vmatprep.subr.mxu0 0.0
        %5810 = vmatpush1.msra.mxu0 0.0
        %5811 = vmatprep.subr.mxu0 0.0
        %5812 = vmatpush1.msra.mxu0 0.0
        %5813 = vmatprep.subr.mxu0 0.0
        %5814 = vmatpush1.msra.mxu0 0.0
        %5815 = vmatprep.subr.mxu0 0.0
        %5816 = vmatpush1.msra.mxu0 0.0
        %5817 = vmatprep.subr.mxu0 0.0
        %5818 = vmatpush1.msra.mxu0 0.0
        %5819 = vmatprep.subr.mxu0 0.0
        %5820 = vmatpush1.msra.mxu0 0.0
        %5821 = vmatprep.subr.mxu0 0.0
        %5822 = vmatpush1.msra.mxu0 0.0
        %5823 = vmatprep.subr.mxu0 0.0
        %5824 = vmatpush1.msra.mxu0 0.0
        %5825 = vmatprep.subr.mxu0 0.0
        %5826 = vmatpush1.msra.mxu0 0.0
        %5827 = vmatprep.subr.mxu0 0.0
        %5828 = vmatpush1.msra.mxu0 0.0
        %5829 = vmatprep.subr.mxu0 0.0
        %5830 = vmatpush1.msra.mxu0 0.0
        %5831 = vmatprep.subr.mxu0 0.0
        %5832 = vmatpush1.msra.mxu0 0.0
        %5833 = vmatprep.subr.mxu0 0.0
        %5834 = vmatpush1.msra.mxu0 0.0
        %5835 = vmatprep.subr.mxu0 0.0
        %5836 = vmatpush1.msra.mxu0 0.0
        %5837 = vmatprep.mubr.f32.mxu0 0.0
        %5838 = vmatmul.mubr.f32.gmra.mrb[0].mxu0 %v5412
        %v5839 = vpop.f32.mrb[0].mxu0
        %v5840 = vadd.f32 %v5403, %v5839
        %v5841 = vpop.f32.mrb[0].mxu0
        %5842 = vmatprep.mubr.f32.mxu0 0.0
        %5843 = vmatmul.mubr.f32.gmra.mrb[0].mxu0 %v5415
        %v5844 = vpop.f32.mrb[0].mxu0
        %v5845 = vadd.f32 %v5408, %v5844
        %v5846 = vpop.f32.mrb[0].mxu0
        %5847 = vdwg.mxu0
        %v5848 = vsel %vm1037, %v5331, %v5333
        %v5849 = vsel %vm1039, %v5848, %v5335
        %v5850 = vsel %vm1041, %v5849, %v3665
        %v5851 = vsel %vm879, %v5850, %v5337
        %v5852 = vsel %vm739, %v5851, %v5339
        %v5853 = vsel %vm599, %v5852, %v5341
        %v5854 = vsel %vm459, %v5853, %v5343
        %v5855 = vsel %vm1037, %v5345, %v5347
        %v5856 = vsel %vm1039, %v5855, %v5363
        %v5857 = vsel %vm1041, %v5856, %v5365
        %v5858 = vsel %vm879, %v5857, %v5494
        %v5859 = vsel %vm739, %v5858, %v2021
        %v5860 = vsel %vm599, %v5859, %v5496
        %v5861 = vsel %vm459, %v5860, %v5498
        %v5862 = vsel %vm1037, %v5500, %v5502
        %v5866 = vrot.slane %v5854, 6
        %v5867 = vrot.slane %v5861, 6
        %v5868 = vsel %vm1039, %v5866, %v5867
        %v5869 = vrot.slane %v5862, 6
        %v5870 = vsel %vm1039, %v5867, %v5869
        %5871 = vrot.lane.b32.xlu0 %v5866, 127
        %v5872 = vpop.permute.xlu0 %5871
        %5873 = vrot.lane.b32.xlu0 %v5868, 127
        %v5874 = vpop.permute.xlu0 %5873
        %5875 = vrot.lane.b32.xlu0 %v5870, 127
        %v5876 = vpop.permute.xlu0 %5875
        %v5880 = vrot.slane %v5854, 4
        %v5881 = vrot.slane %v5861, 4
        %v5882 = vsel %vm879, %v5880, %v5881
        %v5883 = vrot.slane %v5862, 4
        %v5884 = vsel %vm879, %v5881, %v5883
        %5885 = vrot.lane.b32.xlu0 %v5880, 126
        %v5886 = vpop.permute.xlu0 %5885
        %5887 = vrot.lane.b32.xlu0 %v5882, 126
        %v5888 = vpop.permute.xlu0 %5887
        %5889 = vrot.lane.b32.xlu0 %v5884, 126
        %v5890 = vpop.permute.xlu0 %5889
        %v5893 = vsel %vm1039, %v5862, %v5872
        %v5894 = vsel %vm879, %v5876, %v5886
        %v5895 = vsel %vm599, %v5890, 0
        %5897 = vmatprep.subr.mxu0 0.0
        %5898 = vmatpush1.msra.mxu0 %v5854
        %5899 = vmatprep.subr.mxu0 0.0
        %5900 = vmatpush1.msra.mxu0 %v5861
        %5901 = vmatprep.subr.mxu0 0.0
        %5902 = vmatpush1.msra.mxu0 %v5893
        %5903 = vmatprep.subr.mxu0 0.0
        %5904 = vmatpush1.msra.mxu0 %v5874
        %5905 = vmatprep.subr.mxu0 0.0
        %5906 = vmatpush1.msra.mxu0 %v5894
        %5907 = vmatprep.subr.mxu0 0.0
        %5908 = vmatpush1.msra.mxu0 %v5888
        %5909 = vmatprep.subr.mxu0 0.0
        %5910 = vmatpush1.msra.mxu0 %v5895
        %5911 = vmatprep.subr.mxu0 0.0
        %5912 = vmatpush1.msra.mxu0 0.0
        %5913 = vmatprep.subr.mxu0 0.0
        %5914 = vmatpush1.msra.mxu0 0.0
        %5915 = vmatprep.subr.mxu0 0.0
        %5916 = vmatpush1.msra.mxu0 0.0
        %5917 = vmatprep.subr.mxu0 0.0
        %5918 = vmatpush1.msra.mxu0 0.0
        %5919 = vmatprep.subr.mxu0 0.0
        %5920 = vmatpush1.msra.mxu0 0.0
        %5921 = vmatprep.subr.mxu0 0.0
        %5922 = vmatpush1.msra.mxu0 0.0
        %5923 = vmatprep.subr.mxu0 0.0
        %5924 = vmatpush1.msra.mxu0 0.0
        %5925 = vmatprep.subr.mxu0 0.0
        %5926 = vmatpush1.msra.mxu0 0.0
        %5927 = vmatprep.subr.mxu0 0.0
        %5928 = vmatpush1.msra.mxu0 0.0
        %5929 = vmatprep.subr.mxu0 0.0
        %5930 = vmatpush1.msra.mxu0 0.0
        %5931 = vmatprep.subr.mxu0 0.0
        %5932 = vmatpush1.msra.mxu0 0.0
        %5933 = vmatprep.subr.mxu0 0.0
        %5934 = vmatpush1.msra.mxu0 0.0
        %5935 = vmatprep.subr.mxu0 0.0
        %5936 = vmatpush1.msra.mxu0 0.0
        %5937 = vmatprep.subr.mxu0 0.0
        %5938 = vmatpush1.msra.mxu0 0.0
        %5939 = vmatprep.subr.mxu0 0.0
        %5940 = vmatpush1.msra.mxu0 0.0
        %5941 = vmatprep.subr.mxu0 0.0
        %5942 = vmatpush1.msra.mxu0 0.0
        %5943 = vmatprep.subr.mxu0 0.0
        %5944 = vmatpush1.msra.mxu0 0.0
        %5945 = vmatprep.subr.mxu0 0.0
        %5946 = vmatpush1.msra.mxu0 0.0
        %5947 = vmatprep.subr.mxu0 0.0
        %5948 = vmatpush1.msra.mxu0 0.0
        %5949 = vmatprep.subr.mxu0 0.0
        %5950 = vmatpush1.msra.mxu0 0.0
        %5951 = vmatprep.subr.mxu0 0.0
        %5952 = vmatpush1.msra.mxu0 0.0
        %5953 = vmatprep.subr.mxu0 0.0
        %5954 = vmatpush1.msra.mxu0 0.0
        %5955 = vmatprep.subr.mxu0 0.0
        %5956 = vmatpush1.msra.mxu0 0.0
        %5957 = vmatprep.subr.mxu0 0.0
        %5958 = vmatpush1.msra.mxu0 0.0
        %5959 = vmatprep.subr.mxu0 0.0
        %5960 = vmatpush1.msra.mxu0 0.0
        %5961 = vmatprep.mubr.f32.mxu0 0.0
        %5962 = vmatmul.mubr.f32.gmra.mrb[0].mxu0 %v5412
        %v5963 = vpop.f32.mrb[0].mxu0
        %v5964 = vadd.f32 %v5403, %v5963
        %v5965 = vpop.f32.mrb[0].mxu0
        %5966 = vmatprep.mubr.f32.mxu0 0.0
        %5967 = vmatmul.mubr.f32.gmra.mrb[0].mxu0 %v5415
        %v5968 = vpop.f32.mrb[0].mxu0
        %v5969 = vadd.f32 %v5408, %v5968
        %v5970 = vpop.f32.mrb[0].mxu0
        %5971 = vdwg.mxu0
        %v5972 = vmax.f32 %v5840, %v5964
        %v5973 = vmax.f32 %v5845, %v5969
        %5976 = vrot.lane.b32.xlu0 %v5972, 127
        %v5977 = vpop.permute.xlu0 %5976
        %5978 = vrot.lane.b32.xlu0 %v5973, 127
        %v5979 = vpop.permute.xlu0 %5978
        %5982 = vrot.lane.b32.xlu0 %v5972, 126
        %v5983 = vpop.permute.xlu0 %5982
        %5984 = vrot.lane.b32.xlu0 %v5973, 126
        %v5985 = vpop.permute.xlu0 %5984
        %5988 = vrot.lane.b32.xlu0 %v5972, 125
        %v5989 = vpop.permute.xlu0 %5988
        %5990 = vrot.lane.b32.xlu0 %v5973, 125
        %v5991 = vpop.permute.xlu0 %5990
        %5994 = vrot.lane.b32.xlu0 %v5972, 124
        %v5995 = vpop.permute.xlu0 %5994
        %5996 = vrot.lane.b32.xlu0 %v5973, 124
        %v5997 = vpop.permute.xlu0 %5996
        %v6000 = vsel %vm1134, %v5972, %v5977
        %v6001 = vsel %vm1134, %v5973, %v5979
        %v6002 = vsel %vm1137, %v6000, %v5983
        %v6003 = vsel %vm1137, %v6001, %v5985
        %v6004 = vsel %vm1140, %v6002, %v5989
        %v6005 = vsel %vm1140, %v6003, %v5991
        %v6006 = vsel %vm1143, %v6004, %v5995
        %v6007 = vsel %vm1143, %v6005, %v5997
        %6008 = vrot.lane.b32.xlu0 %v5972, 123
        %v6009 = vpop.permute.xlu0 %6008
        %6010 = vrot.lane.b32.xlu0 %v5973, 123
        %v6011 = vpop.permute.xlu0 %6010
        %v6014 = vsel %vm1134, %v5977, %v5983
        %v6015 = vsel %vm1134, %v5979, %v5985
        %v6016 = vsel %vm1137, %v6014, %v5989
        %v6017 = vsel %vm1137, %v6015, %v5991
        %v6018 = vsel %vm1140, %v6016, %v5995
        %v6019 = vsel %vm1140, %v6017, %v5997
        %v6020 = vsel %vm1143, %v6018, %v6009
        %v6021 = vsel %vm1143, %v6019, %v6011
        %v6022 = vmax.f32 %v6006, %v6020
        %v6023 = vmax.f32 %v6007, %v6021
        %v6024 = vtanh.pop %v6022
        %v6025 = vtanh.pop %v6023
        %v6026 = vsel %vm1037, %v5504, %v5506
        %v6027 = vsel %vm1039, %v6026, %v5508
        %v6028 = vsel %vm1041, %v6027, %v5510
        %v6029 = vsel %vm879, %v6028, %v4487
        %v6030 = vsel %vm739, %v6029, %v5512
        %v6031 = vsel %vm599, %v6030, %v5514
        %v6032 = vsel %vm459, %v6031, %v5516
        %v6033 = vsel %vm1037, %v5518, %v5520
        %v6034 = vsel %vm1039, %v6033, %v5536
        %v6035 = vsel %vm1041, %v6034, %v5538
        %v6036 = vsel %vm879, %v6035, %v5704
        %v6037 = vsel %vm739, %v6036, %v5706
        %v6038 = vsel %vm599, %v6037, %v2843
        %v6039 = vsel %vm459, %v6038, %v5708
        %v6040 = vsel %vm1037, %v5710, %v5712
        %v6044 = vrot.slane %v6032, 6
        %v6045 = vrot.slane %v6039, 6
        %v6046 = vsel %vm1039, %v6044, %v6045
        %v6047 = vrot.slane %v6040, 6
        %v6048 = vsel %vm1039, %v6045, %v6047
        %6049 = vrot.lane.b32.xlu0 %v6044, 127
        %v6050 = vpop.permute.xlu0 %6049
        %6051 = vrot.lane.b32.xlu0 %v6046, 127
        %v6052 = vpop.permute.xlu0 %6051
        %6053 = vrot.lane.b32.xlu0 %v6048, 127
        %v6054 = vpop.permute.xlu0 %6053
        %v6058 = vrot.slane %v6032, 4
        %v6059 = vrot.slane %v6039, 4
        %v6060 = vsel %vm879, %v6058, %v6059
        %v6061 = vrot.slane %v6040, 4
        %v6062 = vsel %vm879, %v6059, %v6061
        %6063 = vrot.lane.b32.xlu0 %v6058, 126
        %v6064 = vpop.permute.xlu0 %6063
        %6065 = vrot.lane.b32.xlu0 %v6060, 126
        %v6066 = vpop.permute.xlu0 %6065
        %6067 = vrot.lane.b32.xlu0 %v6062, 126
        %v6068 = vpop.permute.xlu0 %6067
        %v6071 = vsel %vm1039, %v6040, %v6050
        %v6072 = vsel %vm879, %v6054, %v6064
        %v6073 = vsel %vm599, %v6068, 0
        %6075 = vmatprep.subr.mxu0 0.0
        %6076 = vmatpush1.msra.mxu0 %v6032
        %6077 = vmatprep.subr.mxu0 0.0
        %6078 = vmatpush1.msra.mxu0 %v6039
        %6079 = vmatprep.subr.mxu0 0.0
        %6080 = vmatpush1.msra.mxu0 %v6071
        %6081 = vmatprep.subr.mxu0 0.0
        %6082 = vmatpush1.msra.mxu0 %v6052
        %6083 = vmatprep.subr.mxu0 0.0
        %6084 = vmatpush1.msra.mxu0 %v6072
        %6085 = vmatprep.subr.mxu0 0.0
        %6086 = vmatpush1.msra.mxu0 %v6066
        %6087 = vmatprep.subr.mxu0 0.0
        %6088 = vmatpush1.msra.mxu0 %v6073
        %6089 = vmatprep.subr.mxu0 0.0
        %6090 = vmatpush1.msra.mxu0 0.0
        %6091 = vmatprep.subr.mxu0 0.0
        %6092 = vmatpush1.msra.mxu0 0.0
        %6093 = vmatprep.subr.mxu0 0.0
        %6094 = vmatpush1.msra.mxu0 0.0
        %6095 = vmatprep.subr.mxu0 0.0
        %6096 = vmatpush1.msra.mxu0 0.0
        %6097 = vmatprep.subr.mxu0 0.0
        %6098 = vmatpush1.msra.mxu0 0.0
        %6099 = vmatprep.subr.mxu0 0.0
        %6100 = vmatpush1.msra.mxu0 0.0
        %6101 = vmatprep.subr.mxu0 0.0
        %6102 = vmatpush1.msra.mxu0 0.0
        %6103 = vmatprep.subr.mxu0 0.0
        %6104 = vmatpush1.msra.mxu0 0.0
        %6105 = vmatprep.subr.mxu0 0.0
        %6106 = vmatpush1.msra.mxu0 0.0
        %6107 = vmatprep.subr.mxu0 0.0
        %6108 = vmatpush1.msra.mxu0 0.0
        %6109 = vmatprep.subr.mxu0 0.0
        %6110 = vmatpush1.msra.mxu0 0.0
        %6111 = vmatprep.subr.mxu0 0.0
        %6112 = vmatpush1.msra.mxu0 0.0
        %6113 = vmatprep.subr.mxu0 0.0
        %6114 = vmatpush1.msra.mxu0 0.0
        %6115 = vmatprep.subr.mxu0 0.0
        %6116 = vmatpush1.msra.mxu0 0.0
        %6117 = vmatprep.subr.mxu0 0.0
        %6118 = vmatpush1.msra.mxu0 0.0
        %6119 = vmatprep.subr.mxu0 0.0
        %6120 = vmatpush1.msra.mxu0 0.0
        %6121 = vmatprep.subr.mxu0 0.0
        %6122 = vmatpush1.msra.mxu0 0.0
        %6123 = vmatprep.subr.mxu0 0.0
        %6124 = vmatpush1.msra.mxu0 0.0
        %6125 = vmatprep.subr.mxu0 0.0
        %6126 = vmatpush1.msra.mxu0 0.0
        %6127 = vmatprep.subr.mxu0 0.0
        %6128 = vmatpush1.msra.mxu0 0.0
        %6129 = vmatprep.subr.mxu0 0.0
        %6130 = vmatpush1.msra.mxu0 0.0
        %6131 = vmatprep.subr.mxu0 0.0
        %6132 = vmatpush1.msra.mxu0 0.0
        %6133 = vmatprep.subr.mxu0 0.0
        %6134 = vmatpush1.msra.mxu0 0.0
        %6135 = vmatprep.subr.mxu0 0.0
        %6136 = vmatpush1.msra.mxu0 0.0
        %6137 = vmatprep.subr.mxu0 0.0
        %6138 = vmatpush1.msra.mxu0 0.0
        %6139 = vmatprep.mubr.f32.mxu0 0.0
        %6140 = vmatmul.mubr.f32.gmra.mrb[0].mxu0 %v5412
        %v6141 = vpop.f32.mrb[0].mxu0
        %v6142 = vadd.f32 %v5403, %v6141
        %v6143 = vpop.f32.mrb[0].mxu0
        %6144 = vmatprep.mubr.f32.mxu0 0.0
        %6145 = vmatmul.mubr.f32.gmra.mrb[0].mxu0 %v5415
        %v6146 = vpop.f32.mrb[0].mxu0
        %v6147 = vadd.f32 %v5408, %v6146
        %v6148 = vpop.f32.mrb[0].mxu0
        %6149 = vdwg.mxu0
        %v6150 = vsel %vm1037, %v5714, %v5716
        %v6151 = vsel %vm1039, %v6150, %v5718
        %v6152 = vsel %vm1041, %v6151, %v5720
        %v6153 = vsel %vm879, %v6152, %v5722
        %v6154 = vsel %vm739, %v6153, %v5309
        %v6155 = vsel %vm599, %v6154, %v1199
        %v6156 = vsel %vm459, %v6155, %v5316
        %v6157 = vsel %vm1037, %v5319, %v5322
        %v6158 = vsel %vm1039, %v6157, %v5325
        %v6159 = vsel %vm1041, %v6158, %v5328
        %v6160 = vsel %vm879, %v6159, %v5331
        %v6161 = vsel %vm739, %v6160, %v5333
        %v6162 = vsel %vm599, %v6161, %v5335
        %v6163 = vsel %vm459, %v6162, %v3665
        %v6164 = vsel %vm1037, %v5337, %v5339
        %v6168 = vrot.slane %v6156, 6
        %v6169 = vrot.slane %v6163, 6
        %v6170 = vsel %vm1039, %v6168, %v6169
        %v6171 = vrot.slane %v6164, 6
        %v6172 = vsel %vm1039, %v6169, %v6171
        %6173 = vrot.lane.b32.xlu0 %v6168, 127
        %v6174 = vpop.permute.xlu0 %6173
        %6175 = vrot.lane.b32.xlu0 %v6170, 127
        %v6176 = vpop.permute.xlu0 %6175
        %6177 = vrot.lane.b32.xlu0 %v6172, 127
        %v6178 = vpop.permute.xlu0 %6177
        %v6182 = vrot.slane %v6156, 4
        %v6183 = vrot.slane %v6163, 4
        %v6184 = vsel %vm879, %v6182, %v6183
        %v6185 = vrot.slane %v6164, 4
        %v6186 = vsel %vm879, %v6183, %v6185
        %6187 = vrot.lane.b32.xlu0 %v6182, 126
        %v6188 = vpop.permute.xlu0 %6187
        %6189 = vrot.lane.b32.xlu0 %v6184, 126
        %v6190 = vpop.permute.xlu0 %6189
        %6191 = vrot.lane.b32.xlu0 %v6186, 126
        %v6192 = vpop.permute.xlu0 %6191
        %v6195 = vsel %vm1039, %v6164, %v6174
        %v6196 = vsel %vm879, %v6178, %v6188
        %v6197 = vsel %vm599, %v6192, 0
        %6199 = vmatprep.subr.mxu0 0.0
        %6200 = vmatpush1.msra.mxu0 %v6156
        %6201 = vmatprep.subr.mxu0 0.0
        %6202 = vmatpush1.msra.mxu0 %v6163
        %6203 = vmatprep.subr.mxu0 0.0
        %6204 = vmatpush1.msra.mxu0 %v6195
        %6205 = vmatprep.subr.mxu0 0.0
        %6206 = vmatpush1.msra.mxu0 %v6176
        %6207 = vmatprep.subr.mxu0 0.0
        %6208 = vmatpush1.msra.mxu0 %v6196
        %6209 = vmatprep.subr.mxu0 0.0
        %6210 = vmatpush1.msra.mxu0 %v6190
        %6211 = vmatprep.subr.mxu0 0.0
        %6212 = vmatpush1.msra.mxu0 %v6197
        %6213 = vmatprep.subr.mxu0 0.0
        %6214 = vmatpush1.msra.mxu0 0.0
        %6215 = vmatprep.subr.mxu0 0.0
        %6216 = vmatpush1.msra.mxu0 0.0
        %6217 = vmatprep.subr.mxu0 0.0
        %6218 = vmatpush1.msra.mxu0 0.0
        %6219 = vmatprep.subr.mxu0 0.0
        %6220 = vmatpush1.msra.mxu0 0.0
        %6221 = vmatprep.subr.mxu0 0.0
        %6222 = vmatpush1.msra.mxu0 0.0
        %6223 = vmatprep.subr.mxu0 0.0
        %6224 = vmatpush1.msra.mxu0 0.0
        %6225 = vmatprep.subr.mxu0 0.0
        %6226 = vmatpush1.msra.mxu0 0.0
        %6227 = vmatprep.subr.mxu0 0.0
        %6228 = vmatpush1.msra.mxu0 0.0
        %6229 = vmatprep.subr.mxu0 0.0
        %6230 = vmatpush1.msra.mxu0 0.0
        %6231 = vmatprep.subr.mxu0 0.0
        %6232 = vmatpush1.msra.mxu0 0.0
        %6233 = vmatprep.subr.mxu0 0.0
        %6234 = vmatpush1.msra.mxu0 0.0
        %6235 = vmatprep.subr.mxu0 0.0
        %6236 = vmatpush1.msra.mxu0 0.0
        %6237 = vmatprep.subr.mxu0 0.0
        %6238 = vmatpush1.msra.mxu0 0.0
        %6239 = vmatprep.subr.mxu0 0.0
        %6240 = vmatpush1.msra.mxu0 0.0
        %6241 = vmatprep.subr.mxu0 0.0
        %6242 = vmatpush1.msra.mxu0 0.0
        %6243 = vmatprep.subr.mxu0 0.0
        %6244 = vmatpush1.msra.mxu0 0.0
        %6245 = vmatprep.subr.mxu0 0.0
        %6246 = vmatpush1.msra.mxu0 0.0
        %6247 = vmatprep.subr.mxu0 0.0
        %6248 = vmatpush1.msra.mxu0 0.0
        %6249 = vmatprep.subr.mxu0 0.0
        %6250 = vmatpush1.msra.mxu0 0.0
        %6251 = vmatprep.subr.mxu0 0.0
        %6252 = vmatpush1.msra.mxu0 0.0
        %6253 = vmatprep.subr.mxu0 0.0
        %6254 = vmatpush1.msra.mxu0 0.0
        %6255 = vmatprep.subr.mxu0 0.0
        %6256 = vmatpush1.msra.mxu0 0.0
        %6257 = vmatprep.subr.mxu0 0.0
        %6258 = vmatpush1.msra.mxu0 0.0
        %6259 = vmatprep.subr.mxu0 0.0
        %6260 = vmatpush1.msra.mxu0 0.0
        %6261 = vmatprep.subr.mxu0 0.0
        %6262 = vmatpush1.msra.mxu0 0.0
        %6263 = vmatprep.mubr.f32.mxu0 0.0
        %6264 = vmatmul.mubr.f32.gmra.mrb[0].mxu0 %v5412
        %v6265 = vpop.f32.mrb[0].mxu0
        %v6266 = vadd.f32 %v5403, %v6265
        %v6267 = vpop.f32.mrb[0].mxu0
        %6268 = vmatprep.mubr.f32.mxu0 0.0
        %6269 = vmatmul.mubr.f32.gmra.mrb[0].mxu0 %v5415
        %v6270 = vpop.f32.mrb[0].mxu0
        %v6271 = vadd.f32 %v5408, %v6270
        %v6272 = vpop.f32.mrb[0].mxu0
        %6273 = vdwg.mxu0
        %v6274 = vmax.f32 %v6142, %v6266
        %v6275 = vmax.f32 %v6147, %v6271
        %6278 = vrot.lane.b32.xlu0 %v6274, 127
        %v6279 = vpop.permute.xlu0 %6278
        %6280 = vrot.lane.b32.xlu0 %v6275, 127
        %v6281 = vpop.permute.xlu0 %6280
        %6284 = vrot.lane.b32.xlu0 %v6274, 126
        %v6285 = vpop.permute.xlu0 %6284
        %6286 = vrot.lane.b32.xlu0 %v6275, 126
        %v6287 = vpop.permute.xlu0 %6286
        %6290 = vrot.lane.b32.xlu0 %v6274, 125
        %v6291 = vpop.permute.xlu0 %6290
        %6292 = vrot.lane.b32.xlu0 %v6275, 125
        %v6293 = vpop.permute.xlu0 %6292
        %6296 = vrot.lane.b32.xlu0 %v6274, 124
        %v6297 = vpop.permute.xlu0 %6296
        %6298 = vrot.lane.b32.xlu0 %v6275, 124
        %v6299 = vpop.permute.xlu0 %6298
        %v6302 = vsel %vm1134, %v6274, %v6279
        %v6303 = vsel %vm1134, %v6275, %v6281
        %v6304 = vsel %vm1137, %v6302, %v6285
        %v6305 = vsel %vm1137, %v6303, %v6287
        %v6306 = vsel %vm1140, %v6304, %v6291
        %v6307 = vsel %vm1140, %v6305, %v6293
        %v6308 = vsel %vm1143, %v6306, %v6297
        %v6309 = vsel %vm1143, %v6307, %v6299
        %6310 = vrot.lane.b32.xlu0 %v6274, 123
        %v6311 = vpop.permute.xlu0 %6310
        %6312 = vrot.lane.b32.xlu0 %v6275, 123
        %v6313 = vpop.permute.xlu0 %6312
        %v6316 = vsel %vm1134, %v6279, %v6285
        %v6317 = vsel %vm1134, %v6281, %v6287
        %v6318 = vsel %vm1137, %v6316, %v6291
        %v6319 = vsel %vm1137, %v6317, %v6293
        %v6320 = vsel %vm1140, %v6318, %v6297
        %v6321 = vsel %vm1140, %v6319, %v6299
        %v6322 = vsel %vm1143, %v6320, %v6311
        %v6323 = vsel %vm1143, %v6321, %v6313
        %v6324 = vmax.f32 %v6308, %v6322
        %v6325 = vmax.f32 %v6309, %v6323
        %v6326 = vtanh.pop %v6324
        %v6327 = vtanh.pop %v6325
        %v6329 = vrot.slane %v1200, 4
        %v6332 = vrot.slane %v2022, 3
        %v6335 = vrot.slane %v2844, 2
        %v6338 = vrot.slane %v3666, 1
        %v6340 = vsel %vm1037, %v5341, %v5343
        %v6341 = vsel %vm1039, %v6340, %v5345
        %v6342 = vsel %vm1041, %v6341, %v5347
        %v6343 = vsel %vm879, %v6342, %v5363
        %v6344 = vsel %vm739, %v6343, %v5365
        %v6345 = vsel %vm599, %v6344, %v5494
        %v6346 = vsel %vm459, %v6345, %v2021
        %v6347 = vsel %vm1037, %v5496, %v5498
        %v6348 = vsel %vm1039, %v6347, %v5500
        %v6349 = vsel %vm1041, %v6348, %v5502
        %v6350 = vsel %vm879, %v6349, %v6329
        %v6351 = vsel %vm739, %v6350, %v6332
        %v6352 = vsel %vm599, %v6351, %v6335
        %v6353 = vsel %vm459, %v6352, %v6338
        %v6355 = vrot.slane %v5310, 7
        %v6357 = vsel %vm1037, %v4488, %v6355
        %v6361 = vrot.slane %v6346, 6
        %v6362 = vrot.slane %v6353, 6
        %v6363 = vsel %vm1039, %v6361, %v6362
        %v6364 = vrot.slane %v6357, 6
        %v6365 = vsel %vm1039, %v6362, %v6364
        %6366 = vrot.lane.b32.xlu0 %v6361, 127
        %v6367 = vpop.permute.xlu0 %6366
        %6368 = vrot.lane.b32.xlu0 %v6363, 127
        %v6369 = vpop.permute.xlu0 %6368
        %6370 = vrot.lane.b32.xlu0 %v6365, 127
        %v6371 = vpop.permute.xlu0 %6370
        %v6375 = vrot.slane %v6346, 4
        %v6376 = vrot.slane %v6353, 4
        %v6377 = vsel %vm879, %v6375, %v6376
        %v6378 = vrot.slane %v6357, 4
        %v6379 = vsel %vm879, %v6376, %v6378
        %6380 = vrot.lane.b32.xlu0 %v6375, 126
        %v6381 = vpop.permute.xlu0 %6380
        %6382 = vrot.lane.b32.xlu0 %v6377, 126
        %v6383 = vpop.permute.xlu0 %6382
        %6384 = vrot.lane.b32.xlu0 %v6379, 126
        %v6385 = vpop.permute.xlu0 %6384
        %v6388 = vsel %vm1039, %v6357, %v6367
        %v6389 = vsel %vm879, %v6371, %v6381
        %v6390 = vsel %vm599, %v6385, 0
        %6392 = vmatprep.subr.mxu0 0.0
        %6393 = vmatpush1.msra.mxu0 %v6346
        %6394 = vmatprep.subr.mxu0 0.0
        %6395 = vmatpush1.msra.mxu0 %v6353
        %6396 = vmatprep.subr.mxu0 0.0
        %6397 = vmatpush1.msra.mxu0 %v6388
        %6398 = vmatprep.subr.mxu0 0.0
        %6399 = vmatpush1.msra.mxu0 %v6369
        %6400 = vmatprep.subr.mxu0 0.0
        %6401 = vmatpush1.msra.mxu0 %v6389
        %6402 = vmatprep.subr.mxu0 0.0
        %6403 = vmatpush1.msra.mxu0 %v6383
        %6404 = vmatprep.subr.mxu0 0.0
        %6405 = vmatpush1.msra.mxu0 %v6390
        %6406 = vmatprep.subr.mxu0 0.0
        %6407 = vmatpush1.msra.mxu0 0.0
        %6408 = vmatprep.subr.mxu0 0.0
        %6409 = vmatpush1.msra.mxu0 0.0
        %6410 = vmatprep.subr.mxu0 0.0
        %6411 = vmatpush1.msra.mxu0 0.0
        %6412 = vmatprep.subr.mxu0 0.0
        %6413 = vmatpush1.msra.mxu0 0.0
        %6414 = vmatprep.subr.mxu0 0.0
        %6415 = vmatpush1.msra.mxu0 0.0
        %6416 = vmatprep.subr.mxu0 0.0
        %6417 = vmatpush1.msra.mxu0 0.0
        %6418 = vmatprep.subr.mxu0 0.0
        %6419 = vmatpush1.msra.mxu0 0.0
        %6420 = vmatprep.subr.mxu0 0.0
        %6421 = vmatpush1.msra.mxu0 0.0
        %6422 = vmatprep.subr.mxu0 0.0
        %6423 = vmatpush1.msra.mxu0 0.0
        %6424 = vmatprep.subr.mxu0 0.0
        %6425 = vmatpush1.msra.mxu0 0.0
        %6426 = vmatprep.subr.mxu0 0.0
        %6427 = vmatpush1.msra.mxu0 0.0
        %6428 = vmatprep.subr.mxu0 0.0
        %6429 = vmatpush1.msra.mxu0 0.0
        %6430 = vmatprep.subr.mxu0 0.0
        %6431 = vmatpush1.msra.mxu0 0.0
        %6432 = vmatprep.subr.mxu0 0.0
        %6433 = vmatpush1.msra.mxu0 0.0
        %6434 = vmatprep.subr.mxu0 0.0
        %6435 = vmatpush1.msra.mxu0 0.0
        %6436 = vmatprep.subr.mxu0 0.0
        %6437 = vmatpush1.msra.mxu0 0.0
        %6438 = vmatprep.subr.mxu0 0.0
        %6439 = vmatpush1.msra.mxu0 0.0
        %6440 = vmatprep.subr.mxu0 0.0
        %6441 = vmatpush1.msra.mxu0 0.0
        %6442 = vmatprep.subr.mxu0 0.0
        %6443 = vmatpush1.msra.mxu0 0.0
        %6444 = vmatprep.subr.mxu0 0.0
        %6445 = vmatpush1.msra.mxu0 0.0
        %6446 = vmatprep.subr.mxu0 0.0
        %6447 = vmatpush1.msra.mxu0 0.0
        %6448 = vmatprep.subr.mxu0 0.0
        %6449 = vmatpush1.msra.mxu0 0.0
        %6450 = vmatprep.subr.mxu0 0.0
        %6451 = vmatpush1.msra.mxu0 0.0
        %6452 = vmatprep.subr.mxu0 0.0
        %6453 = vmatpush1.msra.mxu0 0.0
        %6454 = vmatprep.subr.mxu0 0.0
        %6455 = vmatpush1.msra.mxu0 0.0
        %6456 = vmatprep.mubr.f32.mxu0 0.0
        %6457 = vmatmul.mubr.f32.gmra.mrb[0].mxu0 %v5412
        %v6458 = vpop.f32.mrb[0].mxu0
        %v6459 = vadd.f32 %v5403, %v6458
        %v6460 = vpop.f32.mrb[0].mxu0
        %6461 = vmatprep.mubr.f32.mxu0 0.0
        %6462 = vmatmul.mubr.f32.gmra.mrb[0].mxu0 %v5415
        %v6463 = vpop.f32.mrb[0].mxu0
        %v6464 = vadd.f32 %v5408, %v6463
        %v6465 = vpop.f32.mrb[0].mxu0
        %6466 = vdwg.mxu0
        %v6467 = vrot.slane %v1200, 2
        %v6469 = vrot.slane %v2022, 1
        %v6471 = vrot.slane %v3666, 7
        %v6474 = vrot.slane %v4488, 6
        %v6476 = vrot.slane %v5310, 5
        %v6478 = vrot.slane %v1200, 5
        %v6480 = vrot.slane %v2022, 4
        %v6482 = vrot.slane %v2844, 3
        %v6484 = vrot.slane %v3666, 2
        %v6486 = vsel %vm1037, %v5514, %v5516
        %v6487 = vsel %vm1039, %v6486, %v5518
        %v6488 = vsel %vm1041, %v6487, %v5520
        %v6489 = vsel %vm879, %v6488, %v5536
        %v6490 = vsel %vm739, %v6489, %v5538
        %v6491 = vsel %vm599, %v6490, %v6467
        %v6492 = vsel %vm459, %v6491, %v6469
        %v6493 = vsel %vm1037, %v2844, %v6471
        %v6494 = vsel %vm1039, %v6493, %v6474
        %v6495 = vsel %vm1041, %v6494, %v6476
        %v6496 = vsel %vm879, %v6495, %v6478
        %v6497 = vsel %vm739, %v6496, %v6480
        %v6498 = vsel %vm599, %v6497, %v6482
        %v6499 = vsel %vm459, %v6498, %v6484
        %v6500 = vrot.slane %v4488, 1
        %v6502 = vsel %vm1037, %v6500, %v5310
        %v6506 = vrot.slane %v6492, 6
        %v6507 = vrot.slane %v6499, 6
        %v6508 = vsel %vm1039, %v6506, %v6507
        %v6509 = vrot.slane %v6502, 6
        %v6510 = vsel %vm1039, %v6507, %v6509
        %6511 = vrot.lane.b32.xlu0 %v6506, 127
        %v6512 = vpop.permute.xlu0 %6511
        %6513 = vrot.lane.b32.xlu0 %v6508, 127
        %v6514 = vpop.permute.xlu0 %6513
        %6515 = vrot.lane.b32.xlu0 %v6510, 127
        %v6516 = vpop.permute.xlu0 %6515
        %v6520 = vrot.slane %v6492, 4
        %v6521 = vrot.slane %v6499, 4
        %v6522 = vsel %vm879, %v6520, %v6521
        %v6523 = vrot.slane %v6502, 4
        %v6524 = vsel %vm879, %v6521, %v6523
        %6525 = vrot.lane.b32.xlu0 %v6520, 126
        %v6526 = vpop.permute.xlu0 %6525
        %6527 = vrot.lane.b32.xlu0 %v6522, 126
        %v6528 = vpop.permute.xlu0 %6527
        %6529 = vrot.lane.b32.xlu0 %v6524, 126
        %v6530 = vpop.permute.xlu0 %6529
        %v6533 = vsel %vm1039, %v6502, %v6512
        %v6534 = vsel %vm879, %v6516, %v6526
        %v6535 = vsel %vm599, %v6530, 0
        %6537 = vmatprep.subr.mxu0 0.0
        %6538 = vmatpush1.msra.mxu0 %v6492
        %6539 = vmatprep.subr.mxu0 0.0
        %6540 = vmatpush1.msra.mxu0 %v6499
        %6541 = vmatprep.subr.mxu0 0.0
        %6542 = vmatpush1.msra.mxu0 %v6533
        %6543 = vmatprep.subr.mxu0 0.0
        %6544 = vmatpush1.msra.mxu0 %v6514
        %6545 = vmatprep.subr.mxu0 0.0
        %6546 = vmatpush1.msra.mxu0 %v6534
        %6547 = vmatprep.subr.mxu0 0.0
        %6548 = vmatpush1.msra.mxu0 %v6528
        %6549 = vmatprep.subr.mxu0 0.0
        %6550 = vmatpush1.msra.mxu0 %v6535
        %6551 = vmatprep.subr.mxu0 0.0
        %6552 = vmatpush1.msra.mxu0 0.0
        %6553 = vmatprep.subr.mxu0 0.0
        %6554 = vmatpush1.msra.mxu0 0.0
        %6555 = vmatprep.subr.mxu0 0.0
        %6556 = vmatpush1.msra.mxu0 0.0
        %6557 = vmatprep.subr.mxu0 0.0
        %6558 = vmatpush1.msra.mxu0 0.0
        %6559 = vmatprep.subr.mxu0 0.0
        %6560 = vmatpush1.msra.mxu0 0.0
        %6561 = vmatprep.subr.mxu0 0.0
        %6562 = vmatpush1.msra.mxu0 0.0
        %6563 = vmatprep.subr.mxu0 0.0
        %6564 = vmatpush1.msra.mxu0 0.0
        %6565 = vmatprep.subr.mxu0 0.0
        %6566 = vmatpush1.msra.mxu0 0.0
        %6567 = vmatprep.subr.mxu0 0.0
        %6568 = vmatpush1.msra.mxu0 0.0
        %6569 = vmatprep.subr.mxu0 0.0
        %6570 = vmatpush1.msra.mxu0 0.0
        %6571 = vmatprep.subr.mxu0 0.0
        %6572 = vmatpush1.msra.mxu0 0.0
        %6573 = vmatprep.subr.mxu0 0.0
        %6574 = vmatpush1.msra.mxu0 0.0
        %6575 = vmatprep.subr.mxu0 0.0
        %6576 = vmatpush1.msra.mxu0 0.0
        %6577 = vmatprep.subr.mxu0 0.0
        %6578 = vmatpush1.msra.mxu0 0.0
        %6579 = vmatprep.subr.mxu0 0.0
        %6580 = vmatpush1.msra.mxu0 0.0
        %6581 = vmatprep.subr.mxu0 0.0
        %6582 = vmatpush1.msra.mxu0 0.0
        %6583 = vmatprep.subr.mxu0 0.0
        %6584 = vmatpush1.msra.mxu0 0.0
        %6585 = vmatprep.subr.mxu0 0.0
        %6586 = vmatpush1.msra.mxu0 0.0
        %6587 = vmatprep.subr.mxu0 0.0
        %6588 = vmatpush1.msra.mxu0 0.0
        %6589 = vmatprep.subr.mxu0 0.0
        %6590 = vmatpush1.msra.mxu0 0.0
        %6591 = vmatprep.subr.mxu0 0.0
        %6592 = vmatpush1.msra.mxu0 0.0
        %6593 = vmatprep.subr.mxu0 0.0
        %6594 = vmatpush1.msra.mxu0 0.0
        %6595 = vmatprep.subr.mxu0 0.0
        %6596 = vmatpush1.msra.mxu0 0.0
        %6597 = vmatprep.subr.mxu0 0.0
        %6598 = vmatpush1.msra.mxu0 0.0
        %6599 = vmatprep.subr.mxu0 0.0
        %6600 = vmatpush1.msra.mxu0 0.0
        %6601 = vmatprep.mubr.f32.mxu0 0.0
        %6602 = vmatmul.mubr.f32.gmra.mrb[0].mxu0 %v5412
        %v6603 = vpop.f32.mrb[0].mxu0
        %v6604 = vadd.f32 %v5403, %v6603
        %v6605 = vpop.f32.mrb[0].mxu0
        %6606 = vmatprep.mubr.f32.mxu0 0.0
        %6607 = vmatmul.mubr.f32.gmra.mrb[0].mxu0 %v5415
        %v6608 = vpop.f32.mrb[0].mxu0
        %v6609 = vadd.f32 %v5408, %v6608
        %v6610 = vpop.f32.mrb[0].mxu0
        %6611 = vdwg.mxu0
        %v6612 = vmax.f32 %v6459, %v6604
        %v6613 = vmax.f32 %v6464, %v6609
        %6616 = vrot.lane.b32.xlu0 %v6612, 127
        %v6617 = vpop.permute.xlu0 %6616
        %6618 = vrot.lane.b32.xlu0 %v6613, 127
        %v6619 = vpop.permute.xlu0 %6618
        %6622 = vrot.lane.b32.xlu0 %v6612, 126
        %v6623 = vpop.permute.xlu0 %6622
        %6624 = vrot.lane.b32.xlu0 %v6613, 126
        %v6625 = vpop.permute.xlu0 %6624
        %6628 = vrot.lane.b32.xlu0 %v6612, 125
        %v6629 = vpop.permute.xlu0 %6628
        %6630 = vrot.lane.b32.xlu0 %v6613, 125
        %v6631 = vpop.permute.xlu0 %6630
        %6634 = vrot.lane.b32.xlu0 %v6612, 124
        %v6635 = vpop.permute.xlu0 %6634
        %6636 = vrot.lane.b32.xlu0 %v6613, 124
        %v6637 = vpop.permute.xlu0 %6636
        %v6640 = vsel %vm1134, %v6612, %v6617
        %v6641 = vsel %vm1134, %v6613, %v6619
        %v6642 = vsel %vm1137, %v6640, %v6623
        %v6643 = vsel %vm1137, %v6641, %v6625
        %v6644 = vsel %vm1140, %v6642, %v6629
        %v6645 = vsel %vm1140, %v6643, %v6631
        %v6646 = vsel %vm1143, %v6644, %v6635
        %v6647 = vsel %vm1143, %v6645, %v6637
        %6648 = vrot.lane.b32.xlu0 %v6612, 123
        %v6649 = vpop.permute.xlu0 %6648
        %6650 = vrot.lane.b32.xlu0 %v6613, 123
        %v6651 = vpop.permute.xlu0 %6650
        %v6654 = vsel %vm1134, %v6617, %v6623
        %v6655 = vsel %vm1134, %v6619, %v6625
        %v6656 = vsel %vm1137, %v6654, %v6629
        %v6657 = vsel %vm1137, %v6655, %v6631
        %v6658 = vsel %vm1140, %v6656, %v6635
        %v6659 = vsel %vm1140, %v6657, %v6637
        %v6660 = vsel %vm1143, %v6658, %v6649
        %v6661 = vsel %vm1143, %v6659, %v6651
        %v6662 = vmax.f32 %v6646, %v6660
        %v6663 = vmax.f32 %v6647, %v6661
        %v6664 = vtanh.pop %v6662
        %v6665 = vtanh.pop %v6663
        %v6666 = vrot.slane %v2022, 7
        %v6668 = vrot.slane %v2844, 6
        %v6670 = vrot.slane %v3666, 5
        %v6672 = vrot.slane %v4488, 4
        %v6674 = vrot.slane %v5310, 3
        %v6676 = vrot.slane %v1200, 3
        %v6678 = vrot.slane %v2022, 2
        %v6680 = vrot.slane %v2844, 1
        %v6682 = vrot.slane %v4488, 7
        %v6684 = vrot.slane %v5310, 6
        %v6686 = vrot.slane %v1200, 6
        %v6688 = vrot.slane %v2022, 5
        %v6690 = vrot.slane %v2844, 4
        %v6692 = vrot.slane %v3666, 3
        %v6694 = vsel %vm1037, %v1200, %v6666
        %v6695 = vsel %vm1039, %v6694, %v6668
        %v6696 = vsel %vm1041, %v6695, %v6670
        %v6697 = vsel %vm879, %v6696, %v6672
        %v6698 = vsel %vm739, %v6697, %v6674
        %v6699 = vsel %vm599, %v6698, %v6676
        %v6700 = vsel %vm459, %v6699, %v6678
        %v6701 = vsel %vm1037, %v6680, %v3666
        %v6702 = vsel %vm1039, %v6701, %v6682
        %v6703 = vsel %vm1041, %v6702, %v6684
        %v6704 = vsel %vm879, %v6703, %v6686
        %v6705 = vsel %vm739, %v6704, %v6688
        %v6706 = vsel %vm599, %v6705, %v6690
        %v6707 = vsel %vm459, %v6706, %v6692
        %v6708 = vrot.slane %v4488, 2
        %v6710 = vrot.slane %v5310, 1
        %v6712 = vsel %vm1037, %v6708, %v6710
        %v6716 = vrot.slane %v6700, 6
        %v6717 = vrot.slane %v6707, 6
        %v6718 = vsel %vm1039, %v6716, %v6717
        %v6719 = vrot.slane %v6712, 6
        %v6720 = vsel %vm1039, %v6717, %v6719
        %6721 = vrot.lane.b32.xlu0 %v6716, 127
        %v6722 = vpop.permute.xlu0 %6721
        %6723 = vrot.lane.b32.xlu0 %v6718, 127
        %v6724 = vpop.permute.xlu0 %6723
        %6725 = vrot.lane.b32.xlu0 %v6720, 127
        %v6726 = vpop.permute.xlu0 %6725
        %v6730 = vrot.slane %v6700, 4
        %v6731 = vrot.slane %v6707, 4
        %v6732 = vsel %vm879, %v6730, %v6731
        %v6733 = vrot.slane %v6712, 4
        %v6734 = vsel %vm879, %v6731, %v6733
        %6735 = vrot.lane.b32.xlu0 %v6730, 126
        %v6736 = vpop.permute.xlu0 %6735
        %6737 = vrot.lane.b32.xlu0 %v6732, 126
        %v6738 = vpop.permute.xlu0 %6737
        %6739 = vrot.lane.b32.xlu0 %v6734, 126
        %v6740 = vpop.permute.xlu0 %6739
        %v6743 = vsel %vm1039, %v6712, %v6722
        %v6744 = vsel %vm879, %v6726, %v6736
        %v6745 = vsel %vm599, %v6740, 0
        %6747 = vmatprep.subr.mxu0 0.0
        %6748 = vmatpush1.msra.mxu0 %v6700
        %6749 = vmatprep.subr.mxu0 0.0
        %6750 = vmatpush1.msra.mxu0 %v6707
        %6751 = vmatprep.subr.mxu0 0.0
        %6752 = vmatpush1.msra.mxu0 %v6743
        %6753 = vmatprep.subr.mxu0 0.0
        %6754 = vmatpush1.msra.mxu0 %v6724
        %6755 = vmatprep.subr.mxu0 0.0
        %6756 = vmatpush1.msra.mxu0 %v6744
        %6757 = vmatprep.subr.mxu0 0.0
        %6758 = vmatpush1.msra.mxu0 %v6738
        %6759 = vmatprep.subr.mxu0 0.0
        %6760 = vmatpush1.msra.mxu0 %v6745
        %6761 = vmatprep.subr.mxu0 0.0
        %6762 = vmatpush1.msra.mxu0 0.0
        %6763 = vmatprep.subr.mxu0 0.0
        %6764 = vmatpush1.msra.mxu0 0.0
        %6765 = vmatprep.subr.mxu0 0.0
        %6766 = vmatpush1.msra.mxu0 0.0
        %6767 = vmatprep.subr.mxu0 0.0
        %6768 = vmatpush1.msra.mxu0 0.0
        %6769 = vmatprep.subr.mxu0 0.0
        %6770 = vmatpush1.msra.mxu0 0.0
        %6771 = vmatprep.subr.mxu0 0.0
        %6772 = vmatpush1.msra.mxu0 0.0
        %6773 = vmatprep.subr.mxu0 0.0
        %6774 = vmatpush1.msra.mxu0 0.0
        %6775 = vmatprep.subr.mxu0 0.0
        %6776 = vmatpush1.msra.mxu0 0.0
        %6777 = vmatprep.subr.mxu0 0.0
        %6778 = vmatpush1.msra.mxu0 0.0
        %6779 = vmatprep.subr.mxu0 0.0
        %6780 = vmatpush1.msra.mxu0 0.0
        %6781 = vmatprep.subr.mxu0 0.0
        %6782 = vmatpush1.msra.mxu0 0.0
        %6783 = vmatprep.subr.mxu0 0.0
        %6784 = vmatpush1.msra.mxu0 0.0
        %6785 = vmatprep.subr.mxu0 0.0
        %6786 = vmatpush1.msra.mxu0 0.0
        %6787 = vmatprep.subr.mxu0 0.0
        %6788 = vmatpush1.msra.mxu0 0.0
        %6789 = vmatprep.subr.mxu0 0.0
        %6790 = vmatpush1.msra.mxu0 0.0
        %6791 = vmatprep.subr.mxu0 0.0
        %6792 = vmatpush1.msra.mxu0 0.0
        %6793 = vmatprep.subr.mxu0 0.0
        %6794 = vmatpush1.msra.mxu0 0.0
        %6795 = vmatprep.subr.mxu0 0.0
        %6796 = vmatpush1.msra.mxu0 0.0
        %6797 = vmatprep.subr.mxu0 0.0
        %6798 = vmatpush1.msra.mxu0 0.0
        %6799 = vmatprep.subr.mxu0 0.0
        %6800 = vmatpush1.msra.mxu0 0.0
        %6801 = vmatprep.subr.mxu0 0.0
        %6802 = vmatpush1.msra.mxu0 0.0
        %6803 = vmatprep.subr.mxu0 0.0
        %6804 = vmatpush1.msra.mxu0 0.0
        %6805 = vmatprep.subr.mxu0 0.0
        %6806 = vmatpush1.msra.mxu0 0.0
        %6807 = vmatprep.subr.mxu0 0.0
        %6808 = vmatpush1.msra.mxu0 0.0
        %6809 = vmatprep.subr.mxu0 0.0
        %6810 = vmatpush1.msra.mxu0 0.0
        %6811 = vmatprep.mubr.f32.mxu0 0.0
        %6812 = vmatmul.mubr.f32.gmra.mrb[0].mxu0 %v5412
        %v6813 = vpop.f32.mrb[0].mxu0
        %v6814 = vadd.f32 %v5403, %v6813
        %v6815 = vpop.f32.mrb[0].mxu0
        %6816 = vmatprep.mubr.f32.mxu0 0.0
        %6817 = vmatmul.mubr.f32.gmra.mrb[0].mxu0 %v5415
        %v6818 = vpop.f32.mrb[0].mxu0
        %v6819 = vadd.f32 %v5408, %v6818
        %v6820 = vpop.f32.mrb[0].mxu0
        %6821 = vdwg.mxu0
        %v6822 = vrot.slane %v1200, 1
        %v6824 = vrot.slane %v2844, 7
        %v6826 = vrot.slane %v3666, 6
        %v6828 = vrot.slane %v4488, 5
        %v6830 = vrot.slane %v5310, 4
        %v6832 = vrot.slane %v1200, 7
        %v6834 = vrot.slane %v2022, 6
        %v6836 = vrot.slane %v2844, 5
        %v6838 = vrot.slane %v3666, 4
        %v6840 = vsel %vm1037, %v6822, %v2022
        %v6841 = vsel %vm1039, %v6840, %v6824
        %v6842 = vsel %vm1041, %v6841, %v6826
        %v6843 = vsel %vm879, %v6842, %v6828
        %v6844 = vsel %vm739, %v6843, %v6830
        %v6845 = vsel %vm599, %v6844, %v6329
        %v6846 = vsel %vm459, %v6845, %v6332
        %v6847 = vsel %vm1037, %v6335, %v6338
        %v6848 = vsel %vm1039, %v6847, %v4488
        %v6849 = vsel %vm1041, %v6848, %v6355
        %v6850 = vsel %vm879, %v6849, %v6832
        %v6851 = vsel %vm739, %v6850, %v6834
        %v6852 = vsel %vm599, %v6851, %v6836
        %v6853 = vsel %vm459, %v6852, %v6838
        %v6854 = vrot.slane %v4488, 3
        %v6856 = vrot.slane %v5310, 2
        %v6858 = vsel %vm1037, %v6854, %v6856
        %v6862 = vrot.slane %v6846, 6
        %v6863 = vrot.slane %v6853, 6
        %v6864 = vsel %vm1039, %v6862, %v6863
        %v6865 = vrot.slane %v6858, 6
        %v6866 = vsel %vm1039, %v6863, %v6865
        %6867 = vrot.lane.b32.xlu0 %v6862, 127
        %v6868 = vpop.permute.xlu0 %6867
        %6869 = vrot.lane.b32.xlu0 %v6864, 127
        %v6870 = vpop.permute.xlu0 %6869
        %6871 = vrot.lane.b32.xlu0 %v6866, 127
        %v6872 = vpop.permute.xlu0 %6871
        %v6876 = vrot.slane %v6846, 4
        %v6877 = vrot.slane %v6853, 4
        %v6878 = vsel %vm879, %v6876, %v6877
        %v6879 = vrot.slane %v6858, 4
        %v6880 = vsel %vm879, %v6877, %v6879
        %6881 = vrot.lane.b32.xlu0 %v6876, 126
        %v6882 = vpop.permute.xlu0 %6881
        %6883 = vrot.lane.b32.xlu0 %v6878, 126
        %v6884 = vpop.permute.xlu0 %6883
        %6885 = vrot.lane.b32.xlu0 %v6880, 126
        %v6886 = vpop.permute.xlu0 %6885
        %v6889 = vsel %vm1039, %v6858, %v6868
        %v6890 = vsel %vm879, %v6872, %v6882
        %v6891 = vsel %vm599, %v6886, 0
        %6893 = vmatprep.subr.mxu0 0.0
        %6894 = vmatpush1.msra.mxu0 %v6846
        %6895 = vmatprep.subr.mxu0 0.0
        %6896 = vmatpush1.msra.mxu0 %v6853
        %6897 = vmatprep.subr.mxu0 0.0
        %6898 = vmatpush1.msra.mxu0 %v6889
        %6899 = vmatprep.subr.mxu0 0.0
        %6900 = vmatpush1.msra.mxu0 %v6870
        %6901 = vmatprep.subr.mxu0 0.0
        %6902 = vmatpush1.msra.mxu0 %v6890
        %6903 = vmatprep.subr.mxu0 0.0
        %6904 = vmatpush1.msra.mxu0 %v6884
        %6905 = vmatprep.subr.mxu0 0.0
        %6906 = vmatpush1.msra.mxu0 %v6891
        %6907 = vmatprep.subr.mxu0 0.0
        %6908 = vmatpush1.msra.mxu0 0.0
        %6909 = vmatprep.subr.mxu0 0.0
        %6910 = vmatpush1.msra.mxu0 0.0
        %6911 = vmatprep.subr.mxu0 0.0
        %6912 = vmatpush1.msra.mxu0 0.0
        %6913 = vmatprep.subr.mxu0 0.0
        %6914 = vmatpush1.msra.mxu0 0.0
        %6915 = vmatprep.subr.mxu0 0.0
        %6916 = vmatpush1.msra.mxu0 0.0
        %6917 = vmatprep.subr.mxu0 0.0
        %6918 = vmatpush1.msra.mxu0 0.0
        %6919 = vmatprep.subr.mxu0 0.0
        %6920 = vmatpush1.msra.mxu0 0.0
        %6921 = vmatprep.subr.mxu0 0.0
        %6922 = vmatpush1.msra.mxu0 0.0
        %6923 = vmatprep.subr.mxu0 0.0
        %6924 = vmatpush1.msra.mxu0 0.0
        %6925 = vmatprep.subr.mxu0 0.0
        %6926 = vmatpush1.msra.mxu0 0.0
        %6927 = vmatprep.subr.mxu0 0.0
        %6928 = vmatpush1.msra.mxu0 0.0
        %6929 = vmatprep.subr.mxu0 0.0
        %6930 = vmatpush1.msra.mxu0 0.0
        %6931 = vmatprep.subr.mxu0 0.0
        %6932 = vmatpush1.msra.mxu0 0.0
        %6933 = vmatprep.subr.mxu0 0.0
        %6934 = vmatpush1.msra.mxu0 0.0
        %6935 = vmatprep.subr.mxu0 0.0
        %6936 = vmatpush1.msra.mxu0 0.0
        %6937 = vmatprep.subr.mxu0 0.0
        %6938 = vmatpush1.msra.mxu0 0.0
        %6939 = vmatprep.subr.mxu0 0.0
        %6940 = vmatpush1.msra.mxu0 0.0
        %6941 = vmatprep.subr.mxu0 0.0
        %6942 = vmatpush1.msra.mxu0 0.0
        %6943 = vmatprep.subr.mxu0 0.0
        %6944 = vmatpush1.msra.mxu0 0.0
        %6945 = vmatprep.subr.mxu0 0.0
        %6946 = vmatpush1.msra.mxu0 0.0
        %6947 = vmatprep.subr.mxu0 0.0
        %6948 = vmatpush1.msra.mxu0 0.0
        %6949 = vmatprep.subr.mxu0 0.0
        %6950 = vmatpush1.msra.mxu0 0.0
        %6951 = vmatprep.subr.mxu0 0.0
        %6952 = vmatpush1.msra.mxu0 0.0
        %6953 = vmatprep.subr.mxu0 0.0
        %6954 = vmatpush1.msra.mxu0 0.0
        %6955 = vmatprep.subr.mxu0 0.0
        %6956 = vmatpush1.msra.mxu0 0.0
        %6957 = vmatprep.mubr.f32.mxu0 0.0
        %6958 = vmatmul.mubr.f32.gmra.mrb[0].mxu0 %v5412
        %v6959 = vpop.f32.mrb[0].mxu0
        %v6960 = vadd.f32 %v5403, %v6959
        %v6961 = vpop.f32.mrb[0].mxu0
        %6962 = vmatprep.mubr.f32.mxu0 0.0
        %6963 = vmatmul.mubr.f32.gmra.mrb[0].mxu0 %v5415
        %v6964 = vpop.f32.mrb[0].mxu0
        %v6965 = vadd.f32 %v5408, %v6964
        %v6966 = vpop.f32.mrb[0].mxu0
        %6967 = vdwg.mxu0
        %v6968 = vmax.f32 %v6814, %v6960
        %v6969 = vmax.f32 %v6819, %v6965
        %6972 = vrot.lane.b32.xlu0 %v6968, 127
        %v6973 = vpop.permute.xlu0 %6972
        %6974 = vrot.lane.b32.xlu0 %v6969, 127
        %v6975 = vpop.permute.xlu0 %6974
        %6978 = vrot.lane.b32.xlu0 %v6968, 126
        %v6979 = vpop.permute.xlu0 %6978
        %6980 = vrot.lane.b32.xlu0 %v6969, 126
        %v6981 = vpop.permute.xlu0 %6980
        %6984 = vrot.lane.b32.xlu0 %v6968, 125
        %v6985 = vpop.permute.xlu0 %6984
        %6986 = vrot.lane.b32.xlu0 %v6969, 125
        %v6987 = vpop.permute.xlu0 %6986
        %6990 = vrot.lane.b32.xlu0 %v6968, 124
        %v6991 = vpop.permute.xlu0 %6990
        %6992 = vrot.lane.b32.xlu0 %v6969, 124
        %v6993 = vpop.permute.xlu0 %6992
        %v6996 = vsel %vm1134, %v6968, %v6973
        %v6997 = vsel %vm1134, %v6969, %v6975
        %v6998 = vsel %vm1137, %v6996, %v6979
        %v6999 = vsel %vm1137, %v6997, %v6981
        %v7000 = vsel %vm1140, %v6998, %v6985
        %v7001 = vsel %vm1140, %v6999, %v6987
        %v7002 = vsel %vm1143, %v7000, %v6991
        %v7003 = vsel %vm1143, %v7001, %v6993
        %7004 = vrot.lane.b32.xlu0 %v6968, 123
        %v7005 = vpop.permute.xlu0 %7004
        %7006 = vrot.lane.b32.xlu0 %v6969, 123
        %v7007 = vpop.permute.xlu0 %7006
        %v7010 = vsel %vm1134, %v6973, %v6979
        %v7011 = vsel %vm1134, %v6975, %v6981
        %v7012 = vsel %vm1137, %v7010, %v6985
        %v7013 = vsel %vm1137, %v7011, %v6987
        %v7014 = vsel %vm1140, %v7012, %v6991
        %v7015 = vsel %vm1140, %v7013, %v6993
        %v7016 = vsel %vm1143, %v7014, %v7005
        %v7017 = vsel %vm1143, %v7015, %v7007
        %v7018 = vmax.f32 %v7002, %v7016
        %v7019 = vmax.f32 %v7003, %v7017
        %v7020 = vtanh.pop %v7018
        %v7021 = vtanh.pop %v7019
        %7024 = vrot.lane.b32.xlu0 %v6024, 5
        %v7025 = vpop.permute.xlu0 %7024
        %7026 = vrot.lane.b32.xlu0 %v6025, 5
        %v7027 = vpop.permute.xlu0 %7026
        %7032 = vrot.lane.b32.xlu0 %v6326, 10
        %v7033 = vpop.permute.xlu0 %7032
        %7034 = vrot.lane.b32.xlu0 %v6327, 10
        %v7035 = vpop.permute.xlu0 %7034
        %7040 = vrot.lane.b32.xlu0 %v6664, 15
        %v7041 = vpop.permute.xlu0 %7040
        %7042 = vrot.lane.b32.xlu0 %v6665, 15
        %v7043 = vpop.permute.xlu0 %7042
        %7048 = vrot.lane.b32.xlu0 %v7020, 20
        %v7049 = vpop.permute.xlu0 %7048
        %7050 = vrot.lane.b32.xlu0 %v7021, 20
        %v7051 = vpop.permute.xlu0 %7050
        %v7054 = vsel %vm1146, %v5702, %v7025
        %v7055 = vsel %vm1146, %v5703, %v7027
        %v7056 = vsel %vm1161, %v7054, %v7033
        %v7057 = vsel %vm1161, %v7055, %v7035
        %vm7058 = vcmask 121856
        %v7059 = vsel %vm7058, %v7056, %v7041
        %v7060 = vsel %vm7058, %v7057, %v7043
        %vm7061 = vcmask 162816
        %v7062 = vsel %vm7061, %v7059, %v7049
        %v7063 = vsel %vm7061, %v7060, %v7051
        %v7064 = vld [vmem:[%s6] sm:$0x3]
        %v7065 = vld [vmem:[%s5] sm:$0xff]
        %v7066 = vld [vmem:[%s5 + $0x8] sm:$0xff]
        %v7067 = vld [vmem:[%s5 + $0x10] sm:$0xff]
        %v7068 = vld [vmem:[%s5 + $0x18] sm:$0xff]
        %v7069 = vld [vmem:[%s5 + $0x20] sm:$0xff]
        %v7070 = vld [vmem:[%s5 + $0x28] sm:$0xff]
        %v7071 = vld [vmem:[%s5 + $0x30] sm:$0x1]
        %v7072 = vld [vmem:[%s5 + $0x38] sm:$0x1]
        %vm7073 = vcmask 203776
        %v7075 = vsel %vm7073, %v7062, 0
        %v7078 = vsel %vm1037, %v7071, 0
        %v7081 = vsel %vm1037, %v7072, 0
        %7083 = vmatprep.subr.mxu0 %v7066
        %7084 = vmatpush1.msra.mxu0 %v7065
        %7085 = vmatprep.subr.mxu0 %v7068
        %7086 = vmatpush1.msra.mxu0 %v7067
        %7087 = vmatprep.subr.mxu0 %v7070
        %7088 = vmatpush1.msra.mxu0 %v7069
        %7089 = vmatprep.subr.mxu0 %v7081
        %7090 = vmatpush1.msra.mxu0 %v7078
        %7091 = vmatprep.subr.mxu0 0.0
        %7092 = vmatpush1.msra.mxu0 0.0
        %7093 = vmatprep.subr.mxu0 0.0
        %7094 = vmatpush1.msra.mxu0 0.0
        %7095 = vmatprep.subr.mxu0 0.0
        %7096 = vmatpush1.msra.mxu0 0.0
        %7097 = vmatprep.subr.mxu0 0.0
        %7098 = vmatpush1.msra.mxu0 0.0
        %7099 = vmatprep.subr.mxu0 0.0
        %7100 = vmatpush1.msra.mxu0 0.0
        %7101 = vmatprep.subr.mxu0 0.0
        %7102 = vmatpush1.msra.mxu0 0.0
        %7103 = vmatprep.subr.mxu0 0.0
        %7104 = vmatpush1.msra.mxu0 0.0
        %7105 = vmatprep.subr.mxu0 0.0
        %7106 = vmatpush1.msra.mxu0 0.0
        %7107 = vmatprep.subr.mxu0 0.0
        %7108 = vmatpush1.msra.mxu0 0.0
        %7109 = vmatprep.subr.mxu0 0.0
        %7110 = vmatpush1.msra.mxu0 0.0
        %7111 = vmatprep.subr.mxu0 0.0
        %7112 = vmatpush1.msra.mxu0 0.0
        %7113 = vmatprep.subr.mxu0 0.0
        %7114 = vmatpush1.msra.mxu0 0.0
        %7115 = vmatprep.subr.mxu0 0.0
        %7116 = vmatpush1.msra.mxu0 0.0
        %7117 = vmatprep.subr.mxu0 0.0
        %7118 = vmatpush1.msra.mxu0 0.0
        %7119 = vmatprep.subr.mxu0 0.0
        %7120 = vmatpush1.msra.mxu0 0.0
        %7121 = vmatprep.subr.mxu0 0.0
        %7122 = vmatpush1.msra.mxu0 0.0
        %7123 = vmatprep.subr.mxu0 0.0
        %7124 = vmatpush1.msra.mxu0 0.0
        %7125 = vmatprep.subr.mxu0 0.0
        %7126 = vmatpush1.msra.mxu0 0.0
        %7127 = vmatprep.subr.mxu0 0.0
        %7128 = vmatpush1.msra.mxu0 0.0
        %7129 = vmatprep.subr.mxu0 0.0
        %7130 = vmatpush1.msra.mxu0 0.0
        %7131 = vmatprep.subr.mxu0 0.0
        %7132 = vmatpush1.msra.mxu0 0.0
        %7133 = vmatprep.subr.mxu0 0.0
        %7134 = vmatpush1.msra.mxu0 0.0
        %7135 = vmatprep.subr.mxu0 0.0
        %7136 = vmatpush1.msra.mxu0 0.0
        %7137 = vmatprep.subr.mxu0 0.0
        %7138 = vmatpush1.msra.mxu0 0.0
        %7139 = vmatprep.subr.mxu0 0.0
        %7140 = vmatpush1.msra.mxu0 0.0
        %7141 = vmatprep.subr.mxu0 0.0
        %7142 = vmatpush1.msra.mxu0 0.0
        %7143 = vmatprep.subr.mxu0 0.0
        %7144 = vmatpush1.msra.mxu0 0.0
        %7145 = vmatprep.subr.mxu0 0.0
        %7146 = vmatpush1.msra.mxu0 0.0
        %7147 = vmatprep.mubr.f32.mxu0 0.0
        %7148 = vmatmul.mubr.f32.gmra.mrb[0].mxu0 %v7075
        %v7149 = vpop.f32.mrb[0].mxu0
        %v7150 = vadd.f32 0.0, %v7149
        %v7151 = vpop.f32.mrb[0].mxu0
        %v7152 = vadd.f32 0.0, %v7151
        %7153 = vdwg.mxu0
        %v7156 = vcombine.low %v7150, %v7152
        %v7158 = vunpack.c.l.s4 1966171168
        %v7159 = vunpack.c.0.s8 %v7158
        %v7160 = vlaneseq
        %v7161 = vshrl.u32 %v7160, 7
        %v7162 = vsub.s32 %v7159, %v7161
        %v7163 = vrot.slane %v7156, %v7162
        %v7165 = vunpack.c.l.s4 1966171168
        %v7166 = vunpack.c.0.s8 %v7165
        %v7167 = vlaneseq
        %v7168 = vshrl.u32 %v7167, 7
        %v7169 = vsub.s32 %v7166, %v7168
        %v7170 = vrot.slane %v7163, %v7169
        %v7172 = vadd.f32 %v7064, %v7170
        %s7173 = scalar_lea.vmem %s5, 64
        %v7174 = vld [vmem:[%s7173] sm:$0xff]
        %v7175 = vld [vmem:[%s7173 + $0x8] sm:$0xff]
        %v7176 = vld [vmem:[%s7173 + $0x10] sm:$0xff]
        %v7177 = vld [vmem:[%s7173 + $0x18] sm:$0xff]
        %v7178 = vld [vmem:[%s7173 + $0x20] sm:$0xff]
        %v7179 = vld [vmem:[%s7173 + $0x28] sm:$0xff]
        %v7180 = vld [vmem:[%s7173 + $0x30] sm:$0x1]
        %v7181 = vld [vmem:[%s7173 + $0x38] sm:$0x1]
        %v7182 = vrot.slane %v7062, 1
        %v7183 = vsel %vm7073, %v7182, 0
        %v7186 = vsel %vm1037, %v7180, 0
        %v7189 = vsel %vm1037, %v7181, 0
        %7191 = vmatprep.subr.mxu0 %v7175
        %7192 = vmatpush1.msra.mxu0 %v7174
        %7193 = vmatprep.subr.mxu0 %v7177
        %7194 = vmatpush1.msra.mxu0 %v7176
        %7195 = vmatprep.subr.mxu0 %v7179
        %7196 = vmatpush1.msra.mxu0 %v7178
        %7197 = vmatprep.subr.mxu0 %v7189
        %7198 = vmatpush1.msra.mxu0 %v7186
        %7199 = vmatprep.subr.mxu0 0.0
        %7200 = vmatpush1.msra.mxu0 0.0
        %7201 = vmatprep.subr.mxu0 0.0
        %7202 = vmatpush1.msra.mxu0 0.0
        %7203 = vmatprep.subr.mxu0 0.0
        %7204 = vmatpush1.msra.mxu0 0.0
        %7205 = vmatprep.subr.mxu0 0.0
        %7206 = vmatpush1.msra.mxu0 0.0
        %7207 = vmatprep.subr.mxu0 0.0
        %7208 = vmatpush1.msra.mxu0 0.0
        %7209 = vmatprep.subr.mxu0 0.0
        %7210 = vmatpush1.msra.mxu0 0.0
        %7211 = vmatprep.subr.mxu0 0.0
        %7212 = vmatpush1.msra.mxu0 0.0
        %7213 = vmatprep.subr.mxu0 0.0
        %7214 = vmatpush1.msra.mxu0 0.0
        %7215 = vmatprep.subr.mxu0 0.0
        %7216 = vmatpush1.msra.mxu0 0.0
        %7217 = vmatprep.subr.mxu0 0.0
        %7218 = vmatpush1.msra.mxu0 0.0
        %7219 = vmatprep.subr.mxu0 0.0
        %7220 = vmatpush1.msra.mxu0 0.0
        %7221 = vmatprep.subr.mxu0 0.0
        %7222 = vmatpush1.msra.mxu0 0.0
        %7223 = vmatprep.subr.mxu0 0.0
        %7224 = vmatpush1.msra.mxu0 0.0
        %7225 = vmatprep.subr.mxu0 0.0
        %7226 = vmatpush1.msra.mxu0 0.0
        %7227 = vmatprep.subr.mxu0 0.0
        %7228 = vmatpush1.msra.mxu0 0.0
        %7229 = vmatprep.subr.mxu0 0.0
        %7230 = vmatpush1.msra.mxu0 0.0
        %7231 = vmatprep.subr.mxu0 0.0
        %7232 = vmatpush1.msra.mxu0 0.0
        %7233 = vmatprep.subr.mxu0 0.0
        %7234 = vmatpush1.msra.mxu0 0.0
        %7235 = vmatprep.subr.mxu0 0.0
        %7236 = vmatpush1.msra.mxu0 0.0
        %7237 = vmatprep.subr.mxu0 0.0
        %7238 = vmatpush1.msra.mxu0 0.0
        %7239 = vmatprep.subr.mxu0 0.0
        %7240 = vmatpush1.msra.mxu0 0.0
        %7241 = vmatprep.subr.mxu0 0.0
        %7242 = vmatpush1.msra.mxu0 0.0
        %7243 = vmatprep.subr.mxu0 0.0
        %7244 = vmatpush1.msra.mxu0 0.0
        %7245 = vmatprep.subr.mxu0 0.0
        %7246 = vmatpush1.msra.mxu0 0.0
        %7247 = vmatprep.subr.mxu0 0.0
        %7248 = vmatpush1.msra.mxu0 0.0
        %7249 = vmatprep.subr.mxu0 0.0
        %7250 = vmatpush1.msra.mxu0 0.0
        %7251 = vmatprep.subr.mxu0 0.0
        %7252 = vmatpush1.msra.mxu0 0.0
        %7253 = vmatprep.subr.mxu0 0.0
        %7254 = vmatpush1.msra.mxu0 0.0
        %7255 = vmatprep.mubr.f32.mxu0 0.0
        %7256 = vmatmul.mubr.f32.gmra.mrb[0].mxu0 %v7183
        %v7257 = vpop.f32.mrb[0].mxu0
        %v7258 = vadd.f32 0.0, %v7257
        %v7259 = vpop.f32.mrb[0].mxu0
        %v7260 = vadd.f32 0.0, %v7259
        %7261 = vdwg.mxu0
        %v7264 = vcombine.low %v7258, %v7260
        %v7266 = vunpack.c.l.s4 1966171168
        %v7267 = vunpack.c.0.s8 %v7266
        %v7268 = vlaneseq
        %v7269 = vshrl.u32 %v7268, 7
        %v7270 = vsub.s32 %v7267, %v7269
        %v7271 = vrot.slane %v7264, %v7270
        %v7273 = vunpack.c.l.s4 1966171168
        %v7274 = vunpack.c.0.s8 %v7273
        %v7275 = vlaneseq
        %v7276 = vshrl.u32 %v7275, 7
        %v7277 = vsub.s32 %v7274, %v7276
        %v7278 = vrot.slane %v7271, %v7277
        %v7280 = vadd.f32 %v7172, %v7278
        %s7281 = scalar_lea.vmem %s5, 128
        %v7282 = vld [vmem:[%s7281] sm:$0xff]
        %v7283 = vld [vmem:[%s7281 + $0x8] sm:$0xff]
        %v7284 = vld [vmem:[%s7281 + $0x10] sm:$0xff]
        %v7285 = vld [vmem:[%s7281 + $0x18] sm:$0xff]
        %v7286 = vld [vmem:[%s7281 + $0x20] sm:$0xff]
        %v7287 = vld [vmem:[%s7281 + $0x28] sm:$0xff]
        %v7288 = vld [vmem:[%s7281 + $0x30] sm:$0x1]
        %v7289 = vld [vmem:[%s7281 + $0x38] sm:$0x1]
        %v7290 = vrot.slane %v7062, 2
        %v7291 = vsel %vm7073, %v7290, 0
        %v7294 = vsel %vm1037, %v7288, 0
        %v7297 = vsel %vm1037, %v7289, 0
        %7299 = vmatprep.subr.mxu0 %v7283
        %7300 = vmatpush1.msra.mxu0 %v7282
        %7301 = vmatprep.subr.mxu0 %v7285
        %7302 = vmatpush1.msra.mxu0 %v7284
        %7303 = vmatprep.subr.mxu0 %v7287
        %7304 = vmatpush1.msra.mxu0 %v7286
        %7305 = vmatprep.subr.mxu0 %v7297
        %7306 = vmatpush1.msra.mxu0 %v7294
        %7307 = vmatprep.subr.mxu0 0.0
        %7308 = vmatpush1.msra.mxu0 0.0
        %7309 = vmatprep.subr.mxu0 0.0
        %7310 = vmatpush1.msra.mxu0 0.0
        %7311 = vmatprep.subr.mxu0 0.0
        %7312 = vmatpush1.msra.mxu0 0.0
        %7313 = vmatprep.subr.mxu0 0.0
        %7314 = vmatpush1.msra.mxu0 0.0
        %7315 = vmatprep.subr.mxu0 0.0
        %7316 = vmatpush1.msra.mxu0 0.0
        %7317 = vmatprep.subr.mxu0 0.0
        %7318 = vmatpush1.msra.mxu0 0.0
        %7319 = vmatprep.subr.mxu0 0.0
        %7320 = vmatpush1.msra.mxu0 0.0
        %7321 = vmatprep.subr.mxu0 0.0
        %7322 = vmatpush1.msra.mxu0 0.0
        %7323 = vmatprep.subr.mxu0 0.0
        %7324 = vmatpush1.msra.mxu0 0.0
        %7325 = vmatprep.subr.mxu0 0.0
        %7326 = vmatpush1.msra.mxu0 0.0
        %7327 = vmatprep.subr.mxu0 0.0
        %7328 = vmatpush1.msra.mxu0 0.0
        %7329 = vmatprep.subr.mxu0 0.0
        %7330 = vmatpush1.msra.mxu0 0.0
        %7331 = vmatprep.subr.mxu0 0.0
        %7332 = vmatpush1.msra.mxu0 0.0
        %7333 = vmatprep.subr.mxu0 0.0
        %7334 = vmatpush1.msra.mxu0 0.0
        %7335 = vmatprep.subr.mxu0 0.0
        %7336 = vmatpush1.msra.mxu0 0.0
        %7337 = vmatprep.subr.mxu0 0.0
        %7338 = vmatpush1.msra.mxu0 0.0
        %7339 = vmatprep.subr.mxu0 0.0
        %7340 = vmatpush1.msra.mxu0 0.0
        %7341 = vmatprep.subr.mxu0 0.0
        %7342 = vmatpush1.msra.mxu0 0.0
        %7343 = vmatprep.subr.mxu0 0.0
        %7344 = vmatpush1.msra.mxu0 0.0
        %7345 = vmatprep.subr.mxu0 0.0
        %7346 = vmatpush1.msra.mxu0 0.0
        %7347 = vmatprep.subr.mxu0 0.0
        %7348 = vmatpush1.msra.mxu0 0.0
        %7349 = vmatprep.subr.mxu0 0.0
        %7350 = vmatpush1.msra.mxu0 0.0
        %7351 = vmatprep.subr.mxu0 0.0
        %7352 = vmatpush1.msra.mxu0 0.0
        %7353 = vmatprep.subr.mxu0 0.0
        %7354 = vmatpush1.msra.mxu0 0.0
        %7355 = vmatprep.subr.mxu0 0.0
        %7356 = vmatpush1.msra.mxu0 0.0
        %7357 = vmatprep.subr.mxu0 0.0
        %7358 = vmatpush1.msra.mxu0 0.0
        %7359 = vmatprep.subr.mxu0 0.0
        %7360 = vmatpush1.msra.mxu0 0.0
        %7361 = vmatprep.subr.mxu0 0.0
        %7362 = vmatpush1.msra.mxu0 0.0
        %7363 = vmatprep.mubr.f32.mxu0 0.0
        %7364 = vmatmul.mubr.f32.gmra.mrb[0].mxu0 %v7291
        %v7365 = vpop.f32.mrb[0].mxu0
        %v7366 = vadd.f32 0.0, %v7365
        %v7367 = vpop.f32.mrb[0].mxu0
        %v7368 = vadd.f32 0.0, %v7367
        %7369 = vdwg.mxu0
        %v7372 = vcombine.low %v7366, %v7368
        %v7374 = vunpack.c.l.s4 1966171168
        %v7375 = vunpack.c.0.s8 %v7374
        %v7376 = vlaneseq
        %v7377 = vshrl.u32 %v7376, 7
        %v7378 = vsub.s32 %v7375, %v7377
        %v7379 = vrot.slane %v7372, %v7378
        %v7381 = vunpack.c.l.s4 1966171168
        %v7382 = vunpack.c.0.s8 %v7381
        %v7383 = vlaneseq
        %v7384 = vshrl.u32 %v7383, 7
        %v7385 = vsub.s32 %v7382, %v7384
        %v7386 = vrot.slane %v7379, %v7385
        %v7388 = vadd.f32 %v7280, %v7386
        %s7389 = scalar_lea.vmem %s5, 192
        %v7390 = vld [vmem:[%s7389] sm:$0xff]
        %v7391 = vld [vmem:[%s7389 + $0x8] sm:$0xff]
        %v7392 = vld [vmem:[%s7389 + $0x10] sm:$0xff]
        %v7393 = vld [vmem:[%s7389 + $0x18] sm:$0xff]
        %v7394 = vld [vmem:[%s7389 + $0x20] sm:$0xff]
        %v7395 = vld [vmem:[%s7389 + $0x28] sm:$0xff]
        %v7396 = vld [vmem:[%s7389 + $0x30] sm:$0x1]
        %v7397 = vld [vmem:[%s7389 + $0x38] sm:$0x1]
        %v7398 = vrot.slane %v7062, 3
        %v7399 = vsel %vm7073, %v7398, 0
        %v7402 = vsel %vm1037, %v7396, 0
        %v7405 = vsel %vm1037, %v7397, 0
        %7407 = vmatprep.subr.mxu0 %v7391
        %7408 = vmatpush1.msra.mxu0 %v7390
        %7409 = vmatprep.subr.mxu0 %v7393
        %7410 = vmatpush1.msra.mxu0 %v7392
        %7411 = vmatprep.subr.mxu0 %v7395
        %7412 = vmatpush1.msra.mxu0 %v7394
        %7413 = vmatprep.subr.mxu0 %v7405
        %7414 = vmatpush1.msra.mxu0 %v7402
        %7415 = vmatprep.subr.mxu0 0.0
        %7416 = vmatpush1.msra.mxu0 0.0
        %7417 = vmatprep.subr.mxu0 0.0
        %7418 = vmatpush1.msra.mxu0 0.0
        %7419 = vmatprep.subr.mxu0 0.0
        %7420 = vmatpush1.msra.mxu0 0.0
        %7421 = vmatprep.subr.mxu0 0.0
        %7422 = vmatpush1.msra.mxu0 0.0
        %7423 = vmatprep.subr.mxu0 0.0
        %7424 = vmatpush1.msra.mxu0 0.0
        %7425 = vmatprep.subr.mxu0 0.0
        %7426 = vmatpush1.msra.mxu0 0.0
        %7427 = vmatprep.subr.mxu0 0.0
        %7428 = vmatpush1.msra.mxu0 0.0
        %7429 = vmatprep.subr.mxu0 0.0
        %7430 = vmatpush1.msra.mxu0 0.0
        %7431 = vmatprep.subr.mxu0 0.0
        %7432 = vmatpush1.msra.mxu0 0.0
        %7433 = vmatprep.subr.mxu0 0.0
        %7434 = vmatpush1.msra.mxu0 0.0
        %7435 = vmatprep.subr.mxu0 0.0
        %7436 = vmatpush1.msra.mxu0 0.0
        %7437 = vmatprep.subr.mxu0 0.0
        %7438 = vmatpush1.msra.mxu0 0.0
        %7439 = vmatprep.subr.mxu0 0.0
        %7440 = vmatpush1.msra.mxu0 0.0
        %7441 = vmatprep.subr.mxu0 0.0
        %7442 = vmatpush1.msra.mxu0 0.0
        %7443 = vmatprep.subr.mxu0 0.0
        %7444 = vmatpush1.msra.mxu0 0.0
        %7445 = vmatprep.subr.mxu0 0.0
        %7446 = vmatpush1.msra.mxu0 0.0
        %7447 = vmatprep.subr.mxu0 0.0
        %7448 = vmatpush1.msra.mxu0 0.0
        %7449 = vmatprep.subr.mxu0 0.0
        %7450 = vmatpush1.msra.mxu0 0.0
        %7451 = vmatprep.subr.mxu0 0.0
        %7452 = vmatpush1.msra.mxu0 0.0
        %7453 = vmatprep.subr.mxu0 0.0
        %7454 = vmatpush1.msra.mxu0 0.0
        %7455 = vmatprep.subr.mxu0 0.0
        %7456 = vmatpush1.msra.mxu0 0.0
        %7457 = vmatprep.subr.mxu0 0.0
        %7458 = vmatpush1.msra.mxu0 0.0
        %7459 = vmatprep.subr.mxu0 0.0
        %7460 = vmatpush1.msra.mxu0 0.0
        %7461 = vmatprep.subr.mxu0 0.0
        %7462 = vmatpush1.msra.mxu0 0.0
        %7463 = vmatprep.subr.mxu0 0.0
        %7464 = vmatpush1.msra.mxu0 0.0
        %7465 = vmatprep.subr.mxu0 0.0
        %7466 = vmatpush1.msra.mxu0 0.0
        %7467 = vmatprep.subr.mxu0 0.0
        %7468 = vmatpush1.msra.mxu0 0.0
        %7469 = vmatprep.subr.mxu0 0.0
        %7470 = vmatpush1.msra.mxu0 0.0
        %7471 = vmatprep.mubr.f32.mxu0 0.0
        %7472 = vmatmul.mubr.f32.gmra.mrb[0].mxu0 %v7399
        %v7473 = vpop.f32.mrb[0].mxu0
        %v7474 = vadd.f32 0.0, %v7473
        %v7475 = vpop.f32.mrb[0].mxu0
        %v7476 = vadd.f32 0.0, %v7475
        %7477 = vdwg.mxu0
        %v7480 = vcombine.low %v7474, %v7476
        %v7482 = vunpack.c.l.s4 1966171168
        %v7483 = vunpack.c.0.s8 %v7482
        %v7484 = vlaneseq
        %v7485 = vshrl.u32 %v7484, 7
        %v7486 = vsub.s32 %v7483, %v7485
        %v7487 = vrot.slane %v7480, %v7486
        %v7489 = vunpack.c.l.s4 1966171168
        %v7490 = vunpack.c.0.s8 %v7489
        %v7491 = vlaneseq
        %v7492 = vshrl.u32 %v7491, 7
        %v7493 = vsub.s32 %v7490, %v7492
        %v7494 = vrot.slane %v7487, %v7493
        %v7496 = vadd.f32 %v7388, %v7494
        %s7497 = scalar_lea.vmem %s5, 256
        %v7498 = vld [vmem:[%s7497] sm:$0xff]
        %v7499 = vld [vmem:[%s7497 + $0x8] sm:$0xff]
        %v7500 = vld [vmem:[%s7497 + $0x10] sm:$0xff]
        %v7501 = vld [vmem:[%s7497 + $0x18] sm:$0xff]
        %v7502 = vld [vmem:[%s7497 + $0x20] sm:$0xff]
        %v7503 = vld [vmem:[%s7497 + $0x28] sm:$0xff]
        %v7504 = vld [vmem:[%s7497 + $0x30] sm:$0x1]
        %v7505 = vld [vmem:[%s7497 + $0x38] sm:$0x1]
        %v7506 = vrot.slane %v7062, 4
        %v7507 = vsel %vm7073, %v7506, 0
        %v7510 = vsel %vm1037, %v7504, 0
        %v7513 = vsel %vm1037, %v7505, 0
        %7515 = vmatprep.subr.mxu0 %v7499
        %7516 = vmatpush1.msra.mxu0 %v7498
        %7517 = vmatprep.subr.mxu0 %v7501
        %7518 = vmatpush1.msra.mxu0 %v7500
        %7519 = vmatprep.subr.mxu0 %v7503
        %7520 = vmatpush1.msra.mxu0 %v7502
        %7521 = vmatprep.subr.mxu0 %v7513
        %7522 = vmatpush1.msra.mxu0 %v7510
        %7523 = vmatprep.subr.mxu0 0.0
        %7524 = vmatpush1.msra.mxu0 0.0
        %7525 = vmatprep.subr.mxu0 0.0
        %7526 = vmatpush1.msra.mxu0 0.0
        %7527 = vmatprep.subr.mxu0 0.0
        %7528 = vmatpush1.msra.mxu0 0.0
        %7529 = vmatprep.subr.mxu0 0.0
        %7530 = vmatpush1.msra.mxu0 0.0
        %7531 = vmatprep.subr.mxu0 0.0
        %7532 = vmatpush1.msra.mxu0 0.0
        %7533 = vmatprep.subr.mxu0 0.0
        %7534 = vmatpush1.msra.mxu0 0.0
        %7535 = vmatprep.subr.mxu0 0.0
        %7536 = vmatpush1.msra.mxu0 0.0
        %7537 = vmatprep.subr.mxu0 0.0
        %7538 = vmatpush1.msra.mxu0 0.0
        %7539 = vmatprep.subr.mxu0 0.0
        %7540 = vmatpush1.msra.mxu0 0.0
        %7541 = vmatprep.subr.mxu0 0.0
        %7542 = vmatpush1.msra.mxu0 0.0
        %7543 = vmatprep.subr.mxu0 0.0
        %7544 = vmatpush1.msra.mxu0 0.0
        %7545 = vmatprep.subr.mxu0 0.0
        %7546 = vmatpush1.msra.mxu0 0.0
        %7547 = vmatprep.subr.mxu0 0.0
        %7548 = vmatpush1.msra.mxu0 0.0
        %7549 = vmatprep.subr.mxu0 0.0
        %7550 = vmatpush1.msra.mxu0 0.0
        %7551 = vmatprep.subr.mxu0 0.0
        %7552 = vmatpush1.msra.mxu0 0.0
        %7553 = vmatprep.subr.mxu0 0.0
        %7554 = vmatpush1.msra.mxu0 0.0
        %7555 = vmatprep.subr.mxu0 0.0
        %7556 = vmatpush1.msra.mxu0 0.0
        %7557 = vmatprep.subr.mxu0 0.0
        %7558 = vmatpush1.msra.mxu0 0.0
        %7559 = vmatprep.subr.mxu0 0.0
        %7560 = vmatpush1.msra.mxu0 0.0
        %7561 = vmatprep.subr.mxu0 0.0
        %7562 = vmatpush1.msra.mxu0 0.0
        %7563 = vmatprep.subr.mxu0 0.0
        %7564 = vmatpush1.msra.mxu0 0.0
        %7565 = vmatprep.subr.mxu0 0.0
        %7566 = vmatpush1.msra.mxu0 0.0
        %7567 = vmatprep.subr.mxu0 0.0
        %7568 = vmatpush1.msra.mxu0 0.0
        %7569 = vmatprep.subr.mxu0 0.0
        %7570 = vmatpush1.msra.mxu0 0.0
        %7571 = vmatprep.subr.mxu0 0.0
        %7572 = vmatpush1.msra.mxu0 0.0
        %7573 = vmatprep.subr.mxu0 0.0
        %7574 = vmatpush1.msra.mxu0 0.0
        %7575 = vmatprep.subr.mxu0 0.0
        %7576 = vmatpush1.msra.mxu0 0.0
        %7577 = vmatprep.subr.mxu0 0.0
        %7578 = vmatpush1.msra.mxu0 0.0
        %7579 = vmatprep.mubr.f32.mxu0 0.0
        %7580 = vmatmul.mubr.f32.gmra.mrb[0].mxu0 %v7507
        %v7581 = vpop.f32.mrb[0].mxu0
        %v7582 = vadd.f32 0.0, %v7581
        %v7583 = vpop.f32.mrb[0].mxu0
        %v7584 = vadd.f32 0.0, %v7583
        %7585 = vdwg.mxu0
        %v7588 = vcombine.low %v7582, %v7584
        %v7590 = vunpack.c.l.s4 1966171168
        %v7591 = vunpack.c.0.s8 %v7590
        %v7592 = vlaneseq
        %v7593 = vshrl.u32 %v7592, 7
        %v7594 = vsub.s32 %v7591, %v7593
        %v7595 = vrot.slane %v7588, %v7594
        %v7597 = vunpack.c.l.s4 1966171168
        %v7598 = vunpack.c.0.s8 %v7597
        %v7599 = vlaneseq
        %v7600 = vshrl.u32 %v7599, 7
        %v7601 = vsub.s32 %v7598, %v7600
        %v7602 = vrot.slane %v7595, %v7601
        %v7604 = vadd.f32 %v7496, %v7602
        %s7605 = scalar_lea.vmem %s5, 320
        %v7606 = vld [vmem:[%s7605] sm:$0xff]
        %v7607 = vld [vmem:[%s7605 + $0x8] sm:$0xff]
        %v7608 = vld [vmem:[%s7605 + $0x10] sm:$0xff]
        %v7609 = vld [vmem:[%s7605 + $0x18] sm:$0xff]
        %v7610 = vld [vmem:[%s7605 + $0x20] sm:$0xff]
        %v7611 = vld [vmem:[%s7605 + $0x28] sm:$0xff]
        %v7612 = vld [vmem:[%s7605 + $0x30] sm:$0x1]
        %v7613 = vld [vmem:[%s7605 + $0x38] sm:$0x1]
        %v7614 = vrot.slane %v7062, 5
        %v7615 = vsel %vm7073, %v7614, 0
        %v7618 = vsel %vm1037, %v7612, 0
        %v7621 = vsel %vm1037, %v7613, 0
        %7623 = vmatprep.subr.mxu0 %v7607
        %7624 = vmatpush1.msra.mxu0 %v7606
        %7625 = vmatprep.subr.mxu0 %v7609
        %7626 = vmatpush1.msra.mxu0 %v7608
        %7627 = vmatprep.subr.mxu0 %v7611
        %7628 = vmatpush1.msra.mxu0 %v7610
        %7629 = vmatprep.subr.mxu0 %v7621
        %7630 = vmatpush1.msra.mxu0 %v7618
        %7631 = vmatprep.subr.mxu0 0.0
        %7632 = vmatpush1.msra.mxu0 0.0
        %7633 = vmatprep.subr.mxu0 0.0
        %7634 = vmatpush1.msra.mxu0 0.0
        %7635 = vmatprep.subr.mxu0 0.0
        %7636 = vmatpush1.msra.mxu0 0.0
        %7637 = vmatprep.subr.mxu0 0.0
        %7638 = vmatpush1.msra.mxu0 0.0
        %7639 = vmatprep.subr.mxu0 0.0
        %7640 = vmatpush1.msra.mxu0 0.0
        %7641 = vmatprep.subr.mxu0 0.0
        %7642 = vmatpush1.msra.mxu0 0.0
        %7643 = vmatprep.subr.mxu0 0.0
        %7644 = vmatpush1.msra.mxu0 0.0
        %7645 = vmatprep.subr.mxu0 0.0
        %7646 = vmatpush1.msra.mxu0 0.0
        %7647 = vmatprep.subr.mxu0 0.0
        %7648 = vmatpush1.msra.mxu0 0.0
        %7649 = vmatprep.subr.mxu0 0.0
        %7650 = vmatpush1.msra.mxu0 0.0
        %7651 = vmatprep.subr.mxu0 0.0
        %7652 = vmatpush1.msra.mxu0 0.0
        %7653 = vmatprep.subr.mxu0 0.0
        %7654 = vmatpush1.msra.mxu0 0.0
        %7655 = vmatprep.subr.mxu0 0.0
        %7656 = vmatpush1.msra.mxu0 0.0
        %7657 = vmatprep.subr.mxu0 0.0
        %7658 = vmatpush1.msra.mxu0 0.0
        %7659 = vmatprep.subr.mxu0 0.0
        %7660 = vmatpush1.msra.mxu0 0.0
        %7661 = vmatprep.subr.mxu0 0.0
        %7662 = vmatpush1.msra.mxu0 0.0
        %7663 = vmatprep.subr.mxu0 0.0
        %7664 = vmatpush1.msra.mxu0 0.0
        %7665 = vmatprep.subr.mxu0 0.0
        %7666 = vmatpush1.msra.mxu0 0.0
        %7667 = vmatprep.subr.mxu0 0.0
        %7668 = vmatpush1.msra.mxu0 0.0
        %7669 = vmatprep.subr.mxu0 0.0
        %7670 = vmatpush1.msra.mxu0 0.0
        %7671 = vmatprep.subr.mxu0 0.0
        %7672 = vmatpush1.msra.mxu0 0.0
        %7673 = vmatprep.subr.mxu0 0.0
        %7674 = vmatpush1.msra.mxu0 0.0
        %7675 = vmatprep.subr.mxu0 0.0
        %7676 = vmatpush1.msra.mxu0 0.0
        %7677 = vmatprep.subr.mxu0 0.0
        %7678 = vmatpush1.msra.mxu0 0.0
        %7679 = vmatprep.subr.mxu0 0.0
        %7680 = vmatpush1.msra.mxu0 0.0
        %7681 = vmatprep.subr.mxu0 0.0
        %7682 = vmatpush1.msra.mxu0 0.0
        %7683 = vmatprep.subr.mxu0 0.0
        %7684 = vmatpush1.msra.mxu0 0.0
        %7685 = vmatprep.subr.mxu0 0.0
        %7686 = vmatpush1.msra.mxu0 0.0
        %7687 = vmatprep.mubr.f32.mxu0 0.0
        %7688 = vmatmul.mubr.f32.gmra.mrb[0].mxu0 %v7615
        %v7689 = vpop.f32.mrb[0].mxu0
        %v7690 = vadd.f32 0.0, %v7689
        %v7691 = vpop.f32.mrb[0].mxu0
        %v7692 = vadd.f32 0.0, %v7691
        %7693 = vdwg.mxu0
        %v7696 = vcombine.low %v7690, %v7692
        %v7698 = vunpack.c.l.s4 1966171168
        %v7699 = vunpack.c.0.s8 %v7698
        %v7700 = vlaneseq
        %v7701 = vshrl.u32 %v7700, 7
        %v7702 = vsub.s32 %v7699, %v7701
        %v7703 = vrot.slane %v7696, %v7702
        %v7705 = vunpack.c.l.s4 1966171168
        %v7706 = vunpack.c.0.s8 %v7705
        %v7707 = vlaneseq
        %v7708 = vshrl.u32 %v7707, 7
        %v7709 = vsub.s32 %v7706, %v7708
        %v7710 = vrot.slane %v7703, %v7709
        %v7712 = vadd.f32 %v7604, %v7710
        %s7713 = scalar_lea.vmem %s5, 384
        %v7714 = vld [vmem:[%s7713] sm:$0xff]
        %v7715 = vld [vmem:[%s7713 + $0x8] sm:$0xff]
        %v7716 = vld [vmem:[%s7713 + $0x10] sm:$0xff]
        %v7717 = vld [vmem:[%s7713 + $0x18] sm:$0xff]
        %v7718 = vld [vmem:[%s7713 + $0x20] sm:$0xff]
        %v7719 = vld [vmem:[%s7713 + $0x28] sm:$0xff]
        %v7720 = vld [vmem:[%s7713 + $0x30] sm:$0x1]
        %v7721 = vld [vmem:[%s7713 + $0x38] sm:$0x1]
        %v7722 = vrot.slane %v7062, 6
        %v7723 = vsel %vm7073, %v7722, 0
        %v7726 = vsel %vm1037, %v7720, 0
        %v7729 = vsel %vm1037, %v7721, 0
        %7731 = vmatprep.subr.mxu0 %v7715
        %7732 = vmatpush1.msra.mxu0 %v7714
        %7733 = vmatprep.subr.mxu0 %v7717
        %7734 = vmatpush1.msra.mxu0 %v7716
        %7735 = vmatprep.subr.mxu0 %v7719
        %7736 = vmatpush1.msra.mxu0 %v7718
        %7737 = vmatprep.subr.mxu0 %v7729
        %7738 = vmatpush1.msra.mxu0 %v7726
        %7739 = vmatprep.subr.mxu0 0.0
        %7740 = vmatpush1.msra.mxu0 0.0
        %7741 = vmatprep.subr.mxu0 0.0
        %7742 = vmatpush1.msra.mxu0 0.0
        %7743 = vmatprep.subr.mxu0 0.0
        %7744 = vmatpush1.msra.mxu0 0.0
        %7745 = vmatprep.subr.mxu0 0.0
        %7746 = vmatpush1.msra.mxu0 0.0
        %7747 = vmatprep.subr.mxu0 0.0
        %7748 = vmatpush1.msra.mxu0 0.0
        %7749 = vmatprep.subr.mxu0 0.0
        %7750 = vmatpush1.msra.mxu0 0.0
        %7751 = vmatprep.subr.mxu0 0.0
        %7752 = vmatpush1.msra.mxu0 0.0
        %7753 = vmatprep.subr.mxu0 0.0
        %7754 = vmatpush1.msra.mxu0 0.0
        %7755 = vmatprep.subr.mxu0 0.0
        %7756 = vmatpush1.msra.mxu0 0.0
        %7757 = vmatprep.subr.mxu0 0.0
        %7758 = vmatpush1.msra.mxu0 0.0
        %7759 = vmatprep.subr.mxu0 0.0
        %7760 = vmatpush1.msra.mxu0 0.0
        %7761 = vmatprep.subr.mxu0 0.0
        %7762 = vmatpush1.msra.mxu0 0.0
        %7763 = vmatprep.subr.mxu0 0.0
        %7764 = vmatpush1.msra.mxu0 0.0
        %7765 = vmatprep.subr.mxu0 0.0
        %7766 = vmatpush1.msra.mxu0 0.0
        %7767 = vmatprep.subr.mxu0 0.0
        %7768 = vmatpush1.msra.mxu0 0.0
        %7769 = vmatprep.subr.mxu0 0.0
        %7770 = vmatpush1.msra.mxu0 0.0
        %7771 = vmatprep.subr.mxu0 0.0
        %7772 = vmatpush1.msra.mxu0 0.0
        %7773 = vmatprep.subr.mxu0 0.0
        %7774 = vmatpush1.msra.mxu0 0.0
        %7775 = vmatprep.subr.mxu0 0.0
        %7776 = vmatpush1.msra.mxu0 0.0
        %7777 = vmatprep.subr.mxu0 0.0
        %7778 = vmatpush1.msra.mxu0 0.0
        %7779 = vmatprep.subr.mxu0 0.0
        %7780 = vmatpush1.msra.mxu0 0.0
        %7781 = vmatprep.subr.mxu0 0.0
        %7782 = vmatpush1.msra.mxu0 0.0
        %7783 = vmatprep.subr.mxu0 0.0
        %7784 = vmatpush1.msra.mxu0 0.0
        %7785 = vmatprep.subr.mxu0 0.0
        %7786 = vmatpush1.msra.mxu0 0.0
        %7787 = vmatprep.subr.mxu0 0.0
        %7788 = vmatpush1.msra.mxu0 0.0
        %7789 = vmatprep.subr.mxu0 0.0
        %7790 = vmatpush1.msra.mxu0 0.0
        %7791 = vmatprep.subr.mxu0 0.0
        %7792 = vmatpush1.msra.mxu0 0.0
        %7793 = vmatprep.subr.mxu0 0.0
        %7794 = vmatpush1.msra.mxu0 0.0
        %7795 = vmatprep.mubr.f32.mxu0 0.0
        %7796 = vmatmul.mubr.f32.gmra.mrb[0].mxu0 %v7723
        %v7797 = vpop.f32.mrb[0].mxu0
        %v7798 = vadd.f32 0.0, %v7797
        %v7799 = vpop.f32.mrb[0].mxu0
        %v7800 = vadd.f32 0.0, %v7799
        %7801 = vdwg.mxu0
        %v7804 = vcombine.low %v7798, %v7800
        %v7806 = vunpack.c.l.s4 1966171168
        %v7807 = vunpack.c.0.s8 %v7806
        %v7808 = vlaneseq
        %v7809 = vshrl.u32 %v7808, 7
        %v7810 = vsub.s32 %v7807, %v7809
        %v7811 = vrot.slane %v7804, %v7810
        %v7813 = vunpack.c.l.s4 1966171168
        %v7814 = vunpack.c.0.s8 %v7813
        %v7815 = vlaneseq
        %v7816 = vshrl.u32 %v7815, 7
        %v7817 = vsub.s32 %v7814, %v7816
        %v7818 = vrot.slane %v7811, %v7817
        %v7820 = vadd.f32 %v7712, %v7818
        %s7821 = scalar_lea.vmem %s5, 448
        %v7822 = vld [vmem:[%s7821] sm:$0xff]
        %v7823 = vld [vmem:[%s7821 + $0x8] sm:$0xff]
        %v7824 = vld [vmem:[%s7821 + $0x10] sm:$0xff]
        %v7825 = vld [vmem:[%s7821 + $0x18] sm:$0xff]
        %v7826 = vld [vmem:[%s7821 + $0x20] sm:$0xff]
        %v7827 = vld [vmem:[%s7821 + $0x28] sm:$0xff]
        %v7828 = vld [vmem:[%s7821 + $0x30] sm:$0x1]
        %v7829 = vld [vmem:[%s7821 + $0x38] sm:$0x1]
        %v7830 = vrot.slane %v7062, 7
        %v7831 = vsel %vm7073, %v7830, 0
        %v7834 = vsel %vm1037, %v7828, 0
        %v7837 = vsel %vm1037, %v7829, 0
        %7839 = vmatprep.subr.mxu0 %v7823
        %7840 = vmatpush1.msra.mxu0 %v7822
        %7841 = vmatprep.subr.mxu0 %v7825
        %7842 = vmatpush1.msra.mxu0 %v7824
        %7843 = vmatprep.subr.mxu0 %v7827
        %7844 = vmatpush1.msra.mxu0 %v7826
        %7845 = vmatprep.subr.mxu0 %v7837
        %7846 = vmatpush1.msra.mxu0 %v7834
        %7847 = vmatprep.subr.mxu0 0.0
        %7848 = vmatpush1.msra.mxu0 0.0
        %7849 = vmatprep.subr.mxu0 0.0
        %7850 = vmatpush1.msra.mxu0 0.0
        %7851 = vmatprep.subr.mxu0 0.0
        %7852 = vmatpush1.msra.mxu0 0.0
        %7853 = vmatprep.subr.mxu0 0.0
        %7854 = vmatpush1.msra.mxu0 0.0
        %7855 = vmatprep.subr.mxu0 0.0
        %7856 = vmatpush1.msra.mxu0 0.0
        %7857 = vmatprep.subr.mxu0 0.0
        %7858 = vmatpush1.msra.mxu0 0.0
        %7859 = vmatprep.subr.mxu0 0.0
        %7860 = vmatpush1.msra.mxu0 0.0
        %7861 = vmatprep.subr.mxu0 0.0
        %7862 = vmatpush1.msra.mxu0 0.0
        %7863 = vmatprep.subr.mxu0 0.0
        %7864 = vmatpush1.msra.mxu0 0.0
        %7865 = vmatprep.subr.mxu0 0.0
        %7866 = vmatpush1.msra.mxu0 0.0
        %7867 = vmatprep.subr.mxu0 0.0
        %7868 = vmatpush1.msra.mxu0 0.0
        %7869 = vmatprep.subr.mxu0 0.0
        %7870 = vmatpush1.msra.mxu0 0.0
        %7871 = vmatprep.subr.mxu0 0.0
        %7872 = vmatpush1.msra.mxu0 0.0
        %7873 = vmatprep.subr.mxu0 0.0
        %7874 = vmatpush1.msra.mxu0 0.0
        %7875 = vmatprep.subr.mxu0 0.0
        %7876 = vmatpush1.msra.mxu0 0.0
        %7877 = vmatprep.subr.mxu0 0.0
        %7878 = vmatpush1.msra.mxu0 0.0
        %7879 = vmatprep.subr.mxu0 0.0
        %7880 = vmatpush1.msra.mxu0 0.0
        %7881 = vmatprep.subr.mxu0 0.0
        %7882 = vmatpush1.msra.mxu0 0.0
        %7883 = vmatprep.subr.mxu0 0.0
        %7884 = vmatpush1.msra.mxu0 0.0
        %7885 = vmatprep.subr.mxu0 0.0
        %7886 = vmatpush1.msra.mxu0 0.0
        %7887 = vmatprep.subr.mxu0 0.0
        %7888 = vmatpush1.msra.mxu0 0.0
        %7889 = vmatprep.subr.mxu0 0.0
        %7890 = vmatpush1.msra.mxu0 0.0
        %7891 = vmatprep.subr.mxu0 0.0
        %7892 = vmatpush1.msra.mxu0 0.0
        %7893 = vmatprep.subr.mxu0 0.0
        %7894 = vmatpush1.msra.mxu0 0.0
        %7895 = vmatprep.subr.mxu0 0.0
        %7896 = vmatpush1.msra.mxu0 0.0
        %7897 = vmatprep.subr.mxu0 0.0
        %7898 = vmatpush1.msra.mxu0 0.0
        %7899 = vmatprep.subr.mxu0 0.0
        %7900 = vmatpush1.msra.mxu0 0.0
        %7901 = vmatprep.subr.mxu0 0.0
        %7902 = vmatpush1.msra.mxu0 0.0
        %7903 = vmatprep.mubr.f32.mxu0 0.0
        %7904 = vmatmul.mubr.f32.gmra.mrb[0].mxu0 %v7831
        %v7905 = vpop.f32.mrb[0].mxu0
        %v7906 = vadd.f32 0.0, %v7905
        %v7907 = vpop.f32.mrb[0].mxu0
        %v7908 = vadd.f32 0.0, %v7907
        %7909 = vdwg.mxu0
        %v7912 = vcombine.low %v7906, %v7908
        %v7914 = vunpack.c.l.s4 1966171168
        %v7915 = vunpack.c.0.s8 %v7914
        %v7916 = vlaneseq
        %v7917 = vshrl.u32 %v7916, 7
        %v7918 = vsub.s32 %v7915, %v7917
        %v7919 = vrot.slane %v7912, %v7918
        %v7921 = vunpack.c.l.s4 1966171168
        %v7922 = vunpack.c.0.s8 %v7921
        %v7923 = vlaneseq
        %v7924 = vshrl.u32 %v7923, 7
        %v7925 = vsub.s32 %v7922, %v7924
        %v7926 = vrot.slane %v7919, %v7925
        %v7928 = vadd.f32 %v7820, %v7926
        %s7929 = scalar_lea.vmem %s5, 512
        %v7930 = vld [vmem:[%s7929] sm:$0xff]
        %v7931 = vld [vmem:[%s7929 + $0x8] sm:$0xff]
        %v7932 = vld [vmem:[%s7929 + $0x10] sm:$0xff]
        %v7933 = vld [vmem:[%s7929 + $0x18] sm:$0xff]
        %v7934 = vld [vmem:[%s7929 + $0x20] sm:$0xff]
        %v7935 = vld [vmem:[%s7929 + $0x28] sm:$0xff]
        %v7936 = vld [vmem:[%s7929 + $0x30] sm:$0x1]
        %v7937 = vld [vmem:[%s7929 + $0x38] sm:$0x1]
        %v7939 = vsel %vm7073, %v7063, 0
        %v7942 = vsel %vm1037, %v7936, 0
        %v7945 = vsel %vm1037, %v7937, 0
        %7947 = vmatprep.subr.mxu0 %v7931
        %7948 = vmatpush1.msra.mxu0 %v7930
        %7949 = vmatprep.subr.mxu0 %v7933
        %7950 = vmatpush1.msra.mxu0 %v7932
        %7951 = vmatprep.subr.mxu0 %v7935
        %7952 = vmatpush1.msra.mxu0 %v7934
        %7953 = vmatprep.subr.mxu0 %v7945
        %7954 = vmatpush1.msra.mxu0 %v7942
        %7955 = vmatprep.subr.mxu0 0.0
        %7956 = vmatpush1.msra.mxu0 0.0
        %7957 = vmatprep.subr.mxu0 0.0
        %7958 = vmatpush1.msra.mxu0 0.0
        %7959 = vmatprep.subr.mxu0 0.0
        %7960 = vmatpush1.msra.mxu0 0.0
        %7961 = vmatprep.subr.mxu0 0.0
        %7962 = vmatpush1.msra.mxu0 0.0
        %7963 = vmatprep.subr.mxu0 0.0
        %7964 = vmatpush1.msra.mxu0 0.0
        %7965 = vmatprep.subr.mxu0 0.0
        %7966 = vmatpush1.msra.mxu0 0.0
        %7967 = vmatprep.subr.mxu0 0.0
        %7968 = vmatpush1.msra.mxu0 0.0
        %7969 = vmatprep.subr.mxu0 0.0
        %7970 = vmatpush1.msra.mxu0 0.0
        %7971 = vmatprep.subr.mxu0 0.0
        %7972 = vmatpush1.msra.mxu0 0.0
        %7973 = vmatprep.subr.mxu0 0.0
        %7974 = vmatpush1.msra.mxu0 0.0
        %7975 = vmatprep.subr.mxu0 0.0
        %7976 = vmatpush1.msra.mxu0 0.0
        %7977 = vmatprep.subr.mxu0 0.0
        %7978 = vmatpush1.msra.mxu0 0.0
        %7979 = vmatprep.subr.mxu0 0.0
        %7980 = vmatpush1.msra.mxu0 0.0
        %7981 = vmatprep.subr.mxu0 0.0
        %7982 = vmatpush1.msra.mxu0 0.0
        %7983 = vmatprep.subr.mxu0 0.0
        %7984 = vmatpush1.msra.mxu0 0.0
        %7985 = vmatprep.subr.mxu0 0.0
        %7986 = vmatpush1.msra.mxu0 0.0
        %7987 = vmatprep.subr.mxu0 0.0
        %7988 = vmatpush1.msra.mxu0 0.0
        %7989 = vmatprep.subr.mxu0 0.0
        %7990 = vmatpush1.msra.mxu0 0.0
        %7991 = vmatprep.subr.mxu0 0.0
        %7992 = vmatpush1.msra.mxu0 0.0
        %7993 = vmatprep.subr.mxu0 0.0
        %7994 = vmatpush1.msra.mxu0 0.0
        %7995 = vmatprep.subr.mxu0 0.0
        %7996 = vmatpush1.msra.mxu0 0.0
        %7997 = vmatprep.subr.mxu0 0.0
        %7998 = vmatpush1.msra.mxu0 0.0
        %7999 = vmatprep.subr.mxu0 0.0
        %8000 = vmatpush1.msra.mxu0 0.0
        %8001 = vmatprep.subr.mxu0 0.0
        %8002 = vmatpush1.msra.mxu0 0.0
        %8003 = vmatprep.subr.mxu0 0.0
        %8004 = vmatpush1.msra.mxu0 0.0
        %8005 = vmatprep.subr.mxu0 0.0
        %8006 = vmatpush1.msra.mxu0 0.0
        %8007 = vmatprep.subr.mxu0 0.0
        %8008 = vmatpush1.msra.mxu0 0.0
        %8009 = vmatprep.subr.mxu0 0.0
        %8010 = vmatpush1.msra.mxu0 0.0
        %8011 = vmatprep.mubr.f32.mxu0 0.0
        %8012 = vmatmul.mubr.f32.gmra.mrb[0].mxu0 %v7939
        %v8013 = vpop.f32.mrb[0].mxu0
        %v8014 = vadd.f32 0.0, %v8013
        %v8015 = vpop.f32.mrb[0].mxu0
        %v8016 = vadd.f32 0.0, %v8015
        %8017 = vdwg.mxu0
        %v8020 = vcombine.low %v8014, %v8016
        %v8022 = vunpack.c.l.s4 1966171168
        %v8023 = vunpack.c.0.s8 %v8022
        %v8024 = vlaneseq
        %v8025 = vshrl.u32 %v8024, 7
        %v8026 = vsub.s32 %v8023, %v8025
        %v8027 = vrot.slane %v8020, %v8026
        %v8029 = vunpack.c.l.s4 1966171168
        %v8030 = vunpack.c.0.s8 %v8029
        %v8031 = vlaneseq
        %v8032 = vshrl.u32 %v8031, 7
        %v8033 = vsub.s32 %v8030, %v8032
        %v8034 = vrot.slane %v8027, %v8033
        %v8036 = vadd.f32 %v7928, %v8034
        %s8037 = scalar_lea.vmem %s5, 576
        %v8038 = vld [vmem:[%s8037] sm:$0xff]
        %v8039 = vld [vmem:[%s8037 + $0x8] sm:$0xff]
        %v8040 = vld [vmem:[%s8037 + $0x10] sm:$0xff]
        %v8041 = vld [vmem:[%s8037 + $0x18] sm:$0xff]
        %v8042 = vld [vmem:[%s8037 + $0x20] sm:$0xff]
        %v8043 = vld [vmem:[%s8037 + $0x28] sm:$0xff]
        %v8044 = vld [vmem:[%s8037 + $0x30] sm:$0x1]
        %v8045 = vld [vmem:[%s8037 + $0x38] sm:$0x1]
        %v8046 = vrot.slane %v7063, 1
        %v8047 = vsel %vm7073, %v8046, 0
        %v8050 = vsel %vm1037, %v8044, 0
        %v8053 = vsel %vm1037, %v8045, 0
        %8055 = vmatprep.subr.mxu0 %v8039
        %8056 = vmatpush1.msra.mxu0 %v8038
        %8057 = vmatprep.subr.mxu0 %v8041
        %8058 = vmatpush1.msra.mxu0 %v8040
        %8059 = vmatprep.subr.mxu0 %v8043
        %8060 = vmatpush1.msra.mxu0 %v8042
        %8061 = vmatprep.subr.mxu0 %v8053
        %8062 = vmatpush1.msra.mxu0 %v8050
        %8063 = vmatprep.subr.mxu0 0.0
        %8064 = vmatpush1.msra.mxu0 0.0
        %8065 = vmatprep.subr.mxu0 0.0
        %8066 = vmatpush1.msra.mxu0 0.0
        %8067 = vmatprep.subr.mxu0 0.0
        %8068 = vmatpush1.msra.mxu0 0.0
        %8069 = vmatprep.subr.mxu0 0.0
        %8070 = vmatpush1.msra.mxu0 0.0
        %8071 = vmatprep.subr.mxu0 0.0
        %8072 = vmatpush1.msra.mxu0 0.0
        %8073 = vmatprep.subr.mxu0 0.0
        %8074 = vmatpush1.msra.mxu0 0.0
        %8075 = vmatprep.subr.mxu0 0.0
        %8076 = vmatpush1.msra.mxu0 0.0
        %8077 = vmatprep.subr.mxu0 0.0
        %8078 = vmatpush1.msra.mxu0 0.0
        %8079 = vmatprep.subr.mxu0 0.0
        %8080 = vmatpush1.msra.mxu0 0.0
        %8081 = vmatprep.subr.mxu0 0.0
        %8082 = vmatpush1.msra.mxu0 0.0
        %8083 = vmatprep.subr.mxu0 0.0
        %8084 = vmatpush1.msra.mxu0 0.0
        %8085 = vmatprep.subr.mxu0 0.0
        %8086 = vmatpush1.msra.mxu0 0.0
        %8087 = vmatprep.subr.mxu0 0.0
        %8088 = vmatpush1.msra.mxu0 0.0
        %8089 = vmatprep.subr.mxu0 0.0
        %8090 = vmatpush1.msra.mxu0 0.0
        %8091 = vmatprep.subr.mxu0 0.0
        %8092 = vmatpush1.msra.mxu0 0.0
        %8093 = vmatprep.subr.mxu0 0.0
        %8094 = vmatpush1.msra.mxu0 0.0
        %8095 = vmatprep.subr.mxu0 0.0
        %8096 = vmatpush1.msra.mxu0 0.0
        %8097 = vmatprep.subr.mxu0 0.0
        %8098 = vmatpush1.msra.mxu0 0.0
        %8099 = vmatprep.subr.mxu0 0.0
        %8100 = vmatpush1.msra.mxu0 0.0
        %8101 = vmatprep.subr.mxu0 0.0
        %8102 = vmatpush1.msra.mxu0 0.0
        %8103 = vmatprep.subr.mxu0 0.0
        %8104 = vmatpush1.msra.mxu0 0.0
        %8105 = vmatprep.subr.mxu0 0.0
        %8106 = vmatpush1.msra.mxu0 0.0
        %8107 = vmatprep.subr.mxu0 0.0
        %8108 = vmatpush1.msra.mxu0 0.0
        %8109 = vmatprep.subr.mxu0 0.0
        %8110 = vmatpush1.msra.mxu0 0.0
        %8111 = vmatprep.subr.mxu0 0.0
        %8112 = vmatpush1.msra.mxu0 0.0
        %8113 = vmatprep.subr.mxu0 0.0
        %8114 = vmatpush1.msra.mxu0 0.0
        %8115 = vmatprep.subr.mxu0 0.0
        %8116 = vmatpush1.msra.mxu0 0.0
        %8117 = vmatprep.subr.mxu0 0.0
        %8118 = vmatpush1.msra.mxu0 0.0
        %8119 = vmatprep.mubr.f32.mxu0 0.0
        %8120 = vmatmul.mubr.f32.gmra.mrb[0].mxu0 %v8047
        %v8121 = vpop.f32.mrb[0].mxu0
        %v8122 = vadd.f32 0.0, %v8121
        %v8123 = vpop.f32.mrb[0].mxu0
        %v8124 = vadd.f32 0.0, %v8123
        %8125 = vdwg.mxu0
        %v8128 = vcombine.low %v8122, %v8124
        %v8130 = vunpack.c.l.s4 1966171168
        %v8131 = vunpack.c.0.s8 %v8130
        %v8132 = vlaneseq
        %v8133 = vshrl.u32 %v8132, 7
        %v8134 = vsub.s32 %v8131, %v8133
        %v8135 = vrot.slane %v8128, %v8134
        %v8137 = vunpack.c.l.s4 1966171168
        %v8138 = vunpack.c.0.s8 %v8137
        %v8139 = vlaneseq
        %v8140 = vshrl.u32 %v8139, 7
        %v8141 = vsub.s32 %v8138, %v8140
        %v8142 = vrot.slane %v8135, %v8141
        %v8144 = vadd.f32 %v8036, %v8142
        %s8145 = scalar_lea.vmem %s5, 640
        %v8146 = vld [vmem:[%s8145] sm:$0xff]
        %v8147 = vld [vmem:[%s8145 + $0x8] sm:$0xff]
        %v8148 = vld [vmem:[%s8145 + $0x10] sm:$0xff]
        %v8149 = vld [vmem:[%s8145 + $0x18] sm:$0xff]
        %v8150 = vld [vmem:[%s8145 + $0x20] sm:$0xff]
        %v8151 = vld [vmem:[%s8145 + $0x28] sm:$0xff]
        %v8152 = vld [vmem:[%s8145 + $0x30] sm:$0x1]
        %v8153 = vld [vmem:[%s8145 + $0x38] sm:$0x1]
        %v8154 = vrot.slane %v7063, 2
        %v8155 = vsel %vm7073, %v8154, 0
        %v8158 = vsel %vm1037, %v8152, 0
        %v8161 = vsel %vm1037, %v8153, 0
        %8163 = vmatprep.subr.mxu0 %v8147
        %8164 = vmatpush1.msra.mxu0 %v8146
        %8165 = vmatprep.subr.mxu0 %v8149
        %8166 = vmatpush1.msra.mxu0 %v8148
        %8167 = vmatprep.subr.mxu0 %v8151
        %8168 = vmatpush1.msra.mxu0 %v8150
        %8169 = vmatprep.subr.mxu0 %v8161
        %8170 = vmatpush1.msra.mxu0 %v8158
        %8171 = vmatprep.subr.mxu0 0.0
        %8172 = vmatpush1.msra.mxu0 0.0
        %8173 = vmatprep.subr.mxu0 0.0
        %8174 = vmatpush1.msra.mxu0 0.0
        %8175 = vmatprep.subr.mxu0 0.0
        %8176 = vmatpush1.msra.mxu0 0.0
        %8177 = vmatprep.subr.mxu0 0.0
        %8178 = vmatpush1.msra.mxu0 0.0
        %8179 = vmatprep.subr.mxu0 0.0
        %8180 = vmatpush1.msra.mxu0 0.0
        %8181 = vmatprep.subr.mxu0 0.0
        %8182 = vmatpush1.msra.mxu0 0.0
        %8183 = vmatprep.subr.mxu0 0.0
        %8184 = vmatpush1.msra.mxu0 0.0
        %8185 = vmatprep.subr.mxu0 0.0
        %8186 = vmatpush1.msra.mxu0 0.0
        %8187 = vmatprep.subr.mxu0 0.0
        %8188 = vmatpush1.msra.mxu0 0.0
        %8189 = vmatprep.subr.mxu0 0.0
        %8190 = vmatpush1.msra.mxu0 0.0
        %8191 = vmatprep.subr.mxu0 0.0
        %8192 = vmatpush1.msra.mxu0 0.0
        %8193 = vmatprep.subr.mxu0 0.0
        %8194 = vmatpush1.msra.mxu0 0.0
        %8195 = vmatprep.subr.mxu0 0.0
        %8196 = vmatpush1.msra.mxu0 0.0
        %8197 = vmatprep.subr.mxu0 0.0
        %8198 = vmatpush1.msra.mxu0 0.0
        %8199 = vmatprep.subr.mxu0 0.0
        %8200 = vmatpush1.msra.mxu0 0.0
        %8201 = vmatprep.subr.mxu0 0.0
        %8202 = vmatpush1.msra.mxu0 0.0
        %8203 = vmatprep.subr.mxu0 0.0
        %8204 = vmatpush1.msra.mxu0 0.0
        %8205 = vmatprep.subr.mxu0 0.0
        %8206 = vmatpush1.msra.mxu0 0.0
        %8207 = vmatprep.subr.mxu0 0.0
        %8208 = vmatpush1.msra.mxu0 0.0
        %8209 = vmatprep.subr.mxu0 0.0
        %8210 = vmatpush1.msra.mxu0 0.0
        %8211 = vmatprep.subr.mxu0 0.0
        %8212 = vmatpush1.msra.mxu0 0.0
        %8213 = vmatprep.subr.mxu0 0.0
        %8214 = vmatpush1.msra.mxu0 0.0
        %8215 = vmatprep.subr.mxu0 0.0
        %8216 = vmatpush1.msra.mxu0 0.0
        %8217 = vmatprep.subr.mxu0 0.0
        %8218 = vmatpush1.msra.mxu0 0.0
        %8219 = vmatprep.subr.mxu0 0.0
        %8220 = vmatpush1.msra.mxu0 0.0
        %8221 = vmatprep.subr.mxu0 0.0
        %8222 = vmatpush1.msra.mxu0 0.0
        %8223 = vmatprep.subr.mxu0 0.0
        %8224 = vmatpush1.msra.mxu0 0.0
        %8225 = vmatprep.subr.mxu0 0.0
        %8226 = vmatpush1.msra.mxu0 0.0
        %8227 = vmatprep.mubr.f32.mxu0 0.0
        %8228 = vmatmul.mubr.f32.gmra.mrb[0].mxu0 %v8155
        %v8229 = vpop.f32.mrb[0].mxu0
        %v8230 = vadd.f32 0.0, %v8229
        %v8231 = vpop.f32.mrb[0].mxu0
        %v8232 = vadd.f32 0.0, %v8231
        %8233 = vdwg.mxu0
        %v8236 = vcombine.low %v8230, %v8232
        %v8238 = vunpack.c.l.s4 1966171168
        %v8239 = vunpack.c.0.s8 %v8238
        %v8240 = vlaneseq
        %v8241 = vshrl.u32 %v8240, 7
        %v8242 = vsub.s32 %v8239, %v8241
        %v8243 = vrot.slane %v8236, %v8242
        %v8245 = vunpack.c.l.s4 1966171168
        %v8246 = vunpack.c.0.s8 %v8245
        %v8247 = vlaneseq
        %v8248 = vshrl.u32 %v8247, 7
        %v8249 = vsub.s32 %v8246, %v8248
        %v8250 = vrot.slane %v8243, %v8249
        %v8252 = vadd.f32 %v8144, %v8250
        %s8253 = scalar_lea.vmem %s5, 704
        %v8254 = vld [vmem:[%s8253] sm:$0xff]
        %v8255 = vld [vmem:[%s8253 + $0x8] sm:$0xff]
        %v8256 = vld [vmem:[%s8253 + $0x10] sm:$0xff]
        %v8257 = vld [vmem:[%s8253 + $0x18] sm:$0xff]
        %v8258 = vld [vmem:[%s8253 + $0x20] sm:$0xff]
        %v8259 = vld [vmem:[%s8253 + $0x28] sm:$0xff]
        %v8260 = vld [vmem:[%s8253 + $0x30] sm:$0x1]
        %v8261 = vld [vmem:[%s8253 + $0x38] sm:$0x1]
        %v8262 = vrot.slane %v7063, 3
        %v8263 = vsel %vm7073, %v8262, 0
        %v8266 = vsel %vm1037, %v8260, 0
        %v8269 = vsel %vm1037, %v8261, 0
        %8271 = vmatprep.subr.mxu0 %v8255
        %8272 = vmatpush1.msra.mxu0 %v8254
        %8273 = vmatprep.subr.mxu0 %v8257
        %8274 = vmatpush1.msra.mxu0 %v8256
        %8275 = vmatprep.subr.mxu0 %v8259
        %8276 = vmatpush1.msra.mxu0 %v8258
        %8277 = vmatprep.subr.mxu0 %v8269
        %8278 = vmatpush1.msra.mxu0 %v8266
        %8279 = vmatprep.subr.mxu0 0.0
        %8280 = vmatpush1.msra.mxu0 0.0
        %8281 = vmatprep.subr.mxu0 0.0
        %8282 = vmatpush1.msra.mxu0 0.0
        %8283 = vmatprep.subr.mxu0 0.0
        %8284 = vmatpush1.msra.mxu0 0.0
        %8285 = vmatprep.subr.mxu0 0.0
        %8286 = vmatpush1.msra.mxu0 0.0
        %8287 = vmatprep.subr.mxu0 0.0
        %8288 = vmatpush1.msra.mxu0 0.0
        %8289 = vmatprep.subr.mxu0 0.0
        %8290 = vmatpush1.msra.mxu0 0.0
        %8291 = vmatprep.subr.mxu0 0.0
        %8292 = vmatpush1.msra.mxu0 0.0
        %8293 = vmatprep.subr.mxu0 0.0
        %8294 = vmatpush1.msra.mxu0 0.0
        %8295 = vmatprep.subr.mxu0 0.0
        %8296 = vmatpush1.msra.mxu0 0.0
        %8297 = vmatprep.subr.mxu0 0.0
        %8298 = vmatpush1.msra.mxu0 0.0
        %8299 = vmatprep.subr.mxu0 0.0
        %8300 = vmatpush1.msra.mxu0 0.0
        %8301 = vmatprep.subr.mxu0 0.0
        %8302 = vmatpush1.msra.mxu0 0.0
        %8303 = vmatprep.subr.mxu0 0.0
        %8304 = vmatpush1.msra.mxu0 0.0
        %8305 = vmatprep.subr.mxu0 0.0
        %8306 = vmatpush1.msra.mxu0 0.0
        %8307 = vmatprep.subr.mxu0 0.0
        %8308 = vmatpush1.msra.mxu0 0.0
        %8309 = vmatprep.subr.mxu0 0.0
        %8310 = vmatpush1.msra.mxu0 0.0
        %8311 = vmatprep.subr.mxu0 0.0
        %8312 = vmatpush1.msra.mxu0 0.0
        %8313 = vmatprep.subr.mxu0 0.0
        %8314 = vmatpush1.msra.mxu0 0.0
        %8315 = vmatprep.subr.mxu0 0.0
        %8316 = vmatpush1.msra.mxu0 0.0
        %8317 = vmatprep.subr.mxu0 0.0
        %8318 = vmatpush1.msra.mxu0 0.0
        %8319 = vmatprep.subr.mxu0 0.0
        %8320 = vmatpush1.msra.mxu0 0.0
        %8321 = vmatprep.subr.mxu0 0.0
        %8322 = vmatpush1.msra.mxu0 0.0
        %8323 = vmatprep.subr.mxu0 0.0
        %8324 = vmatpush1.msra.mxu0 0.0
        %8325 = vmatprep.subr.mxu0 0.0
        %8326 = vmatpush1.msra.mxu0 0.0
        %8327 = vmatprep.subr.mxu0 0.0
        %8328 = vmatpush1.msra.mxu0 0.0
        %8329 = vmatprep.subr.mxu0 0.0
        %8330 = vmatpush1.msra.mxu0 0.0
        %8331 = vmatprep.subr.mxu0 0.0
        %8332 = vmatpush1.msra.mxu0 0.0
        %8333 = vmatprep.subr.mxu0 0.0
        %8334 = vmatpush1.msra.mxu0 0.0
        %8335 = vmatprep.mubr.f32.mxu0 0.0
        %8336 = vmatmul.mubr.f32.gmra.mrb[0].mxu0 %v8263
        %v8337 = vpop.f32.mrb[0].mxu0
        %v8338 = vadd.f32 0.0, %v8337
        %v8339 = vpop.f32.mrb[0].mxu0
        %v8340 = vadd.f32 0.0, %v8339
        %8341 = vdwg.mxu0
        %v8344 = vcombine.low %v8338, %v8340
        %v8346 = vunpack.c.l.s4 1966171168
        %v8347 = vunpack.c.0.s8 %v8346
        %v8348 = vlaneseq
        %v8349 = vshrl.u32 %v8348, 7
        %v8350 = vsub.s32 %v8347, %v8349
        %v8351 = vrot.slane %v8344, %v8350
        %v8353 = vunpack.c.l.s4 1966171168
        %v8354 = vunpack.c.0.s8 %v8353
        %v8355 = vlaneseq
        %v8356 = vshrl.u32 %v8355, 7
        %v8357 = vsub.s32 %v8354, %v8356
        %v8358 = vrot.slane %v8351, %v8357
        %v8360 = vadd.f32 %v8252, %v8358
        %s8361 = scalar_lea.vmem %s5, 768
        %v8362 = vld [vmem:[%s8361] sm:$0xff]
        %v8363 = vld [vmem:[%s8361 + $0x8] sm:$0xff]
        %v8364 = vld [vmem:[%s8361 + $0x10] sm:$0xff]
        %v8365 = vld [vmem:[%s8361 + $0x18] sm:$0xff]
        %v8366 = vld [vmem:[%s8361 + $0x20] sm:$0xff]
        %v8367 = vld [vmem:[%s8361 + $0x28] sm:$0xff]
        %v8368 = vld [vmem:[%s8361 + $0x30] sm:$0x1]
        %v8369 = vld [vmem:[%s8361 + $0x38] sm:$0x1]
        %v8370 = vrot.slane %v7063, 4
        %v8371 = vsel %vm7073, %v8370, 0
        %v8374 = vsel %vm1037, %v8368, 0
        %v8377 = vsel %vm1037, %v8369, 0
        %8379 = vmatprep.subr.mxu0 %v8363
        %8380 = vmatpush1.msra.mxu0 %v8362
        %8381 = vmatprep.subr.mxu0 %v8365
        %8382 = vmatpush1.msra.mxu0 %v8364
        %8383 = vmatprep.subr.mxu0 %v8367
        %8384 = vmatpush1.msra.mxu0 %v8366
        %8385 = vmatprep.subr.mxu0 %v8377
        %8386 = vmatpush1.msra.mxu0 %v8374
        %8387 = vmatprep.subr.mxu0 0.0
        %8388 = vmatpush1.msra.mxu0 0.0
        %8389 = vmatprep.subr.mxu0 0.0
        %8390 = vmatpush1.msra.mxu0 0.0
        %8391 = vmatprep.subr.mxu0 0.0
        %8392 = vmatpush1.msra.mxu0 0.0
        %8393 = vmatprep.subr.mxu0 0.0
        %8394 = vmatpush1.msra.mxu0 0.0
        %8395 = vmatprep.subr.mxu0 0.0
        %8396 = vmatpush1.msra.mxu0 0.0
        %8397 = vmatprep.subr.mxu0 0.0
        %8398 = vmatpush1.msra.mxu0 0.0
        %8399 = vmatprep.subr.mxu0 0.0
        %8400 = vmatpush1.msra.mxu0 0.0
        %8401 = vmatprep.subr.mxu0 0.0
        %8402 = vmatpush1.msra.mxu0 0.0
        %8403 = vmatprep.subr.mxu0 0.0
        %8404 = vmatpush1.msra.mxu0 0.0
        %8405 = vmatprep.subr.mxu0 0.0
        %8406 = vmatpush1.msra.mxu0 0.0
        %8407 = vmatprep.subr.mxu0 0.0
        %8408 = vmatpush1.msra.mxu0 0.0
        %8409 = vmatprep.subr.mxu0 0.0
        %8410 = vmatpush1.msra.mxu0 0.0
        %8411 = vmatprep.subr.mxu0 0.0
        %8412 = vmatpush1.msra.mxu0 0.0
        %8413 = vmatprep.subr.mxu0 0.0
        %8414 = vmatpush1.msra.mxu0 0.0
        %8415 = vmatprep.subr.mxu0 0.0
        %8416 = vmatpush1.msra.mxu0 0.0
        %8417 = vmatprep.subr.mxu0 0.0
        %8418 = vmatpush1.msra.mxu0 0.0
        %8419 = vmatprep.subr.mxu0 0.0
        %8420 = vmatpush1.msra.mxu0 0.0
        %8421 = vmatprep.subr.mxu0 0.0
        %8422 = vmatpush1.msra.mxu0 0.0
        %8423 = vmatprep.subr.mxu0 0.0
        %8424 = vmatpush1.msra.mxu0 0.0
        %8425 = vmatprep.subr.mxu0 0.0
        %8426 = vmatpush1.msra.mxu0 0.0
        %8427 = vmatprep.subr.mxu0 0.0
        %8428 = vmatpush1.msra.mxu0 0.0
        %8429 = vmatprep.subr.mxu0 0.0
        %8430 = vmatpush1.msra.mxu0 0.0
        %8431 = vmatprep.subr.mxu0 0.0
        %8432 = vmatpush1.msra.mxu0 0.0
        %8433 = vmatprep.subr.mxu0 0.0
        %8434 = vmatpush1.msra.mxu0 0.0
        %8435 = vmatprep.subr.mxu0 0.0
        %8436 = vmatpush1.msra.mxu0 0.0
        %8437 = vmatprep.subr.mxu0 0.0
        %8438 = vmatpush1.msra.mxu0 0.0
        %8439 = vmatprep.subr.mxu0 0.0
        %8440 = vmatpush1.msra.mxu0 0.0
        %8441 = vmatprep.subr.mxu0 0.0
        %8442 = vmatpush1.msra.mxu0 0.0
        %8443 = vmatprep.mubr.f32.mxu0 0.0
        %8444 = vmatmul.mubr.f32.gmra.mrb[0].mxu0 %v8371
        %v8445 = vpop.f32.mrb[0].mxu0
        %v8446 = vadd.f32 0.0, %v8445
        %v8447 = vpop.f32.mrb[0].mxu0
        %v8448 = vadd.f32 0.0, %v8447
        %8449 = vdwg.mxu0
        %v8452 = vcombine.low %v8446, %v8448
        %v8454 = vunpack.c.l.s4 1966171168
        %v8455 = vunpack.c.0.s8 %v8454
        %v8456 = vlaneseq
        %v8457 = vshrl.u32 %v8456, 7
        %v8458 = vsub.s32 %v8455, %v8457
        %v8459 = vrot.slane %v8452, %v8458
        %v8461 = vunpack.c.l.s4 1966171168
        %v8462 = vunpack.c.0.s8 %v8461
        %v8463 = vlaneseq
        %v8464 = vshrl.u32 %v8463, 7
        %v8465 = vsub.s32 %v8462, %v8464
        %v8466 = vrot.slane %v8459, %v8465
        %v8468 = vadd.f32 %v8360, %v8466
        %s8469 = scalar_lea.vmem %s5, 832
        %v8470 = vld [vmem:[%s8469] sm:$0xff]
        %v8471 = vld [vmem:[%s8469 + $0x8] sm:$0xff]
        %v8472 = vld [vmem:[%s8469 + $0x10] sm:$0xff]
        %v8473 = vld [vmem:[%s8469 + $0x18] sm:$0xff]
        %v8474 = vld [vmem:[%s8469 + $0x20] sm:$0xff]
        %v8475 = vld [vmem:[%s8469 + $0x28] sm:$0xff]
        %v8476 = vld [vmem:[%s8469 + $0x30] sm:$0x1]
        %v8477 = vld [vmem:[%s8469 + $0x38] sm:$0x1]
        %v8478 = vrot.slane %v7063, 5
        %v8479 = vsel %vm7073, %v8478, 0
        %v8482 = vsel %vm1037, %v8476, 0
        %v8485 = vsel %vm1037, %v8477, 0
        %8487 = vmatprep.subr.mxu0 %v8471
        %8488 = vmatpush1.msra.mxu0 %v8470
        %8489 = vmatprep.subr.mxu0 %v8473
        %8490 = vmatpush1.msra.mxu0 %v8472
        %8491 = vmatprep.subr.mxu0 %v8475
        %8492 = vmatpush1.msra.mxu0 %v8474
        %8493 = vmatprep.subr.mxu0 %v8485
        %8494 = vmatpush1.msra.mxu0 %v8482
        %8495 = vmatprep.subr.mxu0 0.0
        %8496 = vmatpush1.msra.mxu0 0.0
        %8497 = vmatprep.subr.mxu0 0.0
        %8498 = vmatpush1.msra.mxu0 0.0
        %8499 = vmatprep.subr.mxu0 0.0
        %8500 = vmatpush1.msra.mxu0 0.0
        %8501 = vmatprep.subr.mxu0 0.0
        %8502 = vmatpush1.msra.mxu0 0.0
        %8503 = vmatprep.subr.mxu0 0.0
        %8504 = vmatpush1.msra.mxu0 0.0
        %8505 = vmatprep.subr.mxu0 0.0
        %8506 = vmatpush1.msra.mxu0 0.0
        %8507 = vmatprep.subr.mxu0 0.0
        %8508 = vmatpush1.msra.mxu0 0.0
        %8509 = vmatprep.subr.mxu0 0.0
        %8510 = vmatpush1.msra.mxu0 0.0
        %8511 = vmatprep.subr.mxu0 0.0
        %8512 = vmatpush1.msra.mxu0 0.0
        %8513 = vmatprep.subr.mxu0 0.0
        %8514 = vmatpush1.msra.mxu0 0.0
        %8515 = vmatprep.subr.mxu0 0.0
        %8516 = vmatpush1.msra.mxu0 0.0
        %8517 = vmatprep.subr.mxu0 0.0
        %8518 = vmatpush1.msra.mxu0 0.0
        %8519 = vmatprep.subr.mxu0 0.0
        %8520 = vmatpush1.msra.mxu0 0.0
        %8521 = vmatprep.subr.mxu0 0.0
        %8522 = vmatpush1.msra.mxu0 0.0
        %8523 = vmatprep.subr.mxu0 0.0
        %8524 = vmatpush1.msra.mxu0 0.0
        %8525 = vmatprep.subr.mxu0 0.0
        %8526 = vmatpush1.msra.mxu0 0.0
        %8527 = vmatprep.subr.mxu0 0.0
        %8528 = vmatpush1.msra.mxu0 0.0
        %8529 = vmatprep.subr.mxu0 0.0
        %8530 = vmatpush1.msra.mxu0 0.0
        %8531 = vmatprep.subr.mxu0 0.0
        %8532 = vmatpush1.msra.mxu0 0.0
        %8533 = vmatprep.subr.mxu0 0.0
        %8534 = vmatpush1.msra.mxu0 0.0
        %8535 = vmatprep.subr.mxu0 0.0
        %8536 = vmatpush1.msra.mxu0 0.0
        %8537 = vmatprep.subr.mxu0 0.0
        %8538 = vmatpush1.msra.mxu0 0.0
        %8539 = vmatprep.subr.mxu0 0.0
        %8540 = vmatpush1.msra.mxu0 0.0
        %8541 = vmatprep.subr.mxu0 0.0
        %8542 = vmatpush1.msra.mxu0 0.0
        %8543 = vmatprep.subr.mxu0 0.0
        %8544 = vmatpush1.msra.mxu0 0.0
        %8545 = vmatprep.subr.mxu0 0.0
        %8546 = vmatpush1.msra.mxu0 0.0
        %8547 = vmatprep.subr.mxu0 0.0
        %8548 = vmatpush1.msra.mxu0 0.0
        %8549 = vmatprep.subr.mxu0 0.0
        %8550 = vmatpush1.msra.mxu0 0.0
        %8551 = vmatprep.mubr.f32.mxu0 0.0
        %8552 = vmatmul.mubr.f32.gmra.mrb[0].mxu0 %v8479
        %v8553 = vpop.f32.mrb[0].mxu0
        %v8554 = vadd.f32 0.0, %v8553
        %v8555 = vpop.f32.mrb[0].mxu0
        %v8556 = vadd.f32 0.0, %v8555
        %8557 = vdwg.mxu0
        %v8560 = vcombine.low %v8554, %v8556
        %v8562 = vunpack.c.l.s4 1966171168
        %v8563 = vunpack.c.0.s8 %v8562
        %v8564 = vlaneseq
        %v8565 = vshrl.u32 %v8564, 7
        %v8566 = vsub.s32 %v8563, %v8565
        %v8567 = vrot.slane %v8560, %v8566
        %v8569 = vunpack.c.l.s4 1966171168
        %v8570 = vunpack.c.0.s8 %v8569
        %v8571 = vlaneseq
        %v8572 = vshrl.u32 %v8571, 7
        %v8573 = vsub.s32 %v8570, %v8572
        %v8574 = vrot.slane %v8567, %v8573
        %v8576 = vadd.f32 %v8468, %v8574
        %v8577 = vtanh.pop %v8576
        %v8578 = vld [vmem:[%s7] sm:$0xff]
        %v8579 = vld [vmem:[%s7 + $0x8] sm:$0xff]
        %v8580 = vld [vmem:[%s7 + $0x10] sm:$0xff]
        %v8581 = vld [vmem:[%s7 + $0x18] sm:$0xff]
        %v8582 = vld [vmem:[%s7 + $0x20] sm:$0xff]
        %v8583 = vld [vmem:[%s7 + $0x28] sm:$0xff]
        %v8584 = vld [vmem:[%s7 + $0x30] sm:$0xff]
        %v8585 = vld [vmem:[%s7 + $0x38] sm:$0xff]
        %v8586 = vld [vmem:[%s7 + $0x40] sm:$0xff]
        %v8587 = vld [vmem:[%s7 + $0x48] sm:$0xff]
        %v8588 = vld [vmem:[%s7 + $0x50] sm:$0xff]
        %v8589 = vld [vmem:[%s7 + $0x58] sm:$0xff]
        %v8590 = vld [vmem:[%s7 + $0x60] sm:$0xff]
        %v8591 = vld [vmem:[%s7 + $0x68] sm:$0xff]
        %v8592 = vld [vmem:[%s7 + $0x70] sm:$0xff]
        %v8593 = vld [vmem:[%s7 + $0x78] sm:$0xff]
        %v8594 = vld [vmem:[%s7 + $0x80] sm:$0xff]
        %v8595 = vld [vmem:[%s7 + $0x88] sm:$0xff]
        %v8596 = vld [vmem:[%s7 + $0x90] sm:$0x3f]
        %v8597 = vld [vmem:[%s8] sm:$0x1]
        %v8599 = vlaneseq
        %v8600 = vshrl.u32 %v8599, 7
        %v8601 = vsub.s32 0, %v8600
        %v8602 = vrot.slane %v8577, %v8601
        %v8603 = vlaneseq
        %v8604 = vshrl.u32 %v8603, 7
        %v8605 = vsub.s32 1, %v8604
        %v8606 = vrot.slane %v8577, %v8605
        %vm8608 = vcmask 179200
        %v8609 = vsel %vm8608, %v8606, 0
        %v8612 = vsel %vm599, %v8596, 0
        %8614 = vmatprep.subr.mxu0 0.0
        %8615 = vmatpush1.msra.mxu0 %v8578
        %8616 = vmatprep.subr.mxu0 0.0
        %8617 = vmatpush1.msra.mxu0 %v8579
        %8618 = vmatprep.subr.mxu0 0.0
        %8619 = vmatpush1.msra.mxu0 %v8580
        %8620 = vmatprep.subr.mxu0 0.0
        %8621 = vmatpush1.msra.mxu0 %v8581
        %8622 = vmatprep.subr.mxu0 0.0
        %8623 = vmatpush1.msra.mxu0 %v8582
        %8624 = vmatprep.subr.mxu0 0.0
        %8625 = vmatpush1.msra.mxu0 %v8583
        %8626 = vmatprep.subr.mxu0 0.0
        %8627 = vmatpush1.msra.mxu0 %v8584
        %8628 = vmatprep.subr.mxu0 0.0
        %8629 = vmatpush1.msra.mxu0 %v8585
        %8630 = vmatprep.subr.mxu0 0.0
        %8631 = vmatpush1.msra.mxu0 %v8586
        %8632 = vmatprep.subr.mxu0 0.0
        %8633 = vmatpush1.msra.mxu0 %v8587
        %8634 = vmatprep.subr.mxu0 0.0
        %8635 = vmatpush1.msra.mxu0 %v8588
        %8636 = vmatprep.subr.mxu0 0.0
        %8637 = vmatpush1.msra.mxu0 %v8589
        %8638 = vmatprep.subr.mxu0 0.0
        %8639 = vmatpush1.msra.mxu0 %v8590
        %8640 = vmatprep.subr.mxu0 0.0
        %8641 = vmatpush1.msra.mxu0 %v8591
        %8642 = vmatprep.subr.mxu0 0.0
        %8643 = vmatpush1.msra.mxu0 %v8592
        %8644 = vmatprep.subr.mxu0 0.0
        %8645 = vmatpush1.msra.mxu0 %v8593
        %8646 = vmatprep.subr.mxu0 0.0
        %8647 = vmatpush1.msra.mxu0 %v8594
        %8648 = vmatprep.subr.mxu0 0.0
        %8649 = vmatpush1.msra.mxu0 %v8595
        %8650 = vmatprep.subr.mxu0 0.0
        %8651 = vmatpush1.msra.mxu0 %v8612
        %8652 = vmatprep.subr.mxu0 0.0
        %8653 = vmatpush1.msra.mxu0 0.0
        %8654 = vmatprep.subr.mxu0 0.0
        %8655 = vmatpush1.msra.mxu0 0.0
        %8656 = vmatprep.subr.mxu0 0.0
        %8657 = vmatpush1.msra.mxu0 0.0
        %8658 = vmatprep.subr.mxu0 0.0
        %8659 = vmatpush1.msra.mxu0 0.0
        %8660 = vmatprep.subr.mxu0 0.0
        %8661 = vmatpush1.msra.mxu0 0.0
        %8662 = vmatprep.subr.mxu0 0.0
        %8663 = vmatpush1.msra.mxu0 0.0
        %8664 = vmatprep.subr.mxu0 0.0
        %8665 = vmatpush1.msra.mxu0 0.0
        %8666 = vmatprep.subr.mxu0 0.0
        %8667 = vmatpush1.msra.mxu0 0.0
        %8668 = vmatprep.subr.mxu0 0.0
        %8669 = vmatpush1.msra.mxu0 0.0
        %8670 = vmatprep.subr.mxu0 0.0
        %8671 = vmatpush1.msra.mxu0 0.0
        %8672 = vmatprep.subr.mxu0 0.0
        %8673 = vmatpush1.msra.mxu0 0.0
        %8674 = vmatprep.subr.mxu0 0.0
        %8675 = vmatpush1.msra.mxu0 0.0
        %8676 = vmatprep.subr.mxu0 0.0
        %8677 = vmatpush1.msra.mxu0 0.0
        %8678 = vmatprep.mubr.f32.mxu0 %v8609
        %8679 = vmatmul.mubr.f32.gmra.mrb[0].mxu0 %v8602
        %v8680 = vpop.f32.mrb[0].mxu0
        %v8681 = vadd.f32 %v8597, %v8680
        %v8682 = vpop.f32.mrb[0].mxu0
        %8683 = vdwg.mxu0
        %vm8684 = vcmask 73728
        %8685 = vst.msk [vmem:[%s351] sm:$0x1] %vm8684, %v8681
        %s8686 = sand.u32 %s227, 1
        %s8687 = scalar_lea.sflag [#allocation3], %s8686
        %s8688 = sand.u32 %s227, 1
        %s8689 = scalar_lea.vmem [#allocation7], %s8688
        // Predicated region
        $region65: #{robust_conv_net.1} parent=55 // pred_check
          %p8690 = pneg %p237
        $region66: #{robust_conv_net.1} parent=55 // pred_check_branch
          %8692 = sbr.rel (%p8690) target = $region68
        $region67: #{robust_conv_net.1} parent=55 // pred_region
          %s8694 = ssub.s32 16, 16
          %8695 = vsyncadd %s8687, %s8694
          %s8696 = smul.addr %s25, 16
          %s8697 = scalar_lea.hbm %s9, %s8696
          %s8699 = sshll.u32 %s8689, 4
          %s8700 = int_to_ptr.vmem [resolvable:$true] %s8699
          %8702 = dma.vmem_to_hbm [thread:$0]  %s8700, 16, %s8697, %s8687
        $region68: #{robust_conv_net.1} parent=55 // pred_fallthru
          _
      $region56: #{robust_conv_net.1} parent=5 // pred_fallthru
        _
      %p8703 = scmp.le.s32.totalorder 2, %s20
      // Predicated region
      $region69: #{robust_conv_net.1} parent=5 // pred_check
        %p8704 = pneg %p8703
      $region70: #{robust_conv_net.1} parent=5 // pred_check_branch
        %8706 = sbr.rel (%p8704) target = $region72
      $region71: #{robust_conv_net.1} parent=5 // pred_region
        %s8707 = ssub.s32 %s20, 2
        // Predicated region
        $region73: #{robust_conv_net.1} parent=71 // pred_check
          %p8708 = pneg %p243
        $region74: #{robust_conv_net.1} parent=71 // pred_check_branch
          %8710 = sbr.rel (%p8708) target = $region76
        $region75: #{robust_conv_net.1} parent=71 // pred_region
          %s8711 = sand.u32 %s228, 1
          %s8712 = scalar_lea.sflag [#allocation3], %s8711
          %s8713 = sand.u32 %s228, 1
          %s8714 = scalar_lea.vmem [#allocation7], %s8713
          %8715 = dma.done %s8712, 16
        $region76: #{robust_conv_net.1} parent=71 // pred_fallthru
          _
      $region72: #{robust_conv_net.1} parent=5 // pred_fallthru
        _
    $region6: #{robust_conv_net.1} parent=1 // loop_footer
      %s24 = sadd.s32 1, %s20
    $region7: #{robust_conv_net.1} parent=1 // loop_footer_branch
      %19 = sbr.rel target = $region3
    $region8: #{robust_conv_net.1} parent=1 // loop_exit
      _
    %8716 = vsyncpa [#allocation3], 1
    %s8717 = scalar_lea.sflag [#allocation3], 1
    %8718 = vsyncpa %s8717, 1
    %8719 = vsyncpa [#allocation4], 1
    %s8720 = scalar_lea.sflag [#allocation4], 1
    %8721 = vsyncpa %s8720, 1
    %8722 = vsyncpa [#allocation6], 1

</llo_original>
